<compile_context>
chip_gen: v7x
topology: tpu7x:2x2x1
jax: 0.10.0
libtpu: 0.0.40
codegen_flags: <defaults>
</compile_context>

<pallas_src>
import functools

import jax
import jax.numpy as jnp
from jax.experimental import pallas as pl
from jax.experimental.pallas import tpu as pltpu


_VMEM_LIMIT = 32 * 1024 * 1024  # safe on v5e/v6e (128 MiB phys) and v7x (64 MiB phys)


def _compiler_params():
    return pltpu.CompilerParams(
        dimension_semantics=("parallel",),   # shards M-tiles across v7x's 2 TCs
        vmem_limit_bytes=_VMEM_LIMIT,
    )


# ----------------------------------------------------------------------------
# Kernel 1: fused Conv3x3(pad=1) + ReLU + MaxPool2x2(stride 2)
# ----------------------------------------------------------------------------

def _conv_relu_pool_kernel(cols_ref, w_ref, b_ref, o_ref):
    # cols_ref: (4, TM, 9*Cin) bf16  -- 4 = the 2x2 pooling-window positions
    # w_ref   : (9*Cin, Cout)  bf16
    # b_ref   : (1, Cout)      f32
    # o_ref   : (TM, Cout)     bf16  (pooled activation, lane-dense)
    w = w_ref[...]
    m = jnp.dot(cols_ref[0], w, preferred_element_type=jnp.float32)
    for p in range(1, 4):                                   # static unroll
        m = jnp.maximum(m, jnp.dot(cols_ref[p], w,
                                   preferred_element_type=jnp.float32))
    # max / (+bias) / ReLU commute => equals MaxPool(ReLU(conv + bias)).
    o_ref[...] = jnp.maximum(m + b_ref[...], 0.0).astype(o_ref.dtype)


def _choose_tm(M):
    """Single block when small; otherwise >=2 tiles (v7x megacore), <=1024 rows."""
    if M <= 256:
        return M
    for tm in (1024, 512, 256, 128):
        if tm < M and M % tm == 0:
            return tm
    return M


def conv_relu_pool(cols, w, b):
    """cols: (4, M, K) bf16, w: (K, Cout) bf16, b: (Cout,) f32 -> (M, Cout) bf16."""
    _, M, K = cols.shape
    cout = w.shape[1]
    tm = _choose_tm(M)
    return pl.pallas_call(
        _conv_relu_pool_kernel,
        out_shape=jax.ShapeDtypeStruct((M, cout), jnp.bfloat16),
        grid=(M // tm,),
        in_specs=[
            pl.BlockSpec((4, tm, K), lambda i: (0, i, 0)),
            pl.BlockSpec((K, cout), lambda i: (0, 0)),
            pl.BlockSpec((1, cout), lambda i: (0, 0)),
        ],
        out_specs=pl.BlockSpec((tm, cout), lambda i: (i, 0)),
        compiler_params=_compiler_params(),
    )(cols, w, b.reshape(1, cout))


# ----------------------------------------------------------------------------
# Kernel 2: fused fc1 + (shared head ReLU) + combined predicate/classes linear
# ----------------------------------------------------------------------------

def _head_kernel(feat_ref, w1_ref, b1_ref, wh_ref, bh_ref, pred_ref, cls_ref,
                 *, num_predicates):
    # fc1 (no activation on its own output) ...
    h = jnp.dot(feat_ref[...], w1_ref[...], preferred_element_type=jnp.float32)
    h = h + b1_ref[...]
    # ... both heads start with ReLU on fc1's output -> apply it once.
    h = jnp.maximum(h, 0.0)
    # TODO(synk): Dropout(0.2) is eval-mode identity (no RNG masking).
    out = jnp.dot(h.astype(wh_ref.dtype), wh_ref[...],
                  preferred_element_type=jnp.float32) + bh_ref[...]
    pred_ref[...] = jax.nn.sigmoid(out[:, :num_predicates]).astype(pred_ref.dtype)
    cls_ref[...] = out[:, num_predicates:].astype(cls_ref.dtype)


def fused_head(feat, w1, b1, wh, bh, num_predicates, num_classes):
    M, K = feat.shape
    H = w1.shape[1]
    NH = wh.shape[1]
    kern = functools.partial(_head_kernel, num_predicates=num_predicates)
    return pl.pallas_call(
        kern,
        out_shape=(jax.ShapeDtypeStruct((M, num_predicates), jnp.float32),
                   jax.ShapeDtypeStruct((M, num_classes), jnp.float32)),
        grid=(1,),
        in_specs=[
            pl.BlockSpec((M, K), lambda i: (0, 0)),
            pl.BlockSpec((K, H), lambda i: (0, 0)),
            pl.BlockSpec((1, H), lambda i: (0, 0)),
            pl.BlockSpec((H, NH), lambda i: (0, 0)),
            pl.BlockSpec((1, NH), lambda i: (0, 0)),
        ],
        out_specs=(pl.BlockSpec((M, num_predicates), lambda i: (0, 0)),
                   pl.BlockSpec((M, num_classes), lambda i: (0, 0))),
        compiler_params=_compiler_params(),
    )(feat, w1, b1.reshape(1, H), wh, bh.reshape(1, NH))


# ----------------------------------------------------------------------------
# Glue (pure JAX patch extraction; tiny at these sizes)
# ----------------------------------------------------------------------------

def im2col_pool_slabs(x):
    """NHWC -> (4, N*Ho*Wo, 9*C): 3x3/pad=1 im2col patches grouped by pool position.

    Slab p = 2*a + b holds the patches for conv-output pixels (2i+a, 2j+b);
    the max over slabs after the conv equals MaxPool2d(2, 2, stride=2).
    """
    N, H, W, C = x.shape
    Ho, Wo = H // 2, W // 2
    xp = jnp.pad(x, ((0, 0), (1, 1), (1, 1), (0, 0)))
    slabs = []
    for a in range(2):
        for b in range(2):
            patches = [xp[:, a + dy: a + dy + 2 * Ho: 2,
                             b + dx: b + dx + 2 * Wo: 2, :]
                       for dy in range(3) for dx in range(3)]
            cols = jnp.concatenate(patches, axis=-1)          # (N, Ho, Wo, 9*C)
            slabs.append(cols.reshape(N * Ho * Wo, 9 * C))
    return jnp.stack(slabs, axis=0), (N, Ho, Wo)


# ----------------------------------------------------------------------------
# Model: parameters + forward
# ----------------------------------------------------------------------------

CONV_CHANNELS = [(3, 16), (16, 32), (32, 64), (64, 128), (128, 256)]


def init_params(key, cnn_out_features, num_classes, num_predicates):
    # MXU-facing weights stored bf16 once at init; biases kept f32.
    params = {"conv": []}
    for (cin, cout) in CONV_CHANNELS:
        key, kw, kb = jax.random.split(key, 3)
        w = jax.random.normal(kw, (3, 3, cin, cout), jnp.float32) * 0.05
        b = jax.random.normal(kb, (cout,), jnp.float32) * 0.05
        params["conv"].append((w.reshape(9 * cin, cout).astype(jnp.bfloat16), b))
    key, k1, k2, k3, k4, k5, k6 = jax.random.split(key, 7)
    params["fc1_w"] = (jax.random.normal(k1, (cnn_out_features, 512), jnp.float32)
                       * 0.02).astype(jnp.bfloat16)
    params["fc1_b"] = jax.random.normal(k2, (512,), jnp.float32) * 0.02
    params["pred_w"] = (jax.random.normal(k3, (512, num_predicates), jnp.float32)
                        * 0.02).astype(jnp.bfloat16)
    params["pred_b"] = jax.random.normal(k4, (num_predicates,), jnp.float32) * 0.02
    params["cls_w"] = (jax.random.normal(k5, (512, num_classes), jnp.float32)
                       * 0.02).astype(jnp.bfloat16)
    params["cls_b"] = jax.random.normal(k6, (num_classes,), jnp.float32) * 0.02
    return params


def animal_classifier_forward(x_nchw, params):
    num_predicates = params["pred_w"].shape[1]
    num_classes = params["cls_w"].shape[1]

    # NCHW (PyTorch) -> NHWC (kernel layout); MXU inputs in bf16, f32 accumulation.
    x = jnp.transpose(x_nchw, (0, 2, 3, 1)).astype(jnp.bfloat16)

    # CNN: 5x fused (conv3x3 pad=1 + ReLU + maxpool2x2/2) pallas_calls.
    for (w, b) in params["conv"]:
        cout = w.shape[1]
        cols, (N, Ho, Wo) = im2col_pool_slabs(x)   # XLA glue (tiny slices/concat)
        y = conv_relu_pool(cols, w, b)             # fused Pallas kernel
        x = y.reshape(N, Ho, Wo, cout)

    # torch.flatten(x, 1) on NCHW ordering (identity when spatial is 1x1).
    feat = jnp.transpose(x, (0, 3, 1, 2)).reshape(x.shape[0], -1)

    # fc1 + shared head ReLU + combined (predicate | classes) linear: one kernel.
    head_w = jnp.concatenate([params["pred_w"], params["cls_w"]], axis=1)
    head_b = jnp.concatenate([params["pred_b"], params["cls_b"]], axis=0)
    predicates, classes = fused_head(
        feat, params["fc1_w"], params["fc1_b"],
        head_w, head_b, num_predicates, num_classes)
    return predicates, classes


if __name__ == "__main__":
    batch, in_ch, spatial = 2, 3, 32          # 32 -> five /2 pools -> 1x1 spatial
    num_classes, num_predicates = 10, 24

    # _get_cnn_output_size equivalent for this input size: 256 * 1 * 1.
    cnn_out_features = 256 * (spatial // 32) * (spatial // 32)

    key = jax.random.PRNGKey(0)
    key, kx, kp = jax.random.split(key, 3)
    x = jax.random.normal(kx, (batch, in_ch, spatial, spatial), jnp.float32)
    params = init_params(kp, cnn_out_features, num_classes, num_predicates)

    fwd = jax.jit(animal_classifier_forward)
    predicates, classes = fwd(x, params)
    jax.block_until_ready((predicates, classes))

    assert predicates.shape == (batch, num_predicates)
    assert classes.shape == (batch, num_classes)
    assert bool(jnp.all(jnp.isfinite(predicates))) and bool(jnp.all(jnp.isfinite(classes)))
    assert bool(jnp.all((predicates >= 0.0) & (predicates <= 1.0)))  # sigmoid range

    print("KERNEL_OK")
</pallas_src>

<mosaic_0001>
module attributes {stable_mosaic.version = 11 : i64} {
  func.func @_conv_relu_pool_kernel(%arg0: i32, %arg1: memref<4x256x27xbf16, #tpu.memory_space<vmem>>, %arg2: memref<27x16xbf16, #tpu.memory_space<vmem>>, %arg3: memref<1x16xf32, #tpu.memory_space<vmem>>, %arg4: memref<256x16xbf16, #tpu.memory_space<vmem>>) attributes {dimension_semantics = [#tpu.dimension_semantics<parallel>], iteration_bounds = array<i64: 2>, scalar_prefetch = 0 : i64, scratch_operands = 0 : i64, tpu.core_type = #tpu.core_type<tc>, window_params = [{transform_indices = @transform_0, window_bounds = array<i64: 4, 256, 27>}, {pipeline_mode = #tpu.pipeline_mode<synchronous>, transform_indices = @transform_1, window_bounds = array<i64: 27, 16>}, {pipeline_mode = #tpu.pipeline_mode<synchronous>, transform_indices = @transform_2, window_bounds = array<i64: 1, 16>}, {transform_indices = @transform_3, window_bounds = array<i64: 256, 16>}]} {
    %c0 = arith.constant 0 : index
    %c0_0 = arith.constant 0 : index
    %0 = vector.load %arg2[%c0, %c0_0] : memref<27x16xbf16, #tpu.memory_space<vmem>>, vector<27x16xbf16>
    %c0_1 = arith.constant 0 : index
    %c0_2 = arith.constant 0 : index
    %c0_3 = arith.constant 0 : index
    %1 = vector.load %arg1[%c0_1, %c0_2, %c0_3] : memref<4x256x27xbf16, #tpu.memory_space<vmem>>, vector<1x256x27xbf16>
    %2 = vector.shape_cast %1 : vector<1x256x27xbf16> to vector<256x27xbf16>
    %cst = arith.constant dense<0.000000e+00> : vector<256x16xf32>
    %3 = tpu.matmul %2, %0, %cst {dimension_numbers = #tpu.dot_dimension_numbers<[1], [0], [0], [1], [0, 0, 1, 1], [], []>} : vector<256x27xbf16>, vector<27x16xbf16>, vector<256x16xf32> -> vector<256x16xf32>
    %c1 = arith.constant 1 : index
    %c0_4 = arith.constant 0 : index
    %c0_5 = arith.constant 0 : index
    %4 = vector.load %arg1[%c1, %c0_4, %c0_5] : memref<4x256x27xbf16, #tpu.memory_space<vmem>>, vector<1x256x27xbf16>
    %5 = vector.shape_cast %4 : vector<1x256x27xbf16> to vector<256x27xbf16>
    %cst_6 = arith.constant dense<0.000000e+00> : vector<256x16xf32>
    %6 = tpu.matmul %5, %0, %cst_6 {dimension_numbers = #tpu.dot_dimension_numbers<[1], [0], [0], [1], [0, 0, 1, 1], [], []>} : vector<256x27xbf16>, vector<27x16xbf16>, vector<256x16xf32> -> vector<256x16xf32>
    %7 = arith.maximumf %3, %6 : vector<256x16xf32>
    %c2 = arith.constant 2 : index
    %c0_7 = arith.constant 0 : index
    %c0_8 = arith.constant 0 : index
    %8 = vector.load %arg1[%c2, %c0_7, %c0_8] : memref<4x256x27xbf16, #tpu.memory_space<vmem>>, vector<1x256x27xbf16>
    %9 = vector.shape_cast %8 : vector<1x256x27xbf16> to vector<256x27xbf16>
    %cst_9 = arith.constant dense<0.000000e+00> : vector<256x16xf32>
    %10 = tpu.matmul %9, %0, %cst_9 {dimension_numbers = #tpu.dot_dimension_numbers<[1], [0], [0], [1], [0, 0, 1, 1], [], []>} : vector<256x27xbf16>, vector<27x16xbf16>, vector<256x16xf32> -> vector<256x16xf32>
    %11 = arith.maximumf %7, %10 : vector<256x16xf32>
    %c3 = arith.constant 3 : index
    %c0_10 = arith.constant 0 : index
    %c0_11 = arith.constant 0 : index
    %12 = vector.load %arg1[%c3, %c0_10, %c0_11] : memref<4x256x27xbf16, #tpu.memory_space<vmem>>, vector<1x256x27xbf16>
    %13 = vector.shape_cast %12 : vector<1x256x27xbf16> to vector<256x27xbf16>
    %cst_12 = arith.constant dense<0.000000e+00> : vector<256x16xf32>
    %14 = tpu.matmul %13, %0, %cst_12 {dimension_numbers = #tpu.dot_dimension_numbers<[1], [0], [0], [1], [0, 0, 1, 1], [], []>} : vector<256x27xbf16>, vector<27x16xbf16>, vector<256x16xf32> -> vector<256x16xf32>
    %15 = arith.maximumf %11, %14 : vector<256x16xf32>
    %c0_13 = arith.constant 0 : index
    %c0_14 = arith.constant 0 : index
    %16 = vector.load %arg3[%c0_13, %c0_14] : memref<1x16xf32, #tpu.memory_space<vmem>>, vector<1x16xf32>
    %17 = vector.broadcast %16 : vector<1x16xf32> to vector<256x16xf32>
    %18 = arith.addf %15, %17 : vector<256x16xf32>
    %cst_15 = arith.constant 0.000000e+00 : f32
    %19 = vector.broadcast %cst_15 : f32 to vector<256x16xf32>
    %20 = arith.maximumf %18, %19 : vector<256x16xf32>
    %21 = arith.truncf %20 : vector<256x16xf32> to vector<256x16xbf16>
    %c0_16 = arith.constant 0 : index
    %c0_17 = arith.constant 0 : index
    %22 = vector.load %arg4[%c0_16, %c0_17] : memref<256x16xbf16, #tpu.memory_space<vmem>>, vector<256x16xbf16>
    tpu.vector_store %arg4[%c0_16, %c0_17], %21 {strides = array<i32>} : memref<256x16xbf16, #tpu.memory_space<vmem>>, vector<256x16xbf16>,
    return
  }
  func.func @transform_0(%arg0: i32) -> (i32, i32, i32) {
    %c0_i32 = arith.constant 0 : i32
    %c0_i32_0 = arith.constant 0 : i32
    %c0_i32_1 = arith.constant 0 : i32
    return %c0_i32, %arg0, %c0_i32_0 : i32, i32, i32
  }
  func.func @transform_1(%arg0: i32) -> (i32, i32) {
    %c0_i32 = arith.constant 0 : i32
    %c0_i32_0 = arith.constant 0 : i32
    %c0_i32_1 = arith.constant 0 : i32
    return %c0_i32, %c0_i32_0 : i32, i32
  }
  func.func @transform_2(%arg0: i32) -> (i32, i32) {
    %c0_i32 = arith.constant 0 : i32
    %c0_i32_0 = arith.constant 0 : i32
    %c0_i32_1 = arith.constant 0 : i32
    return %c0_i32, %c0_i32_0 : i32, i32
  }
  func.func @transform_3(%arg0: i32) -> (i32, i32) {
    %c0_i32 = arith.constant 0 : i32
    %c0_i32_0 = arith.constant 0 : i32
    return %arg0, %c0_i32 : i32, i32
  }
}

module attributes {stable_mosaic.version = 11 : i64} {
  func.func @_conv_relu_pool_kernel(%arg0: i32, %arg1: memref<4x128x144xbf16, #tpu.memory_space<vmem>>, %arg2: memref<144x32xbf16, #tpu.memory_space<vmem>>, %arg3: memref<1x32xf32, #tpu.memory_space<vmem>>, %arg4: memref<128x32xbf16, #tpu.memory_space<vmem>>) attributes {dimension_semantics = [#tpu.dimension_semantics<parallel>], iteration_bounds = array<i64: 1>, scalar_prefetch = 0 : i64, scratch_operands = 0 : i64, tpu.core_type = #tpu.core_type<tc>, window_params = [{transform_indices = @transform_0, window_bounds = array<i64: 4, 128, 144>}, {pipeline_mode = #tpu.pipeline_mode<synchronous>, transform_indices = @transform_1, window_bounds = array<i64: 144, 32>}, {pipeline_mode = #tpu.pipeline_mode<synchronous>, transform_indices = @transform_2, window_bounds = array<i64: 1, 32>}, {transform_indices = @transform_3, window_bounds = array<i64: 128, 32>}]} {
    %c0 = arith.constant 0 : index
    %c0_0 = arith.constant 0 : index
    %0 = vector.load %arg2[%c0, %c0_0] : memref<144x32xbf16, #tpu.memory_space<vmem>>, vector<144x32xbf16>
    %c0_1 = arith.constant 0 : index
    %c0_2 = arith.constant 0 : index
    %c0_3 = arith.constant 0 : index
    %1 = vector.load %arg1[%c0_1, %c0_2, %c0_3] : memref<4x128x144xbf16, #tpu.memory_space<vmem>>, vector<1x128x144xbf16>
    %2 = vector.shape_cast %1 : vector<1x128x144xbf16> to vector<128x144xbf16>
    %cst = arith.constant dense<0.000000e+00> : vector<128x32xf32>
    %3 = tpu.matmul %2, %0, %cst {dimension_numbers = #tpu.dot_dimension_numbers<[1], [0], [0], [1], [0, 0, 1, 1], [], []>} : vector<128x144xbf16>, vector<144x32xbf16>, vector<128x32xf32> -> vector<128x32xf32>
    %c1 = arith.constant 1 : index
    %c0_4 = arith.constant 0 : index
    %c0_5 = arith.constant 0 : index
    %4 = vector.load %arg1[%c1, %c0_4, %c0_5] : memref<4x128x144xbf16, #tpu.memory_space<vmem>>, vector<1x128x144xbf16>
    %5 = vector.shape_cast %4 : vector<1x128x144xbf16> to vector<128x144xbf16>
    %cst_6 = arith.constant dense<0.000000e+00> : vector<128x32xf32>
    %6 = tpu.matmul %5, %0, %cst_6 {dimension_numbers = #tpu.dot_dimension_numbers<[1], [0], [0], [1], [0, 0, 1, 1], [], []>} : vector<128x144xbf16>, vector<144x32xbf16>, vector<128x32xf32> -> vector<128x32xf32>
    %7 = arith.maximumf %3, %6 : vector<128x32xf32>
    %c2 = arith.constant 2 : index
    %c0_7 = arith.constant 0 : index
    %c0_8 = arith.constant 0 : index
    %8 = vector.load %arg1[%c2, %c0_7, %c0_8] : memref<4x128x144xbf16, #tpu.memory_space<vmem>>, vector<1x128x144xbf16>
    %9 = vector.shape_cast %8 : vector<1x128x144xbf16> to vector<128x144xbf16>
    %cst_9 = arith.constant dense<0.000000e+00> : vector<128x32xf32>
    %10 = tpu.matmul %9, %0, %cst_9 {dimension_numbers = #tpu.dot_dimension_numbers<[1], [0], [0], [1], [0, 0, 1, 1], [], []>} : vector<128x144xbf16>, vector<144x32xbf16>, vector<128x32xf32> -> vector<128x32xf32>
    %11 = arith.maximumf %7, %10 : vector<128x32xf32>
    %c3 = arith.constant 3 : index
    %c0_10 = arith.constant 0 : index
    %c0_11 = arith.constant 0 : index
    %12 = vector.load %arg1[%c3, %c0_10, %c0_11] : memref<4x128x144xbf16, #tpu.memory_space<vmem>>, vector<1x128x144xbf16>
    %13 = vector.shape_cast %12 : vector<1x128x144xbf16> to vector<128x144xbf16>
    %cst_12 = arith.constant dense<0.000000e+00> : vector<128x32xf32>
    %14 = tpu.matmul %13, %0, %cst_12 {dimension_numbers = #tpu.dot_dimension_numbers<[1], [0], [0], [1], [0, 0, 1, 1], [], []>} : vector<128x144xbf16>, vector<144x32xbf16>, vector<128x32xf32> -> vector<128x32xf32>
    %15 = arith.maximumf %11, %14 : vector<128x32xf32>
    %c0_13 = arith.constant 0 : index
    %c0_14 = arith.constant 0 : index
    %16 = vector.load %arg3[%c0_13, %c0_14] : memref<1x32xf32, #tpu.memory_space<vmem>>, vector<1x32xf32>
    %17 = vector.broadcast %16 : vector<1x32xf32> to vector<128x32xf32>
    %18 = arith.addf %15, %17 : vector<128x32xf32>
    %cst_15 = arith.constant 0.000000e+00 : f32
    %19 = vector.broadcast %cst_15 : f32 to vector<128x32xf32>
    %20 = arith.maximumf %18, %19 : vector<128x32xf32>
    %21 = arith.truncf %20 : vector<128x32xf32> to vector<128x32xbf16>
    %c0_16 = arith.constant 0 : index
    %c0_17 = arith.constant 0 : index
    %22 = vector.load %arg4[%c0_16, %c0_17] : memref<128x32xbf16, #tpu.memory_space<vmem>>, vector<128x32xbf16>
    tpu.vector_store %arg4[%c0_16, %c0_17], %21 {strides = array<i32>} : memref<128x32xbf16, #tpu.memory_space<vmem>>, vector<128x32xbf16>,
    return
  }
  func.func @transform_0(%arg0: i32) -> (i32, i32, i32) {
    %c0_i32 = arith.constant 0 : i32
    %c0_i32_0 = arith.constant 0 : i32
    %c0_i32_1 = arith.constant 0 : i32
    return %c0_i32, %arg0, %c0_i32_0 : i32, i32, i32
  }
  func.func @transform_1(%arg0: i32) -> (i32, i32) {
    %c0_i32 = arith.constant 0 : i32
    %c0_i32_0 = arith.constant 0 : i32
    %c0_i32_1 = arith.constant 0 : i32
    return %c0_i32, %c0_i32_0 : i32, i32
  }
  func.func @transform_2(%arg0: i32) -> (i32, i32) {
    %c0_i32 = arith.constant 0 : i32
    %c0_i32_0 = arith.constant 0 : i32
    %c0_i32_1 = arith.constant 0 : i32
    return %c0_i32, %c0_i32_0 : i32, i32
  }
  func.func @transform_3(%arg0: i32) -> (i32, i32) {
    %c0_i32 = arith.constant 0 : i32
    %c0_i32_0 = arith.constant 0 : i32
    return %arg0, %c0_i32 : i32, i32
  }
}

module attributes {stable_mosaic.version = 11 : i64} {
  func.func @_conv_relu_pool_kernel(%arg0: i32, %arg1: memref<4x32x288xbf16, #tpu.memory_space<vmem>>, %arg2: memref<288x64xbf16, #tpu.memory_space<vmem>>, %arg3: memref<1x64xf32, #tpu.memory_space<vmem>>, %arg4: memref<32x64xbf16, #tpu.memory_space<vmem>>) attributes {dimension_semantics = [#tpu.dimension_semantics<parallel>], iteration_bounds = array<i64: 1>, scalar_prefetch = 0 : i64, scratch_operands = 0 : i64, tpu.core_type = #tpu.core_type<tc>, window_params = [{transform_indices = @transform_0, window_bounds = array<i64: 4, 32, 288>}, {pipeline_mode = #tpu.pipeline_mode<synchronous>, transform_indices = @transform_1, window_bounds = array<i64: 288, 64>}, {pipeline_mode = #tpu.pipeline_mode<synchronous>, transform_indices = @transform_2, window_bounds = array<i64: 1, 64>}, {transform_indices = @transform_3, window_bounds = array<i64: 32, 64>}]} {
    %c0 = arith.constant 0 : index
    %c0_0 = arith.constant 0 : index
    %0 = vector.load %arg2[%c0, %c0_0] : memref<288x64xbf16, #tpu.memory_space<vmem>>, vector<288x64xbf16>
    %c0_1 = arith.constant 0 : index
    %c0_2 = arith.constant 0 : index
    %c0_3 = arith.constant 0 : index
    %1 = vector.load %arg1[%c0_1, %c0_2, %c0_3] : memref<4x32x288xbf16, #tpu.memory_space<vmem>>, vector<1x32x288xbf16>
    %2 = vector.shape_cast %1 : vector<1x32x288xbf16> to vector<32x288xbf16>
    %cst = arith.constant dense<0.000000e+00> : vector<32x64xf32>
    %3 = tpu.matmul %2, %0, %cst {dimension_numbers = #tpu.dot_dimension_numbers<[1], [0], [0], [1], [0, 0, 1, 1], [], []>} : vector<32x288xbf16>, vector<288x64xbf16>, vector<32x64xf32> -> vector<32x64xf32>
    %c1 = arith.constant 1 : index
    %c0_4 = arith.constant 0 : index
    %c0_5 = arith.constant 0 : index
    %4 = vector.load %arg1[%c1, %c0_4, %c0_5] : memref<4x32x288xbf16, #tpu.memory_space<vmem>>, vector<1x32x288xbf16>
    %5 = vector.shape_cast %4 : vector<1x32x288xbf16> to vector<32x288xbf16>
    %cst_6 = arith.constant dense<0.000000e+00> : vector<32x64xf32>
    %6 = tpu.matmul %5, %0, %cst_6 {dimension_numbers = #tpu.dot_dimension_numbers<[1], [0], [0], [1], [0, 0, 1, 1], [], []>} : vector<32x288xbf16>, vector<288x64xbf16>, vector<32x64xf32> -> vector<32x64xf32>
    %7 = arith.maximumf %3, %6 : vector<32x64xf32>
    %c2 = arith.constant 2 : index
    %c0_7 = arith.constant 0 : index
    %c0_8 = arith.constant 0 : index
    %8 = vector.load %arg1[%c2, %c0_7, %c0_8] : memref<4x32x288xbf16, #tpu.memory_space<vmem>>, vector<1x32x288xbf16>
    %9 = vector.shape_cast %8 : vector<1x32x288xbf16> to vector<32x288xbf16>
    %cst_9 = arith.constant dense<0.000000e+00> : vector<32x64xf32>
    %10 = tpu.matmul %9, %0, %cst_9 {dimension_numbers = #tpu.dot_dimension_numbers<[1], [0], [0], [1], [0, 0, 1, 1], [], []>} : vector<32x288xbf16>, vector<288x64xbf16>, vector<32x64xf32> -> vector<32x64xf32>
    %11 = arith.maximumf %7, %10 : vector<32x64xf32>
    %c3 = arith.constant 3 : index
    %c0_10 = arith.constant 0 : index
    %c0_11 = arith.constant 0 : index
    %12 = vector.load %arg1[%c3, %c0_10, %c0_11] : memref<4x32x288xbf16, #tpu.memory_space<vmem>>, vector<1x32x288xbf16>
    %13 = vector.shape_cast %12 : vector<1x32x288xbf16> to vector<32x288xbf16>
    %cst_12 = arith.constant dense<0.000000e+00> : vector<32x64xf32>
    %14 = tpu.matmul %13, %0, %cst_12 {dimension_numbers = #tpu.dot_dimension_numbers<[1], [0], [0], [1], [0, 0, 1, 1], [], []>} : vector<32x288xbf16>, vector<288x64xbf16>, vector<32x64xf32> -> vector<32x64xf32>
    %15 = arith.maximumf %11, %14 : vector<32x64xf32>
    %c0_13 = arith.constant 0 : index
    %c0_14 = arith.constant 0 : index
    %16 = vector.load %arg3[%c0_13, %c0_14] : memref<1x64xf32, #tpu.memory_space<vmem>>, vector<1x64xf32>
    %17 = vector.broadcast %16 : vector<1x64xf32> to vector<32x64xf32>
    %18 = arith.addf %15, %17 : vector<32x64xf32>
    %cst_15 = arith.constant 0.000000e+00 : f32
    %19 = vector.broadcast %cst_15 : f32 to vector<32x64xf32>
    %20 = arith.maximumf %18, %19 : vector<32x64xf32>
    %21 = arith.truncf %20 : vector<32x64xf32> to vector<32x64xbf16>
    %c0_16 = arith.constant 0 : index
    %c0_17 = arith.constant 0 : index
    %22 = vector.load %arg4[%c0_16, %c0_17] : memref<32x64xbf16, #tpu.memory_space<vmem>>, vector<32x64xbf16>
    tpu.vector_store %arg4[%c0_16, %c0_17], %21 {strides = array<i32>} : memref<32x64xbf16, #tpu.memory_space<vmem>>, vector<32x64xbf16>,
    return
  }
  func.func @transform_0(%arg0: i32) -> (i32, i32, i32) {
    %c0_i32 = arith.constant 0 : i32
    %c0_i32_0 = arith.constant 0 : i32
    %c0_i32_1 = arith.constant 0 : i32
    return %c0_i32, %arg0, %c0_i32_0 : i32, i32, i32
  }
  func.func @transform_1(%arg0: i32) -> (i32, i32) {
    %c0_i32 = arith.constant 0 : i32
    %c0_i32_0 = arith.constant 0 : i32
    %c0_i32_1 = arith.constant 0 : i32
    return %c0_i32, %c0_i32_0 : i32, i32
  }
  func.func @transform_2(%arg0: i32) -> (i32, i32) {
    %c0_i32 = arith.constant 0 : i32
    %c0_i32_0 = arith.constant 0 : i32
    %c0_i32_1 = arith.constant 0 : i32
    return %c0_i32, %c0_i32_0 : i32, i32
  }
  func.func @transform_3(%arg0: i32) -> (i32, i32) {
    %c0_i32 = arith.constant 0 : i32
    %c0_i32_0 = arith.constant 0 : i32
    return %arg0, %c0_i32 : i32, i32
  }
}

module attributes {stable_mosaic.version = 11 : i64} {
  func.func @_conv_relu_pool_kernel(%arg0: i32, %arg1: memref<4x8x576xbf16, #tpu.memory_space<vmem>>, %arg2: memref<576x128xbf16, #tpu.memory_space<vmem>>, %arg3: memref<1x128xf32, #tpu.memory_space<vmem>>, %arg4: memref<8x128xbf16, #tpu.memory_space<vmem>>) attributes {dimension_semantics = [#tpu.dimension_semantics<parallel>], iteration_bounds = array<i64: 1>, scalar_prefetch = 0 : i64, scratch_operands = 0 : i64, tpu.core_type = #tpu.core_type<tc>, window_params = [{transform_indices = @transform_0, window_bounds = array<i64: 4, 8, 576>}, {pipeline_mode = #tpu.pipeline_mode<synchronous>, transform_indices = @transform_1, window_bounds = array<i64: 576, 128>}, {pipeline_mode = #tpu.pipeline_mode<synchronous>, transform_indices = @transform_2, window_bounds = array<i64: 1, 128>}, {transform_indices = @transform_3, window_bounds = array<i64: 8, 128>}]} {
    %c0 = arith.constant 0 : index
    %c0_0 = arith.constant 0 : index
    %0 = vector.load %arg2[%c0, %c0_0] : memref<576x128xbf16, #tpu.memory_space<vmem>>, vector<576x128xbf16>
    %c0_1 = arith.constant 0 : index
    %c0_2 = arith.constant 0 : index
    %c0_3 = arith.constant 0 : index
    %1 = vector.load %arg1[%c0_1, %c0_2, %c0_3] : memref<4x8x576xbf16, #tpu.memory_space<vmem>>, vector<1x8x576xbf16>
    %2 = vector.shape_cast %1 : vector<1x8x576xbf16> to vector<8x576xbf16>
    %cst = arith.constant dense<0.000000e+00> : vector<8x128xf32>
    %3 = tpu.matmul %2, %0, %cst {dimension_numbers = #tpu.dot_dimension_numbers<[1], [0], [0], [1], [0, 0, 1, 1], [], []>} : vector<8x576xbf16>, vector<576x128xbf16>, vector<8x128xf32> -> vector<8x128xf32>
    %c1 = arith.constant 1 : index
    %c0_4 = arith.constant 0 : index
    %c0_5 = arith.constant 0 : index
    %4 = vector.load %arg1[%c1, %c0_4, %c0_5] : memref<4x8x576xbf16, #tpu.memory_space<vmem>>, vector<1x8x576xbf16>
    %5 = vector.shape_cast %4 : vector<1x8x576xbf16> to vector<8x576xbf16>
    %cst_6 = arith.constant dense<0.000000e+00> : vector<8x128xf32>
    %6 = tpu.matmul %5, %0, %cst_6 {dimension_numbers = #tpu.dot_dimension_numbers<[1], [0], [0], [1], [0, 0, 1, 1], [], []>} : vector<8x576xbf16>, vector<576x128xbf16>, vector<8x128xf32> -> vector<8x128xf32>
    %7 = arith.maximumf %3, %6 : vector<8x128xf32>
    %c2 = arith.constant 2 : index
    %c0_7 = arith.constant 0 : index
    %c0_8 = arith.constant 0 : index
    %8 = vector.load %arg1[%c2, %c0_7, %c0_8] : memref<4x8x576xbf16, #tpu.memory_space<vmem>>, vector<1x8x576xbf16>
    %9 = vector.shape_cast %8 : vector<1x8x576xbf16> to vector<8x576xbf16>
    %cst_9 = arith.constant dense<0.000000e+00> : vector<8x128xf32>
    %10 = tpu.matmul %9, %0, %cst_9 {dimension_numbers = #tpu.dot_dimension_numbers<[1], [0], [0], [1], [0, 0, 1, 1], [], []>} : vector<8x576xbf16>, vector<576x128xbf16>, vector<8x128xf32> -> vector<8x128xf32>
    %11 = arith.maximumf %7, %10 : vector<8x128xf32>
    %c3 = arith.constant 3 : index
    %c0_10 = arith.constant 0 : index
    %c0_11 = arith.constant 0 : index
    %12 = vector.load %arg1[%c3, %c0_10, %c0_11] : memref<4x8x576xbf16, #tpu.memory_space<vmem>>, vector<1x8x576xbf16>
    %13 = vector.shape_cast %12 : vector<1x8x576xbf16> to vector<8x576xbf16>
    %cst_12 = arith.constant dense<0.000000e+00> : vector<8x128xf32>
    %14 = tpu.matmul %13, %0, %cst_12 {dimension_numbers = #tpu.dot_dimension_numbers<[1], [0], [0], [1], [0, 0, 1, 1], [], []>} : vector<8x576xbf16>, vector<576x128xbf16>, vector<8x128xf32> -> vector<8x128xf32>
    %15 = arith.maximumf %11, %14 : vector<8x128xf32>
    %c0_13 = arith.constant 0 : index
    %c0_14 = arith.constant 0 : index
    %16 = vector.load %arg3[%c0_13, %c0_14] : memref<1x128xf32, #tpu.memory_space<vmem>>, vector<1x128xf32>
    %17 = vector.broadcast %16 : vector<1x128xf32> to vector<8x128xf32>
    %18 = arith.addf %15, %17 : vector<8x128xf32>
    %cst_15 = arith.constant 0.000000e+00 : f32
    %19 = vector.broadcast %cst_15 : f32 to vector<8x128xf32>
    %20 = arith.maximumf %18, %19 : vector<8x128xf32>
    %21 = arith.truncf %20 : vector<8x128xf32> to vector<8x128xbf16>
    %c0_16 = arith.constant 0 : index
    %c0_17 = arith.constant 0 : index
    %22 = vector.load %arg4[%c0_16, %c0_17] : memref<8x128xbf16, #tpu.memory_space<vmem>>, vector<8x128xbf16>
    tpu.vector_store %arg4[%c0_16, %c0_17], %21 {strides = array<i32>} : memref<8x128xbf16, #tpu.memory_space<vmem>>, vector<8x128xbf16>,
    return
  }
  func.func @transform_0(%arg0: i32) -> (i32, i32, i32) {
    %c0_i32 = arith.constant 0 : i32
    %c0_i32_0 = arith.constant 0 : i32
    %c0_i32_1 = arith.constant 0 : i32
    return %c0_i32, %arg0, %c0_i32_0 : i32, i32, i32
  }
  func.func @transform_1(%arg0: i32) -> (i32, i32) {
    %c0_i32 = arith.constant 0 : i32
    %c0_i32_0 = arith.constant 0 : i32
    %c0_i32_1 = arith.constant 0 : i32
    return %c0_i32, %c0_i32_0 : i32, i32
  }
  func.func @transform_2(%arg0: i32) -> (i32, i32) {
    %c0_i32 = arith.constant 0 : i32
    %c0_i32_0 = arith.constant 0 : i32
    %c0_i32_1 = arith.constant 0 : i32
    return %c0_i32, %c0_i32_0 : i32, i32
  }
  func.func @transform_3(%arg0: i32) -> (i32, i32) {
    %c0_i32 = arith.constant 0 : i32
    %c0_i32_0 = arith.constant 0 : i32
    return %arg0, %c0_i32 : i32, i32
  }
}

module attributes {stable_mosaic.version = 11 : i64} {
  func.func @_conv_relu_pool_kernel(%arg0: i32, %arg1: memref<4x2x1152xbf16, #tpu.memory_space<vmem>>, %arg2: memref<1152x256xbf16, #tpu.memory_space<vmem>>, %arg3: memref<1x256xf32, #tpu.memory_space<vmem>>, %arg4: memref<2x256xbf16, #tpu.memory_space<vmem>>) attributes {dimension_semantics = [#tpu.dimension_semantics<parallel>], iteration_bounds = array<i64: 1>, scalar_prefetch = 0 : i64, scratch_operands = 0 : i64, tpu.core_type = #tpu.core_type<tc>, window_params = [{transform_indices = @transform_0, window_bounds = array<i64: 4, 2, 1152>}, {pipeline_mode = #tpu.pipeline_mode<synchronous>, transform_indices = @transform_1, window_bounds = array<i64: 1152, 256>}, {pipeline_mode = #tpu.pipeline_mode<synchronous>, transform_indices = @transform_2, window_bounds = array<i64: 1, 256>}, {transform_indices = @transform_3, window_bounds = array<i64: 2, 256>}]} {
    %c0 = arith.constant 0 : index
    %c0_0 = arith.constant 0 : index
    %0 = vector.load %arg2[%c0, %c0_0] : memref<1152x256xbf16, #tpu.memory_space<vmem>>, vector<1152x256xbf16>
    %c0_1 = arith.constant 0 : index
    %c0_2 = arith.constant 0 : index
    %c0_3 = arith.constant 0 : index
    %1 = vector.load %arg1[%c0_1, %c0_2, %c0_3] : memref<4x2x1152xbf16, #tpu.memory_space<vmem>>, vector<1x2x1152xbf16>
    %2 = vector.shape_cast %1 : vector<1x2x1152xbf16> to vector<2x1152xbf16>
    %cst = arith.constant dense<0.000000e+00> : vector<2x256xf32>
    %3 = tpu.matmul %2, %0, %cst {dimension_numbers = #tpu.dot_dimension_numbers<[1], [0], [0], [1], [0, 0, 1, 1], [], []>} : vector<2x1152xbf16>, vector<1152x256xbf16>, vector<2x256xf32> -> vector<2x256xf32>
    %c1 = arith.constant 1 : index
    %c0_4 = arith.constant 0 : index
    %c0_5 = arith.constant 0 : index
    %4 = vector.load %arg1[%c1, %c0_4, %c0_5] : memref<4x2x1152xbf16, #tpu.memory_space<vmem>>, vector<1x2x1152xbf16>
    %5 = vector.shape_cast %4 : vector<1x2x1152xbf16> to vector<2x1152xbf16>
    %cst_6 = arith.constant dense<0.000000e+00> : vector<2x256xf32>
    %6 = tpu.matmul %5, %0, %cst_6 {dimension_numbers = #tpu.dot_dimension_numbers<[1], [0], [0], [1], [0, 0, 1, 1], [], []>} : vector<2x1152xbf16>, vector<1152x256xbf16>, vector<2x256xf32> -> vector<2x256xf32>
    %7 = arith.maximumf %3, %6 : vector<2x256xf32>
    %c2 = arith.constant 2 : index
    %c0_7 = arith.constant 0 : index
    %c0_8 = arith.constant 0 : index
    %8 = vector.load %arg1[%c2, %c0_7, %c0_8] : memref<4x2x1152xbf16, #tpu.memory_space<vmem>>, vector<1x2x1152xbf16>
    %9 = vector.shape_cast %8 : vector<1x2x1152xbf16> to vector<2x1152xbf16>
    %cst_9 = arith.constant dense<0.000000e+00> : vector<2x256xf32>
    %10 = tpu.matmul %9, %0, %cst_9 {dimension_numbers = #tpu.dot_dimension_numbers<[1], [0], [0], [1], [0, 0, 1, 1], [], []>} : vector<2x1152xbf16>, vector<1152x256xbf16>, vector<2x256xf32> -> vector<2x256xf32>
    %11 = arith.maximumf %7, %10 : vector<2x256xf32>
    %c3 = arith.constant 3 : index
    %c0_10 = arith.constant 0 : index
    %c0_11 = arith.constant 0 : index
    %12 = vector.load %arg1[%c3, %c0_10, %c0_11] : memref<4x2x1152xbf16, #tpu.memory_space<vmem>>, vector<1x2x1152xbf16>
    %13 = vector.shape_cast %12 : vector<1x2x1152xbf16> to vector<2x1152xbf16>
    %cst_12 = arith.constant dense<0.000000e+00> : vector<2x256xf32>
    %14 = tpu.matmul %13, %0, %cst_12 {dimension_numbers = #tpu.dot_dimension_numbers<[1], [0], [0], [1], [0, 0, 1, 1], [], []>} : vector<2x1152xbf16>, vector<1152x256xbf16>, vector<2x256xf32> -> vector<2x256xf32>
    %15 = arith.maximumf %11, %14 : vector<2x256xf32>
    %c0_13 = arith.constant 0 : index
    %c0_14 = arith.constant 0 : index
    %16 = vector.load %arg3[%c0_13, %c0_14] : memref<1x256xf32, #tpu.memory_space<vmem>>, vector<1x256xf32>
    %17 = vector.broadcast %16 : vector<1x256xf32> to vector<2x256xf32>
    %18 = arith.addf %15, %17 : vector<2x256xf32>
    %cst_15 = arith.constant 0.000000e+00 : f32
    %19 = vector.broadcast %cst_15 : f32 to vector<2x256xf32>
    %20 = arith.maximumf %18, %19 : vector<2x256xf32>
    %21 = arith.truncf %20 : vector<2x256xf32> to vector<2x256xbf16>
    %c0_16 = arith.constant 0 : index
    %c0_17 = arith.constant 0 : index
    %22 = vector.load %arg4[%c0_16, %c0_17] : memref<2x256xbf16, #tpu.memory_space<vmem>>, vector<2x256xbf16>
    tpu.vector_store %arg4[%c0_16, %c0_17], %21 {strides = array<i32>} : memref<2x256xbf16, #tpu.memory_space<vmem>>, vector<2x256xbf16>,
    return
  }
  func.func @transform_0(%arg0: i32) -> (i32, i32, i32) {
    %c0_i32 = arith.constant 0 : i32
    %c0_i32_0 = arith.constant 0 : i32
    %c0_i32_1 = arith.constant 0 : i32
    return %c0_i32, %arg0, %c0_i32_0 : i32, i32, i32
  }
  func.func @transform_1(%arg0: i32) -> (i32, i32) {
    %c0_i32 = arith.constant 0 : i32
    %c0_i32_0 = arith.constant 0 : i32
    %c0_i32_1 = arith.constant 0 : i32
    return %c0_i32, %c0_i32_0 : i32, i32
  }
  func.func @transform_2(%arg0: i32) -> (i32, i32) {
    %c0_i32 = arith.constant 0 : i32
    %c0_i32_0 = arith.constant 0 : i32
    %c0_i32_1 = arith.constant 0 : i32
    return %c0_i32, %c0_i32_0 : i32, i32
  }
  func.func @transform_3(%arg0: i32) -> (i32, i32) {
    %c0_i32 = arith.constant 0 : i32
    %c0_i32_0 = arith.constant 0 : i32
    return %arg0, %c0_i32 : i32, i32
  }
}

module attributes {stable_mosaic.version = 11 : i64} {
  func.func @_head_kernel(%arg0: i32, %arg1: memref<2x256xbf16, #tpu.memory_space<vmem>>, %arg2: memref<256x512xbf16, #tpu.memory_space<vmem>>, %arg3: memref<1x512xf32, #tpu.memory_space<vmem>>, %arg4: memref<512x34xbf16, #tpu.memory_space<vmem>>, %arg5: memref<1x34xf32, #tpu.memory_space<vmem>>, %arg6: memref<2x24xf32, #tpu.memory_space<vmem>>, %arg7: memref<2x10xf32, #tpu.memory_space<vmem>>) attributes {dimension_semantics = [#tpu.dimension_semantics<parallel>], iteration_bounds = array<i64: 1>, scalar_prefetch = 0 : i64, scratch_operands = 0 : i64, tpu.core_type = #tpu.core_type<tc>, window_params = [{pipeline_mode = #tpu.pipeline_mode<synchronous>, transform_indices = @transform_0, window_bounds = array<i64: 2, 256>}, {pipeline_mode = #tpu.pipeline_mode<synchronous>, transform_indices = @transform_1, window_bounds = array<i64: 256, 512>}, {pipeline_mode = #tpu.pipeline_mode<synchronous>, transform_indices = @transform_2, window_bounds = array<i64: 1, 512>}, {pipeline_mode = #tpu.pipeline_mode<synchronous>, transform_indices = @transform_3, window_bounds = array<i64: 512, 34>}, {pipeline_mode = #tpu.pipeline_mode<synchronous>, transform_indices = @transform_4, window_bounds = array<i64: 1, 34>}, {pipeline_mode = #tpu.pipeline_mode<synchronous>, transform_indices = @transform_5, window_bounds = array<i64: 2, 24>}, {pipeline_mode = #tpu.pipeline_mode<synchronous>, transform_indices = @transform_6, window_bounds = array<i64: 2, 10>}]} {
    %c0 = arith.constant 0 : index
    %c0_0 = arith.constant 0 : index
    %0 = vector.load %arg1[%c0, %c0_0] : memref<2x256xbf16, #tpu.memory_space<vmem>>, vector<2x256xbf16>
    %c0_1 = arith.constant 0 : index
    %c0_2 = arith.constant 0 : index
    %1 = vector.load %arg2[%c0_1, %c0_2] : memref<256x512xbf16, #tpu.memory_space<vmem>>, vector<256x512xbf16>
    %cst = arith.constant dense<0.000000e+00> : vector<2x512xf32>
    %2 = tpu.matmul %0, %1, %cst {dimension_numbers = #tpu.dot_dimension_numbers<[1], [0], [0], [1], [0, 0, 1, 1], [], []>} : vector<2x256xbf16>, vector<256x512xbf16>, vector<2x512xf32> -> vector<2x512xf32>
    %c0_3 = arith.constant 0 : index
    %c0_4 = arith.constant 0 : index
    %3 = vector.load %arg3[%c0_3, %c0_4] : memref<1x512xf32, #tpu.memory_space<vmem>>, vector<1x512xf32>
    %4 = vector.broadcast %3 : vector<1x512xf32> to vector<2x512xf32>
    %5 = arith.addf %2, %4 : vector<2x512xf32>
    %cst_5 = arith.constant 0.000000e+00 : f32
    %6 = vector.broadcast %cst_5 : f32 to vector<2x512xf32>
    %7 = arith.maximumf %5, %6 : vector<2x512xf32>
    %8 = arith.truncf %7 : vector<2x512xf32> to vector<2x512xbf16>
    %c0_6 = arith.constant 0 : index
    %c0_7 = arith.constant 0 : index
    %9 = vector.load %arg4[%c0_6, %c0_7] : memref<512x34xbf16, #tpu.memory_space<vmem>>, vector<512x34xbf16>
    %cst_8 = arith.constant dense<0.000000e+00> : vector<2x34xf32>
    %10 = tpu.matmul %8, %9, %cst_8 {dimension_numbers = #tpu.dot_dimension_numbers<[1], [0], [0], [1], [0, 0, 1, 1], [], []>} : vector<2x512xbf16>, vector<512x34xbf16>, vector<2x34xf32> -> vector<2x34xf32>
    %c0_9 = arith.constant 0 : index
    %c0_10 = arith.constant 0 : index
    %11 = vector.load %arg5[%c0_9, %c0_10] : memref<1x34xf32, #tpu.memory_space<vmem>>, vector<1x34xf32>
    %12 = vector.broadcast %11 : vector<1x34xf32> to vector<2x34xf32>
    %13 = arith.addf %10, %12 : vector<2x34xf32>
    %14 = vector.extract_strided_slice %13 {offsets = [0, 0], sizes = [2, 24], strides = [1, 1]} : vector<2x34xf32> to vector<2x24xf32>
    %15 = arith.negf %14 : vector<2x24xf32>
    %16 = math.exp %15 : vector<2x24xf32>
    %cst_11 = arith.constant 1.000000e+00 : f32
    %17 = vector.broadcast %cst_11 : f32 to vector<2x24xf32>
    %18 = arith.addf %17, %16 : vector<2x24xf32>
    %19 = arith.divf %17, %18 : vector<2x24xf32>
    %c0_12 = arith.constant 0 : index
    %c0_13 = arith.constant 0 : index
    %20 = vector.load %arg6[%c0_12, %c0_13] : memref<2x24xf32, #tpu.memory_space<vmem>>, vector<2x24xf32>
    tpu.vector_store %arg6[%c0_12, %c0_13], %19 {strides = array<i32>} : memref<2x24xf32, #tpu.memory_space<vmem>>, vector<2x24xf32>,
    %21 = vector.extract_strided_slice %13 {offsets = [0, 24], sizes = [2, 10], strides = [1, 1]} : vector<2x34xf32> to vector<2x10xf32>
    %c0_14 = arith.constant 0 : index
    %c0_15 = arith.constant 0 : index
    %22 = vector.load %arg7[%c0_14, %c0_15] : memref<2x10xf32, #tpu.memory_space<vmem>>, vector<2x10xf32>
    tpu.vector_store %arg7[%c0_14, %c0_15], %21 {strides = array<i32>} : memref<2x10xf32, #tpu.memory_space<vmem>>, vector<2x10xf32>,
    return
  }
  func.func @transform_0(%arg0: i32) -> (i32, i32) {
    %c0_i32 = arith.constant 0 : i32
    %c0_i32_0 = arith.constant 0 : i32
    %c0_i32_1 = arith.constant 0 : i32
    return %c0_i32, %c0_i32_0 : i32, i32
  }
  func.func @transform_1(%arg0: i32) -> (i32, i32) {
    %c0_i32 = arith.constant 0 : i32
    %c0_i32_0 = arith.constant 0 : i32
    %c0_i32_1 = arith.constant 0 : i32
    return %c0_i32, %c0_i32_0 : i32, i32
  }
  func.func @transform_2(%arg0: i32) -> (i32, i32) {
    %c0_i32 = arith.constant 0 : i32
    %c0_i32_0 = arith.constant 0 : i32
    %c0_i32_1 = arith.constant 0 : i32
    return %c0_i32, %c0_i32_0 : i32, i32
  }
  func.func @transform_3(%arg0: i32) -> (i32, i32) {
    %c0_i32 = arith.constant 0 : i32
    %c0_i32_0 = arith.constant 0 : i32
    %c0_i32_1 = arith.constant 0 : i32
    return %c0_i32, %c0_i32_0 : i32, i32
  }
  func.func @transform_4(%arg0: i32) -> (i32, i32) {
    %c0_i32 = arith.constant 0 : i32
    %c0_i32_0 = arith.constant 0 : i32
    %c0_i32_1 = arith.constant 0 : i32
    return %c0_i32, %c0_i32_0 : i32, i32
  }
  func.func @transform_5(%arg0: i32) -> (i32, i32) {
    %c0_i32 = arith.constant 0 : i32
    %c0_i32_0 = arith.constant 0 : i32
    %c0_i32_1 = arith.constant 0 : i32
    return %c0_i32, %c0_i32_0 : i32, i32
  }
  func.func @transform_6(%arg0: i32) -> (i32, i32) {
    %c0_i32 = arith.constant 0 : i32
    %c0_i32_0 = arith.constant 0 : i32
    %c0_i32_1 = arith.constant 0 : i32
    return %c0_i32, %c0_i32_0 : i32, i32
  }
}

</mosaic_0001>

<llo_original>
// kernel: animal_classifier_forward.6
$region0: #{animal_classifier_forward.6}
  #allocation0 [shape = 'u32[]', space=smem, size = 0x4, offset = 0x4, fixed_abs, tag = 'smem constant byte address 0x4 - core index']
  #allocation1 [shape = 'u32[144,128]{1,0:T(1,128)}', space=vmem, size = 0x12000, scoped, tag = 'internal scratch']
  %s0 = inlined_call_operand.vmem [shape: bf16[4,512,27], index: 0, kind: input, shape index: {}]
  %s1 = inlined_call_operand.vmem [shape: bf16[27,16], index: 1, kind: input, shape index: {}]
  %s2 = inlined_call_operand.vmem [shape: f32[1,16], index: 2, kind: input, shape index: {}]
  %s3 = inlined_call_operand.vmem [shape: bf16[512,16], index: 3, kind: output, shape index: {}]
  %s4 = sld [smem:[#allocation0]]
  $region86: #{animal_classifier_forward.6} parent=0
    _
  %s6 = ssub.s32 1, %s4
  %s7 = scalar_select 0, %s6, %s4
  $region1: #{animal_classifier_forward.6} parent=0
    #allocation2 [shape = 'u8[524288]{0}', space=vmem, size = 0x80000, scoped, tag = 'input window, operand 0']
    loop: start=0, step=1, limit=4
    $region2: #{animal_classifier_forward.6} parent=1 // loop_pre_header
      _
    $region3: #{animal_classifier_forward.6} parent=1 // loop_header
      %s9 = sphi 0, %s13
      %p10 = scmp.ge.s32.totalorder %s9, 4
      %s19 = sphi 0, %s21
      %s22 = sphi 0, %s19
      %s23 = sphi 0, %s22
      %s39 = sphi 0, %s23
      %s43 = sphi 0, %s43
      %s45 = sphi 0, %s43
      %s46 = sphi 0, %s45
      %s60 = sphi 0, %s46
      %s64 = sphi 0, %s64
      %s66 = sphi 0, %s64
      %s67 = sphi 0, %s66
      %s81 = sphi 0, %s67
      %s87 = sphi 0, %s89
      %s90 = sphi 0, %s87
      %s91 = sphi 0, %s90
      %s107 = sphi 0, %s91
    $region4: #{animal_classifier_forward.6} parent=1 // loop_header_branch
      %12 = sbr.rel (%p10) target = $region8
    $region5: #{animal_classifier_forward.6} parent=1 // loop_body
      %s14 = ssub.s32 %s9, 1
      %s15 = ssub.s32 %s9, 2
      %s16 = sadd.s32 %s9, 1
      %s17 = ssub.s32 %s9, %s16
      %p18 = scmp.eq.s32.totalorder %s17, 0
      %s20 = sadd.s32 %s19, 1
      %s21 = scalar_select %p18, %s19, %s20
      %p24 = pneg %p18
      %p25 = scmp.eq.s32.totalorder %s9, 1
      %p26 = por %p24, %p25
      %p27 = scmp.ne.s32.totalorder %s19, %s22
      %p28 = scmp.eq.s32.totalorder %s9, 0
      %p29 = por %p27, %p28
      %p30 = scmp.ne.s32.totalorder %s19, %s22
      %p31 = scmp.eq.s32.totalorder %s14, 1
      %p32 = por %p30, %p31
      %p33 = scmp.ne.s32.totalorder %s22, %s23
      %p34 = scmp.eq.s32.totalorder %s14, 0
      %p35 = por %p33, %p34
      %p36 = scmp.ne.s32.totalorder %s22, %s23
      %p37 = scmp.eq.s32.totalorder %s15, 1
      %p38 = por %p36, %p37
      %p40 = scmp.ne.s32.totalorder %s23, %s39
      %p41 = scmp.eq.s32.totalorder %s15, 0
      %p42 = por %p40, %p41
      %s44 = sadd.s32 %s43, 1
      %p47 = scmp.eq.s32.totalorder %s9, 1
      %p48 = scmp.ne.s32.totalorder %s43, %s45
      %p49 = scmp.eq.s32.totalorder %s9, 0
      %p50 = por %p48, %p49
      %p51 = scmp.ne.s32.totalorder %s43, %s45
      %p52 = scmp.eq.s32.totalorder %s14, 1
      %p53 = por %p51, %p52
      %p54 = scmp.ne.s32.totalorder %s45, %s46
      %p55 = scmp.eq.s32.totalorder %s14, 0
      %p56 = por %p54, %p55
      %p57 = scmp.ne.s32.totalorder %s45, %s46
      %p58 = scmp.eq.s32.totalorder %s15, 1
      %p59 = por %p57, %p58
      %p61 = scmp.ne.s32.totalorder %s46, %s60
      %p62 = scmp.eq.s32.totalorder %s15, 0
      %p63 = por %p61, %p62
      %s65 = sadd.s32 %s64, 1
      %p68 = scmp.eq.s32.totalorder %s9, 1
      %p69 = scmp.ne.s32.totalorder %s64, %s66
      %p70 = scmp.eq.s32.totalorder %s9, 0
      %p71 = por %p69, %p70
      %p72 = scmp.ne.s32.totalorder %s64, %s66
      %p73 = scmp.eq.s32.totalorder %s14, 1
      %p74 = por %p72, %p73
      %p75 = scmp.ne.s32.totalorder %s66, %s67
      %p76 = scmp.eq.s32.totalorder %s14, 0
      %p77 = por %p75, %p76
      %p78 = scmp.ne.s32.totalorder %s66, %s67
      %p79 = scmp.eq.s32.totalorder %s15, 1
      %p80 = por %p78, %p79
      %p82 = scmp.ne.s32.totalorder %s67, %s81
      %p83 = scmp.eq.s32.totalorder %s15, 0
      %p84 = por %p82, %p83
      %s85 = ssub.s32 %s9, %s16
      %p86 = scmp.eq.s32.totalorder %s85, 0
      %s88 = sadd.s32 %s87, 1
      %s89 = scalar_select %p86, %s87, %s88
      %p92 = pneg %p86
      %p93 = scmp.eq.s32.totalorder %s9, 1
      %p94 = por %p92, %p93
      %p95 = scmp.ne.s32.totalorder %s87, %s90
      %p96 = scmp.eq.s32.totalorder %s9, 0
      %p97 = por %p95, %p96
      %p98 = scmp.ne.s32.totalorder %s87, %s90
      %p99 = scmp.eq.s32.totalorder %s14, 1
      %p100 = por %p98, %p99
      %p101 = scmp.ne.s32.totalorder %s90, %s91
      %p102 = scmp.eq.s32.totalorder %s14, 0
      %p103 = por %p101, %p102
      %p104 = scmp.ne.s32.totalorder %s90, %s91
      %p105 = scmp.eq.s32.totalorder %s15, 1
      %p106 = por %p104, %p105
      %p108 = scmp.ne.s32.totalorder %s91, %s107
      %p109 = scmp.eq.s32.totalorder %s15, 0
      %p110 = por %p108, %p109
      %p111 = scmp.le.s32.totalorder 1, %s9
      %p112 = scmp.lt.s32.totalorder %s9, 3
      %p113 = pnand %p111, %p112
      %p114 = pneg %p113
      // Predicated region
      $region9: #{animal_classifier_forward.6} parent=5 // pred_check
        _
      $region10: #{animal_classifier_forward.6} parent=5 // pred_check_branch
        %116 = sbr.rel (%p113) target = $region12
      $region11: #{animal_classifier_forward.6} parent=5 // pred_region
        %s117 = ssub.s32 %s9, 1
        // Predicated region
        $region13: #{animal_classifier_forward.6} parent=11 // pred_check
          %p118 = pneg %p56
        $region14: #{animal_classifier_forward.6} parent=11 // pred_check_branch
          %120 = sbr.rel (%p118) target = $region16
        $region15: #{animal_classifier_forward.6} parent=11 // pred_region
          _
        $region16: #{animal_classifier_forward.6} parent=11 // pred_fallthru
          _
        // Predicated region
        $region17: #{animal_classifier_forward.6} parent=11 // pred_check
          %p121 = pneg %p77
        $region18: #{animal_classifier_forward.6} parent=11 // pred_check_branch
          %123 = sbr.rel (%p121) target = $region20
        $region19: #{animal_classifier_forward.6} parent=11 // pred_region
          _
        $region20: #{animal_classifier_forward.6} parent=11 // pred_fallthru
          _
      $region12: #{animal_classifier_forward.6} parent=5 // pred_fallthru
        _
      %p124 = scmp.lt.s32.totalorder %s9, 2
      // Predicated region
      $region21: #{animal_classifier_forward.6} parent=5 // pred_check
        %p125 = pneg %p124
      $region22: #{animal_classifier_forward.6} parent=5 // pred_check_branch
        %127 = sbr.rel (%p125) target = $region24
      $region23: #{animal_classifier_forward.6} parent=5 // pred_region
        // Predicated region
        $region25: #{animal_classifier_forward.6} parent=23 // pred_check
          %p128 = pneg %p29
        $region26: #{animal_classifier_forward.6} parent=23 // pred_check_branch
          %130 = sbr.rel (%p128) target = $region28
        $region27: #{animal_classifier_forward.6} parent=23 // pred_region
          %s131 = sand.u32 %s19, 1
          %s132 = sand.u32 %s19, 1
          %s133 = smul.addr %s132, 512
          %s134 = scalar_lea.vmem [#allocation2], %s133
          %s135 = smul.u32 32, %s9
          %s136 = smul.addr %s135, 4
          %s137 = scalar_lea.vmem %s0, %s136
          // Predicated region
          $region29: #{animal_classifier_forward.6} parent=27 // pred_check
            _
          $region30: #{animal_classifier_forward.6} parent=27 // pred_check_branch
            %139 = sbr.rel (0) target = $region32
          $region31: #{animal_classifier_forward.6} parent=27 // pred_region
            // Predicated region
            $region33: #{animal_classifier_forward.6} parent=31 // pred_check
              _
            $region34: #{animal_classifier_forward.6} parent=31 // pred_check_branch
              %141 = sbr.rel target = $region36
            $region35: #{animal_classifier_forward.6} parent=31 // pred_region
              // Predicated region
              $region48: #{animal_classifier_forward.6} parent=35 // pred_check
                _
              $region49: #{animal_classifier_forward.6} parent=35 // pred_check_branch
                %410 = sbr.rel (0) target = $region51
              $region50: #{animal_classifier_forward.6} parent=35 // pred_region
                loop: start=0, step=1, limit=1
                $region52: #{animal_classifier_forward.6} parent=50 // loop_pre_header
                  _
                $region53: #{animal_classifier_forward.6} parent=50 // loop_header
                  %s412 = sphi 0, %s416
                  %p413 = scmp.ge.s32.totalorder %s412, 1
                  %s417 = sphi %s137, %s137
                  %s418 = sphi %s134, %s134
                $region54: #{animal_classifier_forward.6} parent=50 // loop_header_branch
                  %415 = sbr.rel (%p413) target = $region58
                $region55: #{animal_classifier_forward.6} parent=50 // loop_body
                  _
                $region56: #{animal_classifier_forward.6} parent=50 // loop_footer
                  %s416 = sadd.s32 1, %s412
                $region57: #{animal_classifier_forward.6} parent=50 // loop_footer_branch
                  %411 = sbr.rel target = $region53
                $region58: #{animal_classifier_forward.6} parent=50 // loop_exit
                  _
                loop: start=0, step=1, limit=1
                $region59: #{animal_classifier_forward.6} parent=50 // loop_pre_header
                  _
                $region60: #{animal_classifier_forward.6} parent=50 // loop_header
                  %s421 = sphi 0, %s425
                  %p422 = scmp.ge.s32.totalorder %s421, 1
                  %s426 = sphi %s137, %s137
                  %s427 = sphi %s134, %s134
                $region61: #{animal_classifier_forward.6} parent=50 // loop_header_branch
                  %424 = sbr.rel (%p422) target = $region65
                $region62: #{animal_classifier_forward.6} parent=50 // loop_body
                  %v428 = vld [vmem:[%s426] sm:$0xf]
                  %429 = vst [vmem:[%s427] sm:$0xf] %v428
                  %v430 = vld [vmem:[%s426 + $0x4] sm:$0xf]
                  %431 = vst [vmem:[%s427 + $0x4] sm:$0xf] %v430
                  %v432 = vld [vmem:[%s426 + $0x8] sm:$0xf]
                  %433 = vst [vmem:[%s427 + $0x8] sm:$0xf] %v432
                  %v434 = vld [vmem:[%s426 + $0xc] sm:$0xf]
                  %435 = vst [vmem:[%s427 + $0xc] sm:$0xf] %v434
                  %v436 = vld [vmem:[%s426 + $0x10] sm:$0xf]
                  %437 = vst [vmem:[%s427 + $0x10] sm:$0xf] %v436
                  %v438 = vld [vmem:[%s426 + $0x14] sm:$0xf]
                  %439 = vst [vmem:[%s427 + $0x14] sm:$0xf] %v438
                  %v440 = vld [vmem:[%s426 + $0x18] sm:$0xf]
                  %441 = vst [vmem:[%s427 + $0x18] sm:$0xf] %v440
                  %v442 = vld [vmem:[%s426 + $0x1c] sm:$0xf]
                  %443 = vst [vmem:[%s427 + $0x1c] sm:$0xf] %v442
                  %v444 = vld [vmem:[%s426 + $0x20] sm:$0xf]
                  %445 = vst [vmem:[%s427 + $0x20] sm:$0xf] %v444
                  %v446 = vld [vmem:[%s426 + $0x24] sm:$0xf]
                  %447 = vst [vmem:[%s427 + $0x24] sm:$0xf] %v446
                  %v448 = vld [vmem:[%s426 + $0x28] sm:$0xf]
                  %449 = vst [vmem:[%s427 + $0x28] sm:$0xf] %v448
                  %v450 = vld [vmem:[%s426 + $0x2c] sm:$0xf]
                  %451 = vst [vmem:[%s427 + $0x2c] sm:$0xf] %v450
                  %v452 = vld [vmem:[%s426 + $0x30] sm:$0xf]
                  %453 = vst [vmem:[%s427 + $0x30] sm:$0xf] %v452
                  %v454 = vld [vmem:[%s426 + $0x34] sm:$0xf]
                  %455 = vst [vmem:[%s427 + $0x34] sm:$0xf] %v454
                  %v456 = vld [vmem:[%s426 + $0x38] sm:$0xf]
                  %457 = vst [vmem:[%s427 + $0x38] sm:$0xf] %v456
                  %v458 = vld [vmem:[%s426 + $0x3c] sm:$0xf]
                  %459 = vst [vmem:[%s427 + $0x3c] sm:$0xf] %v458
                  %v460 = vld [vmem:[%s426 + $0x40] sm:$0xf]
                  %461 = vst [vmem:[%s427 + $0x40] sm:$0xf] %v460
                  %v462 = vld [vmem:[%s426 + $0x44] sm:$0xf]
                  %463 = vst [vmem:[%s427 + $0x44] sm:$0xf] %v462
                  %v464 = vld [vmem:[%s426 + $0x48] sm:$0xf]
                  %465 = vst [vmem:[%s427 + $0x48] sm:$0xf] %v464
                  %v466 = vld [vmem:[%s426 + $0x4c] sm:$0xf]
                  %467 = vst [vmem:[%s427 + $0x4c] sm:$0xf] %v466
                  %v468 = vld [vmem:[%s426 + $0x50] sm:$0xf]
                  %469 = vst [vmem:[%s427 + $0x50] sm:$0xf] %v468
                  %v470 = vld [vmem:[%s426 + $0x54] sm:$0xf]
                  %471 = vst [vmem:[%s427 + $0x54] sm:$0xf] %v470
                  %v472 = vld [vmem:[%s426 + $0x58] sm:$0xf]
                  %473 = vst [vmem:[%s427 + $0x58] sm:$0xf] %v472
                  %v474 = vld [vmem:[%s426 + $0x5c] sm:$0xf]
                  %475 = vst [vmem:[%s427 + $0x5c] sm:$0xf] %v474
                  %v476 = vld [vmem:[%s426 + $0x60] sm:$0xf]
                  %477 = vst [vmem:[%s427 + $0x60] sm:$0xf] %v476
                  %v478 = vld [vmem:[%s426 + $0x64] sm:$0xf]
                  %479 = vst [vmem:[%s427 + $0x64] sm:$0xf] %v478
                  %v480 = vld [vmem:[%s426 + $0x68] sm:$0xf]
                  %481 = vst [vmem:[%s427 + $0x68] sm:$0xf] %v480
                  %v482 = vld [vmem:[%s426 + $0x6c] sm:$0xf]
                  %483 = vst [vmem:[%s427 + $0x6c] sm:$0xf] %v482
                  %v484 = vld [vmem:[%s426 + $0x70] sm:$0xf]
                  %485 = vst [vmem:[%s427 + $0x70] sm:$0xf] %v484
                  %v486 = vld [vmem:[%s426 + $0x74] sm:$0xf]
                  %487 = vst [vmem:[%s427 + $0x74] sm:$0xf] %v486
                  %v488 = vld [vmem:[%s426 + $0x78] sm:$0xf]
                  %489 = vst [vmem:[%s427 + $0x78] sm:$0xf] %v488
                  %v490 = vld [vmem:[%s426 + $0x7c] sm:$0xf]
                  %491 = vst [vmem:[%s427 + $0x7c] sm:$0xf] %v490
                  %v492 = vld [vmem:[%s426 + $0x100] sm:$0xf]
                  %493 = vst [vmem:[%s427 + $0x80] sm:$0xf] %v492
                  %v494 = vld [vmem:[%s426 + $0x104] sm:$0xf]
                  %495 = vst [vmem:[%s427 + $0x84] sm:$0xf] %v494
                  %v496 = vld [vmem:[%s426 + $0x108] sm:$0xf]
                  %497 = vst [vmem:[%s427 + $0x88] sm:$0xf] %v496
                  %v498 = vld [vmem:[%s426 + $0x10c] sm:$0xf]
                  %499 = vst [vmem:[%s427 + $0x8c] sm:$0xf] %v498
                  %v500 = vld [vmem:[%s426 + $0x110] sm:$0xf]
                  %501 = vst [vmem:[%s427 + $0x90] sm:$0xf] %v500
                  %v502 = vld [vmem:[%s426 + $0x114] sm:$0xf]
                  %503 = vst [vmem:[%s427 + $0x94] sm:$0xf] %v502
                  %v504 = vld [vmem:[%s426 + $0x118] sm:$0xf]
                  %505 = vst [vmem:[%s427 + $0x98] sm:$0xf] %v504
                  %v506 = vld [vmem:[%s426 + $0x11c] sm:$0xf]
                  %507 = vst [vmem:[%s427 + $0x9c] sm:$0xf] %v506
                  %v508 = vld [vmem:[%s426 + $0x120] sm:$0xf]
                  %509 = vst [vmem:[%s427 + $0xa0] sm:$0xf] %v508
                  %v510 = vld [vmem:[%s426 + $0x124] sm:$0xf]
                  %511 = vst [vmem:[%s427 + $0xa4] sm:$0xf] %v510
                  %v512 = vld [vmem:[%s426 + $0x128] sm:$0xf]
                  %513 = vst [vmem:[%s427 + $0xa8] sm:$0xf] %v512
                  %v514 = vld [vmem:[%s426 + $0x12c] sm:$0xf]
                  %515 = vst [vmem:[%s427 + $0xac] sm:$0xf] %v514
                  %v516 = vld [vmem:[%s426 + $0x130] sm:$0xf]
                  %517 = vst [vmem:[%s427 + $0xb0] sm:$0xf] %v516
                  %v518 = vld [vmem:[%s426 + $0x134] sm:$0xf]
                  %519 = vst [vmem:[%s427 + $0xb4] sm:$0xf] %v518
                  %v520 = vld [vmem:[%s426 + $0x138] sm:$0xf]
                  %521 = vst [vmem:[%s427 + $0xb8] sm:$0xf] %v520
                  %v522 = vld [vmem:[%s426 + $0x13c] sm:$0xf]
                  %523 = vst [vmem:[%s427 + $0xbc] sm:$0xf] %v522
                  %v524 = vld [vmem:[%s426 + $0x140] sm:$0xf]
                  %525 = vst [vmem:[%s427 + $0xc0] sm:$0xf] %v524
                  %v526 = vld [vmem:[%s426 + $0x144] sm:$0xf]
                  %527 = vst [vmem:[%s427 + $0xc4] sm:$0xf] %v526
                  %v528 = vld [vmem:[%s426 + $0x148] sm:$0xf]
                  %529 = vst [vmem:[%s427 + $0xc8] sm:$0xf] %v528
                  %v530 = vld [vmem:[%s426 + $0x14c] sm:$0xf]
                  %531 = vst [vmem:[%s427 + $0xcc] sm:$0xf] %v530
                  %v532 = vld [vmem:[%s426 + $0x150] sm:$0xf]
                  %533 = vst [vmem:[%s427 + $0xd0] sm:$0xf] %v532
                  %v534 = vld [vmem:[%s426 + $0x154] sm:$0xf]
                  %535 = vst [vmem:[%s427 + $0xd4] sm:$0xf] %v534
                  %v536 = vld [vmem:[%s426 + $0x158] sm:$0xf]
                  %537 = vst [vmem:[%s427 + $0xd8] sm:$0xf] %v536
                  %v538 = vld [vmem:[%s426 + $0x15c] sm:$0xf]
                  %539 = vst [vmem:[%s427 + $0xdc] sm:$0xf] %v538
                  %v540 = vld [vmem:[%s426 + $0x160] sm:$0xf]
                  %541 = vst [vmem:[%s427 + $0xe0] sm:$0xf] %v540
                  %v542 = vld [vmem:[%s426 + $0x164] sm:$0xf]
                  %543 = vst [vmem:[%s427 + $0xe4] sm:$0xf] %v542
                  %v544 = vld [vmem:[%s426 + $0x168] sm:$0xf]
                  %545 = vst [vmem:[%s427 + $0xe8] sm:$0xf] %v544
                  %v546 = vld [vmem:[%s426 + $0x16c] sm:$0xf]
                  %547 = vst [vmem:[%s427 + $0xec] sm:$0xf] %v546
                  %v548 = vld [vmem:[%s426 + $0x170] sm:$0xf]
                  %549 = vst [vmem:[%s427 + $0xf0] sm:$0xf] %v548
                  %v550 = vld [vmem:[%s426 + $0x174] sm:$0xf]
                  %551 = vst [vmem:[%s427 + $0xf4] sm:$0xf] %v550
                  %v552 = vld [vmem:[%s426 + $0x178] sm:$0xf]
                  %553 = vst [vmem:[%s427 + $0xf8] sm:$0xf] %v552
                  %v554 = vld [vmem:[%s426 + $0x17c] sm:$0xf]
                  %555 = vst [vmem:[%s427 + $0xfc] sm:$0xf] %v554
                  %v556 = vld [vmem:[%s426 + $0x200] sm:$0xf]
                  %557 = vst [vmem:[%s427 + $0x100] sm:$0xf] %v556
                  %v558 = vld [vmem:[%s426 + $0x204] sm:$0xf]
                  %559 = vst [vmem:[%s427 + $0x104] sm:$0xf] %v558
                  %v560 = vld [vmem:[%s426 + $0x208] sm:$0xf]
                  %561 = vst [vmem:[%s427 + $0x108] sm:$0xf] %v560
                  %v562 = vld [vmem:[%s426 + $0x20c] sm:$0xf]
                  %563 = vst [vmem:[%s427 + $0x10c] sm:$0xf] %v562
                  %v564 = vld [vmem:[%s426 + $0x210] sm:$0xf]
                  %565 = vst [vmem:[%s427 + $0x110] sm:$0xf] %v564
                  %v566 = vld [vmem:[%s426 + $0x214] sm:$0xf]
                  %567 = vst [vmem:[%s427 + $0x114] sm:$0xf] %v566
                  %v568 = vld [vmem:[%s426 + $0x218] sm:$0xf]
                  %569 = vst [vmem:[%s427 + $0x118] sm:$0xf] %v568
                  %v570 = vld [vmem:[%s426 + $0x21c] sm:$0xf]
                  %571 = vst [vmem:[%s427 + $0x11c] sm:$0xf] %v570
                  %v572 = vld [vmem:[%s426 + $0x220] sm:$0xf]
                  %573 = vst [vmem:[%s427 + $0x120] sm:$0xf] %v572
                  %v574 = vld [vmem:[%s426 + $0x224] sm:$0xf]
                  %575 = vst [vmem:[%s427 + $0x124] sm:$0xf] %v574
                  %v576 = vld [vmem:[%s426 + $0x228] sm:$0xf]
                  %577 = vst [vmem:[%s427 + $0x128] sm:$0xf] %v576
                  %v578 = vld [vmem:[%s426 + $0x22c] sm:$0xf]
                  %579 = vst [vmem:[%s427 + $0x12c] sm:$0xf] %v578
                  %v580 = vld [vmem:[%s426 + $0x230] sm:$0xf]
                  %581 = vst [vmem:[%s427 + $0x130] sm:$0xf] %v580
                  %v582 = vld [vmem:[%s426 + $0x234] sm:$0xf]
                  %583 = vst [vmem:[%s427 + $0x134] sm:$0xf] %v582
                  %v584 = vld [vmem:[%s426 + $0x238] sm:$0xf]
                  %585 = vst [vmem:[%s427 + $0x138] sm:$0xf] %v584
                  %v586 = vld [vmem:[%s426 + $0x23c] sm:$0xf]
                  %587 = vst [vmem:[%s427 + $0x13c] sm:$0xf] %v586
                  %v588 = vld [vmem:[%s426 + $0x240] sm:$0xf]
                  %589 = vst [vmem:[%s427 + $0x140] sm:$0xf] %v588
                  %v590 = vld [vmem:[%s426 + $0x244] sm:$0xf]
                  %591 = vst [vmem:[%s427 + $0x144] sm:$0xf] %v590
                  %v592 = vld [vmem:[%s426 + $0x248] sm:$0xf]
                  %593 = vst [vmem:[%s427 + $0x148] sm:$0xf] %v592
                  %v594 = vld [vmem:[%s426 + $0x24c] sm:$0xf]
                  %595 = vst [vmem:[%s427 + $0x14c] sm:$0xf] %v594
                  %v596 = vld [vmem:[%s426 + $0x250] sm:$0xf]
                  %597 = vst [vmem:[%s427 + $0x150] sm:$0xf] %v596
                  %v598 = vld [vmem:[%s426 + $0x254] sm:$0xf]
                  %599 = vst [vmem:[%s427 + $0x154] sm:$0xf] %v598
                  %v600 = vld [vmem:[%s426 + $0x258] sm:$0xf]
                  %601 = vst [vmem:[%s427 + $0x158] sm:$0xf] %v600
                  %v602 = vld [vmem:[%s426 + $0x25c] sm:$0xf]
                  %603 = vst [vmem:[%s427 + $0x15c] sm:$0xf] %v602
                  %v604 = vld [vmem:[%s426 + $0x260] sm:$0xf]
                  %605 = vst [vmem:[%s427 + $0x160] sm:$0xf] %v604
                  %v606 = vld [vmem:[%s426 + $0x264] sm:$0xf]
                  %607 = vst [vmem:[%s427 + $0x164] sm:$0xf] %v606
                  %v608 = vld [vmem:[%s426 + $0x268] sm:$0xf]
                  %609 = vst [vmem:[%s427 + $0x168] sm:$0xf] %v608
                  %v610 = vld [vmem:[%s426 + $0x26c] sm:$0xf]
                  %611 = vst [vmem:[%s427 + $0x16c] sm:$0xf] %v610
                  %v612 = vld [vmem:[%s426 + $0x270] sm:$0xf]
                  %613 = vst [vmem:[%s427 + $0x170] sm:$0xf] %v612
                  %v614 = vld [vmem:[%s426 + $0x274] sm:$0xf]
                  %615 = vst [vmem:[%s427 + $0x174] sm:$0xf] %v614
                  %v616 = vld [vmem:[%s426 + $0x278] sm:$0xf]
                  %617 = vst [vmem:[%s427 + $0x178] sm:$0xf] %v616
                  %v618 = vld [vmem:[%s426 + $0x27c] sm:$0xf]
                  %619 = vst [vmem:[%s427 + $0x17c] sm:$0xf] %v618
                  %v620 = vld [vmem:[%s426 + $0x300] sm:$0xf]
                  %621 = vst [vmem:[%s427 + $0x180] sm:$0xf] %v620
                  %v622 = vld [vmem:[%s426 + $0x304] sm:$0xf]
                  %623 = vst [vmem:[%s427 + $0x184] sm:$0xf] %v622
                  %v624 = vld [vmem:[%s426 + $0x308] sm:$0xf]
                  %625 = vst [vmem:[%s427 + $0x188] sm:$0xf] %v624
                  %v626 = vld [vmem:[%s426 + $0x30c] sm:$0xf]
                  %627 = vst [vmem:[%s427 + $0x18c] sm:$0xf] %v626
                  %v628 = vld [vmem:[%s426 + $0x310] sm:$0xf]
                  %629 = vst [vmem:[%s427 + $0x190] sm:$0xf] %v628
                  %v630 = vld [vmem:[%s426 + $0x314] sm:$0xf]
                  %631 = vst [vmem:[%s427 + $0x194] sm:$0xf] %v630
                  %v632 = vld [vmem:[%s426 + $0x318] sm:$0xf]
                  %633 = vst [vmem:[%s427 + $0x198] sm:$0xf] %v632
                  %v634 = vld [vmem:[%s426 + $0x31c] sm:$0xf]
                  %635 = vst [vmem:[%s427 + $0x19c] sm:$0xf] %v634
                  %v636 = vld [vmem:[%s426 + $0x320] sm:$0xf]
                  %637 = vst [vmem:[%s427 + $0x1a0] sm:$0xf] %v636
                  %v638 = vld [vmem:[%s426 + $0x324] sm:$0xf]
                  %639 = vst [vmem:[%s427 + $0x1a4] sm:$0xf] %v638
                  %v640 = vld [vmem:[%s426 + $0x328] sm:$0xf]
                  %641 = vst [vmem:[%s427 + $0x1a8] sm:$0xf] %v640
                  %v642 = vld [vmem:[%s426 + $0x32c] sm:$0xf]
                  %643 = vst [vmem:[%s427 + $0x1ac] sm:$0xf] %v642
                  %v644 = vld [vmem:[%s426 + $0x330] sm:$0xf]
                  %645 = vst [vmem:[%s427 + $0x1b0] sm:$0xf] %v644
                  %v646 = vld [vmem:[%s426 + $0x334] sm:$0xf]
                  %647 = vst [vmem:[%s427 + $0x1b4] sm:$0xf] %v646
                  %v648 = vld [vmem:[%s426 + $0x338] sm:$0xf]
                  %649 = vst [vmem:[%s427 + $0x1b8] sm:$0xf] %v648
                  %v650 = vld [vmem:[%s426 + $0x33c] sm:$0xf]
                  %651 = vst [vmem:[%s427 + $0x1bc] sm:$0xf] %v650
                  %v652 = vld [vmem:[%s426 + $0x340] sm:$0xf]
                  %653 = vst [vmem:[%s427 + $0x1c0] sm:$0xf] %v652
                  %v654 = vld [vmem:[%s426 + $0x344] sm:$0xf]
                  %655 = vst [vmem:[%s427 + $0x1c4] sm:$0xf] %v654
                  %v656 = vld [vmem:[%s426 + $0x348] sm:$0xf]
                  %657 = vst [vmem:[%s427 + $0x1c8] sm:$0xf] %v656
                  %v658 = vld [vmem:[%s426 + $0x34c] sm:$0xf]
                  %659 = vst [vmem:[%s427 + $0x1cc] sm:$0xf] %v658
                  %v660 = vld [vmem:[%s426 + $0x350] sm:$0xf]
                  %661 = vst [vmem:[%s427 + $0x1d0] sm:$0xf] %v660
                  %v662 = vld [vmem:[%s426 + $0x354] sm:$0xf]
                  %663 = vst [vmem:[%s427 + $0x1d4] sm:$0xf] %v662
                  %v664 = vld [vmem:[%s426 + $0x358] sm:$0xf]
                  %665 = vst [vmem:[%s427 + $0x1d8] sm:$0xf] %v664
                  %v666 = vld [vmem:[%s426 + $0x35c] sm:$0xf]
                  %667 = vst [vmem:[%s427 + $0x1dc] sm:$0xf] %v666
                  %v668 = vld [vmem:[%s426 + $0x360] sm:$0xf]
                  %669 = vst [vmem:[%s427 + $0x1e0] sm:$0xf] %v668
                  %v670 = vld [vmem:[%s426 + $0x364] sm:$0xf]
                  %671 = vst [vmem:[%s427 + $0x1e4] sm:$0xf] %v670
                  %v672 = vld [vmem:[%s426 + $0x368] sm:$0xf]
                  %673 = vst [vmem:[%s427 + $0x1e8] sm:$0xf] %v672
                  %v674 = vld [vmem:[%s426 + $0x36c] sm:$0xf]
                  %675 = vst [vmem:[%s427 + $0x1ec] sm:$0xf] %v674
                  %v676 = vld [vmem:[%s426 + $0x370] sm:$0xf]
                  %677 = vst [vmem:[%s427 + $0x1f0] sm:$0xf] %v676
                  %v678 = vld [vmem:[%s426 + $0x374] sm:$0xf]
                  %679 = vst [vmem:[%s427 + $0x1f4] sm:$0xf] %v678
                  %v680 = vld [vmem:[%s426 + $0x378] sm:$0xf]
                  %681 = vst [vmem:[%s427 + $0x1f8] sm:$0xf] %v680
                  %v682 = vld [vmem:[%s426 + $0x37c] sm:$0xf]
                  %683 = vst [vmem:[%s427 + $0x1fc] sm:$0xf] %v682
                $region63: #{animal_classifier_forward.6} parent=50 // loop_footer
                  %s425 = sadd.s32 1, %s421
                $region64: #{animal_classifier_forward.6} parent=50 // loop_footer_branch
                  %420 = sbr.rel target = $region60
                $region65: #{animal_classifier_forward.6} parent=50 // loop_exit
                  _
              $region51: #{animal_classifier_forward.6} parent=35 // pred_fallthru
                _
            $region36: #{animal_classifier_forward.6} parent=31 // pred_fallthru
              _
            // Predicated region
            $region37: #{animal_classifier_forward.6} parent=31 // pred_check
              _
            $region38: #{animal_classifier_forward.6} parent=31 // pred_check_branch
              %143 = sbr.rel (0) target = $region40
            $region39: #{animal_classifier_forward.6} parent=31 // pred_region
              loop: start=0, step=1, limit=1
              $region41: #{animal_classifier_forward.6} parent=39 // loop_pre_header
                _
              $region42: #{animal_classifier_forward.6} parent=39 // loop_header
                %s146 = sphi 0, %s150
                %p147 = scmp.ge.s32.totalorder %s146, 1
                %s151 = sphi %s137, %s137
                %s152 = sphi %s134, %s134
              $region43: #{animal_classifier_forward.6} parent=39 // loop_header_branch
                %149 = sbr.rel (%p147) target = $region47
              $region44: #{animal_classifier_forward.6} parent=39 // loop_body
                %v153 = vld [vmem:[%s151] sm:$0xf]
                %154 = vst [vmem:[%s152] sm:$0xf] %v153
                %v155 = vld [vmem:[%s151 + $0x4] sm:$0xf]
                %156 = vst [vmem:[%s152 + $0x4] sm:$0xf] %v155
                %v157 = vld [vmem:[%s151 + $0x8] sm:$0xf]
                %158 = vst [vmem:[%s152 + $0x8] sm:$0xf] %v157
                %v159 = vld [vmem:[%s151 + $0xc] sm:$0xf]
                %160 = vst [vmem:[%s152 + $0xc] sm:$0xf] %v159
                %v161 = vld [vmem:[%s151 + $0x10] sm:$0xf]
                %162 = vst [vmem:[%s152 + $0x10] sm:$0xf] %v161
                %v163 = vld [vmem:[%s151 + $0x14] sm:$0xf]
                %164 = vst [vmem:[%s152 + $0x14] sm:$0xf] %v163
                %v165 = vld [vmem:[%s151 + $0x18] sm:$0xf]
                %166 = vst [vmem:[%s152 + $0x18] sm:$0xf] %v165
                %v167 = vld [vmem:[%s151 + $0x1c] sm:$0xf]
                %168 = vst [vmem:[%s152 + $0x1c] sm:$0xf] %v167
                %v169 = vld [vmem:[%s151 + $0x20] sm:$0xf]
                %170 = vst [vmem:[%s152 + $0x20] sm:$0xf] %v169
                %v171 = vld [vmem:[%s151 + $0x24] sm:$0xf]
                %172 = vst [vmem:[%s152 + $0x24] sm:$0xf] %v171
                %v173 = vld [vmem:[%s151 + $0x28] sm:$0xf]
                %174 = vst [vmem:[%s152 + $0x28] sm:$0xf] %v173
                %v175 = vld [vmem:[%s151 + $0x2c] sm:$0xf]
                %176 = vst [vmem:[%s152 + $0x2c] sm:$0xf] %v175
                %v177 = vld [vmem:[%s151 + $0x30] sm:$0xf]
                %178 = vst [vmem:[%s152 + $0x30] sm:$0xf] %v177
                %v179 = vld [vmem:[%s151 + $0x34] sm:$0xf]
                %180 = vst [vmem:[%s152 + $0x34] sm:$0xf] %v179
                %v181 = vld [vmem:[%s151 + $0x38] sm:$0xf]
                %182 = vst [vmem:[%s152 + $0x38] sm:$0xf] %v181
                %v183 = vld [vmem:[%s151 + $0x3c] sm:$0xf]
                %184 = vst [vmem:[%s152 + $0x3c] sm:$0xf] %v183
                %v185 = vld [vmem:[%s151 + $0x40] sm:$0xf]
                %186 = vst [vmem:[%s152 + $0x40] sm:$0xf] %v185
                %v187 = vld [vmem:[%s151 + $0x44] sm:$0xf]
                %188 = vst [vmem:[%s152 + $0x44] sm:$0xf] %v187
                %v189 = vld [vmem:[%s151 + $0x48] sm:$0xf]
                %190 = vst [vmem:[%s152 + $0x48] sm:$0xf] %v189
                %v191 = vld [vmem:[%s151 + $0x4c] sm:$0xf]
                %192 = vst [vmem:[%s152 + $0x4c] sm:$0xf] %v191
                %v193 = vld [vmem:[%s151 + $0x50] sm:$0xf]
                %194 = vst [vmem:[%s152 + $0x50] sm:$0xf] %v193
                %v195 = vld [vmem:[%s151 + $0x54] sm:$0xf]
                %196 = vst [vmem:[%s152 + $0x54] sm:$0xf] %v195
                %v197 = vld [vmem:[%s151 + $0x58] sm:$0xf]
                %198 = vst [vmem:[%s152 + $0x58] sm:$0xf] %v197
                %v199 = vld [vmem:[%s151 + $0x5c] sm:$0xf]
                %200 = vst [vmem:[%s152 + $0x5c] sm:$0xf] %v199
                %v201 = vld [vmem:[%s151 + $0x60] sm:$0xf]
                %202 = vst [vmem:[%s152 + $0x60] sm:$0xf] %v201
                %v203 = vld [vmem:[%s151 + $0x64] sm:$0xf]
                %204 = vst [vmem:[%s152 + $0x64] sm:$0xf] %v203
                %v205 = vld [vmem:[%s151 + $0x68] sm:$0xf]
                %206 = vst [vmem:[%s152 + $0x68] sm:$0xf] %v205
                %v207 = vld [vmem:[%s151 + $0x6c] sm:$0xf]
                %208 = vst [vmem:[%s152 + $0x6c] sm:$0xf] %v207
                %v209 = vld [vmem:[%s151 + $0x70] sm:$0xf]
                %210 = vst [vmem:[%s152 + $0x70] sm:$0xf] %v209
                %v211 = vld [vmem:[%s151 + $0x74] sm:$0xf]
                %212 = vst [vmem:[%s152 + $0x74] sm:$0xf] %v211
                %v213 = vld [vmem:[%s151 + $0x78] sm:$0xf]
                %214 = vst [vmem:[%s152 + $0x78] sm:$0xf] %v213
                %v215 = vld [vmem:[%s151 + $0x7c] sm:$0xf]
                %216 = vst [vmem:[%s152 + $0x7c] sm:$0xf] %v215
                %v217 = vld [vmem:[%s151 + $0x100] sm:$0xf]
                %218 = vst [vmem:[%s152 + $0x80] sm:$0xf] %v217
                %v219 = vld [vmem:[%s151 + $0x104] sm:$0xf]
                %220 = vst [vmem:[%s152 + $0x84] sm:$0xf] %v219
                %v221 = vld [vmem:[%s151 + $0x108] sm:$0xf]
                %222 = vst [vmem:[%s152 + $0x88] sm:$0xf] %v221
                %v223 = vld [vmem:[%s151 + $0x10c] sm:$0xf]
                %224 = vst [vmem:[%s152 + $0x8c] sm:$0xf] %v223
                %v225 = vld [vmem:[%s151 + $0x110] sm:$0xf]
                %226 = vst [vmem:[%s152 + $0x90] sm:$0xf] %v225
                %v227 = vld [vmem:[%s151 + $0x114] sm:$0xf]
                %228 = vst [vmem:[%s152 + $0x94] sm:$0xf] %v227
                %v229 = vld [vmem:[%s151 + $0x118] sm:$0xf]
                %230 = vst [vmem:[%s152 + $0x98] sm:$0xf] %v229
                %v231 = vld [vmem:[%s151 + $0x11c] sm:$0xf]
                %232 = vst [vmem:[%s152 + $0x9c] sm:$0xf] %v231
                %v233 = vld [vmem:[%s151 + $0x120] sm:$0xf]
                %234 = vst [vmem:[%s152 + $0xa0] sm:$0xf] %v233
                %v235 = vld [vmem:[%s151 + $0x124] sm:$0xf]
                %236 = vst [vmem:[%s152 + $0xa4] sm:$0xf] %v235
                %v237 = vld [vmem:[%s151 + $0x128] sm:$0xf]
                %238 = vst [vmem:[%s152 + $0xa8] sm:$0xf] %v237
                %v239 = vld [vmem:[%s151 + $0x12c] sm:$0xf]
                %240 = vst [vmem:[%s152 + $0xac] sm:$0xf] %v239
                %v241 = vld [vmem:[%s151 + $0x130] sm:$0xf]
                %242 = vst [vmem:[%s152 + $0xb0] sm:$0xf] %v241
                %v243 = vld [vmem:[%s151 + $0x134] sm:$0xf]
                %244 = vst [vmem:[%s152 + $0xb4] sm:$0xf] %v243
                %v245 = vld [vmem:[%s151 + $0x138] sm:$0xf]
                %246 = vst [vmem:[%s152 + $0xb8] sm:$0xf] %v245
                %v247 = vld [vmem:[%s151 + $0x13c] sm:$0xf]
                %248 = vst [vmem:[%s152 + $0xbc] sm:$0xf] %v247
                %v249 = vld [vmem:[%s151 + $0x140] sm:$0xf]
                %250 = vst [vmem:[%s152 + $0xc0] sm:$0xf] %v249
                %v251 = vld [vmem:[%s151 + $0x144] sm:$0xf]
                %252 = vst [vmem:[%s152 + $0xc4] sm:$0xf] %v251
                %v253 = vld [vmem:[%s151 + $0x148] sm:$0xf]
                %254 = vst [vmem:[%s152 + $0xc8] sm:$0xf] %v253
                %v255 = vld [vmem:[%s151 + $0x14c] sm:$0xf]
                %256 = vst [vmem:[%s152 + $0xcc] sm:$0xf] %v255
                %v257 = vld [vmem:[%s151 + $0x150] sm:$0xf]
                %258 = vst [vmem:[%s152 + $0xd0] sm:$0xf] %v257
                %v259 = vld [vmem:[%s151 + $0x154] sm:$0xf]
                %260 = vst [vmem:[%s152 + $0xd4] sm:$0xf] %v259
                %v261 = vld [vmem:[%s151 + $0x158] sm:$0xf]
                %262 = vst [vmem:[%s152 + $0xd8] sm:$0xf] %v261
                %v263 = vld [vmem:[%s151 + $0x15c] sm:$0xf]
                %264 = vst [vmem:[%s152 + $0xdc] sm:$0xf] %v263
                %v265 = vld [vmem:[%s151 + $0x160] sm:$0xf]
                %266 = vst [vmem:[%s152 + $0xe0] sm:$0xf] %v265
                %v267 = vld [vmem:[%s151 + $0x164] sm:$0xf]
                %268 = vst [vmem:[%s152 + $0xe4] sm:$0xf] %v267
                %v269 = vld [vmem:[%s151 + $0x168] sm:$0xf]
                %270 = vst [vmem:[%s152 + $0xe8] sm:$0xf] %v269
                %v271 = vld [vmem:[%s151 + $0x16c] sm:$0xf]
                %272 = vst [vmem:[%s152 + $0xec] sm:$0xf] %v271
                %v273 = vld [vmem:[%s151 + $0x170] sm:$0xf]
                %274 = vst [vmem:[%s152 + $0xf0] sm:$0xf] %v273
                %v275 = vld [vmem:[%s151 + $0x174] sm:$0xf]
                %276 = vst [vmem:[%s152 + $0xf4] sm:$0xf] %v275
                %v277 = vld [vmem:[%s151 + $0x178] sm:$0xf]
                %278 = vst [vmem:[%s152 + $0xf8] sm:$0xf] %v277
                %v279 = vld [vmem:[%s151 + $0x17c] sm:$0xf]
                %280 = vst [vmem:[%s152 + $0xfc] sm:$0xf] %v279
                %v281 = vld [vmem:[%s151 + $0x200] sm:$0xf]
                %282 = vst [vmem:[%s152 + $0x100] sm:$0xf] %v281
                %v283 = vld [vmem:[%s151 + $0x204] sm:$0xf]
                %284 = vst [vmem:[%s152 + $0x104] sm:$0xf] %v283
                %v285 = vld [vmem:[%s151 + $0x208] sm:$0xf]
                %286 = vst [vmem:[%s152 + $0x108] sm:$0xf] %v285
                %v287 = vld [vmem:[%s151 + $0x20c] sm:$0xf]
                %288 = vst [vmem:[%s152 + $0x10c] sm:$0xf] %v287
                %v289 = vld [vmem:[%s151 + $0x210] sm:$0xf]
                %290 = vst [vmem:[%s152 + $0x110] sm:$0xf] %v289
                %v291 = vld [vmem:[%s151 + $0x214] sm:$0xf]
                %292 = vst [vmem:[%s152 + $0x114] sm:$0xf] %v291
                %v293 = vld [vmem:[%s151 + $0x218] sm:$0xf]
                %294 = vst [vmem:[%s152 + $0x118] sm:$0xf] %v293
                %v295 = vld [vmem:[%s151 + $0x21c] sm:$0xf]
                %296 = vst [vmem:[%s152 + $0x11c] sm:$0xf] %v295
                %v297 = vld [vmem:[%s151 + $0x220] sm:$0xf]
                %298 = vst [vmem:[%s152 + $0x120] sm:$0xf] %v297
                %v299 = vld [vmem:[%s151 + $0x224] sm:$0xf]
                %300 = vst [vmem:[%s152 + $0x124] sm:$0xf] %v299
                %v301 = vld [vmem:[%s151 + $0x228] sm:$0xf]
                %302 = vst [vmem:[%s152 + $0x128] sm:$0xf] %v301
                %v303 = vld [vmem:[%s151 + $0x22c] sm:$0xf]
                %304 = vst [vmem:[%s152 + $0x12c] sm:$0xf] %v303
                %v305 = vld [vmem:[%s151 + $0x230] sm:$0xf]
                %306 = vst [vmem:[%s152 + $0x130] sm:$0xf] %v305
                %v307 = vld [vmem:[%s151 + $0x234] sm:$0xf]
                %308 = vst [vmem:[%s152 + $0x134] sm:$0xf] %v307
                %v309 = vld [vmem:[%s151 + $0x238] sm:$0xf]
                %310 = vst [vmem:[%s152 + $0x138] sm:$0xf] %v309
                %v311 = vld [vmem:[%s151 + $0x23c] sm:$0xf]
                %312 = vst [vmem:[%s152 + $0x13c] sm:$0xf] %v311
                %v313 = vld [vmem:[%s151 + $0x240] sm:$0xf]
                %314 = vst [vmem:[%s152 + $0x140] sm:$0xf] %v313
                %v315 = vld [vmem:[%s151 + $0x244] sm:$0xf]
                %316 = vst [vmem:[%s152 + $0x144] sm:$0xf] %v315
                %v317 = vld [vmem:[%s151 + $0x248] sm:$0xf]
                %318 = vst [vmem:[%s152 + $0x148] sm:$0xf] %v317
                %v319 = vld [vmem:[%s151 + $0x24c] sm:$0xf]
                %320 = vst [vmem:[%s152 + $0x14c] sm:$0xf] %v319
                %v321 = vld [vmem:[%s151 + $0x250] sm:$0xf]
                %322 = vst [vmem:[%s152 + $0x150] sm:$0xf] %v321
                %v323 = vld [vmem:[%s151 + $0x254] sm:$0xf]
                %324 = vst [vmem:[%s152 + $0x154] sm:$0xf] %v323
                %v325 = vld [vmem:[%s151 + $0x258] sm:$0xf]
                %326 = vst [vmem:[%s152 + $0x158] sm:$0xf] %v325
                %v327 = vld [vmem:[%s151 + $0x25c] sm:$0xf]
                %328 = vst [vmem:[%s152 + $0x15c] sm:$0xf] %v327
                %v329 = vld [vmem:[%s151 + $0x260] sm:$0xf]
                %330 = vst [vmem:[%s152 + $0x160] sm:$0xf] %v329
                %v331 = vld [vmem:[%s151 + $0x264] sm:$0xf]
                %332 = vst [vmem:[%s152 + $0x164] sm:$0xf] %v331
                %v333 = vld [vmem:[%s151 + $0x268] sm:$0xf]
                %334 = vst [vmem:[%s152 + $0x168] sm:$0xf] %v333
                %v335 = vld [vmem:[%s151 + $0x26c] sm:$0xf]
                %336 = vst [vmem:[%s152 + $0x16c] sm:$0xf] %v335
                %v337 = vld [vmem:[%s151 + $0x270] sm:$0xf]
                %338 = vst [vmem:[%s152 + $0x170] sm:$0xf] %v337
                %v339 = vld [vmem:[%s151 + $0x274] sm:$0xf]
                %340 = vst [vmem:[%s152 + $0x174] sm:$0xf] %v339
                %v341 = vld [vmem:[%s151 + $0x278] sm:$0xf]
                %342 = vst [vmem:[%s152 + $0x178] sm:$0xf] %v341
                %v343 = vld [vmem:[%s151 + $0x27c] sm:$0xf]
                %344 = vst [vmem:[%s152 + $0x17c] sm:$0xf] %v343
                %v345 = vld [vmem:[%s151 + $0x300] sm:$0xf]
                %346 = vst [vmem:[%s152 + $0x180] sm:$0xf] %v345
                %v347 = vld [vmem:[%s151 + $0x304] sm:$0xf]
                %348 = vst [vmem:[%s152 + $0x184] sm:$0xf] %v347
                %v349 = vld [vmem:[%s151 + $0x308] sm:$0xf]
                %350 = vst [vmem:[%s152 + $0x188] sm:$0xf] %v349
                %v351 = vld [vmem:[%s151 + $0x30c] sm:$0xf]
                %352 = vst [vmem:[%s152 + $0x18c] sm:$0xf] %v351
                %v353 = vld [vmem:[%s151 + $0x310] sm:$0xf]
                %354 = vst [vmem:[%s152 + $0x190] sm:$0xf] %v353
                %v355 = vld [vmem:[%s151 + $0x314] sm:$0xf]
                %356 = vst [vmem:[%s152 + $0x194] sm:$0xf] %v355
                %v357 = vld [vmem:[%s151 + $0x318] sm:$0xf]
                %358 = vst [vmem:[%s152 + $0x198] sm:$0xf] %v357
                %v359 = vld [vmem:[%s151 + $0x31c] sm:$0xf]
                %360 = vst [vmem:[%s152 + $0x19c] sm:$0xf] %v359
                %v361 = vld [vmem:[%s151 + $0x320] sm:$0xf]
                %362 = vst [vmem:[%s152 + $0x1a0] sm:$0xf] %v361
                %v363 = vld [vmem:[%s151 + $0x324] sm:$0xf]
                %364 = vst [vmem:[%s152 + $0x1a4] sm:$0xf] %v363
                %v365 = vld [vmem:[%s151 + $0x328] sm:$0xf]
                %366 = vst [vmem:[%s152 + $0x1a8] sm:$0xf] %v365
                %v367 = vld [vmem:[%s151 + $0x32c] sm:$0xf]
                %368 = vst [vmem:[%s152 + $0x1ac] sm:$0xf] %v367
                %v369 = vld [vmem:[%s151 + $0x330] sm:$0xf]
                %370 = vst [vmem:[%s152 + $0x1b0] sm:$0xf] %v369
                %v371 = vld [vmem:[%s151 + $0x334] sm:$0xf]
                %372 = vst [vmem:[%s152 + $0x1b4] sm:$0xf] %v371
                %v373 = vld [vmem:[%s151 + $0x338] sm:$0xf]
                %374 = vst [vmem:[%s152 + $0x1b8] sm:$0xf] %v373
                %v375 = vld [vmem:[%s151 + $0x33c] sm:$0xf]
                %376 = vst [vmem:[%s152 + $0x1bc] sm:$0xf] %v375
                %v377 = vld [vmem:[%s151 + $0x340] sm:$0xf]
                %378 = vst [vmem:[%s152 + $0x1c0] sm:$0xf] %v377
                %v379 = vld [vmem:[%s151 + $0x344] sm:$0xf]
                %380 = vst [vmem:[%s152 + $0x1c4] sm:$0xf] %v379
                %v381 = vld [vmem:[%s151 + $0x348] sm:$0xf]
                %382 = vst [vmem:[%s152 + $0x1c8] sm:$0xf] %v381
                %v383 = vld [vmem:[%s151 + $0x34c] sm:$0xf]
                %384 = vst [vmem:[%s152 + $0x1cc] sm:$0xf] %v383
                %v385 = vld [vmem:[%s151 + $0x350] sm:$0xf]
                %386 = vst [vmem:[%s152 + $0x1d0] sm:$0xf] %v385
                %v387 = vld [vmem:[%s151 + $0x354] sm:$0xf]
                %388 = vst [vmem:[%s152 + $0x1d4] sm:$0xf] %v387
                %v389 = vld [vmem:[%s151 + $0x358] sm:$0xf]
                %390 = vst [vmem:[%s152 + $0x1d8] sm:$0xf] %v389
                %v391 = vld [vmem:[%s151 + $0x35c] sm:$0xf]
                %392 = vst [vmem:[%s152 + $0x1dc] sm:$0xf] %v391
                %v393 = vld [vmem:[%s151 + $0x360] sm:$0xf]
                %394 = vst [vmem:[%s152 + $0x1e0] sm:$0xf] %v393
                %v395 = vld [vmem:[%s151 + $0x364] sm:$0xf]
                %396 = vst [vmem:[%s152 + $0x1e4] sm:$0xf] %v395
                %v397 = vld [vmem:[%s151 + $0x368] sm:$0xf]
                %398 = vst [vmem:[%s152 + $0x1e8] sm:$0xf] %v397
                %v399 = vld [vmem:[%s151 + $0x36c] sm:$0xf]
                %400 = vst [vmem:[%s152 + $0x1ec] sm:$0xf] %v399
                %v401 = vld [vmem:[%s151 + $0x370] sm:$0xf]
                %402 = vst [vmem:[%s152 + $0x1f0] sm:$0xf] %v401
                %v403 = vld [vmem:[%s151 + $0x374] sm:$0xf]
                %404 = vst [vmem:[%s152 + $0x1f4] sm:$0xf] %v403
                %v405 = vld [vmem:[%s151 + $0x378] sm:$0xf]
                %406 = vst [vmem:[%s152 + $0x1f8] sm:$0xf] %v405
                %v407 = vld [vmem:[%s151 + $0x37c] sm:$0xf]
                %408 = vst [vmem:[%s152 + $0x1fc] sm:$0xf] %v407
              $region45: #{animal_classifier_forward.6} parent=39 // loop_footer
                %s150 = sadd.s32 1, %s146
              $region46: #{animal_classifier_forward.6} parent=39 // loop_footer_branch
                %145 = sbr.rel target = $region42
              $region47: #{animal_classifier_forward.6} parent=39 // loop_exit
                _
            $region40: #{animal_classifier_forward.6} parent=31 // pred_fallthru
              _
          $region32: #{animal_classifier_forward.6} parent=27 // pred_fallthru
            _
          %684 = vnop
        $region28: #{animal_classifier_forward.6} parent=23 // pred_fallthru
          _
      $region24: #{animal_classifier_forward.6} parent=5 // pred_fallthru
        _
      %p685 = scmp.le.s32.totalorder 1, %s9
      %p686 = scmp.lt.s32.totalorder %s9, 3
      %p687 = pnand %p685, %p686
      %p688 = pneg %p687
      // Predicated region
      $region66: #{animal_classifier_forward.6} parent=5 // pred_check
        _
      $region67: #{animal_classifier_forward.6} parent=5 // pred_check_branch
        %690 = sbr.rel (%p687) target = $region69
      $region68: #{animal_classifier_forward.6} parent=5 // pred_region
        %s691 = ssub.s32 %s9, 1
        %s692 = sand.u32 %s22, 1
        %s693 = sand.u32 %s22, 1
        %s694 = smul.addr %s693, 512
        %s695 = scalar_lea.vmem [#allocation2], %s694
        // Predicated region
        $region70: #{animal_classifier_forward.6} parent=68 // pred_check
          %p696 = pneg %p35
        $region71: #{animal_classifier_forward.6} parent=68 // pred_check_branch
          %698 = sbr.rel (%p696) target = $region73
        $region72: #{animal_classifier_forward.6} parent=68 // pred_region
          _
        $region73: #{animal_classifier_forward.6} parent=68 // pred_fallthru
          _
        %s699 = sand.u32 %s22, 1
        %s700 = sand.u32 %s22, 1
        %s701 = smul.addr %s700, 512
        %s702 = scalar_lea.vmem [#allocation2], %s701
        %p703 = pneg %p35
        %p704 = pneg %p32
        %p705 = pneg %p56
        %p706 = pneg %p53
        %p707 = pneg %p77
        %p708 = pneg %p74
        %p709 = pneg %p103
        %p710 = pneg %p100
        %s711 = smul.u32 32, %s14
        %p712 = scmp.lt.s32.totalorder %s711, 63
        %s713 = scalar_select %p712, %s711, 63
        %s714 = smul.addr %s713, 4
        %s715 = scalar_lea.vmem %s3, %s714
        %s716 = smul.u32 32, %s14
        %s717 = smul.u32 32, %s14
        %p718 = scmp.lt.s32.totalorder %s717, 63
        %s719 = scalar_select %p718, %s717, 63
        %s720 = smul.addr %s719, 4
        %s721 = scalar_lea.vmem %s3, %s720
        %s722 = smul.u32 32, %s14
        %v724 = vld [vmem:[%s1] sm:$0xf]
        %v725 = vld [vmem:[%s1 + $0x4] sm:$0xf]
        %v726 = vld [vmem:[%s1 + $0x8] sm:$0xf]
        %v727 = vld [vmem:[%s1 + $0xc] sm:$0x3]
        %v728 = vld [vmem:[%s695] sm:$0xf]
        %v729 = vld [vmem:[%s695 + $0x4] sm:$0xf]
        %v730 = vld [vmem:[%s695 + $0x8] sm:$0xf]
        %v731 = vld [vmem:[%s695 + $0xc] sm:$0xf]
        %v732 = vld [vmem:[%s695 + $0x10] sm:$0xf]
        %v733 = vld [vmem:[%s695 + $0x14] sm:$0xf]
        %v734 = vld [vmem:[%s695 + $0x18] sm:$0xf]
        %v735 = vld [vmem:[%s695 + $0x1c] sm:$0xf]
        %v736 = vld [vmem:[%s695 + $0x20] sm:$0xf]
        %v737 = vld [vmem:[%s695 + $0x24] sm:$0xf]
        %v738 = vld [vmem:[%s695 + $0x28] sm:$0xf]
        %v739 = vld [vmem:[%s695 + $0x2c] sm:$0xf]
        %v740 = vld [vmem:[%s695 + $0x30] sm:$0xf]
        %v741 = vld [vmem:[%s695 + $0x34] sm:$0xf]
        %v742 = vld [vmem:[%s695 + $0x38] sm:$0xf]
        %v743 = vld [vmem:[%s695 + $0x3c] sm:$0xf]
        %v744 = vld [vmem:[%s695 + $0x40] sm:$0xf]
        %v745 = vld [vmem:[%s695 + $0x44] sm:$0xf]
        %v746 = vld [vmem:[%s695 + $0x48] sm:$0xf]
        %v747 = vld [vmem:[%s695 + $0x4c] sm:$0xf]
        %v748 = vld [vmem:[%s695 + $0x50] sm:$0xf]
        %v749 = vld [vmem:[%s695 + $0x54] sm:$0xf]
        %v750 = vld [vmem:[%s695 + $0x58] sm:$0xf]
        %v751 = vld [vmem:[%s695 + $0x5c] sm:$0xf]
        %v752 = vld [vmem:[%s695 + $0x60] sm:$0xf]
        %v753 = vld [vmem:[%s695 + $0x64] sm:$0xf]
        %v754 = vld [vmem:[%s695 + $0x68] sm:$0xf]
        %v755 = vld [vmem:[%s695 + $0x6c] sm:$0xf]
        %v756 = vld [vmem:[%s695 + $0x70] sm:$0xf]
        %v757 = vld [vmem:[%s695 + $0x74] sm:$0xf]
        %v758 = vld [vmem:[%s695 + $0x78] sm:$0xf]
        %v759 = vld [vmem:[%s695 + $0x7c] sm:$0xf]
        %v792 = vunpack.c.l.b16 %v728
        %v793 = vunpack.c.l.b16 %v729
        %v794 = vunpack.c.l.b16 %v730
        %v795 = vunpack.c.l.b16 %v731
        %v796 = vunpack.c.l.b16 %v732
        %v797 = vunpack.c.l.b16 %v733
        %v798 = vunpack.c.l.b16 %v734
        %v799 = vunpack.c.l.b16 %v735
        %v800 = vunpack.c.l.b16 %v736
        %v801 = vunpack.c.l.b16 %v737
        %v802 = vunpack.c.l.b16 %v738
        %v803 = vunpack.c.l.b16 %v739
        %v804 = vunpack.c.l.b16 %v740
        %v805 = vunpack.c.l.b16 %v741
        %v806 = vunpack.c.l.b16 %v742
        %v807 = vunpack.c.l.b16 %v743
        %v808 = vunpack.c.l.b16 %v744
        %v809 = vunpack.c.l.b16 %v745
        %v810 = vunpack.c.l.b16 %v746
        %v811 = vunpack.c.l.b16 %v747
        %v812 = vunpack.c.l.b16 %v748
        %v813 = vunpack.c.l.b16 %v749
        %v814 = vunpack.c.l.b16 %v750
        %v815 = vunpack.c.l.b16 %v751
        %v816 = vunpack.c.l.b16 %v752
        %v817 = vunpack.c.l.b16 %v753
        %v818 = vunpack.c.l.b16 %v754
        %v819 = vunpack.c.l.b16 %v755
        %v820 = vunpack.c.l.b16 %v756
        %v821 = vunpack.c.l.b16 %v757
        %v822 = vunpack.c.l.b16 %v758
        %v823 = vunpack.c.l.b16 %v759
        %v824 = vpack.c.b16 %v793, %v792
        %v825 = vpack.c.b16 %v795, %v794
        %v826 = vpack.c.b16 %v797, %v796
        %v827 = vpack.c.b16 %v799, %v798
        %v828 = vpack.c.b16 %v801, %v800
        %v829 = vpack.c.b16 %v803, %v802
        %v830 = vpack.c.b16 %v805, %v804
        %v831 = vpack.c.b16 %v807, %v806
        %v832 = vpack.c.b16 %v809, %v808
        %v833 = vpack.c.b16 %v811, %v810
        %v834 = vpack.c.b16 %v813, %v812
        %v835 = vpack.c.b16 %v815, %v814
        %v836 = vpack.c.b16 %v817, %v816
        %v837 = vpack.c.b16 %v819, %v818
        %v838 = vpack.c.b16 %v821, %v820
        %v839 = vpack.c.b16 %v823, %v822
        %v844 = vunpack.c.l.b16 %v724
        %v845 = vunpack.c.l.b16 %v725
        %v846 = vunpack.c.l.b16 %v726
        %v847 = vunpack.c.l.b16 %v727
        %v848 = vpack.c.b16 %v845, %v844
        %v849 = vpack.c.b16 %v847, %v846
        %vm851 = vcmask 220160
        %v853 = vsel %vm851, %v824, 0
        %v856 = vsel %vm851, %v825, 0
        %v859 = vsel %vm851, %v826, 0
        %v862 = vsel %vm851, %v827, 0
        %v865 = vsel %vm851, %v828, 0
        %v868 = vsel %vm851, %v829, 0
        %v871 = vsel %vm851, %v830, 0
        %v874 = vsel %vm851, %v831, 0
        %v877 = vsel %vm851, %v832, 0
        %v880 = vsel %vm851, %v833, 0
        %v883 = vsel %vm851, %v834, 0
        %v886 = vsel %vm851, %v835, 0
        %v889 = vsel %vm851, %v836, 0
        %v892 = vsel %vm851, %v837, 0
        %v895 = vsel %vm851, %v838, 0
        %v898 = vsel %vm851, %v839, 0
        %vm900 = vcmask 1044480
        %vm901 = vcmask 1045504
        %v902 = vsel %vm900, 4294967295, 65535
        %v903 = vsel %vm901, %v902, 0
        %v905 = vand.u32 %v849, %v903
        %907 = vmatprep.subr.bf16.mxu0 0
        %908 = vmatpush1.bf16.msra.mxu0 %v848
        %909 = vmatprep.subr.bf16.mxu0 0
        %910 = vmatpush1.bf16.msra.mxu0 %v905
        %911 = vmatprep.subr.bf16.mxu0 0
        %912 = vmatpush1.bf16.msra.mxu0 0
        %913 = vmatprep.subr.bf16.mxu0 0
        %914 = vmatpush1.bf16.msra.mxu0 0
        %915 = vmatprep.subr.bf16.mxu0 0
        %916 = vmatpush1.bf16.msra.mxu0 0
        %917 = vmatprep.subr.bf16.mxu0 0
        %918 = vmatpush1.bf16.msra.mxu0 0
        %919 = vmatprep.subr.bf16.mxu0 0
        %920 = vmatpush1.bf16.msra.mxu0 0
        %921 = vmatprep.subr.bf16.mxu0 0
        %922 = vmatpush1.bf16.msra.mxu0 0
        %923 = vmatprep.subr.bf16.mxu0 0
        %924 = vmatpush1.bf16.msra.mxu0 0
        %925 = vmatprep.subr.bf16.mxu0 0
        %926 = vmatpush1.bf16.msra.mxu0 0
        %927 = vmatprep.subr.bf16.mxu0 0
        %928 = vmatpush1.bf16.msra.mxu0 0
        %929 = vmatprep.subr.bf16.mxu0 0
        %930 = vmatpush1.bf16.msra.mxu0 0
        %931 = vmatprep.subr.bf16.mxu0 0
        %932 = vmatpush1.bf16.msra.mxu0 0
        %933 = vmatprep.subr.bf16.mxu0 0
        %934 = vmatpush1.bf16.msra.mxu0 0
        %935 = vmatprep.subr.bf16.mxu0 0
        %936 = vmatpush1.bf16.msra.mxu0 0
        %937 = vmatprep.subr.bf16.mxu0 0
        %938 = vmatpush1.bf16.msra.mxu0 0
        %939 = vmatprep.mubr.bf16.mxu0 0
        %940 = vmatmul.mubr.bf16.gmra.mrb[0].mxu0 %v853
        %v941 = vpop.f32.mrb[0].mxu0
        %v942 = vadd.f32 0.0, %v941
        %v943 = vpop.f32.mrb[0].mxu0
        %v944 = vpop.f32.mrb[0].mxu0
        %v945 = vadd.f32 0.0, %v944
        %v946 = vpop.f32.mrb[0].mxu0
        %947 = vmatprep.mubr.bf16.mxu0 0
        %948 = vmatmul.mubr.bf16.gmra.mrb[0].mxu0 %v856
        %v949 = vpop.f32.mrb[0].mxu0
        %v950 = vadd.f32 0.0, %v949
        %v951 = vpop.f32.mrb[0].mxu0
        %v952 = vpop.f32.mrb[0].mxu0
        %v953 = vadd.f32 0.0, %v952
        %v954 = vpop.f32.mrb[0].mxu0
        %955 = vmatprep.mubr.bf16.mxu0 0
        %956 = vmatmul.mubr.bf16.gmra.mrb[0].mxu0 %v859
        %v957 = vpop.f32.mrb[0].mxu0
        %v958 = vadd.f32 0.0, %v957
        %v959 = vpop.f32.mrb[0].mxu0
        %v960 = vpop.f32.mrb[0].mxu0
        %v961 = vadd.f32 0.0, %v960
        %v962 = vpop.f32.mrb[0].mxu0
        %963 = vmatprep.mubr.bf16.mxu0 0
        %964 = vmatmul.mubr.bf16.gmra.mrb[0].mxu0 %v862
        %v965 = vpop.f32.mrb[0].mxu0
        %v966 = vadd.f32 0.0, %v965
        %v967 = vpop.f32.mrb[0].mxu0
        %v968 = vpop.f32.mrb[0].mxu0
        %v969 = vadd.f32 0.0, %v968
        %v970 = vpop.f32.mrb[0].mxu0
        %971 = vmatprep.mubr.bf16.mxu0 0
        %972 = vmatmul.mubr.bf16.gmra.mrb[0].mxu0 %v865
        %v973 = vpop.f32.mrb[0].mxu0
        %v974 = vadd.f32 0.0, %v973
        %v975 = vpop.f32.mrb[0].mxu0
        %v976 = vpop.f32.mrb[0].mxu0
        %v977 = vadd.f32 0.0, %v976
        %v978 = vpop.f32.mrb[0].mxu0
        %979 = vmatprep.mubr.bf16.mxu0 0
        %980 = vmatmul.mubr.bf16.gmra.mrb[0].mxu0 %v868
        %v981 = vpop.f32.mrb[0].mxu0
        %v982 = vadd.f32 0.0, %v981
        %v983 = vpop.f32.mrb[0].mxu0
        %v984 = vpop.f32.mrb[0].mxu0
        %v985 = vadd.f32 0.0, %v984
        %v986 = vpop.f32.mrb[0].mxu0
        %987 = vmatprep.mubr.bf16.mxu0 0
        %988 = vmatmul.mubr.bf16.gmra.mrb[0].mxu0 %v871
        %v989 = vpop.f32.mrb[0].mxu0
        %v990 = vadd.f32 0.0, %v989
        %v991 = vpop.f32.mrb[0].mxu0
        %v992 = vpop.f32.mrb[0].mxu0
        %v993 = vadd.f32 0.0, %v992
        %v994 = vpop.f32.mrb[0].mxu0
        %995 = vmatprep.mubr.bf16.mxu0 0
        %996 = vmatmul.mubr.bf16.gmra.mrb[0].mxu0 %v874
        %v997 = vpop.f32.mrb[0].mxu0
        %v998 = vadd.f32 0.0, %v997
        %v999 = vpop.f32.mrb[0].mxu0
        %v1000 = vpop.f32.mrb[0].mxu0
        %v1001 = vadd.f32 0.0, %v1000
        %v1002 = vpop.f32.mrb[0].mxu0
        %1003 = vmatprep.mubr.bf16.mxu0 0
        %1004 = vmatmul.mubr.bf16.gmra.mrb[0].mxu0 %v877
        %v1005 = vpop.f32.mrb[0].mxu0
        %v1006 = vadd.f32 0.0, %v1005
        %v1007 = vpop.f32.mrb[0].mxu0
        %v1008 = vpop.f32.mrb[0].mxu0
        %v1009 = vadd.f32 0.0, %v1008
        %v1010 = vpop.f32.mrb[0].mxu0
        %1011 = vmatprep.mubr.bf16.mxu0 0
        %1012 = vmatmul.mubr.bf16.gmra.mrb[0].mxu0 %v880
        %v1013 = vpop.f32.mrb[0].mxu0
        %v1014 = vadd.f32 0.0, %v1013
        %v1015 = vpop.f32.mrb[0].mxu0
        %v1016 = vpop.f32.mrb[0].mxu0
        %v1017 = vadd.f32 0.0, %v1016
        %v1018 = vpop.f32.mrb[0].mxu0
        %1019 = vmatprep.mubr.bf16.mxu0 0
        %1020 = vmatmul.mubr.bf16.gmra.mrb[0].mxu0 %v883
        %v1021 = vpop.f32.mrb[0].mxu0
        %v1022 = vadd.f32 0.0, %v1021
        %v1023 = vpop.f32.mrb[0].mxu0
        %v1024 = vpop.f32.mrb[0].mxu0
        %v1025 = vadd.f32 0.0, %v1024
        %v1026 = vpop.f32.mrb[0].mxu0
        %1027 = vmatprep.mubr.bf16.mxu0 0
        %1028 = vmatmul.mubr.bf16.gmra.mrb[0].mxu0 %v886
        %v1029 = vpop.f32.mrb[0].mxu0
        %v1030 = vadd.f32 0.0, %v1029
        %v1031 = vpop.f32.mrb[0].mxu0
        %v1032 = vpop.f32.mrb[0].mxu0
        %v1033 = vadd.f32 0.0, %v1032
        %v1034 = vpop.f32.mrb[0].mxu0
        %1035 = vmatprep.mubr.bf16.mxu0 0
        %1036 = vmatmul.mubr.bf16.gmra.mrb[0].mxu0 %v889
        %v1037 = vpop.f32.mrb[0].mxu0
        %v1038 = vadd.f32 0.0, %v1037
        %v1039 = vpop.f32.mrb[0].mxu0
        %v1040 = vpop.f32.mrb[0].mxu0
        %v1041 = vadd.f32 0.0, %v1040
        %v1042 = vpop.f32.mrb[0].mxu0
        %1043 = vmatprep.mubr.bf16.mxu0 0
        %1044 = vmatmul.mubr.bf16.gmra.mrb[0].mxu0 %v892
        %v1045 = vpop.f32.mrb[0].mxu0
        %v1046 = vadd.f32 0.0, %v1045
        %v1047 = vpop.f32.mrb[0].mxu0
        %v1048 = vpop.f32.mrb[0].mxu0
        %v1049 = vadd.f32 0.0, %v1048
        %v1050 = vpop.f32.mrb[0].mxu0
        %1051 = vmatprep.mubr.bf16.mxu0 0
        %1052 = vmatmul.mubr.bf16.gmra.mrb[0].mxu0 %v895
        %v1053 = vpop.f32.mrb[0].mxu0
        %v1054 = vadd.f32 0.0, %v1053
        %v1055 = vpop.f32.mrb[0].mxu0
        %v1056 = vpop.f32.mrb[0].mxu0
        %v1057 = vadd.f32 0.0, %v1056
        %v1058 = vpop.f32.mrb[0].mxu0
        %1059 = vmatprep.mubr.bf16.mxu0 0
        %1060 = vmatmul.mubr.bf16.gmra.mrb[0].mxu0 %v898
        %v1061 = vpop.f32.mrb[0].mxu0
        %v1062 = vadd.f32 0.0, %v1061
        %v1063 = vpop.f32.mrb[0].mxu0
        %v1064 = vpop.f32.mrb[0].mxu0
        %v1065 = vadd.f32 0.0, %v1064
        %v1066 = vpop.f32.mrb[0].mxu0
        %1067 = vdwg.mxu0
        %s1068 = scalar_lea.vmem %s695, 128 [#allocation2]
        %v1069 = vld [vmem:[%s1068] sm:$0xf]
        %v1070 = vld [vmem:[%s1068 + $0x4] sm:$0xf]
        %v1071 = vld [vmem:[%s1068 + $0x8] sm:$0xf]
        %v1072 = vld [vmem:[%s1068 + $0xc] sm:$0xf]
        %v1073 = vld [vmem:[%s1068 + $0x10] sm:$0xf]
        %v1074 = vld [vmem:[%s1068 + $0x14] sm:$0xf]
        %v1075 = vld [vmem:[%s1068 + $0x18] sm:$0xf]
        %v1076 = vld [vmem:[%s1068 + $0x1c] sm:$0xf]
        %v1077 = vld [vmem:[%s1068 + $0x20] sm:$0xf]
        %v1078 = vld [vmem:[%s1068 + $0x24] sm:$0xf]
        %v1079 = vld [vmem:[%s1068 + $0x28] sm:$0xf]
        %v1080 = vld [vmem:[%s1068 + $0x2c] sm:$0xf]
        %v1081 = vld [vmem:[%s1068 + $0x30] sm:$0xf]
        %v1082 = vld [vmem:[%s1068 + $0x34] sm:$0xf]
        %v1083 = vld [vmem:[%s1068 + $0x38] sm:$0xf]
        %v1084 = vld [vmem:[%s1068 + $0x3c] sm:$0xf]
        %v1085 = vld [vmem:[%s1068 + $0x40] sm:$0xf]
        %v1086 = vld [vmem:[%s1068 + $0x44] sm:$0xf]
        %v1087 = vld [vmem:[%s1068 + $0x48] sm:$0xf]
        %v1088 = vld [vmem:[%s1068 + $0x4c] sm:$0xf]
        %v1089 = vld [vmem:[%s1068 + $0x50] sm:$0xf]
        %v1090 = vld [vmem:[%s1068 + $0x54] sm:$0xf]
        %v1091 = vld [vmem:[%s1068 + $0x58] sm:$0xf]
        %v1092 = vld [vmem:[%s1068 + $0x5c] sm:$0xf]
        %v1093 = vld [vmem:[%s1068 + $0x60] sm:$0xf]
        %v1094 = vld [vmem:[%s1068 + $0x64] sm:$0xf]
        %v1095 = vld [vmem:[%s1068 + $0x68] sm:$0xf]
        %v1096 = vld [vmem:[%s1068 + $0x6c] sm:$0xf]
        %v1097 = vld [vmem:[%s1068 + $0x70] sm:$0xf]
        %v1098 = vld [vmem:[%s1068 + $0x74] sm:$0xf]
        %v1099 = vld [vmem:[%s1068 + $0x78] sm:$0xf]
        %v1100 = vld [vmem:[%s1068 + $0x7c] sm:$0xf]
        %v1133 = vunpack.c.l.b16 %v1069
        %v1134 = vunpack.c.l.b16 %v1070
        %v1135 = vunpack.c.l.b16 %v1071
        %v1136 = vunpack.c.l.b16 %v1072
        %v1137 = vunpack.c.l.b16 %v1073
        %v1138 = vunpack.c.l.b16 %v1074
        %v1139 = vunpack.c.l.b16 %v1075
        %v1140 = vunpack.c.l.b16 %v1076
        %v1141 = vunpack.c.l.b16 %v1077
        %v1142 = vunpack.c.l.b16 %v1078
        %v1143 = vunpack.c.l.b16 %v1079
        %v1144 = vunpack.c.l.b16 %v1080
        %v1145 = vunpack.c.l.b16 %v1081
        %v1146 = vunpack.c.l.b16 %v1082
        %v1147 = vunpack.c.l.b16 %v1083
        %v1148 = vunpack.c.l.b16 %v1084
        %v1149 = vunpack.c.l.b16 %v1085
        %v1150 = vunpack.c.l.b16 %v1086
        %v1151 = vunpack.c.l.b16 %v1087
        %v1152 = vunpack.c.l.b16 %v1088
        %v1153 = vunpack.c.l.b16 %v1089
        %v1154 = vunpack.c.l.b16 %v1090
        %v1155 = vunpack.c.l.b16 %v1091
        %v1156 = vunpack.c.l.b16 %v1092
        %v1157 = vunpack.c.l.b16 %v1093
        %v1158 = vunpack.c.l.b16 %v1094
        %v1159 = vunpack.c.l.b16 %v1095
        %v1160 = vunpack.c.l.b16 %v1096
        %v1161 = vunpack.c.l.b16 %v1097
        %v1162 = vunpack.c.l.b16 %v1098
        %v1163 = vunpack.c.l.b16 %v1099
        %v1164 = vunpack.c.l.b16 %v1100
        %v1165 = vpack.c.b16 %v1134, %v1133
        %v1166 = vpack.c.b16 %v1136, %v1135
        %v1167 = vpack.c.b16 %v1138, %v1137
        %v1168 = vpack.c.b16 %v1140, %v1139
        %v1169 = vpack.c.b16 %v1142, %v1141
        %v1170 = vpack.c.b16 %v1144, %v1143
        %v1171 = vpack.c.b16 %v1146, %v1145
        %v1172 = vpack.c.b16 %v1148, %v1147
        %v1173 = vpack.c.b16 %v1150, %v1149
        %v1174 = vpack.c.b16 %v1152, %v1151
        %v1175 = vpack.c.b16 %v1154, %v1153
        %v1176 = vpack.c.b16 %v1156, %v1155
        %v1177 = vpack.c.b16 %v1158, %v1157
        %v1178 = vpack.c.b16 %v1160, %v1159
        %v1179 = vpack.c.b16 %v1162, %v1161
        %v1180 = vpack.c.b16 %v1164, %v1163
        %v1182 = vsel %vm851, %v1165, 0
        %v1185 = vsel %vm851, %v1166, 0
        %v1188 = vsel %vm851, %v1167, 0
        %v1191 = vsel %vm851, %v1168, 0
        %v1194 = vsel %vm851, %v1169, 0
        %v1197 = vsel %vm851, %v1170, 0
        %v1200 = vsel %vm851, %v1171, 0
        %v1203 = vsel %vm851, %v1172, 0
        %v1206 = vsel %vm851, %v1173, 0
        %v1209 = vsel %vm851, %v1174, 0
        %v1212 = vsel %vm851, %v1175, 0
        %v1215 = vsel %vm851, %v1176, 0
        %v1218 = vsel %vm851, %v1177, 0
        %v1221 = vsel %vm851, %v1178, 0
        %v1224 = vsel %vm851, %v1179, 0
        %v1227 = vsel %vm851, %v1180, 0
        %1229 = vmatprep.subr.bf16.mxu0 0
        %1230 = vmatpush1.bf16.msra.mxu0 %v848
        %1231 = vmatprep.subr.bf16.mxu0 0
        %1232 = vmatpush1.bf16.msra.mxu0 %v905
        %1233 = vmatprep.subr.bf16.mxu0 0
        %1234 = vmatpush1.bf16.msra.mxu0 0
        %1235 = vmatprep.subr.bf16.mxu0 0
        %1236 = vmatpush1.bf16.msra.mxu0 0
        %1237 = vmatprep.subr.bf16.mxu0 0
        %1238 = vmatpush1.bf16.msra.mxu0 0
        %1239 = vmatprep.subr.bf16.mxu0 0
        %1240 = vmatpush1.bf16.msra.mxu0 0
        %1241 = vmatprep.subr.bf16.mxu0 0
        %1242 = vmatpush1.bf16.msra.mxu0 0
        %1243 = vmatprep.subr.bf16.mxu0 0
        %1244 = vmatpush1.bf16.msra.mxu0 0
        %1245 = vmatprep.subr.bf16.mxu0 0
        %1246 = vmatpush1.bf16.msra.mxu0 0
        %1247 = vmatprep.subr.bf16.mxu0 0
        %1248 = vmatpush1.bf16.msra.mxu0 0
        %1249 = vmatprep.subr.bf16.mxu0 0
        %1250 = vmatpush1.bf16.msra.mxu0 0
        %1251 = vmatprep.subr.bf16.mxu0 0
        %1252 = vmatpush1.bf16.msra.mxu0 0
        %1253 = vmatprep.subr.bf16.mxu0 0
        %1254 = vmatpush1.bf16.msra.mxu0 0
        %1255 = vmatprep.subr.bf16.mxu0 0
        %1256 = vmatpush1.bf16.msra.mxu0 0
        %1257 = vmatprep.subr.bf16.mxu0 0
        %1258 = vmatpush1.bf16.msra.mxu0 0
        %1259 = vmatprep.subr.bf16.mxu0 0
        %1260 = vmatpush1.bf16.msra.mxu0 0
        %1261 = vmatprep.mubr.bf16.mxu0 0
        %1262 = vmatmul.mubr.bf16.gmra.mrb[0].mxu0 %v1182
        %v1263 = vpop.f32.mrb[0].mxu0
        %v1264 = vadd.f32 0.0, %v1263
        %v1265 = vpop.f32.mrb[0].mxu0
        %v1266 = vpop.f32.mrb[0].mxu0
        %v1267 = vadd.f32 0.0, %v1266
        %v1268 = vpop.f32.mrb[0].mxu0
        %1269 = vmatprep.mubr.bf16.mxu0 0
        %1270 = vmatmul.mubr.bf16.gmra.mrb[0].mxu0 %v1185
        %v1271 = vpop.f32.mrb[0].mxu0
        %v1272 = vadd.f32 0.0, %v1271
        %v1273 = vpop.f32.mrb[0].mxu0
        %v1274 = vpop.f32.mrb[0].mxu0
        %v1275 = vadd.f32 0.0, %v1274
        %v1276 = vpop.f32.mrb[0].mxu0
        %1277 = vmatprep.mubr.bf16.mxu0 0
        %1278 = vmatmul.mubr.bf16.gmra.mrb[0].mxu0 %v1188
        %v1279 = vpop.f32.mrb[0].mxu0
        %v1280 = vadd.f32 0.0, %v1279
        %v1281 = vpop.f32.mrb[0].mxu0
        %v1282 = vpop.f32.mrb[0].mxu0
        %v1283 = vadd.f32 0.0, %v1282
        %v1284 = vpop.f32.mrb[0].mxu0
        %1285 = vmatprep.mubr.bf16.mxu0 0
        %1286 = vmatmul.mubr.bf16.gmra.mrb[0].mxu0 %v1191
        %v1287 = vpop.f32.mrb[0].mxu0
        %v1288 = vadd.f32 0.0, %v1287
        %v1289 = vpop.f32.mrb[0].mxu0
        %v1290 = vpop.f32.mrb[0].mxu0
        %v1291 = vadd.f32 0.0, %v1290
        %v1292 = vpop.f32.mrb[0].mxu0
        %1293 = vmatprep.mubr.bf16.mxu0 0
        %1294 = vmatmul.mubr.bf16.gmra.mrb[0].mxu0 %v1194
        %v1295 = vpop.f32.mrb[0].mxu0
        %v1296 = vadd.f32 0.0, %v1295
        %v1297 = vpop.f32.mrb[0].mxu0
        %v1298 = vpop.f32.mrb[0].mxu0
        %v1299 = vadd.f32 0.0, %v1298
        %v1300 = vpop.f32.mrb[0].mxu0
        %1301 = vmatprep.mubr.bf16.mxu0 0
        %1302 = vmatmul.mubr.bf16.gmra.mrb[0].mxu0 %v1197
        %v1303 = vpop.f32.mrb[0].mxu0
        %v1304 = vadd.f32 0.0, %v1303
        %v1305 = vpop.f32.mrb[0].mxu0
        %v1306 = vpop.f32.mrb[0].mxu0
        %v1307 = vadd.f32 0.0, %v1306
        %v1308 = vpop.f32.mrb[0].mxu0
        %1309 = vmatprep.mubr.bf16.mxu0 0
        %1310 = vmatmul.mubr.bf16.gmra.mrb[0].mxu0 %v1200
        %v1311 = vpop.f32.mrb[0].mxu0
        %v1312 = vadd.f32 0.0, %v1311
        %v1313 = vpop.f32.mrb[0].mxu0
        %v1314 = vpop.f32.mrb[0].mxu0
        %v1315 = vadd.f32 0.0, %v1314
        %v1316 = vpop.f32.mrb[0].mxu0
        %1317 = vmatprep.mubr.bf16.mxu0 0
        %1318 = vmatmul.mubr.bf16.gmra.mrb[0].mxu0 %v1203
        %v1319 = vpop.f32.mrb[0].mxu0
        %v1320 = vadd.f32 0.0, %v1319
        %v1321 = vpop.f32.mrb[0].mxu0
        %v1322 = vpop.f32.mrb[0].mxu0
        %v1323 = vadd.f32 0.0, %v1322
        %v1324 = vpop.f32.mrb[0].mxu0
        %1325 = vmatprep.mubr.bf16.mxu0 0
        %1326 = vmatmul.mubr.bf16.gmra.mrb[0].mxu0 %v1206
        %v1327 = vpop.f32.mrb[0].mxu0
        %v1328 = vadd.f32 0.0, %v1327
        %v1329 = vpop.f32.mrb[0].mxu0
        %v1330 = vpop.f32.mrb[0].mxu0
        %v1331 = vadd.f32 0.0, %v1330
        %v1332 = vpop.f32.mrb[0].mxu0
        %1333 = vmatprep.mubr.bf16.mxu0 0
        %1334 = vmatmul.mubr.bf16.gmra.mrb[0].mxu0 %v1209
        %v1335 = vpop.f32.mrb[0].mxu0
        %v1336 = vadd.f32 0.0, %v1335
        %v1337 = vpop.f32.mrb[0].mxu0
        %v1338 = vpop.f32.mrb[0].mxu0
        %v1339 = vadd.f32 0.0, %v1338
        %v1340 = vpop.f32.mrb[0].mxu0
        %1341 = vmatprep.mubr.bf16.mxu0 0
        %1342 = vmatmul.mubr.bf16.gmra.mrb[0].mxu0 %v1212
        %v1343 = vpop.f32.mrb[0].mxu0
        %v1344 = vadd.f32 0.0, %v1343
        %v1345 = vpop.f32.mrb[0].mxu0
        %v1346 = vpop.f32.mrb[0].mxu0
        %v1347 = vadd.f32 0.0, %v1346
        %v1348 = vpop.f32.mrb[0].mxu0
        %1349 = vmatprep.mubr.bf16.mxu0 0
        %1350 = vmatmul.mubr.bf16.gmra.mrb[0].mxu0 %v1215
        %v1351 = vpop.f32.mrb[0].mxu0
        %v1352 = vadd.f32 0.0, %v1351
        %v1353 = vpop.f32.mrb[0].mxu0
        %v1354 = vpop.f32.mrb[0].mxu0
        %v1355 = vadd.f32 0.0, %v1354
        %v1356 = vpop.f32.mrb[0].mxu0
        %1357 = vmatprep.mubr.bf16.mxu0 0
        %1358 = vmatmul.mubr.bf16.gmra.mrb[0].mxu0 %v1218
        %v1359 = vpop.f32.mrb[0].mxu0
        %v1360 = vadd.f32 0.0, %v1359
        %v1361 = vpop.f32.mrb[0].mxu0
        %v1362 = vpop.f32.mrb[0].mxu0
        %v1363 = vadd.f32 0.0, %v1362
        %v1364 = vpop.f32.mrb[0].mxu0
        %1365 = vmatprep.mubr.bf16.mxu0 0
        %1366 = vmatmul.mubr.bf16.gmra.mrb[0].mxu0 %v1221
        %v1367 = vpop.f32.mrb[0].mxu0
        %v1368 = vadd.f32 0.0, %v1367
        %v1369 = vpop.f32.mrb[0].mxu0
        %v1370 = vpop.f32.mrb[0].mxu0
        %v1371 = vadd.f32 0.0, %v1370
        %v1372 = vpop.f32.mrb[0].mxu0
        %1373 = vmatprep.mubr.bf16.mxu0 0
        %1374 = vmatmul.mubr.bf16.gmra.mrb[0].mxu0 %v1224
        %v1375 = vpop.f32.mrb[0].mxu0
        %v1376 = vadd.f32 0.0, %v1375
        %v1377 = vpop.f32.mrb[0].mxu0
        %v1378 = vpop.f32.mrb[0].mxu0
        %v1379 = vadd.f32 0.0, %v1378
        %v1380 = vpop.f32.mrb[0].mxu0
        %1381 = vmatprep.mubr.bf16.mxu0 0
        %1382 = vmatmul.mubr.bf16.gmra.mrb[0].mxu0 %v1227
        %v1383 = vpop.f32.mrb[0].mxu0
        %v1384 = vadd.f32 0.0, %v1383
        %v1385 = vpop.f32.mrb[0].mxu0
        %v1386 = vpop.f32.mrb[0].mxu0
        %v1387 = vadd.f32 0.0, %v1386
        %v1388 = vpop.f32.mrb[0].mxu0
        %1389 = vdwg.mxu0
        %v1390 = vmax.f32 %v942, %v1264
        %v1391 = vmax.f32 %v945, %v1267
        %v1392 = vmax.f32 %v950, %v1272
        %v1393 = vmax.f32 %v953, %v1275
        %v1394 = vmax.f32 %v958, %v1280
        %v1395 = vmax.f32 %v961, %v1283
        %v1396 = vmax.f32 %v966, %v1288
        %v1397 = vmax.f32 %v969, %v1291
        %v1398 = vmax.f32 %v974, %v1296
        %v1399 = vmax.f32 %v977, %v1299
        %v1400 = vmax.f32 %v982, %v1304
        %v1401 = vmax.f32 %v985, %v1307
        %v1402 = vmax.f32 %v990, %v1312
        %v1403 = vmax.f32 %v993, %v1315
        %v1404 = vmax.f32 %v998, %v1320
        %v1405 = vmax.f32 %v1001, %v1323
        %v1406 = vmax.f32 %v1006, %v1328
        %v1407 = vmax.f32 %v1009, %v1331
        %v1408 = vmax.f32 %v1014, %v1336
        %v1409 = vmax.f32 %v1017, %v1339
        %v1410 = vmax.f32 %v1022, %v1344
        %v1411 = vmax.f32 %v1025, %v1347
        %v1412 = vmax.f32 %v1030, %v1352
        %v1413 = vmax.f32 %v1033, %v1355
        %v1414 = vmax.f32 %v1038, %v1360
        %v1415 = vmax.f32 %v1041, %v1363
        %v1416 = vmax.f32 %v1046, %v1368
        %v1417 = vmax.f32 %v1049, %v1371
        %v1418 = vmax.f32 %v1054, %v1376
        %v1419 = vmax.f32 %v1057, %v1379
        %v1420 = vmax.f32 %v1062, %v1384
        %v1421 = vmax.f32 %v1065, %v1387
        %s1422 = scalar_lea.vmem %s695, 256 [#allocation2]
        %v1423 = vld [vmem:[%s1422] sm:$0xf]
        %v1424 = vld [vmem:[%s1422 + $0x4] sm:$0xf]
        %v1425 = vld [vmem:[%s1422 + $0x8] sm:$0xf]
        %v1426 = vld [vmem:[%s1422 + $0xc] sm:$0xf]
        %v1427 = vld [vmem:[%s1422 + $0x10] sm:$0xf]
        %v1428 = vld [vmem:[%s1422 + $0x14] sm:$0xf]
        %v1429 = vld [vmem:[%s1422 + $0x18] sm:$0xf]
        %v1430 = vld [vmem:[%s1422 + $0x1c] sm:$0xf]
        %v1431 = vld [vmem:[%s1422 + $0x20] sm:$0xf]
        %v1432 = vld [vmem:[%s1422 + $0x24] sm:$0xf]
        %v1433 = vld [vmem:[%s1422 + $0x28] sm:$0xf]
        %v1434 = vld [vmem:[%s1422 + $0x2c] sm:$0xf]
        %v1435 = vld [vmem:[%s1422 + $0x30] sm:$0xf]
        %v1436 = vld [vmem:[%s1422 + $0x34] sm:$0xf]
        %v1437 = vld [vmem:[%s1422 + $0x38] sm:$0xf]
        %v1438 = vld [vmem:[%s1422 + $0x3c] sm:$0xf]
        %v1439 = vld [vmem:[%s1422 + $0x40] sm:$0xf]
        %v1440 = vld [vmem:[%s1422 + $0x44] sm:$0xf]
        %v1441 = vld [vmem:[%s1422 + $0x48] sm:$0xf]
        %v1442 = vld [vmem:[%s1422 + $0x4c] sm:$0xf]
        %v1443 = vld [vmem:[%s1422 + $0x50] sm:$0xf]
        %v1444 = vld [vmem:[%s1422 + $0x54] sm:$0xf]
        %v1445 = vld [vmem:[%s1422 + $0x58] sm:$0xf]
        %v1446 = vld [vmem:[%s1422 + $0x5c] sm:$0xf]
        %v1447 = vld [vmem:[%s1422 + $0x60] sm:$0xf]
        %v1448 = vld [vmem:[%s1422 + $0x64] sm:$0xf]
        %v1449 = vld [vmem:[%s1422 + $0x68] sm:$0xf]
        %v1450 = vld [vmem:[%s1422 + $0x6c] sm:$0xf]
        %v1451 = vld [vmem:[%s1422 + $0x70] sm:$0xf]
        %v1452 = vld [vmem:[%s1422 + $0x74] sm:$0xf]
        %v1453 = vld [vmem:[%s1422 + $0x78] sm:$0xf]
        %v1454 = vld [vmem:[%s1422 + $0x7c] sm:$0xf]
        %v1487 = vunpack.c.l.b16 %v1423
        %v1488 = vunpack.c.l.b16 %v1424
        %v1489 = vunpack.c.l.b16 %v1425
        %v1490 = vunpack.c.l.b16 %v1426
        %v1491 = vunpack.c.l.b16 %v1427
        %v1492 = vunpack.c.l.b16 %v1428
        %v1493 = vunpack.c.l.b16 %v1429
        %v1494 = vunpack.c.l.b16 %v1430
        %v1495 = vunpack.c.l.b16 %v1431
        %v1496 = vunpack.c.l.b16 %v1432
        %v1497 = vunpack.c.l.b16 %v1433
        %v1498 = vunpack.c.l.b16 %v1434
        %v1499 = vunpack.c.l.b16 %v1435
        %v1500 = vunpack.c.l.b16 %v1436
        %v1501 = vunpack.c.l.b16 %v1437
        %v1502 = vunpack.c.l.b16 %v1438
        %v1503 = vunpack.c.l.b16 %v1439
        %v1504 = vunpack.c.l.b16 %v1440
        %v1505 = vunpack.c.l.b16 %v1441
        %v1506 = vunpack.c.l.b16 %v1442
        %v1507 = vunpack.c.l.b16 %v1443
        %v1508 = vunpack.c.l.b16 %v1444
        %v1509 = vunpack.c.l.b16 %v1445
        %v1510 = vunpack.c.l.b16 %v1446
        %v1511 = vunpack.c.l.b16 %v1447
        %v1512 = vunpack.c.l.b16 %v1448
        %v1513 = vunpack.c.l.b16 %v1449
        %v1514 = vunpack.c.l.b16 %v1450
        %v1515 = vunpack.c.l.b16 %v1451
        %v1516 = vunpack.c.l.b16 %v1452
        %v1517 = vunpack.c.l.b16 %v1453
        %v1518 = vunpack.c.l.b16 %v1454
        %v1519 = vpack.c.b16 %v1488, %v1487
        %v1520 = vpack.c.b16 %v1490, %v1489
        %v1521 = vpack.c.b16 %v1492, %v1491
        %v1522 = vpack.c.b16 %v1494, %v1493
        %v1523 = vpack.c.b16 %v1496, %v1495
        %v1524 = vpack.c.b16 %v1498, %v1497
        %v1525 = vpack.c.b16 %v1500, %v1499
        %v1526 = vpack.c.b16 %v1502, %v1501
        %v1527 = vpack.c.b16 %v1504, %v1503
        %v1528 = vpack.c.b16 %v1506, %v1505
        %v1529 = vpack.c.b16 %v1508, %v1507
        %v1530 = vpack.c.b16 %v1510, %v1509
        %v1531 = vpack.c.b16 %v1512, %v1511
        %v1532 = vpack.c.b16 %v1514, %v1513
        %v1533 = vpack.c.b16 %v1516, %v1515
        %v1534 = vpack.c.b16 %v1518, %v1517
        %v1536 = vsel %vm851, %v1519, 0
        %v1539 = vsel %vm851, %v1520, 0
        %v1542 = vsel %vm851, %v1521, 0
        %v1545 = vsel %vm851, %v1522, 0
        %v1548 = vsel %vm851, %v1523, 0
        %v1551 = vsel %vm851, %v1524, 0
        %v1554 = vsel %vm851, %v1525, 0
        %v1557 = vsel %vm851, %v1526, 0
        %v1560 = vsel %vm851, %v1527, 0
        %v1563 = vsel %vm851, %v1528, 0
        %v1566 = vsel %vm851, %v1529, 0
        %v1569 = vsel %vm851, %v1530, 0
        %v1572 = vsel %vm851, %v1531, 0
        %v1575 = vsel %vm851, %v1532, 0
        %v1578 = vsel %vm851, %v1533, 0
        %v1581 = vsel %vm851, %v1534, 0
        %1583 = vmatprep.subr.bf16.mxu0 0
        %1584 = vmatpush1.bf16.msra.mxu0 %v848
        %1585 = vmatprep.subr.bf16.mxu0 0
        %1586 = vmatpush1.bf16.msra.mxu0 %v905
        %1587 = vmatprep.subr.bf16.mxu0 0
        %1588 = vmatpush1.bf16.msra.mxu0 0
        %1589 = vmatprep.subr.bf16.mxu0 0
        %1590 = vmatpush1.bf16.msra.mxu0 0
        %1591 = vmatprep.subr.bf16.mxu0 0
        %1592 = vmatpush1.bf16.msra.mxu0 0
        %1593 = vmatprep.subr.bf16.mxu0 0
        %1594 = vmatpush1.bf16.msra.mxu0 0
        %1595 = vmatprep.subr.bf16.mxu0 0
        %1596 = vmatpush1.bf16.msra.mxu0 0
        %1597 = vmatprep.subr.bf16.mxu0 0
        %1598 = vmatpush1.bf16.msra.mxu0 0
        %1599 = vmatprep.subr.bf16.mxu0 0
        %1600 = vmatpush1.bf16.msra.mxu0 0
        %1601 = vmatprep.subr.bf16.mxu0 0
        %1602 = vmatpush1.bf16.msra.mxu0 0
        %1603 = vmatprep.subr.bf16.mxu0 0
        %1604 = vmatpush1.bf16.msra.mxu0 0
        %1605 = vmatprep.subr.bf16.mxu0 0
        %1606 = vmatpush1.bf16.msra.mxu0 0
        %1607 = vmatprep.subr.bf16.mxu0 0
        %1608 = vmatpush1.bf16.msra.mxu0 0
        %1609 = vmatprep.subr.bf16.mxu0 0
        %1610 = vmatpush1.bf16.msra.mxu0 0
        %1611 = vmatprep.subr.bf16.mxu0 0
        %1612 = vmatpush1.bf16.msra.mxu0 0
        %1613 = vmatprep.subr.bf16.mxu0 0
        %1614 = vmatpush1.bf16.msra.mxu0 0
        %1615 = vmatprep.mubr.bf16.mxu0 0
        %1616 = vmatmul.mubr.bf16.gmra.mrb[0].mxu0 %v1536
        %v1617 = vpop.f32.mrb[0].mxu0
        %v1618 = vadd.f32 0.0, %v1617
        %v1619 = vpop.f32.mrb[0].mxu0
        %v1620 = vpop.f32.mrb[0].mxu0
        %v1621 = vadd.f32 0.0, %v1620
        %v1622 = vpop.f32.mrb[0].mxu0
        %1623 = vmatprep.mubr.bf16.mxu0 0
        %1624 = vmatmul.mubr.bf16.gmra.mrb[0].mxu0 %v1539
        %v1625 = vpop.f32.mrb[0].mxu0
        %v1626 = vadd.f32 0.0, %v1625
        %v1627 = vpop.f32.mrb[0].mxu0
        %v1628 = vpop.f32.mrb[0].mxu0
        %v1629 = vadd.f32 0.0, %v1628
        %v1630 = vpop.f32.mrb[0].mxu0
        %1631 = vmatprep.mubr.bf16.mxu0 0
        %1632 = vmatmul.mubr.bf16.gmra.mrb[0].mxu0 %v1542
        %v1633 = vpop.f32.mrb[0].mxu0
        %v1634 = vadd.f32 0.0, %v1633
        %v1635 = vpop.f32.mrb[0].mxu0
        %v1636 = vpop.f32.mrb[0].mxu0
        %v1637 = vadd.f32 0.0, %v1636
        %v1638 = vpop.f32.mrb[0].mxu0
        %1639 = vmatprep.mubr.bf16.mxu0 0
        %1640 = vmatmul.mubr.bf16.gmra.mrb[0].mxu0 %v1545
        %v1641 = vpop.f32.mrb[0].mxu0
        %v1642 = vadd.f32 0.0, %v1641
        %v1643 = vpop.f32.mrb[0].mxu0
        %v1644 = vpop.f32.mrb[0].mxu0
        %v1645 = vadd.f32 0.0, %v1644
        %v1646 = vpop.f32.mrb[0].mxu0
        %1647 = vmatprep.mubr.bf16.mxu0 0
        %1648 = vmatmul.mubr.bf16.gmra.mrb[0].mxu0 %v1548
        %v1649 = vpop.f32.mrb[0].mxu0
        %v1650 = vadd.f32 0.0, %v1649
        %v1651 = vpop.f32.mrb[0].mxu0
        %v1652 = vpop.f32.mrb[0].mxu0
        %v1653 = vadd.f32 0.0, %v1652
        %v1654 = vpop.f32.mrb[0].mxu0
        %1655 = vmatprep.mubr.bf16.mxu0 0
        %1656 = vmatmul.mubr.bf16.gmra.mrb[0].mxu0 %v1551
        %v1657 = vpop.f32.mrb[0].mxu0
        %v1658 = vadd.f32 0.0, %v1657
        %v1659 = vpop.f32.mrb[0].mxu0
        %v1660 = vpop.f32.mrb[0].mxu0
        %v1661 = vadd.f32 0.0, %v1660
        %v1662 = vpop.f32.mrb[0].mxu0
        %1663 = vmatprep.mubr.bf16.mxu0 0
        %1664 = vmatmul.mubr.bf16.gmra.mrb[0].mxu0 %v1554
        %v1665 = vpop.f32.mrb[0].mxu0
        %v1666 = vadd.f32 0.0, %v1665
        %v1667 = vpop.f32.mrb[0].mxu0
        %v1668 = vpop.f32.mrb[0].mxu0
        %v1669 = vadd.f32 0.0, %v1668
        %v1670 = vpop.f32.mrb[0].mxu0
        %1671 = vmatprep.mubr.bf16.mxu0 0
        %1672 = vmatmul.mubr.bf16.gmra.mrb[0].mxu0 %v1557
        %v1673 = vpop.f32.mrb[0].mxu0
        %v1674 = vadd.f32 0.0, %v1673
        %v1675 = vpop.f32.mrb[0].mxu0
        %v1676 = vpop.f32.mrb[0].mxu0
        %v1677 = vadd.f32 0.0, %v1676
        %v1678 = vpop.f32.mrb[0].mxu0
        %1679 = vmatprep.mubr.bf16.mxu0 0
        %1680 = vmatmul.mubr.bf16.gmra.mrb[0].mxu0 %v1560
        %v1681 = vpop.f32.mrb[0].mxu0
        %v1682 = vadd.f32 0.0, %v1681
        %v1683 = vpop.f32.mrb[0].mxu0
        %v1684 = vpop.f32.mrb[0].mxu0
        %v1685 = vadd.f32 0.0, %v1684
        %v1686 = vpop.f32.mrb[0].mxu0
        %1687 = vmatprep.mubr.bf16.mxu0 0
        %1688 = vmatmul.mubr.bf16.gmra.mrb[0].mxu0 %v1563
        %v1689 = vpop.f32.mrb[0].mxu0
        %v1690 = vadd.f32 0.0, %v1689
        %v1691 = vpop.f32.mrb[0].mxu0
        %v1692 = vpop.f32.mrb[0].mxu0
        %v1693 = vadd.f32 0.0, %v1692
        %v1694 = vpop.f32.mrb[0].mxu0
        %1695 = vmatprep.mubr.bf16.mxu0 0
        %1696 = vmatmul.mubr.bf16.gmra.mrb[0].mxu0 %v1566
        %v1697 = vpop.f32.mrb[0].mxu0
        %v1698 = vadd.f32 0.0, %v1697
        %v1699 = vpop.f32.mrb[0].mxu0
        %v1700 = vpop.f32.mrb[0].mxu0
        %v1701 = vadd.f32 0.0, %v1700
        %v1702 = vpop.f32.mrb[0].mxu0
        %1703 = vmatprep.mubr.bf16.mxu0 0
        %1704 = vmatmul.mubr.bf16.gmra.mrb[0].mxu0 %v1569
        %v1705 = vpop.f32.mrb[0].mxu0
        %v1706 = vadd.f32 0.0, %v1705
        %v1707 = vpop.f32.mrb[0].mxu0
        %v1708 = vpop.f32.mrb[0].mxu0
        %v1709 = vadd.f32 0.0, %v1708
        %v1710 = vpop.f32.mrb[0].mxu0
        %1711 = vmatprep.mubr.bf16.mxu0 0
        %1712 = vmatmul.mubr.bf16.gmra.mrb[0].mxu0 %v1572
        %v1713 = vpop.f32.mrb[0].mxu0
        %v1714 = vadd.f32 0.0, %v1713
        %v1715 = vpop.f32.mrb[0].mxu0
        %v1716 = vpop.f32.mrb[0].mxu0
        %v1717 = vadd.f32 0.0, %v1716
        %v1718 = vpop.f32.mrb[0].mxu0
        %1719 = vmatprep.mubr.bf16.mxu0 0
        %1720 = vmatmul.mubr.bf16.gmra.mrb[0].mxu0 %v1575
        %v1721 = vpop.f32.mrb[0].mxu0
        %v1722 = vadd.f32 0.0, %v1721
        %v1723 = vpop.f32.mrb[0].mxu0
        %v1724 = vpop.f32.mrb[0].mxu0
        %v1725 = vadd.f32 0.0, %v1724
        %v1726 = vpop.f32.mrb[0].mxu0
        %1727 = vmatprep.mubr.bf16.mxu0 0
        %1728 = vmatmul.mubr.bf16.gmra.mrb[0].mxu0 %v1578
        %v1729 = vpop.f32.mrb[0].mxu0
        %v1730 = vadd.f32 0.0, %v1729
        %v1731 = vpop.f32.mrb[0].mxu0
        %v1732 = vpop.f32.mrb[0].mxu0
        %v1733 = vadd.f32 0.0, %v1732
        %v1734 = vpop.f32.mrb[0].mxu0
        %1735 = vmatprep.mubr.bf16.mxu0 0
        %1736 = vmatmul.mubr.bf16.gmra.mrb[0].mxu0 %v1581
        %v1737 = vpop.f32.mrb[0].mxu0
        %v1738 = vadd.f32 0.0, %v1737
        %v1739 = vpop.f32.mrb[0].mxu0
        %v1740 = vpop.f32.mrb[0].mxu0
        %v1741 = vadd.f32 0.0, %v1740
        %v1742 = vpop.f32.mrb[0].mxu0
        %1743 = vdwg.mxu0
        %v1744 = vmax.f32 %v1390, %v1618
        %v1745 = vmax.f32 %v1391, %v1621
        %v1746 = vmax.f32 %v1392, %v1626
        %v1747 = vmax.f32 %v1393, %v1629
        %v1748 = vmax.f32 %v1394, %v1634
        %v1749 = vmax.f32 %v1395, %v1637
        %v1750 = vmax.f32 %v1396, %v1642
        %v1751 = vmax.f32 %v1397, %v1645
        %v1752 = vmax.f32 %v1398, %v1650
        %v1753 = vmax.f32 %v1399, %v1653
        %v1754 = vmax.f32 %v1400, %v1658
        %v1755 = vmax.f32 %v1401, %v1661
        %v1756 = vmax.f32 %v1402, %v1666
        %v1757 = vmax.f32 %v1403, %v1669
        %v1758 = vmax.f32 %v1404, %v1674
        %v1759 = vmax.f32 %v1405, %v1677
        %v1760 = vmax.f32 %v1406, %v1682
        %v1761 = vmax.f32 %v1407, %v1685
        %v1762 = vmax.f32 %v1408, %v1690
        %v1763 = vmax.f32 %v1409, %v1693
        %v1764 = vmax.f32 %v1410, %v1698
        %v1765 = vmax.f32 %v1411, %v1701
        %v1766 = vmax.f32 %v1412, %v1706
        %v1767 = vmax.f32 %v1413, %v1709
        %v1768 = vmax.f32 %v1414, %v1714
        %v1769 = vmax.f32 %v1415, %v1717
        %v1770 = vmax.f32 %v1416, %v1722
        %v1771 = vmax.f32 %v1417, %v1725
        %v1772 = vmax.f32 %v1418, %v1730
        %v1773 = vmax.f32 %v1419, %v1733
        %v1774 = vmax.f32 %v1420, %v1738
        %v1775 = vmax.f32 %v1421, %v1741
        %s1776 = scalar_lea.vmem %s695, 384 [#allocation2]
        %v1777 = vld [vmem:[%s1776] sm:$0xf]
        %v1778 = vld [vmem:[%s1776 + $0x4] sm:$0xf]
        %v1779 = vld [vmem:[%s1776 + $0x8] sm:$0xf]
        %v1780 = vld [vmem:[%s1776 + $0xc] sm:$0xf]
        %v1781 = vld [vmem:[%s1776 + $0x10] sm:$0xf]
        %v1782 = vld [vmem:[%s1776 + $0x14] sm:$0xf]
        %v1783 = vld [vmem:[%s1776 + $0x18] sm:$0xf]
        %v1784 = vld [vmem:[%s1776 + $0x1c] sm:$0xf]
        %v1785 = vld [vmem:[%s1776 + $0x20] sm:$0xf]
        %v1786 = vld [vmem:[%s1776 + $0x24] sm:$0xf]
        %v1787 = vld [vmem:[%s1776 + $0x28] sm:$0xf]
        %v1788 = vld [vmem:[%s1776 + $0x2c] sm:$0xf]
        %v1789 = vld [vmem:[%s1776 + $0x30] sm:$0xf]
        %v1790 = vld [vmem:[%s1776 + $0x34] sm:$0xf]
        %v1791 = vld [vmem:[%s1776 + $0x38] sm:$0xf]
        %v1792 = vld [vmem:[%s1776 + $0x3c] sm:$0xf]
        %v1793 = vld [vmem:[%s1776 + $0x40] sm:$0xf]
        %v1794 = vld [vmem:[%s1776 + $0x44] sm:$0xf]
        %v1795 = vld [vmem:[%s1776 + $0x48] sm:$0xf]
        %v1796 = vld [vmem:[%s1776 + $0x4c] sm:$0xf]
        %v1797 = vld [vmem:[%s1776 + $0x50] sm:$0xf]
        %v1798 = vld [vmem:[%s1776 + $0x54] sm:$0xf]
        %v1799 = vld [vmem:[%s1776 + $0x58] sm:$0xf]
        %v1800 = vld [vmem:[%s1776 + $0x5c] sm:$0xf]
        %v1801 = vld [vmem:[%s1776 + $0x60] sm:$0xf]
        %v1802 = vld [vmem:[%s1776 + $0x64] sm:$0xf]
        %v1803 = vld [vmem:[%s1776 + $0x68] sm:$0xf]
        %v1804 = vld [vmem:[%s1776 + $0x6c] sm:$0xf]
        %v1805 = vld [vmem:[%s1776 + $0x70] sm:$0xf]
        %v1806 = vld [vmem:[%s1776 + $0x74] sm:$0xf]
        %v1807 = vld [vmem:[%s1776 + $0x78] sm:$0xf]
        %v1808 = vld [vmem:[%s1776 + $0x7c] sm:$0xf]
        %v1841 = vunpack.c.l.b16 %v1777
        %v1842 = vunpack.c.l.b16 %v1778
        %v1843 = vunpack.c.l.b16 %v1779
        %v1844 = vunpack.c.l.b16 %v1780
        %v1845 = vunpack.c.l.b16 %v1781
        %v1846 = vunpack.c.l.b16 %v1782
        %v1847 = vunpack.c.l.b16 %v1783
        %v1848 = vunpack.c.l.b16 %v1784
        %v1849 = vunpack.c.l.b16 %v1785
        %v1850 = vunpack.c.l.b16 %v1786
        %v1851 = vunpack.c.l.b16 %v1787
        %v1852 = vunpack.c.l.b16 %v1788
        %v1853 = vunpack.c.l.b16 %v1789
        %v1854 = vunpack.c.l.b16 %v1790
        %v1855 = vunpack.c.l.b16 %v1791
        %v1856 = vunpack.c.l.b16 %v1792
        %v1857 = vunpack.c.l.b16 %v1793
        %v1858 = vunpack.c.l.b16 %v1794
        %v1859 = vunpack.c.l.b16 %v1795
        %v1860 = vunpack.c.l.b16 %v1796
        %v1861 = vunpack.c.l.b16 %v1797
        %v1862 = vunpack.c.l.b16 %v1798
        %v1863 = vunpack.c.l.b16 %v1799
        %v1864 = vunpack.c.l.b16 %v1800
        %v1865 = vunpack.c.l.b16 %v1801
        %v1866 = vunpack.c.l.b16 %v1802
        %v1867 = vunpack.c.l.b16 %v1803
        %v1868 = vunpack.c.l.b16 %v1804
        %v1869 = vunpack.c.l.b16 %v1805
        %v1870 = vunpack.c.l.b16 %v1806
        %v1871 = vunpack.c.l.b16 %v1807
        %v1872 = vunpack.c.l.b16 %v1808
        %v1873 = vpack.c.b16 %v1842, %v1841
        %v1874 = vpack.c.b16 %v1844, %v1843
        %v1875 = vpack.c.b16 %v1846, %v1845
        %v1876 = vpack.c.b16 %v1848, %v1847
        %v1877 = vpack.c.b16 %v1850, %v1849
        %v1878 = vpack.c.b16 %v1852, %v1851
        %v1879 = vpack.c.b16 %v1854, %v1853
        %v1880 = vpack.c.b16 %v1856, %v1855
        %v1881 = vpack.c.b16 %v1858, %v1857
        %v1882 = vpack.c.b16 %v1860, %v1859
        %v1883 = vpack.c.b16 %v1862, %v1861
        %v1884 = vpack.c.b16 %v1864, %v1863
        %v1885 = vpack.c.b16 %v1866, %v1865
        %v1886 = vpack.c.b16 %v1868, %v1867
        %v1887 = vpack.c.b16 %v1870, %v1869
        %v1888 = vpack.c.b16 %v1872, %v1871
        %v1890 = vsel %vm851, %v1873, 0
        %v1893 = vsel %vm851, %v1874, 0
        %v1896 = vsel %vm851, %v1875, 0
        %v1899 = vsel %vm851, %v1876, 0
        %v1902 = vsel %vm851, %v1877, 0
        %v1905 = vsel %vm851, %v1878, 0
        %v1908 = vsel %vm851, %v1879, 0
        %v1911 = vsel %vm851, %v1880, 0
        %v1914 = vsel %vm851, %v1881, 0
        %v1917 = vsel %vm851, %v1882, 0
        %v1920 = vsel %vm851, %v1883, 0
        %v1923 = vsel %vm851, %v1884, 0
        %v1926 = vsel %vm851, %v1885, 0
        %v1929 = vsel %vm851, %v1886, 0
        %v1932 = vsel %vm851, %v1887, 0
        %v1935 = vsel %vm851, %v1888, 0
        %1937 = vmatprep.subr.bf16.mxu0 0
        %1938 = vmatpush1.bf16.msra.mxu0 %v848
        %1939 = vmatprep.subr.bf16.mxu0 0
        %1940 = vmatpush1.bf16.msra.mxu0 %v905
        %1941 = vmatprep.subr.bf16.mxu0 0
        %1942 = vmatpush1.bf16.msra.mxu0 0
        %1943 = vmatprep.subr.bf16.mxu0 0
        %1944 = vmatpush1.bf16.msra.mxu0 0
        %1945 = vmatprep.subr.bf16.mxu0 0
        %1946 = vmatpush1.bf16.msra.mxu0 0
        %1947 = vmatprep.subr.bf16.mxu0 0
        %1948 = vmatpush1.bf16.msra.mxu0 0
        %1949 = vmatprep.subr.bf16.mxu0 0
        %1950 = vmatpush1.bf16.msra.mxu0 0
        %1951 = vmatprep.subr.bf16.mxu0 0
        %1952 = vmatpush1.bf16.msra.mxu0 0
        %1953 = vmatprep.subr.bf16.mxu0 0
        %1954 = vmatpush1.bf16.msra.mxu0 0
        %1955 = vmatprep.subr.bf16.mxu0 0
        %1956 = vmatpush1.bf16.msra.mxu0 0
        %1957 = vmatprep.subr.bf16.mxu0 0
        %1958 = vmatpush1.bf16.msra.mxu0 0
        %1959 = vmatprep.subr.bf16.mxu0 0
        %1960 = vmatpush1.bf16.msra.mxu0 0
        %1961 = vmatprep.subr.bf16.mxu0 0
        %1962 = vmatpush1.bf16.msra.mxu0 0
        %1963 = vmatprep.subr.bf16.mxu0 0
        %1964 = vmatpush1.bf16.msra.mxu0 0
        %1965 = vmatprep.subr.bf16.mxu0 0
        %1966 = vmatpush1.bf16.msra.mxu0 0
        %1967 = vmatprep.subr.bf16.mxu0 0
        %1968 = vmatpush1.bf16.msra.mxu0 0
        %1969 = vmatprep.mubr.bf16.mxu0 0
        %1970 = vmatmul.mubr.bf16.gmra.mrb[0].mxu0 %v1890
        %v1971 = vpop.f32.mrb[0].mxu0
        %v1972 = vadd.f32 0.0, %v1971
        %v1973 = vpop.f32.mrb[0].mxu0
        %v1974 = vpop.f32.mrb[0].mxu0
        %v1975 = vadd.f32 0.0, %v1974
        %v1976 = vpop.f32.mrb[0].mxu0
        %1977 = vmatprep.mubr.bf16.mxu0 0
        %1978 = vmatmul.mubr.bf16.gmra.mrb[0].mxu0 %v1893
        %v1979 = vpop.f32.mrb[0].mxu0
        %v1980 = vadd.f32 0.0, %v1979
        %v1981 = vpop.f32.mrb[0].mxu0
        %v1982 = vpop.f32.mrb[0].mxu0
        %v1983 = vadd.f32 0.0, %v1982
        %v1984 = vpop.f32.mrb[0].mxu0
        %1985 = vmatprep.mubr.bf16.mxu0 0
        %1986 = vmatmul.mubr.bf16.gmra.mrb[0].mxu0 %v1896
        %v1987 = vpop.f32.mrb[0].mxu0
        %v1988 = vadd.f32 0.0, %v1987
        %v1989 = vpop.f32.mrb[0].mxu0
        %v1990 = vpop.f32.mrb[0].mxu0
        %v1991 = vadd.f32 0.0, %v1990
        %v1992 = vpop.f32.mrb[0].mxu0
        %1993 = vmatprep.mubr.bf16.mxu0 0
        %1994 = vmatmul.mubr.bf16.gmra.mrb[0].mxu0 %v1899
        %v1995 = vpop.f32.mrb[0].mxu0
        %v1996 = vadd.f32 0.0, %v1995
        %v1997 = vpop.f32.mrb[0].mxu0
        %v1998 = vpop.f32.mrb[0].mxu0
        %v1999 = vadd.f32 0.0, %v1998
        %v2000 = vpop.f32.mrb[0].mxu0
        %2001 = vmatprep.mubr.bf16.mxu0 0
        %2002 = vmatmul.mubr.bf16.gmra.mrb[0].mxu0 %v1902
        %v2003 = vpop.f32.mrb[0].mxu0
        %v2004 = vadd.f32 0.0, %v2003
        %v2005 = vpop.f32.mrb[0].mxu0
        %v2006 = vpop.f32.mrb[0].mxu0
        %v2007 = vadd.f32 0.0, %v2006
        %v2008 = vpop.f32.mrb[0].mxu0
        %2009 = vmatprep.mubr.bf16.mxu0 0
        %2010 = vmatmul.mubr.bf16.gmra.mrb[0].mxu0 %v1905
        %v2011 = vpop.f32.mrb[0].mxu0
        %v2012 = vadd.f32 0.0, %v2011
        %v2013 = vpop.f32.mrb[0].mxu0
        %v2014 = vpop.f32.mrb[0].mxu0
        %v2015 = vadd.f32 0.0, %v2014
        %v2016 = vpop.f32.mrb[0].mxu0
        %2017 = vmatprep.mubr.bf16.mxu0 0
        %2018 = vmatmul.mubr.bf16.gmra.mrb[0].mxu0 %v1908
        %v2019 = vpop.f32.mrb[0].mxu0
        %v2020 = vadd.f32 0.0, %v2019
        %v2021 = vpop.f32.mrb[0].mxu0
        %v2022 = vpop.f32.mrb[0].mxu0
        %v2023 = vadd.f32 0.0, %v2022
        %v2024 = vpop.f32.mrb[0].mxu0
        %2025 = vmatprep.mubr.bf16.mxu0 0
        %2026 = vmatmul.mubr.bf16.gmra.mrb[0].mxu0 %v1911
        %v2027 = vpop.f32.mrb[0].mxu0
        %v2028 = vadd.f32 0.0, %v2027
        %v2029 = vpop.f32.mrb[0].mxu0
        %v2030 = vpop.f32.mrb[0].mxu0
        %v2031 = vadd.f32 0.0, %v2030
        %v2032 = vpop.f32.mrb[0].mxu0
        %2033 = vmatprep.mubr.bf16.mxu0 0
        %2034 = vmatmul.mubr.bf16.gmra.mrb[0].mxu0 %v1914
        %v2035 = vpop.f32.mrb[0].mxu0
        %v2036 = vadd.f32 0.0, %v2035
        %v2037 = vpop.f32.mrb[0].mxu0
        %v2038 = vpop.f32.mrb[0].mxu0
        %v2039 = vadd.f32 0.0, %v2038
        %v2040 = vpop.f32.mrb[0].mxu0
        %2041 = vmatprep.mubr.bf16.mxu0 0
        %2042 = vmatmul.mubr.bf16.gmra.mrb[0].mxu0 %v1917
        %v2043 = vpop.f32.mrb[0].mxu0
        %v2044 = vadd.f32 0.0, %v2043
        %v2045 = vpop.f32.mrb[0].mxu0
        %v2046 = vpop.f32.mrb[0].mxu0
        %v2047 = vadd.f32 0.0, %v2046
        %v2048 = vpop.f32.mrb[0].mxu0
        %2049 = vmatprep.mubr.bf16.mxu0 0
        %2050 = vmatmul.mubr.bf16.gmra.mrb[0].mxu0 %v1920
        %v2051 = vpop.f32.mrb[0].mxu0
        %v2052 = vadd.f32 0.0, %v2051
        %v2053 = vpop.f32.mrb[0].mxu0
        %v2054 = vpop.f32.mrb[0].mxu0
        %v2055 = vadd.f32 0.0, %v2054
        %v2056 = vpop.f32.mrb[0].mxu0
        %2057 = vmatprep.mubr.bf16.mxu0 0
        %2058 = vmatmul.mubr.bf16.gmra.mrb[0].mxu0 %v1923
        %v2059 = vpop.f32.mrb[0].mxu0
        %v2060 = vadd.f32 0.0, %v2059
        %v2061 = vpop.f32.mrb[0].mxu0
        %v2062 = vpop.f32.mrb[0].mxu0
        %v2063 = vadd.f32 0.0, %v2062
        %v2064 = vpop.f32.mrb[0].mxu0
        %2065 = vmatprep.mubr.bf16.mxu0 0
        %2066 = vmatmul.mubr.bf16.gmra.mrb[0].mxu0 %v1926
        %v2067 = vpop.f32.mrb[0].mxu0
        %v2068 = vadd.f32 0.0, %v2067
        %v2069 = vpop.f32.mrb[0].mxu0
        %v2070 = vpop.f32.mrb[0].mxu0
        %v2071 = vadd.f32 0.0, %v2070
        %v2072 = vpop.f32.mrb[0].mxu0
        %2073 = vmatprep.mubr.bf16.mxu0 0
        %2074 = vmatmul.mubr.bf16.gmra.mrb[0].mxu0 %v1929
        %v2075 = vpop.f32.mrb[0].mxu0
        %v2076 = vadd.f32 0.0, %v2075
        %v2077 = vpop.f32.mrb[0].mxu0
        %v2078 = vpop.f32.mrb[0].mxu0
        %v2079 = vadd.f32 0.0, %v2078
        %v2080 = vpop.f32.mrb[0].mxu0
        %2081 = vmatprep.mubr.bf16.mxu0 0
        %2082 = vmatmul.mubr.bf16.gmra.mrb[0].mxu0 %v1932
        %v2083 = vpop.f32.mrb[0].mxu0
        %v2084 = vadd.f32 0.0, %v2083
        %v2085 = vpop.f32.mrb[0].mxu0
        %v2086 = vpop.f32.mrb[0].mxu0
        %v2087 = vadd.f32 0.0, %v2086
        %v2088 = vpop.f32.mrb[0].mxu0
        %2089 = vmatprep.mubr.bf16.mxu0 0
        %2090 = vmatmul.mubr.bf16.gmra.mrb[0].mxu0 %v1935
        %v2091 = vpop.f32.mrb[0].mxu0
        %v2092 = vadd.f32 0.0, %v2091
        %v2093 = vpop.f32.mrb[0].mxu0
        %v2094 = vpop.f32.mrb[0].mxu0
        %v2095 = vadd.f32 0.0, %v2094
        %v2096 = vpop.f32.mrb[0].mxu0
        %2097 = vdwg.mxu0
        %v2098 = vmax.f32 %v1744, %v1972
        %v2099 = vmax.f32 %v1745, %v1975
        %v2100 = vmax.f32 %v1746, %v1980
        %v2101 = vmax.f32 %v1747, %v1983
        %v2102 = vmax.f32 %v1748, %v1988
        %v2103 = vmax.f32 %v1749, %v1991
        %v2104 = vmax.f32 %v1750, %v1996
        %v2105 = vmax.f32 %v1751, %v1999
        %v2106 = vmax.f32 %v1752, %v2004
        %v2107 = vmax.f32 %v1753, %v2007
        %v2108 = vmax.f32 %v1754, %v2012
        %v2109 = vmax.f32 %v1755, %v2015
        %v2110 = vmax.f32 %v1756, %v2020
        %v2111 = vmax.f32 %v1757, %v2023
        %v2112 = vmax.f32 %v1758, %v2028
        %v2113 = vmax.f32 %v1759, %v2031
        %v2114 = vmax.f32 %v1760, %v2036
        %v2115 = vmax.f32 %v1761, %v2039
        %v2116 = vmax.f32 %v1762, %v2044
        %v2117 = vmax.f32 %v1763, %v2047
        %v2118 = vmax.f32 %v1764, %v2052
        %v2119 = vmax.f32 %v1765, %v2055
        %v2120 = vmax.f32 %v1766, %v2060
        %v2121 = vmax.f32 %v1767, %v2063
        %v2122 = vmax.f32 %v1768, %v2068
        %v2123 = vmax.f32 %v1769, %v2071
        %v2124 = vmax.f32 %v1770, %v2076
        %v2125 = vmax.f32 %v1771, %v2079
        %v2126 = vmax.f32 %v1772, %v2084
        %v2127 = vmax.f32 %v1773, %v2087
        %v2128 = vmax.f32 %v1774, %v2092
        %v2129 = vmax.f32 %v1775, %v2095
        %v2130 = vld [vmem:[%s2] sm:$0x1]
        %v2132 = vlaneseq
        %v2133 = vshrl.u32 %v2132, 7
        %v2134 = vsub.s32 0, %v2133
        %v2135 = vrot.slane %v2130, %v2134
        %v2137 = vadd.f32 %v2098, %v2135
        %v2138 = vadd.f32 %v2099, %v2135
        %v2139 = vadd.f32 %v2100, %v2135
        %v2140 = vadd.f32 %v2101, %v2135
        %v2141 = vadd.f32 %v2102, %v2135
        %v2142 = vadd.f32 %v2103, %v2135
        %v2143 = vadd.f32 %v2104, %v2135
        %v2144 = vadd.f32 %v2105, %v2135
        %v2145 = vadd.f32 %v2106, %v2135
        %v2146 = vadd.f32 %v2107, %v2135
        %v2147 = vadd.f32 %v2108, %v2135
        %v2148 = vadd.f32 %v2109, %v2135
        %v2149 = vadd.f32 %v2110, %v2135
        %v2150 = vadd.f32 %v2111, %v2135
        %v2151 = vadd.f32 %v2112, %v2135
        %v2152 = vadd.f32 %v2113, %v2135
        %v2153 = vadd.f32 %v2114, %v2135
        %v2154 = vadd.f32 %v2115, %v2135
        %v2155 = vadd.f32 %v2116, %v2135
        %v2156 = vadd.f32 %v2117, %v2135
        %v2157 = vadd.f32 %v2118, %v2135
        %v2158 = vadd.f32 %v2119, %v2135
        %v2159 = vadd.f32 %v2120, %v2135
        %v2160 = vadd.f32 %v2121, %v2135
        %v2161 = vadd.f32 %v2122, %v2135
        %v2162 = vadd.f32 %v2123, %v2135
        %v2163 = vadd.f32 %v2124, %v2135
        %v2164 = vadd.f32 %v2125, %v2135
        %v2165 = vadd.f32 %v2126, %v2135
        %v2166 = vadd.f32 %v2127, %v2135
        %v2167 = vadd.f32 %v2128, %v2135
        %v2168 = vadd.f32 %v2129, %v2135
        %v2169 = vmax.f32 %v2137, 0.0
        %v2170 = vmax.f32 %v2138, 0.0
        %v2171 = vmax.f32 %v2139, 0.0
        %v2172 = vmax.f32 %v2140, 0.0
        %v2173 = vmax.f32 %v2141, 0.0
        %v2174 = vmax.f32 %v2142, 0.0
        %v2175 = vmax.f32 %v2143, 0.0
        %v2176 = vmax.f32 %v2144, 0.0
        %v2177 = vmax.f32 %v2145, 0.0
        %v2178 = vmax.f32 %v2146, 0.0
        %v2179 = vmax.f32 %v2147, 0.0
        %v2180 = vmax.f32 %v2148, 0.0
        %v2181 = vmax.f32 %v2149, 0.0
        %v2182 = vmax.f32 %v2150, 0.0
        %v2183 = vmax.f32 %v2151, 0.0
        %v2184 = vmax.f32 %v2152, 0.0
        %v2185 = vmax.f32 %v2153, 0.0
        %v2186 = vmax.f32 %v2154, 0.0
        %v2187 = vmax.f32 %v2155, 0.0
        %v2188 = vmax.f32 %v2156, 0.0
        %v2189 = vmax.f32 %v2157, 0.0
        %v2190 = vmax.f32 %v2158, 0.0
        %v2191 = vmax.f32 %v2159, 0.0
        %v2192 = vmax.f32 %v2160, 0.0
        %v2193 = vmax.f32 %v2161, 0.0
        %v2194 = vmax.f32 %v2162, 0.0
        %v2195 = vmax.f32 %v2163, 0.0
        %v2196 = vmax.f32 %v2164, 0.0
        %v2197 = vmax.f32 %v2165, 0.0
        %v2198 = vmax.f32 %v2166, 0.0
        %v2199 = vmax.f32 %v2167, 0.0
        %v2200 = vmax.f32 %v2168, 0.0
        %v2201 = vpack.c.bf16 %v2170, %v2169
        %v2202 = vpack.c.bf16 %v2172, %v2171
        %v2203 = vpack.c.bf16 %v2174, %v2173
        %v2204 = vpack.c.bf16 %v2176, %v2175
        %v2205 = vpack.c.bf16 %v2178, %v2177
        %v2206 = vpack.c.bf16 %v2180, %v2179
        %v2207 = vpack.c.bf16 %v2182, %v2181
        %v2208 = vpack.c.bf16 %v2184, %v2183
        %v2209 = vpack.c.bf16 %v2186, %v2185
        %v2210 = vpack.c.bf16 %v2188, %v2187
        %v2211 = vpack.c.bf16 %v2190, %v2189
        %v2212 = vpack.c.bf16 %v2192, %v2191
        %v2213 = vpack.c.bf16 %v2194, %v2193
        %v2214 = vpack.c.bf16 %v2196, %v2195
        %v2215 = vpack.c.bf16 %v2198, %v2197
        %v2216 = vpack.c.bf16 %v2200, %v2199
        %v2233 = vunpack.c.l.b16 %v2201
        %v2234 = vunpack.c.h.b16 %v2201
        %v2235 = vunpack.c.l.b16 %v2202
        %v2236 = vunpack.c.h.b16 %v2202
        %v2237 = vunpack.c.l.b16 %v2203
        %v2238 = vunpack.c.h.b16 %v2203
        %v2239 = vunpack.c.l.b16 %v2204
        %v2240 = vunpack.c.h.b16 %v2204
        %v2241 = vunpack.c.l.b16 %v2205
        %v2242 = vunpack.c.h.b16 %v2205
        %v2243 = vunpack.c.l.b16 %v2206
        %v2244 = vunpack.c.h.b16 %v2206
        %v2245 = vunpack.c.l.b16 %v2207
        %v2246 = vunpack.c.h.b16 %v2207
        %v2247 = vunpack.c.l.b16 %v2208
        %v2248 = vunpack.c.h.b16 %v2208
        %v2249 = vunpack.c.l.b16 %v2209
        %v2250 = vunpack.c.h.b16 %v2209
        %v2251 = vunpack.c.l.b16 %v2210
        %v2252 = vunpack.c.h.b16 %v2210
        %v2253 = vunpack.c.l.b16 %v2211
        %v2254 = vunpack.c.h.b16 %v2211
        %v2255 = vunpack.c.l.b16 %v2212
        %v2256 = vunpack.c.h.b16 %v2212
        %v2257 = vunpack.c.l.b16 %v2213
        %v2258 = vunpack.c.h.b16 %v2213
        %v2259 = vunpack.c.l.b16 %v2214
        %v2260 = vunpack.c.h.b16 %v2214
        %v2261 = vunpack.c.l.b16 %v2215
        %v2262 = vunpack.c.h.b16 %v2215
        %v2263 = vunpack.c.l.b16 %v2216
        %v2264 = vunpack.c.h.b16 %v2216
        %v2265 = vpack.c.b16 %v2233, %v2233
        %v2266 = vpack.c.b16 %v2234, %v2234
        %v2267 = vpack.c.b16 %v2235, %v2235
        %v2268 = vpack.c.b16 %v2236, %v2236
        %v2269 = vpack.c.b16 %v2237, %v2237
        %v2270 = vpack.c.b16 %v2238, %v2238
        %v2271 = vpack.c.b16 %v2239, %v2239
        %v2272 = vpack.c.b16 %v2240, %v2240
        %v2273 = vpack.c.b16 %v2241, %v2241
        %v2274 = vpack.c.b16 %v2242, %v2242
        %v2275 = vpack.c.b16 %v2243, %v2243
        %v2276 = vpack.c.b16 %v2244, %v2244
        %v2277 = vpack.c.b16 %v2245, %v2245
        %v2278 = vpack.c.b16 %v2246, %v2246
        %v2279 = vpack.c.b16 %v2247, %v2247
        %v2280 = vpack.c.b16 %v2248, %v2248
        %v2281 = vpack.c.b16 %v2249, %v2249
        %v2282 = vpack.c.b16 %v2250, %v2250
        %v2283 = vpack.c.b16 %v2251, %v2251
        %v2284 = vpack.c.b16 %v2252, %v2252
        %v2285 = vpack.c.b16 %v2253, %v2253
        %v2286 = vpack.c.b16 %v2254, %v2254
        %v2287 = vpack.c.b16 %v2255, %v2255
        %v2288 = vpack.c.b16 %v2256, %v2256
        %v2289 = vpack.c.b16 %v2257, %v2257
        %v2290 = vpack.c.b16 %v2258, %v2258
        %v2291 = vpack.c.b16 %v2259, %v2259
        %v2292 = vpack.c.b16 %v2260, %v2260
        %v2293 = vpack.c.b16 %v2261, %v2261
        %v2294 = vpack.c.b16 %v2262, %v2262
        %v2295 = vpack.c.b16 %v2263, %v2263
        %v2296 = vpack.c.b16 %v2264, %v2264
        %vm2329 = vcmask 125952
        %2330 = vst.msk [vmem:[%s721] sm:$0xf] %vm2329, %v2265
        %2331 = vst.msk [vmem:[%s721 + $0x4] sm:$0xf] %vm2329, %v2266
        %2332 = vst.msk [vmem:[%s721 + $0x8] sm:$0xf] %vm2329, %v2267
        %2333 = vst.msk [vmem:[%s721 + $0xc] sm:$0xf] %vm2329, %v2268
        %2334 = vst.msk [vmem:[%s721 + $0x10] sm:$0xf] %vm2329, %v2269
        %2335 = vst.msk [vmem:[%s721 + $0x14] sm:$0xf] %vm2329, %v2270
        %2336 = vst.msk [vmem:[%s721 + $0x18] sm:$0xf] %vm2329, %v2271
        %2337 = vst.msk [vmem:[%s721 + $0x1c] sm:$0xf] %vm2329, %v2272
        %2338 = vst.msk [vmem:[%s721 + $0x20] sm:$0xf] %vm2329, %v2273
        %2339 = vst.msk [vmem:[%s721 + $0x24] sm:$0xf] %vm2329, %v2274
        %2340 = vst.msk [vmem:[%s721 + $0x28] sm:$0xf] %vm2329, %v2275
        %2341 = vst.msk [vmem:[%s721 + $0x2c] sm:$0xf] %vm2329, %v2276
        %2342 = vst.msk [vmem:[%s721 + $0x30] sm:$0xf] %vm2329, %v2277
        %2343 = vst.msk [vmem:[%s721 + $0x34] sm:$0xf] %vm2329, %v2278
        %2344 = vst.msk [vmem:[%s721 + $0x38] sm:$0xf] %vm2329, %v2279
        %2345 = vst.msk [vmem:[%s721 + $0x3c] sm:$0xf] %vm2329, %v2280
        %2346 = vst.msk [vmem:[%s721 + $0x40] sm:$0xf] %vm2329, %v2281
        %2347 = vst.msk [vmem:[%s721 + $0x44] sm:$0xf] %vm2329, %v2282
        %2348 = vst.msk [vmem:[%s721 + $0x48] sm:$0xf] %vm2329, %v2283
        %2349 = vst.msk [vmem:[%s721 + $0x4c] sm:$0xf] %vm2329, %v2284
        %2350 = vst.msk [vmem:[%s721 + $0x50] sm:$0xf] %vm2329, %v2285
        %2351 = vst.msk [vmem:[%s721 + $0x54] sm:$0xf] %vm2329, %v2286
        %2352 = vst.msk [vmem:[%s721 + $0x58] sm:$0xf] %vm2329, %v2287
        %2353 = vst.msk [vmem:[%s721 + $0x5c] sm:$0xf] %vm2329, %v2288
        %2354 = vst.msk [vmem:[%s721 + $0x60] sm:$0xf] %vm2329, %v2289
        %2355 = vst.msk [vmem:[%s721 + $0x64] sm:$0xf] %vm2329, %v2290
        %2356 = vst.msk [vmem:[%s721 + $0x68] sm:$0xf] %vm2329, %v2291
        %2357 = vst.msk [vmem:[%s721 + $0x6c] sm:$0xf] %vm2329, %v2292
        %2358 = vst.msk [vmem:[%s721 + $0x70] sm:$0xf] %vm2329, %v2293
        %2359 = vst.msk [vmem:[%s721 + $0x74] sm:$0xf] %vm2329, %v2294
        %2360 = vst.msk [vmem:[%s721 + $0x78] sm:$0xf] %vm2329, %v2295
        %2361 = vst.msk [vmem:[%s721 + $0x7c] sm:$0xf] %vm2329, %v2296
        %s2362 = smul.u32 32, %s14
        %p2363 = scmp.lt.s32.totalorder %s2362, 63
        %s2364 = scalar_select %p2363, %s2362, 63
        %s2365 = smul.addr %s2364, 4
        %s2366 = scalar_lea.vmem %s3, %s2365
        // Predicated region
        $region74: #{animal_classifier_forward.6} parent=68 // pred_check
          %p2367 = pneg %p100
        $region75: #{animal_classifier_forward.6} parent=68 // pred_check_branch
          %2369 = sbr.rel (%p2367) target = $region77
        $region76: #{animal_classifier_forward.6} parent=68 // pred_region
          %s2370 = smul.u32 32, %s14
        $region77: #{animal_classifier_forward.6} parent=68 // pred_fallthru
          _
      $region69: #{animal_classifier_forward.6} parent=5 // pred_fallthru
        _
      %p2371 = scmp.le.s32.totalorder 2, %s9
      // Predicated region
      $region78: #{animal_classifier_forward.6} parent=5 // pred_check
        %p2372 = pneg %p2371
      $region79: #{animal_classifier_forward.6} parent=5 // pred_check_branch
        %2374 = sbr.rel (%p2372) target = $region81
      $region80: #{animal_classifier_forward.6} parent=5 // pred_region
        %s2375 = ssub.s32 %s9, 2
        // Predicated region
        $region82: #{animal_classifier_forward.6} parent=80 // pred_check
          %p2376 = pneg %p106
        $region83: #{animal_classifier_forward.6} parent=80 // pred_check_branch
          %2378 = sbr.rel (%p2376) target = $region85
        $region84: #{animal_classifier_forward.6} parent=80 // pred_region
          %s2379 = smul.u32 32, %s15
          %p2380 = scmp.lt.s32.totalorder %s2379, 63
          %s2381 = scalar_select %p2380, %s2379, 63
          %s2382 = smul.addr %s2381, 4
          %s2383 = scalar_lea.vmem %s3, %s2382
        $region85: #{animal_classifier_forward.6} parent=80 // pred_fallthru
          _
      $region81: #{animal_classifier_forward.6} parent=5 // pred_fallthru
        _
    $region6: #{animal_classifier_forward.6} parent=1 // loop_footer
      %s13 = sadd.s32 1, %s9
    $region7: #{animal_classifier_forward.6} parent=1 // loop_footer_branch
      %8 = sbr.rel target = $region3
    $region8: #{animal_classifier_forward.6} parent=1 // loop_exit
      _

// kernel: animal_classifier_forward.7
$region0: #{animal_classifier_forward.7}
  #allocation0 [shape = 'u32[]', space=smem, size = 0x4, offset = 0x4, fixed_abs, tag = 'smem constant byte address 0x4 - core index']
  #allocation1 [shape = 'u32[144,128]{1,0:T(1,128)}', space=vmem, size = 0x12000, scoped, tag = 'internal scratch']
  %s0 = inlined_call_operand.vmem [shape: bf16[4,128,144], index: 0, kind: input, shape index: {}]
  %s1 = inlined_call_operand.vmem [shape: bf16[144,32], index: 1, kind: input, shape index: {}]
  %s2 = inlined_call_operand.vmem [shape: f32[1,32], index: 2, kind: input, shape index: {}]
  %s3 = inlined_call_operand.vmem [shape: bf16[128,32], index: 3, kind: output, shape index: {}]
  %s4 = sld [smem:[#allocation0]]
  $region22: #{animal_classifier_forward.7} parent=0
    _
  %s6 = ssub.s32 1, %s4
  %s7 = scalar_select 0, %s6, %s4
  // Predicated region
  $region2: #{animal_classifier_forward.7} parent=0 // pred_check
    _
  $region3: #{animal_classifier_forward.7} parent=0 // pred_check_branch
    %9 = sbr.rel (0) target = $region5
  $region4: #{animal_classifier_forward.7} parent=0 // pred_region
    _
  $region5: #{animal_classifier_forward.7} parent=0 // pred_fallthru
    _
  // Predicated region
  $region6: #{animal_classifier_forward.7} parent=0 // pred_check
    _
  $region7: #{animal_classifier_forward.7} parent=0 // pred_check_branch
    %11 = sbr.rel (0) target = $region9
  $region8: #{animal_classifier_forward.7} parent=0 // pred_region
    _
  $region9: #{animal_classifier_forward.7} parent=0 // pred_fallthru
    _
  // Predicated region
  $region10: #{animal_classifier_forward.7} parent=0 // pred_check
    _
  $region11: #{animal_classifier_forward.7} parent=0 // pred_check_branch
    %13 = sbr.rel (0) target = $region13
  $region12: #{animal_classifier_forward.7} parent=0 // pred_region
    _
  $region13: #{animal_classifier_forward.7} parent=0 // pred_fallthru
    _
  %v15 = vld [vmem:[%s1] sm:$0xf]
  %v16 = vld [vmem:[%s1 + $0x4] sm:$0xf]
  %v17 = vld [vmem:[%s1 + $0x8] sm:$0xf]
  %v18 = vld [vmem:[%s1 + $0xc] sm:$0xf]
  %v19 = vld [vmem:[%s1 + $0x10] sm:$0xf]
  %v20 = vld [vmem:[%s1 + $0x14] sm:$0xf]
  %v21 = vld [vmem:[%s1 + $0x18] sm:$0xf]
  %v22 = vld [vmem:[%s1 + $0x1c] sm:$0xf]
  %v23 = vld [vmem:[%s1 + $0x20] sm:$0xf]
  %v24 = vld [vmem:[%s1 + $0x24] sm:$0xf]
  %v25 = vld [vmem:[%s1 + $0x28] sm:$0xf]
  %v26 = vld [vmem:[%s1 + $0x2c] sm:$0xf]
  %v27 = vld [vmem:[%s1 + $0x30] sm:$0xf]
  %v28 = vld [vmem:[%s1 + $0x34] sm:$0xf]
  %v29 = vld [vmem:[%s1 + $0x38] sm:$0xf]
  %v30 = vld [vmem:[%s1 + $0x3c] sm:$0xf]
  %v31 = vld [vmem:[%s1 + $0x40] sm:$0xf]
  %v32 = vld [vmem:[%s1 + $0x44] sm:$0xf]
  %v33 = vld [vmem:[%s0] sm:$0xff]
  %v34 = vld [vmem:[%s0 + $0x8] sm:$0xff]
  %v35 = vld [vmem:[%s0 + $0x10] sm:$0xff]
  %v36 = vld [vmem:[%s0 + $0x18] sm:$0xff]
  %v37 = vld [vmem:[%s0 + $0x20] sm:$0xff]
  %v38 = vld [vmem:[%s0 + $0x28] sm:$0xff]
  %v39 = vld [vmem:[%s0 + $0x30] sm:$0xff]
  %v40 = vld [vmem:[%s0 + $0x38] sm:$0xff]
  %v41 = vld [vmem:[%s0 + $0x40] sm:$0xff]
  %v42 = vld [vmem:[%s0 + $0x48] sm:$0xff]
  %v43 = vld [vmem:[%s0 + $0x50] sm:$0xff]
  %v44 = vld [vmem:[%s0 + $0x58] sm:$0xff]
  %v45 = vld [vmem:[%s0 + $0x60] sm:$0xff]
  %v46 = vld [vmem:[%s0 + $0x68] sm:$0xff]
  %v47 = vld [vmem:[%s0 + $0x70] sm:$0xff]
  %v48 = vld [vmem:[%s0 + $0x78] sm:$0xff]
  %v65 = vunpack.c.l.b16 %v33
  %v66 = vunpack.c.h.b16 %v33
  %v67 = vunpack.c.l.b16 %v34
  %v68 = vunpack.c.h.b16 %v34
  %v69 = vunpack.c.l.b16 %v35
  %v70 = vunpack.c.h.b16 %v35
  %v71 = vunpack.c.l.b16 %v36
  %v72 = vunpack.c.h.b16 %v36
  %v73 = vunpack.c.l.b16 %v37
  %v74 = vunpack.c.h.b16 %v37
  %v75 = vunpack.c.l.b16 %v38
  %v76 = vunpack.c.h.b16 %v38
  %v77 = vunpack.c.l.b16 %v39
  %v78 = vunpack.c.h.b16 %v39
  %v79 = vunpack.c.l.b16 %v40
  %v80 = vunpack.c.h.b16 %v40
  %v81 = vunpack.c.l.b16 %v41
  %v82 = vunpack.c.h.b16 %v41
  %v83 = vunpack.c.l.b16 %v42
  %v84 = vunpack.c.h.b16 %v42
  %v85 = vunpack.c.l.b16 %v43
  %v86 = vunpack.c.h.b16 %v43
  %v87 = vunpack.c.l.b16 %v44
  %v88 = vunpack.c.h.b16 %v44
  %v89 = vunpack.c.l.b16 %v45
  %v90 = vunpack.c.h.b16 %v45
  %v91 = vunpack.c.l.b16 %v46
  %v92 = vunpack.c.h.b16 %v46
  %v93 = vunpack.c.l.b16 %v47
  %v94 = vunpack.c.h.b16 %v47
  %v95 = vunpack.c.l.b16 %v48
  %v96 = vunpack.c.h.b16 %v48
  %v97 = vpack.c.b16 %v67, %v65
  %v98 = vpack.c.b16 %v68, %v66
  %v99 = vpack.c.b16 %v71, %v69
  %v100 = vpack.c.b16 %v72, %v70
  %v101 = vpack.c.b16 %v75, %v73
  %v102 = vpack.c.b16 %v76, %v74
  %v103 = vpack.c.b16 %v79, %v77
  %v104 = vpack.c.b16 %v80, %v78
  %v105 = vpack.c.b16 %v83, %v81
  %v106 = vpack.c.b16 %v84, %v82
  %v107 = vpack.c.b16 %v87, %v85
  %v108 = vpack.c.b16 %v88, %v86
  %v109 = vpack.c.b16 %v91, %v89
  %v110 = vpack.c.b16 %v92, %v90
  %v111 = vpack.c.b16 %v95, %v93
  %v112 = vpack.c.b16 %v96, %v94
  %v139 = vunpack.c.l.b16 %v15
  %v140 = vunpack.c.l.b16 %v16
  %v141 = vunpack.c.l.b16 %v17
  %v142 = vunpack.c.l.b16 %v18
  %v143 = vunpack.c.l.b16 %v19
  %v144 = vunpack.c.l.b16 %v20
  %v145 = vunpack.c.l.b16 %v21
  %v146 = vunpack.c.l.b16 %v22
  %v147 = vunpack.c.l.b16 %v23
  %v148 = vunpack.c.l.b16 %v24
  %v149 = vunpack.c.l.b16 %v25
  %v150 = vunpack.c.l.b16 %v26
  %v151 = vunpack.c.l.b16 %v27
  %v152 = vunpack.c.l.b16 %v28
  %v153 = vunpack.c.l.b16 %v29
  %v154 = vunpack.c.l.b16 %v30
  %v155 = vunpack.c.l.b16 %v31
  %v156 = vunpack.c.l.b16 %v32
  %v157 = vpack.c.b16 %v140, %v139
  %v158 = vpack.c.b16 %v142, %v141
  %v159 = vpack.c.b16 %v144, %v143
  %v160 = vpack.c.b16 %v146, %v145
  %v161 = vpack.c.b16 %v148, %v147
  %v162 = vpack.c.b16 %v150, %v149
  %v163 = vpack.c.b16 %v152, %v151
  %v164 = vpack.c.b16 %v154, %v153
  %v165 = vpack.c.b16 %v156, %v155
  %vm175 = vcmask 130048
  %v177 = vsel %vm175, %v98, 0
  %v180 = vsel %vm175, %v100, 0
  %v183 = vsel %vm175, %v102, 0
  %v186 = vsel %vm175, %v104, 0
  %v189 = vsel %vm175, %v106, 0
  %v192 = vsel %vm175, %v108, 0
  %v195 = vsel %vm175, %v110, 0
  %v198 = vsel %vm175, %v112, 0
  %200 = vmatprep.subr.bf16.mxu0 0
  %201 = vmatpush1.bf16.msra.mxu0 %v157
  %202 = vmatprep.subr.bf16.mxu0 0
  %203 = vmatpush1.bf16.msra.mxu0 %v158
  %204 = vmatprep.subr.bf16.mxu0 0
  %205 = vmatpush1.bf16.msra.mxu0 %v159
  %206 = vmatprep.subr.bf16.mxu0 0
  %207 = vmatpush1.bf16.msra.mxu0 %v160
  %208 = vmatprep.subr.bf16.mxu0 0
  %209 = vmatpush1.bf16.msra.mxu0 %v161
  %210 = vmatprep.subr.bf16.mxu0 0
  %211 = vmatpush1.bf16.msra.mxu0 %v162
  %212 = vmatprep.subr.bf16.mxu0 0
  %213 = vmatpush1.bf16.msra.mxu0 %v163
  %214 = vmatprep.subr.bf16.mxu0 0
  %215 = vmatpush1.bf16.msra.mxu0 %v164
  %216 = vmatprep.subr.bf16.mxu0 0
  %217 = vmatpush1.bf16.msra.mxu0 %v165
  %218 = vmatprep.subr.bf16.mxu0 0
  %219 = vmatpush1.bf16.msra.mxu0 0
  %220 = vmatprep.subr.bf16.mxu0 0
  %221 = vmatpush1.bf16.msra.mxu0 0
  %222 = vmatprep.subr.bf16.mxu0 0
  %223 = vmatpush1.bf16.msra.mxu0 0
  %224 = vmatprep.subr.bf16.mxu0 0
  %225 = vmatpush1.bf16.msra.mxu0 0
  %226 = vmatprep.subr.bf16.mxu0 0
  %227 = vmatpush1.bf16.msra.mxu0 0
  %228 = vmatprep.subr.bf16.mxu0 0
  %229 = vmatpush1.bf16.msra.mxu0 0
  %230 = vmatprep.subr.bf16.mxu0 0
  %231 = vmatpush1.bf16.msra.mxu0 0
  %232 = vmatprep.mubr.bf16.mxu0 %v177
  %233 = vmatmul.mubr.bf16.gmra.mrb[0].mxu0 %v97
  %v234 = vpop.f32.mrb[0].mxu0
  %v235 = vadd.f32 0.0, %v234
  %v236 = vpop.f32.mrb[0].mxu0
  %v237 = vpop.f32.mrb[0].mxu0
  %v238 = vadd.f32 0.0, %v237
  %v239 = vpop.f32.mrb[0].mxu0
  %240 = vmatprep.mubr.bf16.mxu0 %v180
  %241 = vmatmul.mubr.bf16.gmra.mrb[0].mxu0 %v99
  %v242 = vpop.f32.mrb[0].mxu0
  %v243 = vadd.f32 0.0, %v242
  %v244 = vpop.f32.mrb[0].mxu0
  %v245 = vpop.f32.mrb[0].mxu0
  %v246 = vadd.f32 0.0, %v245
  %v247 = vpop.f32.mrb[0].mxu0
  %248 = vmatprep.mubr.bf16.mxu0 %v183
  %249 = vmatmul.mubr.bf16.gmra.mrb[0].mxu0 %v101
  %v250 = vpop.f32.mrb[0].mxu0
  %v251 = vadd.f32 0.0, %v250
  %v252 = vpop.f32.mrb[0].mxu0
  %v253 = vpop.f32.mrb[0].mxu0
  %v254 = vadd.f32 0.0, %v253
  %v255 = vpop.f32.mrb[0].mxu0
  %256 = vmatprep.mubr.bf16.mxu0 %v186
  %257 = vmatmul.mubr.bf16.gmra.mrb[0].mxu0 %v103
  %v258 = vpop.f32.mrb[0].mxu0
  %v259 = vadd.f32 0.0, %v258
  %v260 = vpop.f32.mrb[0].mxu0
  %v261 = vpop.f32.mrb[0].mxu0
  %v262 = vadd.f32 0.0, %v261
  %v263 = vpop.f32.mrb[0].mxu0
  %264 = vmatprep.mubr.bf16.mxu0 %v189
  %265 = vmatmul.mubr.bf16.gmra.mrb[0].mxu0 %v105
  %v266 = vpop.f32.mrb[0].mxu0
  %v267 = vadd.f32 0.0, %v266
  %v268 = vpop.f32.mrb[0].mxu0
  %v269 = vpop.f32.mrb[0].mxu0
  %v270 = vadd.f32 0.0, %v269
  %v271 = vpop.f32.mrb[0].mxu0
  %272 = vmatprep.mubr.bf16.mxu0 %v192
  %273 = vmatmul.mubr.bf16.gmra.mrb[0].mxu0 %v107
  %v274 = vpop.f32.mrb[0].mxu0
  %v275 = vadd.f32 0.0, %v274
  %v276 = vpop.f32.mrb[0].mxu0
  %v277 = vpop.f32.mrb[0].mxu0
  %v278 = vadd.f32 0.0, %v277
  %v279 = vpop.f32.mrb[0].mxu0
  %280 = vmatprep.mubr.bf16.mxu0 %v195
  %281 = vmatmul.mubr.bf16.gmra.mrb[0].mxu0 %v109
  %v282 = vpop.f32.mrb[0].mxu0
  %v283 = vadd.f32 0.0, %v282
  %v284 = vpop.f32.mrb[0].mxu0
  %v285 = vpop.f32.mrb[0].mxu0
  %v286 = vadd.f32 0.0, %v285
  %v287 = vpop.f32.mrb[0].mxu0
  %288 = vmatprep.mubr.bf16.mxu0 %v198
  %289 = vmatmul.mubr.bf16.gmra.mrb[0].mxu0 %v111
  %v290 = vpop.f32.mrb[0].mxu0
  %v291 = vadd.f32 0.0, %v290
  %v292 = vpop.f32.mrb[0].mxu0
  %v293 = vpop.f32.mrb[0].mxu0
  %v294 = vadd.f32 0.0, %v293
  %v295 = vpop.f32.mrb[0].mxu0
  %296 = vdwg.mxu0
  %s297 = scalar_lea.vmem %s0, 128
  %v298 = vld [vmem:[%s297] sm:$0xff]
  %v299 = vld [vmem:[%s297 + $0x8] sm:$0xff]
  %v300 = vld [vmem:[%s297 + $0x10] sm:$0xff]
  %v301 = vld [vmem:[%s297 + $0x18] sm:$0xff]
  %v302 = vld [vmem:[%s297 + $0x20] sm:$0xff]
  %v303 = vld [vmem:[%s297 + $0x28] sm:$0xff]
  %v304 = vld [vmem:[%s297 + $0x30] sm:$0xff]
  %v305 = vld [vmem:[%s297 + $0x38] sm:$0xff]
  %v306 = vld [vmem:[%s297 + $0x40] sm:$0xff]
  %v307 = vld [vmem:[%s297 + $0x48] sm:$0xff]
  %v308 = vld [vmem:[%s297 + $0x50] sm:$0xff]
  %v309 = vld [vmem:[%s297 + $0x58] sm:$0xff]
  %v310 = vld [vmem:[%s297 + $0x60] sm:$0xff]
  %v311 = vld [vmem:[%s297 + $0x68] sm:$0xff]
  %v312 = vld [vmem:[%s297 + $0x70] sm:$0xff]
  %v313 = vld [vmem:[%s297 + $0x78] sm:$0xff]
  %v330 = vunpack.c.l.b16 %v298
  %v331 = vunpack.c.h.b16 %v298
  %v332 = vunpack.c.l.b16 %v299
  %v333 = vunpack.c.h.b16 %v299
  %v334 = vunpack.c.l.b16 %v300
  %v335 = vunpack.c.h.b16 %v300
  %v336 = vunpack.c.l.b16 %v301
  %v337 = vunpack.c.h.b16 %v301
  %v338 = vunpack.c.l.b16 %v302
  %v339 = vunpack.c.h.b16 %v302
  %v340 = vunpack.c.l.b16 %v303
  %v341 = vunpack.c.h.b16 %v303
  %v342 = vunpack.c.l.b16 %v304
  %v343 = vunpack.c.h.b16 %v304
  %v344 = vunpack.c.l.b16 %v305
  %v345 = vunpack.c.h.b16 %v305
  %v346 = vunpack.c.l.b16 %v306
  %v347 = vunpack.c.h.b16 %v306
  %v348 = vunpack.c.l.b16 %v307
  %v349 = vunpack.c.h.b16 %v307
  %v350 = vunpack.c.l.b16 %v308
  %v351 = vunpack.c.h.b16 %v308
  %v352 = vunpack.c.l.b16 %v309
  %v353 = vunpack.c.h.b16 %v309
  %v354 = vunpack.c.l.b16 %v310
  %v355 = vunpack.c.h.b16 %v310
  %v356 = vunpack.c.l.b16 %v311
  %v357 = vunpack.c.h.b16 %v311
  %v358 = vunpack.c.l.b16 %v312
  %v359 = vunpack.c.h.b16 %v312
  %v360 = vunpack.c.l.b16 %v313
  %v361 = vunpack.c.h.b16 %v313
  %v362 = vpack.c.b16 %v332, %v330
  %v363 = vpack.c.b16 %v333, %v331
  %v364 = vpack.c.b16 %v336, %v334
  %v365 = vpack.c.b16 %v337, %v335
  %v366 = vpack.c.b16 %v340, %v338
  %v367 = vpack.c.b16 %v341, %v339
  %v368 = vpack.c.b16 %v344, %v342
  %v369 = vpack.c.b16 %v345, %v343
  %v370 = vpack.c.b16 %v348, %v346
  %v371 = vpack.c.b16 %v349, %v347
  %v372 = vpack.c.b16 %v352, %v350
  %v373 = vpack.c.b16 %v353, %v351
  %v374 = vpack.c.b16 %v356, %v354
  %v375 = vpack.c.b16 %v357, %v355
  %v376 = vpack.c.b16 %v360, %v358
  %v377 = vpack.c.b16 %v361, %v359
  %v387 = vsel %vm175, %v363, 0
  %v390 = vsel %vm175, %v365, 0
  %v393 = vsel %vm175, %v367, 0
  %v396 = vsel %vm175, %v369, 0
  %v399 = vsel %vm175, %v371, 0
  %v402 = vsel %vm175, %v373, 0
  %v405 = vsel %vm175, %v375, 0
  %v408 = vsel %vm175, %v377, 0
  %410 = vmatprep.subr.bf16.mxu0 0
  %411 = vmatpush1.bf16.msra.mxu0 %v157
  %412 = vmatprep.subr.bf16.mxu0 0
  %413 = vmatpush1.bf16.msra.mxu0 %v158
  %414 = vmatprep.subr.bf16.mxu0 0
  %415 = vmatpush1.bf16.msra.mxu0 %v159
  %416 = vmatprep.subr.bf16.mxu0 0
  %417 = vmatpush1.bf16.msra.mxu0 %v160
  %418 = vmatprep.subr.bf16.mxu0 0
  %419 = vmatpush1.bf16.msra.mxu0 %v161
  %420 = vmatprep.subr.bf16.mxu0 0
  %421 = vmatpush1.bf16.msra.mxu0 %v162
  %422 = vmatprep.subr.bf16.mxu0 0
  %423 = vmatpush1.bf16.msra.mxu0 %v163
  %424 = vmatprep.subr.bf16.mxu0 0
  %425 = vmatpush1.bf16.msra.mxu0 %v164
  %426 = vmatprep.subr.bf16.mxu0 0
  %427 = vmatpush1.bf16.msra.mxu0 %v165
  %428 = vmatprep.subr.bf16.mxu0 0
  %429 = vmatpush1.bf16.msra.mxu0 0
  %430 = vmatprep.subr.bf16.mxu0 0
  %431 = vmatpush1.bf16.msra.mxu0 0
  %432 = vmatprep.subr.bf16.mxu0 0
  %433 = vmatpush1.bf16.msra.mxu0 0
  %434 = vmatprep.subr.bf16.mxu0 0
  %435 = vmatpush1.bf16.msra.mxu0 0
  %436 = vmatprep.subr.bf16.mxu0 0
  %437 = vmatpush1.bf16.msra.mxu0 0
  %438 = vmatprep.subr.bf16.mxu0 0
  %439 = vmatpush1.bf16.msra.mxu0 0
  %440 = vmatprep.subr.bf16.mxu0 0
  %441 = vmatpush1.bf16.msra.mxu0 0
  %442 = vmatprep.mubr.bf16.mxu0 %v387
  %443 = vmatmul.mubr.bf16.gmra.mrb[0].mxu0 %v362
  %v444 = vpop.f32.mrb[0].mxu0
  %v445 = vadd.f32 0.0, %v444
  %v446 = vpop.f32.mrb[0].mxu0
  %v447 = vpop.f32.mrb[0].mxu0
  %v448 = vadd.f32 0.0, %v447
  %v449 = vpop.f32.mrb[0].mxu0
  %450 = vmatprep.mubr.bf16.mxu0 %v390
  %451 = vmatmul.mubr.bf16.gmra.mrb[0].mxu0 %v364
  %v452 = vpop.f32.mrb[0].mxu0
  %v453 = vadd.f32 0.0, %v452
  %v454 = vpop.f32.mrb[0].mxu0
  %v455 = vpop.f32.mrb[0].mxu0
  %v456 = vadd.f32 0.0, %v455
  %v457 = vpop.f32.mrb[0].mxu0
  %458 = vmatprep.mubr.bf16.mxu0 %v393
  %459 = vmatmul.mubr.bf16.gmra.mrb[0].mxu0 %v366
  %v460 = vpop.f32.mrb[0].mxu0
  %v461 = vadd.f32 0.0, %v460
  %v462 = vpop.f32.mrb[0].mxu0
  %v463 = vpop.f32.mrb[0].mxu0
  %v464 = vadd.f32 0.0, %v463
  %v465 = vpop.f32.mrb[0].mxu0
  %466 = vmatprep.mubr.bf16.mxu0 %v396
  %467 = vmatmul.mubr.bf16.gmra.mrb[0].mxu0 %v368
  %v468 = vpop.f32.mrb[0].mxu0
  %v469 = vadd.f32 0.0, %v468
  %v470 = vpop.f32.mrb[0].mxu0
  %v471 = vpop.f32.mrb[0].mxu0
  %v472 = vadd.f32 0.0, %v471
  %v473 = vpop.f32.mrb[0].mxu0
  %474 = vmatprep.mubr.bf16.mxu0 %v399
  %475 = vmatmul.mubr.bf16.gmra.mrb[0].mxu0 %v370
  %v476 = vpop.f32.mrb[0].mxu0
  %v477 = vadd.f32 0.0, %v476
  %v478 = vpop.f32.mrb[0].mxu0
  %v479 = vpop.f32.mrb[0].mxu0
  %v480 = vadd.f32 0.0, %v479
  %v481 = vpop.f32.mrb[0].mxu0
  %482 = vmatprep.mubr.bf16.mxu0 %v402
  %483 = vmatmul.mubr.bf16.gmra.mrb[0].mxu0 %v372
  %v484 = vpop.f32.mrb[0].mxu0
  %v485 = vadd.f32 0.0, %v484
  %v486 = vpop.f32.mrb[0].mxu0
  %v487 = vpop.f32.mrb[0].mxu0
  %v488 = vadd.f32 0.0, %v487
  %v489 = vpop.f32.mrb[0].mxu0
  %490 = vmatprep.mubr.bf16.mxu0 %v405
  %491 = vmatmul.mubr.bf16.gmra.mrb[0].mxu0 %v374
  %v492 = vpop.f32.mrb[0].mxu0
  %v493 = vadd.f32 0.0, %v492
  %v494 = vpop.f32.mrb[0].mxu0
  %v495 = vpop.f32.mrb[0].mxu0
  %v496 = vadd.f32 0.0, %v495
  %v497 = vpop.f32.mrb[0].mxu0
  %498 = vmatprep.mubr.bf16.mxu0 %v408
  %499 = vmatmul.mubr.bf16.gmra.mrb[0].mxu0 %v376
  %v500 = vpop.f32.mrb[0].mxu0
  %v501 = vadd.f32 0.0, %v500
  %v502 = vpop.f32.mrb[0].mxu0
  %v503 = vpop.f32.mrb[0].mxu0
  %v504 = vadd.f32 0.0, %v503
  %v505 = vpop.f32.mrb[0].mxu0
  %506 = vdwg.mxu0
  %v507 = vmax.f32 %v235, %v445
  %v508 = vmax.f32 %v238, %v448
  %v509 = vmax.f32 %v243, %v453
  %v510 = vmax.f32 %v246, %v456
  %v511 = vmax.f32 %v251, %v461
  %v512 = vmax.f32 %v254, %v464
  %v513 = vmax.f32 %v259, %v469
  %v514 = vmax.f32 %v262, %v472
  %v515 = vmax.f32 %v267, %v477
  %v516 = vmax.f32 %v270, %v480
  %v517 = vmax.f32 %v275, %v485
  %v518 = vmax.f32 %v278, %v488
  %v519 = vmax.f32 %v283, %v493
  %v520 = vmax.f32 %v286, %v496
  %v521 = vmax.f32 %v291, %v501
  %v522 = vmax.f32 %v294, %v504
  %s523 = scalar_lea.vmem %s0, 256
  %v524 = vld [vmem:[%s523] sm:$0xff]
  %v525 = vld [vmem:[%s523 + $0x8] sm:$0xff]
  %v526 = vld [vmem:[%s523 + $0x10] sm:$0xff]
  %v527 = vld [vmem:[%s523 + $0x18] sm:$0xff]
  %v528 = vld [vmem:[%s523 + $0x20] sm:$0xff]
  %v529 = vld [vmem:[%s523 + $0x28] sm:$0xff]
  %v530 = vld [vmem:[%s523 + $0x30] sm:$0xff]
  %v531 = vld [vmem:[%s523 + $0x38] sm:$0xff]
  %v532 = vld [vmem:[%s523 + $0x40] sm:$0xff]
  %v533 = vld [vmem:[%s523 + $0x48] sm:$0xff]
  %v534 = vld [vmem:[%s523 + $0x50] sm:$0xff]
  %v535 = vld [vmem:[%s523 + $0x58] sm:$0xff]
  %v536 = vld [vmem:[%s523 + $0x60] sm:$0xff]
  %v537 = vld [vmem:[%s523 + $0x68] sm:$0xff]
  %v538 = vld [vmem:[%s523 + $0x70] sm:$0xff]
  %v539 = vld [vmem:[%s523 + $0x78] sm:$0xff]
  %v556 = vunpack.c.l.b16 %v524
  %v557 = vunpack.c.h.b16 %v524
  %v558 = vunpack.c.l.b16 %v525
  %v559 = vunpack.c.h.b16 %v525
  %v560 = vunpack.c.l.b16 %v526
  %v561 = vunpack.c.h.b16 %v526
  %v562 = vunpack.c.l.b16 %v527
  %v563 = vunpack.c.h.b16 %v527
  %v564 = vunpack.c.l.b16 %v528
  %v565 = vunpack.c.h.b16 %v528
  %v566 = vunpack.c.l.b16 %v529
  %v567 = vunpack.c.h.b16 %v529
  %v568 = vunpack.c.l.b16 %v530
  %v569 = vunpack.c.h.b16 %v530
  %v570 = vunpack.c.l.b16 %v531
  %v571 = vunpack.c.h.b16 %v531
  %v572 = vunpack.c.l.b16 %v532
  %v573 = vunpack.c.h.b16 %v532
  %v574 = vunpack.c.l.b16 %v533
  %v575 = vunpack.c.h.b16 %v533
  %v576 = vunpack.c.l.b16 %v534
  %v577 = vunpack.c.h.b16 %v534
  %v578 = vunpack.c.l.b16 %v535
  %v579 = vunpack.c.h.b16 %v535
  %v580 = vunpack.c.l.b16 %v536
  %v581 = vunpack.c.h.b16 %v536
  %v582 = vunpack.c.l.b16 %v537
  %v583 = vunpack.c.h.b16 %v537
  %v584 = vunpack.c.l.b16 %v538
  %v585 = vunpack.c.h.b16 %v538
  %v586 = vunpack.c.l.b16 %v539
  %v587 = vunpack.c.h.b16 %v539
  %v588 = vpack.c.b16 %v558, %v556
  %v589 = vpack.c.b16 %v559, %v557
  %v590 = vpack.c.b16 %v562, %v560
  %v591 = vpack.c.b16 %v563, %v561
  %v592 = vpack.c.b16 %v566, %v564
  %v593 = vpack.c.b16 %v567, %v565
  %v594 = vpack.c.b16 %v570, %v568
  %v595 = vpack.c.b16 %v571, %v569
  %v596 = vpack.c.b16 %v574, %v572
  %v597 = vpack.c.b16 %v575, %v573
  %v598 = vpack.c.b16 %v578, %v576
  %v599 = vpack.c.b16 %v579, %v577
  %v600 = vpack.c.b16 %v582, %v580
  %v601 = vpack.c.b16 %v583, %v581
  %v602 = vpack.c.b16 %v586, %v584
  %v603 = vpack.c.b16 %v587, %v585
  %v613 = vsel %vm175, %v589, 0
  %v616 = vsel %vm175, %v591, 0
  %v619 = vsel %vm175, %v593, 0
  %v622 = vsel %vm175, %v595, 0
  %v625 = vsel %vm175, %v597, 0
  %v628 = vsel %vm175, %v599, 0
  %v631 = vsel %vm175, %v601, 0
  %v634 = vsel %vm175, %v603, 0
  %636 = vmatprep.subr.bf16.mxu0 0
  %637 = vmatpush1.bf16.msra.mxu0 %v157
  %638 = vmatprep.subr.bf16.mxu0 0
  %639 = vmatpush1.bf16.msra.mxu0 %v158
  %640 = vmatprep.subr.bf16.mxu0 0
  %641 = vmatpush1.bf16.msra.mxu0 %v159
  %642 = vmatprep.subr.bf16.mxu0 0
  %643 = vmatpush1.bf16.msra.mxu0 %v160
  %644 = vmatprep.subr.bf16.mxu0 0
  %645 = vmatpush1.bf16.msra.mxu0 %v161
  %646 = vmatprep.subr.bf16.mxu0 0
  %647 = vmatpush1.bf16.msra.mxu0 %v162
  %648 = vmatprep.subr.bf16.mxu0 0
  %649 = vmatpush1.bf16.msra.mxu0 %v163
  %650 = vmatprep.subr.bf16.mxu0 0
  %651 = vmatpush1.bf16.msra.mxu0 %v164
  %652 = vmatprep.subr.bf16.mxu0 0
  %653 = vmatpush1.bf16.msra.mxu0 %v165
  %654 = vmatprep.subr.bf16.mxu0 0
  %655 = vmatpush1.bf16.msra.mxu0 0
  %656 = vmatprep.subr.bf16.mxu0 0
  %657 = vmatpush1.bf16.msra.mxu0 0
  %658 = vmatprep.subr.bf16.mxu0 0
  %659 = vmatpush1.bf16.msra.mxu0 0
  %660 = vmatprep.subr.bf16.mxu0 0
  %661 = vmatpush1.bf16.msra.mxu0 0
  %662 = vmatprep.subr.bf16.mxu0 0
  %663 = vmatpush1.bf16.msra.mxu0 0
  %664 = vmatprep.subr.bf16.mxu0 0
  %665 = vmatpush1.bf16.msra.mxu0 0
  %666 = vmatprep.subr.bf16.mxu0 0
  %667 = vmatpush1.bf16.msra.mxu0 0
  %668 = vmatprep.mubr.bf16.mxu0 %v613
  %669 = vmatmul.mubr.bf16.gmra.mrb[0].mxu0 %v588
  %v670 = vpop.f32.mrb[0].mxu0
  %v671 = vadd.f32 0.0, %v670
  %v672 = vpop.f32.mrb[0].mxu0
  %v673 = vpop.f32.mrb[0].mxu0
  %v674 = vadd.f32 0.0, %v673
  %v675 = vpop.f32.mrb[0].mxu0
  %676 = vmatprep.mubr.bf16.mxu0 %v616
  %677 = vmatmul.mubr.bf16.gmra.mrb[0].mxu0 %v590
  %v678 = vpop.f32.mrb[0].mxu0
  %v679 = vadd.f32 0.0, %v678
  %v680 = vpop.f32.mrb[0].mxu0
  %v681 = vpop.f32.mrb[0].mxu0
  %v682 = vadd.f32 0.0, %v681
  %v683 = vpop.f32.mrb[0].mxu0
  %684 = vmatprep.mubr.bf16.mxu0 %v619
  %685 = vmatmul.mubr.bf16.gmra.mrb[0].mxu0 %v592
  %v686 = vpop.f32.mrb[0].mxu0
  %v687 = vadd.f32 0.0, %v686
  %v688 = vpop.f32.mrb[0].mxu0
  %v689 = vpop.f32.mrb[0].mxu0
  %v690 = vadd.f32 0.0, %v689
  %v691 = vpop.f32.mrb[0].mxu0
  %692 = vmatprep.mubr.bf16.mxu0 %v622
  %693 = vmatmul.mubr.bf16.gmra.mrb[0].mxu0 %v594
  %v694 = vpop.f32.mrb[0].mxu0
  %v695 = vadd.f32 0.0, %v694
  %v696 = vpop.f32.mrb[0].mxu0
  %v697 = vpop.f32.mrb[0].mxu0
  %v698 = vadd.f32 0.0, %v697
  %v699 = vpop.f32.mrb[0].mxu0
  %700 = vmatprep.mubr.bf16.mxu0 %v625
  %701 = vmatmul.mubr.bf16.gmra.mrb[0].mxu0 %v596
  %v702 = vpop.f32.mrb[0].mxu0
  %v703 = vadd.f32 0.0, %v702
  %v704 = vpop.f32.mrb[0].mxu0
  %v705 = vpop.f32.mrb[0].mxu0
  %v706 = vadd.f32 0.0, %v705
  %v707 = vpop.f32.mrb[0].mxu0
  %708 = vmatprep.mubr.bf16.mxu0 %v628
  %709 = vmatmul.mubr.bf16.gmra.mrb[0].mxu0 %v598
  %v710 = vpop.f32.mrb[0].mxu0
  %v711 = vadd.f32 0.0, %v710
  %v712 = vpop.f32.mrb[0].mxu0
  %v713 = vpop.f32.mrb[0].mxu0
  %v714 = vadd.f32 0.0, %v713
  %v715 = vpop.f32.mrb[0].mxu0
  %716 = vmatprep.mubr.bf16.mxu0 %v631
  %717 = vmatmul.mubr.bf16.gmra.mrb[0].mxu0 %v600
  %v718 = vpop.f32.mrb[0].mxu0
  %v719 = vadd.f32 0.0, %v718
  %v720 = vpop.f32.mrb[0].mxu0
  %v721 = vpop.f32.mrb[0].mxu0
  %v722 = vadd.f32 0.0, %v721
  %v723 = vpop.f32.mrb[0].mxu0
  %724 = vmatprep.mubr.bf16.mxu0 %v634
  %725 = vmatmul.mubr.bf16.gmra.mrb[0].mxu0 %v602
  %v726 = vpop.f32.mrb[0].mxu0
  %v727 = vadd.f32 0.0, %v726
  %v728 = vpop.f32.mrb[0].mxu0
  %v729 = vpop.f32.mrb[0].mxu0
  %v730 = vadd.f32 0.0, %v729
  %v731 = vpop.f32.mrb[0].mxu0
  %732 = vdwg.mxu0
  %v733 = vmax.f32 %v507, %v671
  %v734 = vmax.f32 %v508, %v674
  %v735 = vmax.f32 %v509, %v679
  %v736 = vmax.f32 %v510, %v682
  %v737 = vmax.f32 %v511, %v687
  %v738 = vmax.f32 %v512, %v690
  %v739 = vmax.f32 %v513, %v695
  %v740 = vmax.f32 %v514, %v698
  %v741 = vmax.f32 %v515, %v703
  %v742 = vmax.f32 %v516, %v706
  %v743 = vmax.f32 %v517, %v711
  %v744 = vmax.f32 %v518, %v714
  %v745 = vmax.f32 %v519, %v719
  %v746 = vmax.f32 %v520, %v722
  %v747 = vmax.f32 %v521, %v727
  %v748 = vmax.f32 %v522, %v730
  %s749 = scalar_lea.vmem %s0, 384
  %v750 = vld [vmem:[%s749] sm:$0xff]
  %v751 = vld [vmem:[%s749 + $0x8] sm:$0xff]
  %v752 = vld [vmem:[%s749 + $0x10] sm:$0xff]
  %v753 = vld [vmem:[%s749 + $0x18] sm:$0xff]
  %v754 = vld [vmem:[%s749 + $0x20] sm:$0xff]
  %v755 = vld [vmem:[%s749 + $0x28] sm:$0xff]
  %v756 = vld [vmem:[%s749 + $0x30] sm:$0xff]
  %v757 = vld [vmem:[%s749 + $0x38] sm:$0xff]
  %v758 = vld [vmem:[%s749 + $0x40] sm:$0xff]
  %v759 = vld [vmem:[%s749 + $0x48] sm:$0xff]
  %v760 = vld [vmem:[%s749 + $0x50] sm:$0xff]
  %v761 = vld [vmem:[%s749 + $0x58] sm:$0xff]
  %v762 = vld [vmem:[%s749 + $0x60] sm:$0xff]
  %v763 = vld [vmem:[%s749 + $0x68] sm:$0xff]
  %v764 = vld [vmem:[%s749 + $0x70] sm:$0xff]
  %v765 = vld [vmem:[%s749 + $0x78] sm:$0xff]
  %v782 = vunpack.c.l.b16 %v750
  %v783 = vunpack.c.h.b16 %v750
  %v784 = vunpack.c.l.b16 %v751
  %v785 = vunpack.c.h.b16 %v751
  %v786 = vunpack.c.l.b16 %v752
  %v787 = vunpack.c.h.b16 %v752
  %v788 = vunpack.c.l.b16 %v753
  %v789 = vunpack.c.h.b16 %v753
  %v790 = vunpack.c.l.b16 %v754
  %v791 = vunpack.c.h.b16 %v754
  %v792 = vunpack.c.l.b16 %v755
  %v793 = vunpack.c.h.b16 %v755
  %v794 = vunpack.c.l.b16 %v756
  %v795 = vunpack.c.h.b16 %v756
  %v796 = vunpack.c.l.b16 %v757
  %v797 = vunpack.c.h.b16 %v757
  %v798 = vunpack.c.l.b16 %v758
  %v799 = vunpack.c.h.b16 %v758
  %v800 = vunpack.c.l.b16 %v759
  %v801 = vunpack.c.h.b16 %v759
  %v802 = vunpack.c.l.b16 %v760
  %v803 = vunpack.c.h.b16 %v760
  %v804 = vunpack.c.l.b16 %v761
  %v805 = vunpack.c.h.b16 %v761
  %v806 = vunpack.c.l.b16 %v762
  %v807 = vunpack.c.h.b16 %v762
  %v808 = vunpack.c.l.b16 %v763
  %v809 = vunpack.c.h.b16 %v763
  %v810 = vunpack.c.l.b16 %v764
  %v811 = vunpack.c.h.b16 %v764
  %v812 = vunpack.c.l.b16 %v765
  %v813 = vunpack.c.h.b16 %v765
  %v814 = vpack.c.b16 %v784, %v782
  %v815 = vpack.c.b16 %v785, %v783
  %v816 = vpack.c.b16 %v788, %v786
  %v817 = vpack.c.b16 %v789, %v787
  %v818 = vpack.c.b16 %v792, %v790
  %v819 = vpack.c.b16 %v793, %v791
  %v820 = vpack.c.b16 %v796, %v794
  %v821 = vpack.c.b16 %v797, %v795
  %v822 = vpack.c.b16 %v800, %v798
  %v823 = vpack.c.b16 %v801, %v799
  %v824 = vpack.c.b16 %v804, %v802
  %v825 = vpack.c.b16 %v805, %v803
  %v826 = vpack.c.b16 %v808, %v806
  %v827 = vpack.c.b16 %v809, %v807
  %v828 = vpack.c.b16 %v812, %v810
  %v829 = vpack.c.b16 %v813, %v811
  %v839 = vsel %vm175, %v815, 0
  %v842 = vsel %vm175, %v817, 0
  %v845 = vsel %vm175, %v819, 0
  %v848 = vsel %vm175, %v821, 0
  %v851 = vsel %vm175, %v823, 0
  %v854 = vsel %vm175, %v825, 0
  %v857 = vsel %vm175, %v827, 0
  %v860 = vsel %vm175, %v829, 0
  %862 = vmatprep.subr.bf16.mxu0 0
  %863 = vmatpush1.bf16.msra.mxu0 %v157
  %864 = vmatprep.subr.bf16.mxu0 0
  %865 = vmatpush1.bf16.msra.mxu0 %v158
  %866 = vmatprep.subr.bf16.mxu0 0
  %867 = vmatpush1.bf16.msra.mxu0 %v159
  %868 = vmatprep.subr.bf16.mxu0 0
  %869 = vmatpush1.bf16.msra.mxu0 %v160
  %870 = vmatprep.subr.bf16.mxu0 0
  %871 = vmatpush1.bf16.msra.mxu0 %v161
  %872 = vmatprep.subr.bf16.mxu0 0
  %873 = vmatpush1.bf16.msra.mxu0 %v162
  %874 = vmatprep.subr.bf16.mxu0 0
  %875 = vmatpush1.bf16.msra.mxu0 %v163
  %876 = vmatprep.subr.bf16.mxu0 0
  %877 = vmatpush1.bf16.msra.mxu0 %v164
  %878 = vmatprep.subr.bf16.mxu0 0
  %879 = vmatpush1.bf16.msra.mxu0 %v165
  %880 = vmatprep.subr.bf16.mxu0 0
  %881 = vmatpush1.bf16.msra.mxu0 0
  %882 = vmatprep.subr.bf16.mxu0 0
  %883 = vmatpush1.bf16.msra.mxu0 0
  %884 = vmatprep.subr.bf16.mxu0 0
  %885 = vmatpush1.bf16.msra.mxu0 0
  %886 = vmatprep.subr.bf16.mxu0 0
  %887 = vmatpush1.bf16.msra.mxu0 0
  %888 = vmatprep.subr.bf16.mxu0 0
  %889 = vmatpush1.bf16.msra.mxu0 0
  %890 = vmatprep.subr.bf16.mxu0 0
  %891 = vmatpush1.bf16.msra.mxu0 0
  %892 = vmatprep.subr.bf16.mxu0 0
  %893 = vmatpush1.bf16.msra.mxu0 0
  %894 = vmatprep.mubr.bf16.mxu0 %v839
  %895 = vmatmul.mubr.bf16.gmra.mrb[0].mxu0 %v814
  %v896 = vpop.f32.mrb[0].mxu0
  %v897 = vadd.f32 0.0, %v896
  %v898 = vpop.f32.mrb[0].mxu0
  %v899 = vpop.f32.mrb[0].mxu0
  %v900 = vadd.f32 0.0, %v899
  %v901 = vpop.f32.mrb[0].mxu0
  %902 = vmatprep.mubr.bf16.mxu0 %v842
  %903 = vmatmul.mubr.bf16.gmra.mrb[0].mxu0 %v816
  %v904 = vpop.f32.mrb[0].mxu0
  %v905 = vadd.f32 0.0, %v904
  %v906 = vpop.f32.mrb[0].mxu0
  %v907 = vpop.f32.mrb[0].mxu0
  %v908 = vadd.f32 0.0, %v907
  %v909 = vpop.f32.mrb[0].mxu0
  %910 = vmatprep.mubr.bf16.mxu0 %v845
  %911 = vmatmul.mubr.bf16.gmra.mrb[0].mxu0 %v818
  %v912 = vpop.f32.mrb[0].mxu0
  %v913 = vadd.f32 0.0, %v912
  %v914 = vpop.f32.mrb[0].mxu0
  %v915 = vpop.f32.mrb[0].mxu0
  %v916 = vadd.f32 0.0, %v915
  %v917 = vpop.f32.mrb[0].mxu0
  %918 = vmatprep.mubr.bf16.mxu0 %v848
  %919 = vmatmul.mubr.bf16.gmra.mrb[0].mxu0 %v820
  %v920 = vpop.f32.mrb[0].mxu0
  %v921 = vadd.f32 0.0, %v920
  %v922 = vpop.f32.mrb[0].mxu0
  %v923 = vpop.f32.mrb[0].mxu0
  %v924 = vadd.f32 0.0, %v923
  %v925 = vpop.f32.mrb[0].mxu0
  %926 = vmatprep.mubr.bf16.mxu0 %v851
  %927 = vmatmul.mubr.bf16.gmra.mrb[0].mxu0 %v822
  %v928 = vpop.f32.mrb[0].mxu0
  %v929 = vadd.f32 0.0, %v928
  %v930 = vpop.f32.mrb[0].mxu0
  %v931 = vpop.f32.mrb[0].mxu0
  %v932 = vadd.f32 0.0, %v931
  %v933 = vpop.f32.mrb[0].mxu0
  %934 = vmatprep.mubr.bf16.mxu0 %v854
  %935 = vmatmul.mubr.bf16.gmra.mrb[0].mxu0 %v824
  %v936 = vpop.f32.mrb[0].mxu0
  %v937 = vadd.f32 0.0, %v936
  %v938 = vpop.f32.mrb[0].mxu0
  %v939 = vpop.f32.mrb[0].mxu0
  %v940 = vadd.f32 0.0, %v939
  %v941 = vpop.f32.mrb[0].mxu0
  %942 = vmatprep.mubr.bf16.mxu0 %v857
  %943 = vmatmul.mubr.bf16.gmra.mrb[0].mxu0 %v826
  %v944 = vpop.f32.mrb[0].mxu0
  %v945 = vadd.f32 0.0, %v944
  %v946 = vpop.f32.mrb[0].mxu0
  %v947 = vpop.f32.mrb[0].mxu0
  %v948 = vadd.f32 0.0, %v947
  %v949 = vpop.f32.mrb[0].mxu0
  %950 = vmatprep.mubr.bf16.mxu0 %v860
  %951 = vmatmul.mubr.bf16.gmra.mrb[0].mxu0 %v828
  %v952 = vpop.f32.mrb[0].mxu0
  %v953 = vadd.f32 0.0, %v952
  %v954 = vpop.f32.mrb[0].mxu0
  %v955 = vpop.f32.mrb[0].mxu0
  %v956 = vadd.f32 0.0, %v955
  %v957 = vpop.f32.mrb[0].mxu0
  %958 = vdwg.mxu0
  %v959 = vmax.f32 %v733, %v897
  %v960 = vmax.f32 %v734, %v900
  %v961 = vmax.f32 %v735, %v905
  %v962 = vmax.f32 %v736, %v908
  %v963 = vmax.f32 %v737, %v913
  %v964 = vmax.f32 %v738, %v916
  %v965 = vmax.f32 %v739, %v921
  %v966 = vmax.f32 %v740, %v924
  %v967 = vmax.f32 %v741, %v929
  %v968 = vmax.f32 %v742, %v932
  %v969 = vmax.f32 %v743, %v937
  %v970 = vmax.f32 %v744, %v940
  %v971 = vmax.f32 %v745, %v945
  %v972 = vmax.f32 %v746, %v948
  %v973 = vmax.f32 %v747, %v953
  %v974 = vmax.f32 %v748, %v956
  %v975 = vld [vmem:[%s2] sm:$0x1]
  %v977 = vlaneseq
  %v978 = vshrl.u32 %v977, 7
  %v979 = vsub.s32 0, %v978
  %v980 = vrot.slane %v975, %v979
  %v982 = vadd.f32 %v959, %v980
  %v983 = vadd.f32 %v960, %v980
  %v984 = vadd.f32 %v961, %v980
  %v985 = vadd.f32 %v962, %v980
  %v986 = vadd.f32 %v963, %v980
  %v987 = vadd.f32 %v964, %v980
  %v988 = vadd.f32 %v965, %v980
  %v989 = vadd.f32 %v966, %v980
  %v990 = vadd.f32 %v967, %v980
  %v991 = vadd.f32 %v968, %v980
  %v992 = vadd.f32 %v969, %v980
  %v993 = vadd.f32 %v970, %v980
  %v994 = vadd.f32 %v971, %v980
  %v995 = vadd.f32 %v972, %v980
  %v996 = vadd.f32 %v973, %v980
  %v997 = vadd.f32 %v974, %v980
  %v998 = vmax.f32 %v982, 0.0
  %v999 = vmax.f32 %v983, 0.0
  %v1000 = vmax.f32 %v984, 0.0
  %v1001 = vmax.f32 %v985, 0.0
  %v1002 = vmax.f32 %v986, 0.0
  %v1003 = vmax.f32 %v987, 0.0
  %v1004 = vmax.f32 %v988, 0.0
  %v1005 = vmax.f32 %v989, 0.0
  %v1006 = vmax.f32 %v990, 0.0
  %v1007 = vmax.f32 %v991, 0.0
  %v1008 = vmax.f32 %v992, 0.0
  %v1009 = vmax.f32 %v993, 0.0
  %v1010 = vmax.f32 %v994, 0.0
  %v1011 = vmax.f32 %v995, 0.0
  %v1012 = vmax.f32 %v996, 0.0
  %v1013 = vmax.f32 %v997, 0.0
  %v1014 = vpack.c.bf16 %v999, %v998
  %v1015 = vpack.c.bf16 %v1001, %v1000
  %v1016 = vpack.c.bf16 %v1003, %v1002
  %v1017 = vpack.c.bf16 %v1005, %v1004
  %v1018 = vpack.c.bf16 %v1007, %v1006
  %v1019 = vpack.c.bf16 %v1009, %v1008
  %v1020 = vpack.c.bf16 %v1011, %v1010
  %v1021 = vpack.c.bf16 %v1013, %v1012
  %v1030 = vunpack.c.l.b16 %v1014
  %v1031 = vunpack.c.h.b16 %v1014
  %v1032 = vunpack.c.l.b16 %v1015
  %v1033 = vunpack.c.h.b16 %v1015
  %v1034 = vunpack.c.l.b16 %v1016
  %v1035 = vunpack.c.h.b16 %v1016
  %v1036 = vunpack.c.l.b16 %v1017
  %v1037 = vunpack.c.h.b16 %v1017
  %v1038 = vunpack.c.l.b16 %v1018
  %v1039 = vunpack.c.h.b16 %v1018
  %v1040 = vunpack.c.l.b16 %v1019
  %v1041 = vunpack.c.h.b16 %v1019
  %v1042 = vunpack.c.l.b16 %v1020
  %v1043 = vunpack.c.h.b16 %v1020
  %v1044 = vunpack.c.l.b16 %v1021
  %v1045 = vunpack.c.h.b16 %v1021
  %v1046 = vpack.c.b16 %v1030, %v1030
  %v1047 = vpack.c.b16 %v1031, %v1031
  %v1048 = vpack.c.b16 %v1032, %v1032
  %v1049 = vpack.c.b16 %v1033, %v1033
  %v1050 = vpack.c.b16 %v1034, %v1034
  %v1051 = vpack.c.b16 %v1035, %v1035
  %v1052 = vpack.c.b16 %v1036, %v1036
  %v1053 = vpack.c.b16 %v1037, %v1037
  %v1054 = vpack.c.b16 %v1038, %v1038
  %v1055 = vpack.c.b16 %v1039, %v1039
  %v1056 = vpack.c.b16 %v1040, %v1040
  %v1057 = vpack.c.b16 %v1041, %v1041
  %v1058 = vpack.c.b16 %v1042, %v1042
  %v1059 = vpack.c.b16 %v1043, %v1043
  %v1060 = vpack.c.b16 %v1044, %v1044
  %v1061 = vpack.c.b16 %v1045, %v1045
  %vm1078 = vcmask 257024
  %1079 = vst.msk [vmem:[%s3] sm:$0xf] %vm1078, %v1046
  %1080 = vst.msk [vmem:[%s3 + $0x4] sm:$0xf] %vm1078, %v1047
  %1081 = vst.msk [vmem:[%s3 + $0x8] sm:$0xf] %vm1078, %v1048
  %1082 = vst.msk [vmem:[%s3 + $0xc] sm:$0xf] %vm1078, %v1049
  %1083 = vst.msk [vmem:[%s3 + $0x10] sm:$0xf] %vm1078, %v1050
  %1084 = vst.msk [vmem:[%s3 + $0x14] sm:$0xf] %vm1078, %v1051
  %1085 = vst.msk [vmem:[%s3 + $0x18] sm:$0xf] %vm1078, %v1052
  %1086 = vst.msk [vmem:[%s3 + $0x1c] sm:$0xf] %vm1078, %v1053
  %1087 = vst.msk [vmem:[%s3 + $0x20] sm:$0xf] %vm1078, %v1054
  %1088 = vst.msk [vmem:[%s3 + $0x24] sm:$0xf] %vm1078, %v1055
  %1089 = vst.msk [vmem:[%s3 + $0x28] sm:$0xf] %vm1078, %v1056
  %1090 = vst.msk [vmem:[%s3 + $0x2c] sm:$0xf] %vm1078, %v1057
  %1091 = vst.msk [vmem:[%s3 + $0x30] sm:$0xf] %vm1078, %v1058
  %1092 = vst.msk [vmem:[%s3 + $0x34] sm:$0xf] %vm1078, %v1059
  %1093 = vst.msk [vmem:[%s3 + $0x38] sm:$0xf] %vm1078, %v1060
  %1094 = vst.msk [vmem:[%s3 + $0x3c] sm:$0xf] %vm1078, %v1061
  // Predicated region
  $region14: #{animal_classifier_forward.7} parent=0 // pred_check
    _
  $region15: #{animal_classifier_forward.7} parent=0 // pred_check_branch
    %1096 = sbr.rel (0) target = $region17
  $region16: #{animal_classifier_forward.7} parent=0 // pred_region
    _
  $region17: #{animal_classifier_forward.7} parent=0 // pred_fallthru
    _
  // Predicated region
  $region18: #{animal_classifier_forward.7} parent=0 // pred_check
    _
  $region19: #{animal_classifier_forward.7} parent=0 // pred_check_branch
    %1098 = sbr.rel (0) target = $region21
  $region20: #{animal_classifier_forward.7} parent=0 // pred_region
    _
  $region21: #{animal_classifier_forward.7} parent=0 // pred_fallthru
    _

// kernel: animal_classifier_forward.8
$region0: #{animal_classifier_forward.8}
  #allocation0 [shape = 'u32[]', space=smem, size = 0x4, offset = 0x4, fixed_abs, tag = 'smem constant byte address 0x4 - core index']
  #allocation1 [shape = 'u32[144,128]{1,0:T(1,128)}', space=vmem, size = 0x12000, scoped, tag = 'internal scratch']
  %s0 = inlined_call_operand.vmem [shape: bf16[4,32,288], index: 0, kind: input, shape index: {}]
  %s1 = inlined_call_operand.vmem [shape: bf16[288,64], index: 1, kind: input, shape index: {}]
  %s2 = inlined_call_operand.vmem [shape: f32[1,64], index: 2, kind: input, shape index: {}]
  %s3 = inlined_call_operand.vmem [shape: bf16[32,64], index: 3, kind: output, shape index: {}]
  %s4 = sld [smem:[#allocation0]]
  $region22: #{animal_classifier_forward.8} parent=0
    _
  %s6 = ssub.s32 1, %s4
  %s7 = scalar_select 0, %s6, %s4
  // Predicated region
  $region2: #{animal_classifier_forward.8} parent=0 // pred_check
    _
  $region3: #{animal_classifier_forward.8} parent=0 // pred_check_branch
    %9 = sbr.rel (0) target = $region5
  $region4: #{animal_classifier_forward.8} parent=0 // pred_region
    _
  $region5: #{animal_classifier_forward.8} parent=0 // pred_fallthru
    _
  // Predicated region
  $region6: #{animal_classifier_forward.8} parent=0 // pred_check
    _
  $region7: #{animal_classifier_forward.8} parent=0 // pred_check_branch
    %11 = sbr.rel (0) target = $region9
  $region8: #{animal_classifier_forward.8} parent=0 // pred_region
    _
  $region9: #{animal_classifier_forward.8} parent=0 // pred_fallthru
    _
  // Predicated region
  $region10: #{animal_classifier_forward.8} parent=0 // pred_check
    _
  $region11: #{animal_classifier_forward.8} parent=0 // pred_check_branch
    %13 = sbr.rel (0) target = $region13
  $region12: #{animal_classifier_forward.8} parent=0 // pred_region
    _
  $region13: #{animal_classifier_forward.8} parent=0 // pred_fallthru
    _
  %v15 = vld [vmem:[%s1] sm:$0xf]
  %v16 = vld [vmem:[%s1 + $0x4] sm:$0xf]
  %v17 = vld [vmem:[%s1 + $0x8] sm:$0xf]
  %v18 = vld [vmem:[%s1 + $0xc] sm:$0xf]
  %v19 = vld [vmem:[%s1 + $0x10] sm:$0xf]
  %v20 = vld [vmem:[%s1 + $0x14] sm:$0xf]
  %v21 = vld [vmem:[%s1 + $0x18] sm:$0xf]
  %v22 = vld [vmem:[%s1 + $0x1c] sm:$0xf]
  %v23 = vld [vmem:[%s1 + $0x20] sm:$0xf]
  %v24 = vld [vmem:[%s1 + $0x24] sm:$0xf]
  %v25 = vld [vmem:[%s1 + $0x28] sm:$0xf]
  %v26 = vld [vmem:[%s1 + $0x2c] sm:$0xf]
  %v27 = vld [vmem:[%s1 + $0x30] sm:$0xf]
  %v28 = vld [vmem:[%s1 + $0x34] sm:$0xf]
  %v29 = vld [vmem:[%s1 + $0x38] sm:$0xf]
  %v30 = vld [vmem:[%s1 + $0x3c] sm:$0xf]
  %v31 = vld [vmem:[%s1 + $0x40] sm:$0xf]
  %v32 = vld [vmem:[%s1 + $0x44] sm:$0xf]
  %v33 = vld [vmem:[%s1 + $0x48] sm:$0xf]
  %v34 = vld [vmem:[%s1 + $0x4c] sm:$0xf]
  %v35 = vld [vmem:[%s1 + $0x50] sm:$0xf]
  %v36 = vld [vmem:[%s1 + $0x54] sm:$0xf]
  %v37 = vld [vmem:[%s1 + $0x58] sm:$0xf]
  %v38 = vld [vmem:[%s1 + $0x5c] sm:$0xf]
  %v39 = vld [vmem:[%s1 + $0x60] sm:$0xf]
  %v40 = vld [vmem:[%s1 + $0x64] sm:$0xf]
  %v41 = vld [vmem:[%s1 + $0x68] sm:$0xf]
  %v42 = vld [vmem:[%s1 + $0x6c] sm:$0xf]
  %v43 = vld [vmem:[%s1 + $0x70] sm:$0xf]
  %v44 = vld [vmem:[%s1 + $0x74] sm:$0xf]
  %v45 = vld [vmem:[%s1 + $0x78] sm:$0xf]
  %v46 = vld [vmem:[%s1 + $0x7c] sm:$0xf]
  %v47 = vld [vmem:[%s1 + $0x80] sm:$0xf]
  %v48 = vld [vmem:[%s1 + $0x84] sm:$0xf]
  %v49 = vld [vmem:[%s1 + $0x88] sm:$0xf]
  %v50 = vld [vmem:[%s1 + $0x8c] sm:$0xf]
  %v51 = vld [vmem:[%s0] sm:$0xff]
  %v52 = vld [vmem:[%s0 + $0x8] sm:$0xf]
  %v53 = vld [vmem:[%s0 + $0xc] sm:$0xff]
  %v54 = vld [vmem:[%s0 + $0x14] sm:$0xf]
  %v55 = vld [vmem:[%s0 + $0x18] sm:$0xff]
  %v56 = vld [vmem:[%s0 + $0x20] sm:$0xf]
  %v57 = vld [vmem:[%s0 + $0x24] sm:$0xff]
  %v58 = vld [vmem:[%s0 + $0x2c] sm:$0xf]
  %v67 = vunpack.c.l.b16 %v51
  %v68 = vunpack.c.h.b16 %v51
  %v69 = vunpack.c.l.b16 %v52
  %v70 = vunpack.c.l.b16 %v53
  %v71 = vunpack.c.h.b16 %v53
  %v72 = vunpack.c.l.b16 %v54
  %v73 = vunpack.c.l.b16 %v55
  %v74 = vunpack.c.h.b16 %v55
  %v75 = vunpack.c.l.b16 %v56
  %v76 = vunpack.c.l.b16 %v57
  %v77 = vunpack.c.h.b16 %v57
  %v78 = vunpack.c.l.b16 %v58
  %v79 = vpack.c.b16 %v70, %v67
  %v80 = vpack.c.b16 %v71, %v68
  %v81 = vpack.c.b16 %v72, %v69
  %v82 = vpack.c.b16 %v76, %v73
  %v83 = vpack.c.b16 %v77, %v74
  %v84 = vpack.c.b16 %v78, %v75
  %v125 = vunpack.c.l.b16 %v15
  %v126 = vunpack.c.l.b16 %v16
  %v127 = vunpack.c.l.b16 %v17
  %v128 = vunpack.c.l.b16 %v18
  %v129 = vunpack.c.l.b16 %v19
  %v130 = vunpack.c.l.b16 %v20
  %v131 = vunpack.c.l.b16 %v21
  %v132 = vunpack.c.l.b16 %v22
  %v133 = vunpack.c.l.b16 %v23
  %v134 = vunpack.c.l.b16 %v24
  %v135 = vunpack.c.l.b16 %v25
  %v136 = vunpack.c.l.b16 %v26
  %v137 = vunpack.c.l.b16 %v27
  %v138 = vunpack.c.l.b16 %v28
  %v139 = vunpack.c.l.b16 %v29
  %v140 = vunpack.c.l.b16 %v30
  %v141 = vunpack.c.l.b16 %v31
  %v142 = vunpack.c.l.b16 %v32
  %v143 = vunpack.c.l.b16 %v33
  %v144 = vunpack.c.l.b16 %v34
  %v145 = vunpack.c.l.b16 %v35
  %v146 = vunpack.c.l.b16 %v36
  %v147 = vunpack.c.l.b16 %v37
  %v148 = vunpack.c.l.b16 %v38
  %v149 = vunpack.c.l.b16 %v39
  %v150 = vunpack.c.l.b16 %v40
  %v151 = vunpack.c.l.b16 %v41
  %v152 = vunpack.c.l.b16 %v42
  %v153 = vunpack.c.l.b16 %v43
  %v154 = vunpack.c.l.b16 %v44
  %v155 = vunpack.c.l.b16 %v45
  %v156 = vunpack.c.l.b16 %v46
  %v157 = vunpack.c.l.b16 %v47
  %v158 = vunpack.c.l.b16 %v48
  %v159 = vunpack.c.l.b16 %v49
  %v160 = vunpack.c.l.b16 %v50
  %v161 = vpack.c.b16 %v126, %v125
  %v162 = vpack.c.b16 %v128, %v127
  %v163 = vpack.c.b16 %v130, %v129
  %v164 = vpack.c.b16 %v132, %v131
  %v165 = vpack.c.b16 %v134, %v133
  %v166 = vpack.c.b16 %v136, %v135
  %v167 = vpack.c.b16 %v138, %v137
  %v168 = vpack.c.b16 %v140, %v139
  %v169 = vpack.c.b16 %v142, %v141
  %v170 = vpack.c.b16 %v144, %v143
  %v171 = vpack.c.b16 %v146, %v145
  %v172 = vpack.c.b16 %v148, %v147
  %v173 = vpack.c.b16 %v150, %v149
  %v174 = vpack.c.b16 %v152, %v151
  %v175 = vpack.c.b16 %v154, %v153
  %v176 = vpack.c.b16 %v156, %v155
  %v177 = vpack.c.b16 %v158, %v157
  %v178 = vpack.c.b16 %v160, %v159
  %vm197 = vcmask 261120
  %v199 = vsel %vm197, %v81, 0
  %v202 = vsel %vm197, %v84, 0
  %204 = vmatprep.subr.bf16.mxu0 0
  %205 = vmatpush1.bf16.msra.mxu0 %v161
  %206 = vmatprep.subr.bf16.mxu0 0
  %207 = vmatpush1.bf16.msra.mxu0 %v162
  %208 = vmatprep.subr.bf16.mxu0 0
  %209 = vmatpush1.bf16.msra.mxu0 %v163
  %210 = vmatprep.subr.bf16.mxu0 0
  %211 = vmatpush1.bf16.msra.mxu0 %v164
  %212 = vmatprep.subr.bf16.mxu0 0
  %213 = vmatpush1.bf16.msra.mxu0 %v165
  %214 = vmatprep.subr.bf16.mxu0 0
  %215 = vmatpush1.bf16.msra.mxu0 %v166
  %216 = vmatprep.subr.bf16.mxu0 0
  %217 = vmatpush1.bf16.msra.mxu0 %v167
  %218 = vmatprep.subr.bf16.mxu0 0
  %219 = vmatpush1.bf16.msra.mxu0 %v168
  %220 = vmatprep.subr.bf16.mxu0 0
  %221 = vmatpush1.bf16.msra.mxu0 %v169
  %222 = vmatprep.subr.bf16.mxu0 0
  %223 = vmatpush1.bf16.msra.mxu0 %v170
  %224 = vmatprep.subr.bf16.mxu0 0
  %225 = vmatpush1.bf16.msra.mxu0 %v171
  %226 = vmatprep.subr.bf16.mxu0 0
  %227 = vmatpush1.bf16.msra.mxu0 %v172
  %228 = vmatprep.subr.bf16.mxu0 0
  %229 = vmatpush1.bf16.msra.mxu0 %v173
  %230 = vmatprep.subr.bf16.mxu0 0
  %231 = vmatpush1.bf16.msra.mxu0 %v174
  %232 = vmatprep.subr.bf16.mxu0 0
  %233 = vmatpush1.bf16.msra.mxu0 %v175
  %234 = vmatprep.subr.bf16.mxu0 0
  %235 = vmatpush1.bf16.msra.mxu0 %v176
  %236 = vmatprep.mubr.bf16.mxu0 %v80
  %237 = vmatmul.mubr.bf16.gmra.mrb[0].mxu0 %v79
  %v238 = vpop.f32.mrb[0].mxu0
  %v239 = vadd.f32 0.0, %v238
  %v240 = vpop.f32.mrb[0].mxu0
  %v241 = vpop.f32.mrb[0].mxu0
  %v242 = vadd.f32 0.0, %v241
  %v243 = vpop.f32.mrb[0].mxu0
  %244 = vmatprep.mubr.bf16.mxu0 %v83
  %245 = vmatmul.mubr.bf16.gmra.mrb[0].mxu0 %v82
  %v246 = vpop.f32.mrb[0].mxu0
  %v247 = vadd.f32 0.0, %v246
  %v248 = vpop.f32.mrb[0].mxu0
  %v249 = vpop.f32.mrb[0].mxu0
  %v250 = vadd.f32 0.0, %v249
  %v251 = vpop.f32.mrb[0].mxu0
  %252 = vdwg.mxu0
  %253 = vmatprep.subr.bf16.mxu0 0
  %254 = vmatpush1.bf16.msra.mxu0 %v177
  %255 = vmatprep.subr.bf16.mxu0 0
  %256 = vmatpush1.bf16.msra.mxu0 %v178
  %257 = vmatprep.subr.bf16.mxu0 0
  %258 = vmatpush1.bf16.msra.mxu0 0
  %259 = vmatprep.subr.bf16.mxu0 0
  %260 = vmatpush1.bf16.msra.mxu0 0
  %261 = vmatprep.subr.bf16.mxu0 0
  %262 = vmatpush1.bf16.msra.mxu0 0
  %263 = vmatprep.subr.bf16.mxu0 0
  %264 = vmatpush1.bf16.msra.mxu0 0
  %265 = vmatprep.subr.bf16.mxu0 0
  %266 = vmatpush1.bf16.msra.mxu0 0
  %267 = vmatprep.subr.bf16.mxu0 0
  %268 = vmatpush1.bf16.msra.mxu0 0
  %269 = vmatprep.subr.bf16.mxu0 0
  %270 = vmatpush1.bf16.msra.mxu0 0
  %271 = vmatprep.subr.bf16.mxu0 0
  %272 = vmatpush1.bf16.msra.mxu0 0
  %273 = vmatprep.subr.bf16.mxu0 0
  %274 = vmatpush1.bf16.msra.mxu0 0
  %275 = vmatprep.subr.bf16.mxu0 0
  %276 = vmatpush1.bf16.msra.mxu0 0
  %277 = vmatprep.subr.bf16.mxu0 0
  %278 = vmatpush1.bf16.msra.mxu0 0
  %279 = vmatprep.subr.bf16.mxu0 0
  %280 = vmatpush1.bf16.msra.mxu0 0
  %281 = vmatprep.subr.bf16.mxu0 0
  %282 = vmatpush1.bf16.msra.mxu0 0
  %283 = vmatprep.subr.bf16.mxu0 0
  %284 = vmatpush1.bf16.msra.mxu0 0
  %285 = vmatprep.mubr.bf16.mxu0 0
  %286 = vmatmul.mubr.bf16.gmra.mrb[0].mxu0 %v199
  %v287 = vpop.f32.mrb[0].mxu0
  %v288 = vadd.f32 %v239, %v287
  %v289 = vpop.f32.mrb[0].mxu0
  %v290 = vpop.f32.mrb[0].mxu0
  %v291 = vadd.f32 %v242, %v290
  %v292 = vpop.f32.mrb[0].mxu0
  %293 = vmatprep.mubr.bf16.mxu0 0
  %294 = vmatmul.mubr.bf16.gmra.mrb[0].mxu0 %v202
  %v295 = vpop.f32.mrb[0].mxu0
  %v296 = vadd.f32 %v247, %v295
  %v297 = vpop.f32.mrb[0].mxu0
  %v298 = vpop.f32.mrb[0].mxu0
  %v299 = vadd.f32 %v250, %v298
  %v300 = vpop.f32.mrb[0].mxu0
  %301 = vdwg.mxu0
  %s302 = scalar_lea.vmem %s0, 48
  %v303 = vld [vmem:[%s302] sm:$0xff]
  %v304 = vld [vmem:[%s302 + $0x8] sm:$0xf]
  %v305 = vld [vmem:[%s302 + $0xc] sm:$0xff]
  %v306 = vld [vmem:[%s302 + $0x14] sm:$0xf]
  %v307 = vld [vmem:[%s302 + $0x18] sm:$0xff]
  %v308 = vld [vmem:[%s302 + $0x20] sm:$0xf]
  %v309 = vld [vmem:[%s302 + $0x24] sm:$0xff]
  %v310 = vld [vmem:[%s302 + $0x2c] sm:$0xf]
  %v319 = vunpack.c.l.b16 %v303
  %v320 = vunpack.c.h.b16 %v303
  %v321 = vunpack.c.l.b16 %v304
  %v322 = vunpack.c.l.b16 %v305
  %v323 = vunpack.c.h.b16 %v305
  %v324 = vunpack.c.l.b16 %v306
  %v325 = vunpack.c.l.b16 %v307
  %v326 = vunpack.c.h.b16 %v307
  %v327 = vunpack.c.l.b16 %v308
  %v328 = vunpack.c.l.b16 %v309
  %v329 = vunpack.c.h.b16 %v309
  %v330 = vunpack.c.l.b16 %v310
  %v331 = vpack.c.b16 %v322, %v319
  %v332 = vpack.c.b16 %v323, %v320
  %v333 = vpack.c.b16 %v324, %v321
  %v334 = vpack.c.b16 %v328, %v325
  %v335 = vpack.c.b16 %v329, %v326
  %v336 = vpack.c.b16 %v330, %v327
  %v342 = vsel %vm197, %v333, 0
  %v345 = vsel %vm197, %v336, 0
  %347 = vmatprep.subr.bf16.mxu0 0
  %348 = vmatpush1.bf16.msra.mxu0 %v161
  %349 = vmatprep.subr.bf16.mxu0 0
  %350 = vmatpush1.bf16.msra.mxu0 %v162
  %351 = vmatprep.subr.bf16.mxu0 0
  %352 = vmatpush1.bf16.msra.mxu0 %v163
  %353 = vmatprep.subr.bf16.mxu0 0
  %354 = vmatpush1.bf16.msra.mxu0 %v164
  %355 = vmatprep.subr.bf16.mxu0 0
  %356 = vmatpush1.bf16.msra.mxu0 %v165
  %357 = vmatprep.subr.bf16.mxu0 0
  %358 = vmatpush1.bf16.msra.mxu0 %v166
  %359 = vmatprep.subr.bf16.mxu0 0
  %360 = vmatpush1.bf16.msra.mxu0 %v167
  %361 = vmatprep.subr.bf16.mxu0 0
  %362 = vmatpush1.bf16.msra.mxu0 %v168
  %363 = vmatprep.subr.bf16.mxu0 0
  %364 = vmatpush1.bf16.msra.mxu0 %v169
  %365 = vmatprep.subr.bf16.mxu0 0
  %366 = vmatpush1.bf16.msra.mxu0 %v170
  %367 = vmatprep.subr.bf16.mxu0 0
  %368 = vmatpush1.bf16.msra.mxu0 %v171
  %369 = vmatprep.subr.bf16.mxu0 0
  %370 = vmatpush1.bf16.msra.mxu0 %v172
  %371 = vmatprep.subr.bf16.mxu0 0
  %372 = vmatpush1.bf16.msra.mxu0 %v173
  %373 = vmatprep.subr.bf16.mxu0 0
  %374 = vmatpush1.bf16.msra.mxu0 %v174
  %375 = vmatprep.subr.bf16.mxu0 0
  %376 = vmatpush1.bf16.msra.mxu0 %v175
  %377 = vmatprep.subr.bf16.mxu0 0
  %378 = vmatpush1.bf16.msra.mxu0 %v176
  %379 = vmatprep.mubr.bf16.mxu0 %v332
  %380 = vmatmul.mubr.bf16.gmra.mrb[0].mxu0 %v331
  %v381 = vpop.f32.mrb[0].mxu0
  %v382 = vadd.f32 0.0, %v381
  %v383 = vpop.f32.mrb[0].mxu0
  %v384 = vpop.f32.mrb[0].mxu0
  %v385 = vadd.f32 0.0, %v384
  %v386 = vpop.f32.mrb[0].mxu0
  %387 = vmatprep.mubr.bf16.mxu0 %v335
  %388 = vmatmul.mubr.bf16.gmra.mrb[0].mxu0 %v334
  %v389 = vpop.f32.mrb[0].mxu0
  %v390 = vadd.f32 0.0, %v389
  %v391 = vpop.f32.mrb[0].mxu0
  %v392 = vpop.f32.mrb[0].mxu0
  %v393 = vadd.f32 0.0, %v392
  %v394 = vpop.f32.mrb[0].mxu0
  %395 = vdwg.mxu0
  %396 = vmatprep.subr.bf16.mxu0 0
  %397 = vmatpush1.bf16.msra.mxu0 %v177
  %398 = vmatprep.subr.bf16.mxu0 0
  %399 = vmatpush1.bf16.msra.mxu0 %v178
  %400 = vmatprep.subr.bf16.mxu0 0
  %401 = vmatpush1.bf16.msra.mxu0 0
  %402 = vmatprep.subr.bf16.mxu0 0
  %403 = vmatpush1.bf16.msra.mxu0 0
  %404 = vmatprep.subr.bf16.mxu0 0
  %405 = vmatpush1.bf16.msra.mxu0 0
  %406 = vmatprep.subr.bf16.mxu0 0
  %407 = vmatpush1.bf16.msra.mxu0 0
  %408 = vmatprep.subr.bf16.mxu0 0
  %409 = vmatpush1.bf16.msra.mxu0 0
  %410 = vmatprep.subr.bf16.mxu0 0
  %411 = vmatpush1.bf16.msra.mxu0 0
  %412 = vmatprep.subr.bf16.mxu0 0
  %413 = vmatpush1.bf16.msra.mxu0 0
  %414 = vmatprep.subr.bf16.mxu0 0
  %415 = vmatpush1.bf16.msra.mxu0 0
  %416 = vmatprep.subr.bf16.mxu0 0
  %417 = vmatpush1.bf16.msra.mxu0 0
  %418 = vmatprep.subr.bf16.mxu0 0
  %419 = vmatpush1.bf16.msra.mxu0 0
  %420 = vmatprep.subr.bf16.mxu0 0
  %421 = vmatpush1.bf16.msra.mxu0 0
  %422 = vmatprep.subr.bf16.mxu0 0
  %423 = vmatpush1.bf16.msra.mxu0 0
  %424 = vmatprep.subr.bf16.mxu0 0
  %425 = vmatpush1.bf16.msra.mxu0 0
  %426 = vmatprep.subr.bf16.mxu0 0
  %427 = vmatpush1.bf16.msra.mxu0 0
  %428 = vmatprep.mubr.bf16.mxu0 0
  %429 = vmatmul.mubr.bf16.gmra.mrb[0].mxu0 %v342
  %v430 = vpop.f32.mrb[0].mxu0
  %v431 = vadd.f32 %v382, %v430
  %v432 = vpop.f32.mrb[0].mxu0
  %v433 = vpop.f32.mrb[0].mxu0
  %v434 = vadd.f32 %v385, %v433
  %v435 = vpop.f32.mrb[0].mxu0
  %436 = vmatprep.mubr.bf16.mxu0 0
  %437 = vmatmul.mubr.bf16.gmra.mrb[0].mxu0 %v345
  %v438 = vpop.f32.mrb[0].mxu0
  %v439 = vadd.f32 %v390, %v438
  %v440 = vpop.f32.mrb[0].mxu0
  %v441 = vpop.f32.mrb[0].mxu0
  %v442 = vadd.f32 %v393, %v441
  %v443 = vpop.f32.mrb[0].mxu0
  %444 = vdwg.mxu0
  %v445 = vmax.f32 %v288, %v431
  %v446 = vmax.f32 %v291, %v434
  %v447 = vmax.f32 %v296, %v439
  %v448 = vmax.f32 %v299, %v442
  %s449 = scalar_lea.vmem %s0, 96
  %v450 = vld [vmem:[%s449] sm:$0xff]
  %v451 = vld [vmem:[%s449 + $0x8] sm:$0xf]
  %v452 = vld [vmem:[%s449 + $0xc] sm:$0xff]
  %v453 = vld [vmem:[%s449 + $0x14] sm:$0xf]
  %v454 = vld [vmem:[%s449 + $0x18] sm:$0xff]
  %v455 = vld [vmem:[%s449 + $0x20] sm:$0xf]
  %v456 = vld [vmem:[%s449 + $0x24] sm:$0xff]
  %v457 = vld [vmem:[%s449 + $0x2c] sm:$0xf]
  %v466 = vunpack.c.l.b16 %v450
  %v467 = vunpack.c.h.b16 %v450
  %v468 = vunpack.c.l.b16 %v451
  %v469 = vunpack.c.l.b16 %v452
  %v470 = vunpack.c.h.b16 %v452
  %v471 = vunpack.c.l.b16 %v453
  %v472 = vunpack.c.l.b16 %v454
  %v473 = vunpack.c.h.b16 %v454
  %v474 = vunpack.c.l.b16 %v455
  %v475 = vunpack.c.l.b16 %v456
  %v476 = vunpack.c.h.b16 %v456
  %v477 = vunpack.c.l.b16 %v457
  %v478 = vpack.c.b16 %v469, %v466
  %v479 = vpack.c.b16 %v470, %v467
  %v480 = vpack.c.b16 %v471, %v468
  %v481 = vpack.c.b16 %v475, %v472
  %v482 = vpack.c.b16 %v476, %v473
  %v483 = vpack.c.b16 %v477, %v474
  %v489 = vsel %vm197, %v480, 0
  %v492 = vsel %vm197, %v483, 0
  %494 = vmatprep.subr.bf16.mxu0 0
  %495 = vmatpush1.bf16.msra.mxu0 %v161
  %496 = vmatprep.subr.bf16.mxu0 0
  %497 = vmatpush1.bf16.msra.mxu0 %v162
  %498 = vmatprep.subr.bf16.mxu0 0
  %499 = vmatpush1.bf16.msra.mxu0 %v163
  %500 = vmatprep.subr.bf16.mxu0 0
  %501 = vmatpush1.bf16.msra.mxu0 %v164
  %502 = vmatprep.subr.bf16.mxu0 0
  %503 = vmatpush1.bf16.msra.mxu0 %v165
  %504 = vmatprep.subr.bf16.mxu0 0
  %505 = vmatpush1.bf16.msra.mxu0 %v166
  %506 = vmatprep.subr.bf16.mxu0 0
  %507 = vmatpush1.bf16.msra.mxu0 %v167
  %508 = vmatprep.subr.bf16.mxu0 0
  %509 = vmatpush1.bf16.msra.mxu0 %v168
  %510 = vmatprep.subr.bf16.mxu0 0
  %511 = vmatpush1.bf16.msra.mxu0 %v169
  %512 = vmatprep.subr.bf16.mxu0 0
  %513 = vmatpush1.bf16.msra.mxu0 %v170
  %514 = vmatprep.subr.bf16.mxu0 0
  %515 = vmatpush1.bf16.msra.mxu0 %v171
  %516 = vmatprep.subr.bf16.mxu0 0
  %517 = vmatpush1.bf16.msra.mxu0 %v172
  %518 = vmatprep.subr.bf16.mxu0 0
  %519 = vmatpush1.bf16.msra.mxu0 %v173
  %520 = vmatprep.subr.bf16.mxu0 0
  %521 = vmatpush1.bf16.msra.mxu0 %v174
  %522 = vmatprep.subr.bf16.mxu0 0
  %523 = vmatpush1.bf16.msra.mxu0 %v175
  %524 = vmatprep.subr.bf16.mxu0 0
  %525 = vmatpush1.bf16.msra.mxu0 %v176
  %526 = vmatprep.mubr.bf16.mxu0 %v479
  %527 = vmatmul.mubr.bf16.gmra.mrb[0].mxu0 %v478
  %v528 = vpop.f32.mrb[0].mxu0
  %v529 = vadd.f32 0.0, %v528
  %v530 = vpop.f32.mrb[0].mxu0
  %v531 = vpop.f32.mrb[0].mxu0
  %v532 = vadd.f32 0.0, %v531
  %v533 = vpop.f32.mrb[0].mxu0
  %534 = vmatprep.mubr.bf16.mxu0 %v482
  %535 = vmatmul.mubr.bf16.gmra.mrb[0].mxu0 %v481
  %v536 = vpop.f32.mrb[0].mxu0
  %v537 = vadd.f32 0.0, %v536
  %v538 = vpop.f32.mrb[0].mxu0
  %v539 = vpop.f32.mrb[0].mxu0
  %v540 = vadd.f32 0.0, %v539
  %v541 = vpop.f32.mrb[0].mxu0
  %542 = vdwg.mxu0
  %543 = vmatprep.subr.bf16.mxu0 0
  %544 = vmatpush1.bf16.msra.mxu0 %v177
  %545 = vmatprep.subr.bf16.mxu0 0
  %546 = vmatpush1.bf16.msra.mxu0 %v178
  %547 = vmatprep.subr.bf16.mxu0 0
  %548 = vmatpush1.bf16.msra.mxu0 0
  %549 = vmatprep.subr.bf16.mxu0 0
  %550 = vmatpush1.bf16.msra.mxu0 0
  %551 = vmatprep.subr.bf16.mxu0 0
  %552 = vmatpush1.bf16.msra.mxu0 0
  %553 = vmatprep.subr.bf16.mxu0 0
  %554 = vmatpush1.bf16.msra.mxu0 0
  %555 = vmatprep.subr.bf16.mxu0 0
  %556 = vmatpush1.bf16.msra.mxu0 0
  %557 = vmatprep.subr.bf16.mxu0 0
  %558 = vmatpush1.bf16.msra.mxu0 0
  %559 = vmatprep.subr.bf16.mxu0 0
  %560 = vmatpush1.bf16.msra.mxu0 0
  %561 = vmatprep.subr.bf16.mxu0 0
  %562 = vmatpush1.bf16.msra.mxu0 0
  %563 = vmatprep.subr.bf16.mxu0 0
  %564 = vmatpush1.bf16.msra.mxu0 0
  %565 = vmatprep.subr.bf16.mxu0 0
  %566 = vmatpush1.bf16.msra.mxu0 0
  %567 = vmatprep.subr.bf16.mxu0 0
  %568 = vmatpush1.bf16.msra.mxu0 0
  %569 = vmatprep.subr.bf16.mxu0 0
  %570 = vmatpush1.bf16.msra.mxu0 0
  %571 = vmatprep.subr.bf16.mxu0 0
  %572 = vmatpush1.bf16.msra.mxu0 0
  %573 = vmatprep.subr.bf16.mxu0 0
  %574 = vmatpush1.bf16.msra.mxu0 0
  %575 = vmatprep.mubr.bf16.mxu0 0
  %576 = vmatmul.mubr.bf16.gmra.mrb[0].mxu0 %v489
  %v577 = vpop.f32.mrb[0].mxu0
  %v578 = vadd.f32 %v529, %v577
  %v579 = vpop.f32.mrb[0].mxu0
  %v580 = vpop.f32.mrb[0].mxu0
  %v581 = vadd.f32 %v532, %v580
  %v582 = vpop.f32.mrb[0].mxu0
  %583 = vmatprep.mubr.bf16.mxu0 0
  %584 = vmatmul.mubr.bf16.gmra.mrb[0].mxu0 %v492
  %v585 = vpop.f32.mrb[0].mxu0
  %v586 = vadd.f32 %v537, %v585
  %v587 = vpop.f32.mrb[0].mxu0
  %v588 = vpop.f32.mrb[0].mxu0
  %v589 = vadd.f32 %v540, %v588
  %v590 = vpop.f32.mrb[0].mxu0
  %591 = vdwg.mxu0
  %v592 = vmax.f32 %v445, %v578
  %v593 = vmax.f32 %v446, %v581
  %v594 = vmax.f32 %v447, %v586
  %v595 = vmax.f32 %v448, %v589
  %s596 = scalar_lea.vmem %s0, 144
  %v597 = vld [vmem:[%s596] sm:$0xff]
  %v598 = vld [vmem:[%s596 + $0x8] sm:$0xf]
  %v599 = vld [vmem:[%s596 + $0xc] sm:$0xff]
  %v600 = vld [vmem:[%s596 + $0x14] sm:$0xf]
  %v601 = vld [vmem:[%s596 + $0x18] sm:$0xff]
  %v602 = vld [vmem:[%s596 + $0x20] sm:$0xf]
  %v603 = vld [vmem:[%s596 + $0x24] sm:$0xff]
  %v604 = vld [vmem:[%s596 + $0x2c] sm:$0xf]
  %v613 = vunpack.c.l.b16 %v597
  %v614 = vunpack.c.h.b16 %v597
  %v615 = vunpack.c.l.b16 %v598
  %v616 = vunpack.c.l.b16 %v599
  %v617 = vunpack.c.h.b16 %v599
  %v618 = vunpack.c.l.b16 %v600
  %v619 = vunpack.c.l.b16 %v601
  %v620 = vunpack.c.h.b16 %v601
  %v621 = vunpack.c.l.b16 %v602
  %v622 = vunpack.c.l.b16 %v603
  %v623 = vunpack.c.h.b16 %v603
  %v624 = vunpack.c.l.b16 %v604
  %v625 = vpack.c.b16 %v616, %v613
  %v626 = vpack.c.b16 %v617, %v614
  %v627 = vpack.c.b16 %v618, %v615
  %v628 = vpack.c.b16 %v622, %v619
  %v629 = vpack.c.b16 %v623, %v620
  %v630 = vpack.c.b16 %v624, %v621
  %v636 = vsel %vm197, %v627, 0
  %v639 = vsel %vm197, %v630, 0
  %641 = vmatprep.subr.bf16.mxu0 0
  %642 = vmatpush1.bf16.msra.mxu0 %v161
  %643 = vmatprep.subr.bf16.mxu0 0
  %644 = vmatpush1.bf16.msra.mxu0 %v162
  %645 = vmatprep.subr.bf16.mxu0 0
  %646 = vmatpush1.bf16.msra.mxu0 %v163
  %647 = vmatprep.subr.bf16.mxu0 0
  %648 = vmatpush1.bf16.msra.mxu0 %v164
  %649 = vmatprep.subr.bf16.mxu0 0
  %650 = vmatpush1.bf16.msra.mxu0 %v165
  %651 = vmatprep.subr.bf16.mxu0 0
  %652 = vmatpush1.bf16.msra.mxu0 %v166
  %653 = vmatprep.subr.bf16.mxu0 0
  %654 = vmatpush1.bf16.msra.mxu0 %v167
  %655 = vmatprep.subr.bf16.mxu0 0
  %656 = vmatpush1.bf16.msra.mxu0 %v168
  %657 = vmatprep.subr.bf16.mxu0 0
  %658 = vmatpush1.bf16.msra.mxu0 %v169
  %659 = vmatprep.subr.bf16.mxu0 0
  %660 = vmatpush1.bf16.msra.mxu0 %v170
  %661 = vmatprep.subr.bf16.mxu0 0
  %662 = vmatpush1.bf16.msra.mxu0 %v171
  %663 = vmatprep.subr.bf16.mxu0 0
  %664 = vmatpush1.bf16.msra.mxu0 %v172
  %665 = vmatprep.subr.bf16.mxu0 0
  %666 = vmatpush1.bf16.msra.mxu0 %v173
  %667 = vmatprep.subr.bf16.mxu0 0
  %668 = vmatpush1.bf16.msra.mxu0 %v174
  %669 = vmatprep.subr.bf16.mxu0 0
  %670 = vmatpush1.bf16.msra.mxu0 %v175
  %671 = vmatprep.subr.bf16.mxu0 0
  %672 = vmatpush1.bf16.msra.mxu0 %v176
  %673 = vmatprep.mubr.bf16.mxu0 %v626
  %674 = vmatmul.mubr.bf16.gmra.mrb[0].mxu0 %v625
  %v675 = vpop.f32.mrb[0].mxu0
  %v676 = vadd.f32 0.0, %v675
  %v677 = vpop.f32.mrb[0].mxu0
  %v678 = vpop.f32.mrb[0].mxu0
  %v679 = vadd.f32 0.0, %v678
  %v680 = vpop.f32.mrb[0].mxu0
  %681 = vmatprep.mubr.bf16.mxu0 %v629
  %682 = vmatmul.mubr.bf16.gmra.mrb[0].mxu0 %v628
  %v683 = vpop.f32.mrb[0].mxu0
  %v684 = vadd.f32 0.0, %v683
  %v685 = vpop.f32.mrb[0].mxu0
  %v686 = vpop.f32.mrb[0].mxu0
  %v687 = vadd.f32 0.0, %v686
  %v688 = vpop.f32.mrb[0].mxu0
  %689 = vdwg.mxu0
  %690 = vmatprep.subr.bf16.mxu0 0
  %691 = vmatpush1.bf16.msra.mxu0 %v177
  %692 = vmatprep.subr.bf16.mxu0 0
  %693 = vmatpush1.bf16.msra.mxu0 %v178
  %694 = vmatprep.subr.bf16.mxu0 0
  %695 = vmatpush1.bf16.msra.mxu0 0
  %696 = vmatprep.subr.bf16.mxu0 0
  %697 = vmatpush1.bf16.msra.mxu0 0
  %698 = vmatprep.subr.bf16.mxu0 0
  %699 = vmatpush1.bf16.msra.mxu0 0
  %700 = vmatprep.subr.bf16.mxu0 0
  %701 = vmatpush1.bf16.msra.mxu0 0
  %702 = vmatprep.subr.bf16.mxu0 0
  %703 = vmatpush1.bf16.msra.mxu0 0
  %704 = vmatprep.subr.bf16.mxu0 0
  %705 = vmatpush1.bf16.msra.mxu0 0
  %706 = vmatprep.subr.bf16.mxu0 0
  %707 = vmatpush1.bf16.msra.mxu0 0
  %708 = vmatprep.subr.bf16.mxu0 0
  %709 = vmatpush1.bf16.msra.mxu0 0
  %710 = vmatprep.subr.bf16.mxu0 0
  %711 = vmatpush1.bf16.msra.mxu0 0
  %712 = vmatprep.subr.bf16.mxu0 0
  %713 = vmatpush1.bf16.msra.mxu0 0
  %714 = vmatprep.subr.bf16.mxu0 0
  %715 = vmatpush1.bf16.msra.mxu0 0
  %716 = vmatprep.subr.bf16.mxu0 0
  %717 = vmatpush1.bf16.msra.mxu0 0
  %718 = vmatprep.subr.bf16.mxu0 0
  %719 = vmatpush1.bf16.msra.mxu0 0
  %720 = vmatprep.subr.bf16.mxu0 0
  %721 = vmatpush1.bf16.msra.mxu0 0
  %722 = vmatprep.mubr.bf16.mxu0 0
  %723 = vmatmul.mubr.bf16.gmra.mrb[0].mxu0 %v636
  %v724 = vpop.f32.mrb[0].mxu0
  %v725 = vadd.f32 %v676, %v724
  %v726 = vpop.f32.mrb[0].mxu0
  %v727 = vpop.f32.mrb[0].mxu0
  %v728 = vadd.f32 %v679, %v727
  %v729 = vpop.f32.mrb[0].mxu0
  %730 = vmatprep.mubr.bf16.mxu0 0
  %731 = vmatmul.mubr.bf16.gmra.mrb[0].mxu0 %v639
  %v732 = vpop.f32.mrb[0].mxu0
  %v733 = vadd.f32 %v684, %v732
  %v734 = vpop.f32.mrb[0].mxu0
  %v735 = vpop.f32.mrb[0].mxu0
  %v736 = vadd.f32 %v687, %v735
  %v737 = vpop.f32.mrb[0].mxu0
  %738 = vdwg.mxu0
  %v739 = vmax.f32 %v592, %v725
  %v740 = vmax.f32 %v593, %v728
  %v741 = vmax.f32 %v594, %v733
  %v742 = vmax.f32 %v595, %v736
  %v743 = vld [vmem:[%s2] sm:$0x1]
  %v745 = vlaneseq
  %v746 = vshrl.u32 %v745, 7
  %v747 = vsub.s32 0, %v746
  %v748 = vrot.slane %v743, %v747
  %v750 = vadd.f32 %v739, %v748
  %v751 = vadd.f32 %v740, %v748
  %v752 = vadd.f32 %v741, %v748
  %v753 = vadd.f32 %v742, %v748
  %v754 = vmax.f32 %v750, 0.0
  %v755 = vmax.f32 %v751, 0.0
  %v756 = vmax.f32 %v752, 0.0
  %v757 = vmax.f32 %v753, 0.0
  %v758 = vpack.c.bf16 %v755, %v754
  %v759 = vpack.c.bf16 %v757, %v756
  %v762 = vunpack.c.l.b16 %v758
  %v763 = vunpack.c.h.b16 %v758
  %v764 = vunpack.c.l.b16 %v759
  %v765 = vunpack.c.h.b16 %v759
  %v766 = vpack.c.b16 %v762, %v762
  %v767 = vpack.c.b16 %v763, %v763
  %v768 = vpack.c.b16 %v764, %v764
  %v769 = vpack.c.b16 %v765, %v765
  %vm774 = vcmask 519168
  %775 = vst.msk [vmem:[%s3] sm:$0xf] %vm774, %v766
  %776 = vst.msk [vmem:[%s3 + $0x4] sm:$0xf] %vm774, %v767
  %777 = vst.msk [vmem:[%s3 + $0x8] sm:$0xf] %vm774, %v768
  %778 = vst.msk [vmem:[%s3 + $0xc] sm:$0xf] %vm774, %v769
  // Predicated region
  $region14: #{animal_classifier_forward.8} parent=0 // pred_check
    _
  $region15: #{animal_classifier_forward.8} parent=0 // pred_check_branch
    %780 = sbr.rel (0) target = $region17
  $region16: #{animal_classifier_forward.8} parent=0 // pred_region
    _
  $region17: #{animal_classifier_forward.8} parent=0 // pred_fallthru
    _
  // Predicated region
  $region18: #{animal_classifier_forward.8} parent=0 // pred_check
    _
  $region19: #{animal_classifier_forward.8} parent=0 // pred_check_branch
    %782 = sbr.rel (0) target = $region21
  $region20: #{animal_classifier_forward.8} parent=0 // pred_region
    _
  $region21: #{animal_classifier_forward.8} parent=0 // pred_fallthru
    _

// kernel: animal_classifier_forward.9
$region0: #{animal_classifier_forward.9}
  #allocation0 [shape = 'u32[]', space=smem, size = 0x4, offset = 0x4, fixed_abs, tag = 'smem constant byte address 0x4 - core index']
  #allocation1 [shape = 'u32[144,128]{1,0:T(1,128)}', space=vmem, size = 0x12000, scoped, tag = 'internal scratch']
  %s0 = inlined_call_operand.vmem [shape: bf16[4,8,576], index: 0, kind: input, shape index: {}]
  %s1 = inlined_call_operand.vmem [shape: bf16[576,128], index: 1, kind: input, shape index: {}]
  %s2 = inlined_call_operand.vmem [shape: f32[1,128], index: 2, kind: input, shape index: {}]
  %s3 = inlined_call_operand.vmem [shape: bf16[8,128], index: 3, kind: output, shape index: {}]
  %s4 = sld [smem:[#allocation0]]
  $region22: #{animal_classifier_forward.9} parent=0
    _
  %s6 = ssub.s32 1, %s4
  %s7 = scalar_select 0, %s6, %s4
  // Predicated region
  $region2: #{animal_classifier_forward.9} parent=0 // pred_check
    _
  $region3: #{animal_classifier_forward.9} parent=0 // pred_check_branch
    %9 = sbr.rel (0) target = $region5
  $region4: #{animal_classifier_forward.9} parent=0 // pred_region
    _
  $region5: #{animal_classifier_forward.9} parent=0 // pred_fallthru
    _
  // Predicated region
  $region6: #{animal_classifier_forward.9} parent=0 // pred_check
    _
  $region7: #{animal_classifier_forward.9} parent=0 // pred_check_branch
    %11 = sbr.rel (0) target = $region9
  $region8: #{animal_classifier_forward.9} parent=0 // pred_region
    _
  $region9: #{animal_classifier_forward.9} parent=0 // pred_fallthru
    _
  // Predicated region
  $region10: #{animal_classifier_forward.9} parent=0 // pred_check
    _
  $region11: #{animal_classifier_forward.9} parent=0 // pred_check_branch
    %13 = sbr.rel (0) target = $region13
  $region12: #{animal_classifier_forward.9} parent=0 // pred_region
    _
  $region13: #{animal_classifier_forward.9} parent=0 // pred_fallthru
    _
  %v15 = vld [vmem:[%s1] sm:$0xf]
  %v16 = vld [vmem:[%s1 + $0x4] sm:$0xf]
  %v17 = vld [vmem:[%s1 + $0x8] sm:$0xf]
  %v18 = vld [vmem:[%s1 + $0xc] sm:$0xf]
  %v19 = vld [vmem:[%s1 + $0x10] sm:$0xf]
  %v20 = vld [vmem:[%s1 + $0x14] sm:$0xf]
  %v21 = vld [vmem:[%s1 + $0x18] sm:$0xf]
  %v22 = vld [vmem:[%s1 + $0x1c] sm:$0xf]
  %v23 = vld [vmem:[%s1 + $0x20] sm:$0xf]
  %v24 = vld [vmem:[%s1 + $0x24] sm:$0xf]
  %v25 = vld [vmem:[%s1 + $0x28] sm:$0xf]
  %v26 = vld [vmem:[%s1 + $0x2c] sm:$0xf]
  %v27 = vld [vmem:[%s1 + $0x30] sm:$0xf]
  %v28 = vld [vmem:[%s1 + $0x34] sm:$0xf]
  %v29 = vld [vmem:[%s1 + $0x38] sm:$0xf]
  %v30 = vld [vmem:[%s1 + $0x3c] sm:$0xf]
  %v31 = vld [vmem:[%s1 + $0x40] sm:$0xf]
  %v32 = vld [vmem:[%s1 + $0x44] sm:$0xf]
  %v33 = vld [vmem:[%s1 + $0x48] sm:$0xf]
  %v34 = vld [vmem:[%s1 + $0x4c] sm:$0xf]
  %v35 = vld [vmem:[%s1 + $0x50] sm:$0xf]
  %v36 = vld [vmem:[%s1 + $0x54] sm:$0xf]
  %v37 = vld [vmem:[%s1 + $0x58] sm:$0xf]
  %v38 = vld [vmem:[%s1 + $0x5c] sm:$0xf]
  %v39 = vld [vmem:[%s1 + $0x60] sm:$0xf]
  %v40 = vld [vmem:[%s1 + $0x64] sm:$0xf]
  %v41 = vld [vmem:[%s1 + $0x68] sm:$0xf]
  %v42 = vld [vmem:[%s1 + $0x6c] sm:$0xf]
  %v43 = vld [vmem:[%s1 + $0x70] sm:$0xf]
  %v44 = vld [vmem:[%s1 + $0x74] sm:$0xf]
  %v45 = vld [vmem:[%s1 + $0x78] sm:$0xf]
  %v46 = vld [vmem:[%s1 + $0x7c] sm:$0xf]
  %v47 = vld [vmem:[%s1 + $0x80] sm:$0xf]
  %v48 = vld [vmem:[%s1 + $0x84] sm:$0xf]
  %v49 = vld [vmem:[%s1 + $0x88] sm:$0xf]
  %v50 = vld [vmem:[%s1 + $0x8c] sm:$0xf]
  %v51 = vld [vmem:[%s1 + $0x90] sm:$0xf]
  %v52 = vld [vmem:[%s1 + $0x94] sm:$0xf]
  %v53 = vld [vmem:[%s1 + $0x98] sm:$0xf]
  %v54 = vld [vmem:[%s1 + $0x9c] sm:$0xf]
  %v55 = vld [vmem:[%s1 + $0xa0] sm:$0xf]
  %v56 = vld [vmem:[%s1 + $0xa4] sm:$0xf]
  %v57 = vld [vmem:[%s1 + $0xa8] sm:$0xf]
  %v58 = vld [vmem:[%s1 + $0xac] sm:$0xf]
  %v59 = vld [vmem:[%s1 + $0xb0] sm:$0xf]
  %v60 = vld [vmem:[%s1 + $0xb4] sm:$0xf]
  %v61 = vld [vmem:[%s1 + $0xb8] sm:$0xf]
  %v62 = vld [vmem:[%s1 + $0xbc] sm:$0xf]
  %v63 = vld [vmem:[%s1 + $0xc0] sm:$0xf]
  %v64 = vld [vmem:[%s1 + $0xc4] sm:$0xf]
  %v65 = vld [vmem:[%s1 + $0xc8] sm:$0xf]
  %v66 = vld [vmem:[%s1 + $0xcc] sm:$0xf]
  %v67 = vld [vmem:[%s1 + $0xd0] sm:$0xf]
  %v68 = vld [vmem:[%s1 + $0xd4] sm:$0xf]
  %v69 = vld [vmem:[%s1 + $0xd8] sm:$0xf]
  %v70 = vld [vmem:[%s1 + $0xdc] sm:$0xf]
  %v71 = vld [vmem:[%s1 + $0xe0] sm:$0xf]
  %v72 = vld [vmem:[%s1 + $0xe4] sm:$0xf]
  %v73 = vld [vmem:[%s1 + $0xe8] sm:$0xf]
  %v74 = vld [vmem:[%s1 + $0xec] sm:$0xf]
  %v75 = vld [vmem:[%s1 + $0xf0] sm:$0xf]
  %v76 = vld [vmem:[%s1 + $0xf4] sm:$0xf]
  %v77 = vld [vmem:[%s1 + $0xf8] sm:$0xf]
  %v78 = vld [vmem:[%s1 + $0xfc] sm:$0xf]
  %v79 = vld [vmem:[%s1 + $0x100] sm:$0xf]
  %v80 = vld [vmem:[%s1 + $0x104] sm:$0xf]
  %v81 = vld [vmem:[%s1 + $0x108] sm:$0xf]
  %v82 = vld [vmem:[%s1 + $0x10c] sm:$0xf]
  %v83 = vld [vmem:[%s1 + $0x110] sm:$0xf]
  %v84 = vld [vmem:[%s1 + $0x114] sm:$0xf]
  %v85 = vld [vmem:[%s1 + $0x118] sm:$0xf]
  %v86 = vld [vmem:[%s1 + $0x11c] sm:$0xf]
  %v87 = vld [vmem:[%s0] sm:$0xff]
  %v88 = vld [vmem:[%s0 + $0x8] sm:$0xff]
  %v89 = vld [vmem:[%s0 + $0x10] sm:$0xf]
  %v93 = vunpack.c.l.b16 %v87
  %v94 = vunpack.c.h.b16 %v87
  %v95 = vunpack.c.l.b16 %v88
  %v96 = vunpack.c.h.b16 %v88
  %v97 = vunpack.c.l.b16 %v89
  %v98 = vpack.c.b16 %v93, %v93
  %v99 = vpack.c.b16 %v94, %v94
  %v100 = vpack.c.b16 %v95, %v95
  %v101 = vpack.c.b16 %v96, %v96
  %v102 = vpack.c.b16 %v97, %v97
  %v179 = vunpack.c.l.b16 %v15
  %v180 = vunpack.c.l.b16 %v16
  %v181 = vunpack.c.l.b16 %v17
  %v182 = vunpack.c.l.b16 %v18
  %v183 = vunpack.c.l.b16 %v19
  %v184 = vunpack.c.l.b16 %v20
  %v185 = vunpack.c.l.b16 %v21
  %v186 = vunpack.c.l.b16 %v22
  %v187 = vunpack.c.l.b16 %v23
  %v188 = vunpack.c.l.b16 %v24
  %v189 = vunpack.c.l.b16 %v25
  %v190 = vunpack.c.l.b16 %v26
  %v191 = vunpack.c.l.b16 %v27
  %v192 = vunpack.c.l.b16 %v28
  %v193 = vunpack.c.l.b16 %v29
  %v194 = vunpack.c.l.b16 %v30
  %v195 = vunpack.c.l.b16 %v31
  %v196 = vunpack.c.l.b16 %v32
  %v197 = vunpack.c.l.b16 %v33
  %v198 = vunpack.c.l.b16 %v34
  %v199 = vunpack.c.l.b16 %v35
  %v200 = vunpack.c.l.b16 %v36
  %v201 = vunpack.c.l.b16 %v37
  %v202 = vunpack.c.l.b16 %v38
  %v203 = vunpack.c.l.b16 %v39
  %v204 = vunpack.c.l.b16 %v40
  %v205 = vunpack.c.l.b16 %v41
  %v206 = vunpack.c.l.b16 %v42
  %v207 = vunpack.c.l.b16 %v43
  %v208 = vunpack.c.l.b16 %v44
  %v209 = vunpack.c.l.b16 %v45
  %v210 = vunpack.c.l.b16 %v46
  %v211 = vunpack.c.l.b16 %v47
  %v212 = vunpack.c.l.b16 %v48
  %v213 = vunpack.c.l.b16 %v49
  %v214 = vunpack.c.l.b16 %v50
  %v215 = vunpack.c.l.b16 %v51
  %v216 = vunpack.c.l.b16 %v52
  %v217 = vunpack.c.l.b16 %v53
  %v218 = vunpack.c.l.b16 %v54
  %v219 = vunpack.c.l.b16 %v55
  %v220 = vunpack.c.l.b16 %v56
  %v221 = vunpack.c.l.b16 %v57
  %v222 = vunpack.c.l.b16 %v58
  %v223 = vunpack.c.l.b16 %v59
  %v224 = vunpack.c.l.b16 %v60
  %v225 = vunpack.c.l.b16 %v61
  %v226 = vunpack.c.l.b16 %v62
  %v227 = vunpack.c.l.b16 %v63
  %v228 = vunpack.c.l.b16 %v64
  %v229 = vunpack.c.l.b16 %v65
  %v230 = vunpack.c.l.b16 %v66
  %v231 = vunpack.c.l.b16 %v67
  %v232 = vunpack.c.l.b16 %v68
  %v233 = vunpack.c.l.b16 %v69
  %v234 = vunpack.c.l.b16 %v70
  %v235 = vunpack.c.l.b16 %v71
  %v236 = vunpack.c.l.b16 %v72
  %v237 = vunpack.c.l.b16 %v73
  %v238 = vunpack.c.l.b16 %v74
  %v239 = vunpack.c.l.b16 %v75
  %v240 = vunpack.c.l.b16 %v76
  %v241 = vunpack.c.l.b16 %v77
  %v242 = vunpack.c.l.b16 %v78
  %v243 = vunpack.c.l.b16 %v79
  %v244 = vunpack.c.l.b16 %v80
  %v245 = vunpack.c.l.b16 %v81
  %v246 = vunpack.c.l.b16 %v82
  %v247 = vunpack.c.l.b16 %v83
  %v248 = vunpack.c.l.b16 %v84
  %v249 = vunpack.c.l.b16 %v85
  %v250 = vunpack.c.l.b16 %v86
  %v251 = vpack.c.b16 %v180, %v179
  %v252 = vpack.c.b16 %v182, %v181
  %v253 = vpack.c.b16 %v184, %v183
  %v254 = vpack.c.b16 %v186, %v185
  %v255 = vpack.c.b16 %v188, %v187
  %v256 = vpack.c.b16 %v190, %v189
  %v257 = vpack.c.b16 %v192, %v191
  %v258 = vpack.c.b16 %v194, %v193
  %v259 = vpack.c.b16 %v196, %v195
  %v260 = vpack.c.b16 %v198, %v197
  %v261 = vpack.c.b16 %v200, %v199
  %v262 = vpack.c.b16 %v202, %v201
  %v263 = vpack.c.b16 %v204, %v203
  %v264 = vpack.c.b16 %v206, %v205
  %v265 = vpack.c.b16 %v208, %v207
  %v266 = vpack.c.b16 %v210, %v209
  %v267 = vpack.c.b16 %v212, %v211
  %v268 = vpack.c.b16 %v214, %v213
  %v269 = vpack.c.b16 %v216, %v215
  %v270 = vpack.c.b16 %v218, %v217
  %v271 = vpack.c.b16 %v220, %v219
  %v272 = vpack.c.b16 %v222, %v221
  %v273 = vpack.c.b16 %v224, %v223
  %v274 = vpack.c.b16 %v226, %v225
  %v275 = vpack.c.b16 %v228, %v227
  %v276 = vpack.c.b16 %v230, %v229
  %v277 = vpack.c.b16 %v232, %v231
  %v278 = vpack.c.b16 %v234, %v233
  %v279 = vpack.c.b16 %v236, %v235
  %v280 = vpack.c.b16 %v238, %v237
  %v281 = vpack.c.b16 %v240, %v239
  %v282 = vpack.c.b16 %v242, %v241
  %v283 = vpack.c.b16 %v244, %v243
  %v284 = vpack.c.b16 %v246, %v245
  %v285 = vpack.c.b16 %v248, %v247
  %v286 = vpack.c.b16 %v250, %v249
  %vm323 = vcmask 523264
  %v325 = vsel %vm323, %v102, 0
  %327 = vmatprep.subr.bf16.mxu0 0
  %328 = vmatpush1.bf16.msra.mxu0 %v251
  %329 = vmatprep.subr.bf16.mxu0 0
  %330 = vmatpush1.bf16.msra.mxu0 %v252
  %331 = vmatprep.subr.bf16.mxu0 0
  %332 = vmatpush1.bf16.msra.mxu0 %v253
  %333 = vmatprep.subr.bf16.mxu0 0
  %334 = vmatpush1.bf16.msra.mxu0 %v254
  %335 = vmatprep.subr.bf16.mxu0 0
  %336 = vmatpush1.bf16.msra.mxu0 %v255
  %337 = vmatprep.subr.bf16.mxu0 0
  %338 = vmatpush1.bf16.msra.mxu0 %v256
  %339 = vmatprep.subr.bf16.mxu0 0
  %340 = vmatpush1.bf16.msra.mxu0 %v257
  %341 = vmatprep.subr.bf16.mxu0 0
  %342 = vmatpush1.bf16.msra.mxu0 %v258
  %343 = vmatprep.subr.bf16.mxu0 0
  %344 = vmatpush1.bf16.msra.mxu0 %v259
  %345 = vmatprep.subr.bf16.mxu0 0
  %346 = vmatpush1.bf16.msra.mxu0 %v260
  %347 = vmatprep.subr.bf16.mxu0 0
  %348 = vmatpush1.bf16.msra.mxu0 %v261
  %349 = vmatprep.subr.bf16.mxu0 0
  %350 = vmatpush1.bf16.msra.mxu0 %v262
  %351 = vmatprep.subr.bf16.mxu0 0
  %352 = vmatpush1.bf16.msra.mxu0 %v263
  %353 = vmatprep.subr.bf16.mxu0 0
  %354 = vmatpush1.bf16.msra.mxu0 %v264
  %355 = vmatprep.subr.bf16.mxu0 0
  %356 = vmatpush1.bf16.msra.mxu0 %v265
  %357 = vmatprep.subr.bf16.mxu0 0
  %358 = vmatpush1.bf16.msra.mxu0 %v266
  %359 = vmatprep.mubr.bf16.mxu0 %v99
  %360 = vmatmul.mubr.bf16.gmra.mrb[0].mxu0 %v98
  %v361 = vpop.f32.mrb[0].mxu0
  %v362 = vadd.f32 0.0, %v361
  %v363 = vpop.f32.mrb[0].mxu0
  %v364 = vpop.f32.mrb[0].mxu0
  %v365 = vpop.f32.mrb[0].mxu0
  %366 = vdwg.mxu0
  %367 = vmatprep.subr.bf16.mxu0 0
  %368 = vmatpush1.bf16.msra.mxu0 %v267
  %369 = vmatprep.subr.bf16.mxu0 0
  %370 = vmatpush1.bf16.msra.mxu0 %v268
  %371 = vmatprep.subr.bf16.mxu0 0
  %372 = vmatpush1.bf16.msra.mxu0 %v269
  %373 = vmatprep.subr.bf16.mxu0 0
  %374 = vmatpush1.bf16.msra.mxu0 %v270
  %375 = vmatprep.subr.bf16.mxu0 0
  %376 = vmatpush1.bf16.msra.mxu0 %v271
  %377 = vmatprep.subr.bf16.mxu0 0
  %378 = vmatpush1.bf16.msra.mxu0 %v272
  %379 = vmatprep.subr.bf16.mxu0 0
  %380 = vmatpush1.bf16.msra.mxu0 %v273
  %381 = vmatprep.subr.bf16.mxu0 0
  %382 = vmatpush1.bf16.msra.mxu0 %v274
  %383 = vmatprep.subr.bf16.mxu0 0
  %384 = vmatpush1.bf16.msra.mxu0 %v275
  %385 = vmatprep.subr.bf16.mxu0 0
  %386 = vmatpush1.bf16.msra.mxu0 %v276
  %387 = vmatprep.subr.bf16.mxu0 0
  %388 = vmatpush1.bf16.msra.mxu0 %v277
  %389 = vmatprep.subr.bf16.mxu0 0
  %390 = vmatpush1.bf16.msra.mxu0 %v278
  %391 = vmatprep.subr.bf16.mxu0 0
  %392 = vmatpush1.bf16.msra.mxu0 %v279
  %393 = vmatprep.subr.bf16.mxu0 0
  %394 = vmatpush1.bf16.msra.mxu0 %v280
  %395 = vmatprep.subr.bf16.mxu0 0
  %396 = vmatpush1.bf16.msra.mxu0 %v281
  %397 = vmatprep.subr.bf16.mxu0 0
  %398 = vmatpush1.bf16.msra.mxu0 %v282
  %399 = vmatprep.mubr.bf16.mxu0 %v101
  %400 = vmatmul.mubr.bf16.gmra.mrb[0].mxu0 %v100
  %v401 = vpop.f32.mrb[0].mxu0
  %v402 = vadd.f32 %v362, %v401
  %v403 = vpop.f32.mrb[0].mxu0
  %v404 = vpop.f32.mrb[0].mxu0
  %v405 = vpop.f32.mrb[0].mxu0
  %406 = vdwg.mxu0
  %407 = vmatprep.subr.bf16.mxu0 0
  %408 = vmatpush1.bf16.msra.mxu0 %v283
  %409 = vmatprep.subr.bf16.mxu0 0
  %410 = vmatpush1.bf16.msra.mxu0 %v284
  %411 = vmatprep.subr.bf16.mxu0 0
  %412 = vmatpush1.bf16.msra.mxu0 %v285
  %413 = vmatprep.subr.bf16.mxu0 0
  %414 = vmatpush1.bf16.msra.mxu0 %v286
  %415 = vmatprep.subr.bf16.mxu0 0
  %416 = vmatpush1.bf16.msra.mxu0 0
  %417 = vmatprep.subr.bf16.mxu0 0
  %418 = vmatpush1.bf16.msra.mxu0 0
  %419 = vmatprep.subr.bf16.mxu0 0
  %420 = vmatpush1.bf16.msra.mxu0 0
  %421 = vmatprep.subr.bf16.mxu0 0
  %422 = vmatpush1.bf16.msra.mxu0 0
  %423 = vmatprep.subr.bf16.mxu0 0
  %424 = vmatpush1.bf16.msra.mxu0 0
  %425 = vmatprep.subr.bf16.mxu0 0
  %426 = vmatpush1.bf16.msra.mxu0 0
  %427 = vmatprep.subr.bf16.mxu0 0
  %428 = vmatpush1.bf16.msra.mxu0 0
  %429 = vmatprep.subr.bf16.mxu0 0
  %430 = vmatpush1.bf16.msra.mxu0 0
  %431 = vmatprep.subr.bf16.mxu0 0
  %432 = vmatpush1.bf16.msra.mxu0 0
  %433 = vmatprep.subr.bf16.mxu0 0
  %434 = vmatpush1.bf16.msra.mxu0 0
  %435 = vmatprep.subr.bf16.mxu0 0
  %436 = vmatpush1.bf16.msra.mxu0 0
  %437 = vmatprep.subr.bf16.mxu0 0
  %438 = vmatpush1.bf16.msra.mxu0 0
  %439 = vmatprep.mubr.bf16.mxu0 0
  %440 = vmatmul.mubr.bf16.gmra.mrb[0].mxu0 %v325
  %v441 = vpop.f32.mrb[0].mxu0
  %v442 = vadd.f32 %v402, %v441
  %v443 = vpop.f32.mrb[0].mxu0
  %v444 = vpop.f32.mrb[0].mxu0
  %v445 = vpop.f32.mrb[0].mxu0
  %446 = vdwg.mxu0
  %s447 = scalar_lea.vmem %s0, 20
  %v448 = vld [vmem:[%s447] sm:$0xff]
  %v449 = vld [vmem:[%s447 + $0x8] sm:$0xff]
  %v450 = vld [vmem:[%s447 + $0x10] sm:$0xf]
  %v454 = vunpack.c.l.b16 %v448
  %v455 = vunpack.c.h.b16 %v448
  %v456 = vunpack.c.l.b16 %v449
  %v457 = vunpack.c.h.b16 %v449
  %v458 = vunpack.c.l.b16 %v450
  %v459 = vpack.c.b16 %v454, %v454
  %v460 = vpack.c.b16 %v455, %v455
  %v461 = vpack.c.b16 %v456, %v456
  %v462 = vpack.c.b16 %v457, %v457
  %v463 = vpack.c.b16 %v458, %v458
  %v469 = vsel %vm323, %v463, 0
  %471 = vmatprep.subr.bf16.mxu0 0
  %472 = vmatpush1.bf16.msra.mxu0 %v251
  %473 = vmatprep.subr.bf16.mxu0 0
  %474 = vmatpush1.bf16.msra.mxu0 %v252
  %475 = vmatprep.subr.bf16.mxu0 0
  %476 = vmatpush1.bf16.msra.mxu0 %v253
  %477 = vmatprep.subr.bf16.mxu0 0
  %478 = vmatpush1.bf16.msra.mxu0 %v254
  %479 = vmatprep.subr.bf16.mxu0 0
  %480 = vmatpush1.bf16.msra.mxu0 %v255
  %481 = vmatprep.subr.bf16.mxu0 0
  %482 = vmatpush1.bf16.msra.mxu0 %v256
  %483 = vmatprep.subr.bf16.mxu0 0
  %484 = vmatpush1.bf16.msra.mxu0 %v257
  %485 = vmatprep.subr.bf16.mxu0 0
  %486 = vmatpush1.bf16.msra.mxu0 %v258
  %487 = vmatprep.subr.bf16.mxu0 0
  %488 = vmatpush1.bf16.msra.mxu0 %v259
  %489 = vmatprep.subr.bf16.mxu0 0
  %490 = vmatpush1.bf16.msra.mxu0 %v260
  %491 = vmatprep.subr.bf16.mxu0 0
  %492 = vmatpush1.bf16.msra.mxu0 %v261
  %493 = vmatprep.subr.bf16.mxu0 0
  %494 = vmatpush1.bf16.msra.mxu0 %v262
  %495 = vmatprep.subr.bf16.mxu0 0
  %496 = vmatpush1.bf16.msra.mxu0 %v263
  %497 = vmatprep.subr.bf16.mxu0 0
  %498 = vmatpush1.bf16.msra.mxu0 %v264
  %499 = vmatprep.subr.bf16.mxu0 0
  %500 = vmatpush1.bf16.msra.mxu0 %v265
  %501 = vmatprep.subr.bf16.mxu0 0
  %502 = vmatpush1.bf16.msra.mxu0 %v266
  %503 = vmatprep.mubr.bf16.mxu0 %v460
  %504 = vmatmul.mubr.bf16.gmra.mrb[0].mxu0 %v459
  %v505 = vpop.f32.mrb[0].mxu0
  %v506 = vadd.f32 0.0, %v505
  %v507 = vpop.f32.mrb[0].mxu0
  %v508 = vpop.f32.mrb[0].mxu0
  %v509 = vpop.f32.mrb[0].mxu0
  %510 = vdwg.mxu0
  %511 = vmatprep.subr.bf16.mxu0 0
  %512 = vmatpush1.bf16.msra.mxu0 %v267
  %513 = vmatprep.subr.bf16.mxu0 0
  %514 = vmatpush1.bf16.msra.mxu0 %v268
  %515 = vmatprep.subr.bf16.mxu0 0
  %516 = vmatpush1.bf16.msra.mxu0 %v269
  %517 = vmatprep.subr.bf16.mxu0 0
  %518 = vmatpush1.bf16.msra.mxu0 %v270
  %519 = vmatprep.subr.bf16.mxu0 0
  %520 = vmatpush1.bf16.msra.mxu0 %v271
  %521 = vmatprep.subr.bf16.mxu0 0
  %522 = vmatpush1.bf16.msra.mxu0 %v272
  %523 = vmatprep.subr.bf16.mxu0 0
  %524 = vmatpush1.bf16.msra.mxu0 %v273
  %525 = vmatprep.subr.bf16.mxu0 0
  %526 = vmatpush1.bf16.msra.mxu0 %v274
  %527 = vmatprep.subr.bf16.mxu0 0
  %528 = vmatpush1.bf16.msra.mxu0 %v275
  %529 = vmatprep.subr.bf16.mxu0 0
  %530 = vmatpush1.bf16.msra.mxu0 %v276
  %531 = vmatprep.subr.bf16.mxu0 0
  %532 = vmatpush1.bf16.msra.mxu0 %v277
  %533 = vmatprep.subr.bf16.mxu0 0
  %534 = vmatpush1.bf16.msra.mxu0 %v278
  %535 = vmatprep.subr.bf16.mxu0 0
  %536 = vmatpush1.bf16.msra.mxu0 %v279
  %537 = vmatprep.subr.bf16.mxu0 0
  %538 = vmatpush1.bf16.msra.mxu0 %v280
  %539 = vmatprep.subr.bf16.mxu0 0
  %540 = vmatpush1.bf16.msra.mxu0 %v281
  %541 = vmatprep.subr.bf16.mxu0 0
  %542 = vmatpush1.bf16.msra.mxu0 %v282
  %543 = vmatprep.mubr.bf16.mxu0 %v462
  %544 = vmatmul.mubr.bf16.gmra.mrb[0].mxu0 %v461
  %v545 = vpop.f32.mrb[0].mxu0
  %v546 = vadd.f32 %v506, %v545
  %v547 = vpop.f32.mrb[0].mxu0
  %v548 = vpop.f32.mrb[0].mxu0
  %v549 = vpop.f32.mrb[0].mxu0
  %550 = vdwg.mxu0
  %551 = vmatprep.subr.bf16.mxu0 0
  %552 = vmatpush1.bf16.msra.mxu0 %v283
  %553 = vmatprep.subr.bf16.mxu0 0
  %554 = vmatpush1.bf16.msra.mxu0 %v284
  %555 = vmatprep.subr.bf16.mxu0 0
  %556 = vmatpush1.bf16.msra.mxu0 %v285
  %557 = vmatprep.subr.bf16.mxu0 0
  %558 = vmatpush1.bf16.msra.mxu0 %v286
  %559 = vmatprep.subr.bf16.mxu0 0
  %560 = vmatpush1.bf16.msra.mxu0 0
  %561 = vmatprep.subr.bf16.mxu0 0
  %562 = vmatpush1.bf16.msra.mxu0 0
  %563 = vmatprep.subr.bf16.mxu0 0
  %564 = vmatpush1.bf16.msra.mxu0 0
  %565 = vmatprep.subr.bf16.mxu0 0
  %566 = vmatpush1.bf16.msra.mxu0 0
  %567 = vmatprep.subr.bf16.mxu0 0
  %568 = vmatpush1.bf16.msra.mxu0 0
  %569 = vmatprep.subr.bf16.mxu0 0
  %570 = vmatpush1.bf16.msra.mxu0 0
  %571 = vmatprep.subr.bf16.mxu0 0
  %572 = vmatpush1.bf16.msra.mxu0 0
  %573 = vmatprep.subr.bf16.mxu0 0
  %574 = vmatpush1.bf16.msra.mxu0 0
  %575 = vmatprep.subr.bf16.mxu0 0
  %576 = vmatpush1.bf16.msra.mxu0 0
  %577 = vmatprep.subr.bf16.mxu0 0
  %578 = vmatpush1.bf16.msra.mxu0 0
  %579 = vmatprep.subr.bf16.mxu0 0
  %580 = vmatpush1.bf16.msra.mxu0 0
  %581 = vmatprep.subr.bf16.mxu0 0
  %582 = vmatpush1.bf16.msra.mxu0 0
  %583 = vmatprep.mubr.bf16.mxu0 0
  %584 = vmatmul.mubr.bf16.gmra.mrb[0].mxu0 %v469
  %v585 = vpop.f32.mrb[0].mxu0
  %v586 = vadd.f32 %v546, %v585
  %v587 = vpop.f32.mrb[0].mxu0
  %v588 = vpop.f32.mrb[0].mxu0
  %v589 = vpop.f32.mrb[0].mxu0
  %590 = vdwg.mxu0
  %v591 = vmax.f32 %v442, %v586
  %s592 = scalar_lea.vmem %s0, 40
  %v593 = vld [vmem:[%s592] sm:$0xff]
  %v594 = vld [vmem:[%s592 + $0x8] sm:$0xff]
  %v595 = vld [vmem:[%s592 + $0x10] sm:$0xf]
  %v599 = vunpack.c.l.b16 %v593
  %v600 = vunpack.c.h.b16 %v593
  %v601 = vunpack.c.l.b16 %v594
  %v602 = vunpack.c.h.b16 %v594
  %v603 = vunpack.c.l.b16 %v595
  %v604 = vpack.c.b16 %v599, %v599
  %v605 = vpack.c.b16 %v600, %v600
  %v606 = vpack.c.b16 %v601, %v601
  %v607 = vpack.c.b16 %v602, %v602
  %v608 = vpack.c.b16 %v603, %v603
  %v614 = vsel %vm323, %v608, 0
  %616 = vmatprep.subr.bf16.mxu0 0
  %617 = vmatpush1.bf16.msra.mxu0 %v251
  %618 = vmatprep.subr.bf16.mxu0 0
  %619 = vmatpush1.bf16.msra.mxu0 %v252
  %620 = vmatprep.subr.bf16.mxu0 0
  %621 = vmatpush1.bf16.msra.mxu0 %v253
  %622 = vmatprep.subr.bf16.mxu0 0
  %623 = vmatpush1.bf16.msra.mxu0 %v254
  %624 = vmatprep.subr.bf16.mxu0 0
  %625 = vmatpush1.bf16.msra.mxu0 %v255
  %626 = vmatprep.subr.bf16.mxu0 0
  %627 = vmatpush1.bf16.msra.mxu0 %v256
  %628 = vmatprep.subr.bf16.mxu0 0
  %629 = vmatpush1.bf16.msra.mxu0 %v257
  %630 = vmatprep.subr.bf16.mxu0 0
  %631 = vmatpush1.bf16.msra.mxu0 %v258
  %632 = vmatprep.subr.bf16.mxu0 0
  %633 = vmatpush1.bf16.msra.mxu0 %v259
  %634 = vmatprep.subr.bf16.mxu0 0
  %635 = vmatpush1.bf16.msra.mxu0 %v260
  %636 = vmatprep.subr.bf16.mxu0 0
  %637 = vmatpush1.bf16.msra.mxu0 %v261
  %638 = vmatprep.subr.bf16.mxu0 0
  %639 = vmatpush1.bf16.msra.mxu0 %v262
  %640 = vmatprep.subr.bf16.mxu0 0
  %641 = vmatpush1.bf16.msra.mxu0 %v263
  %642 = vmatprep.subr.bf16.mxu0 0
  %643 = vmatpush1.bf16.msra.mxu0 %v264
  %644 = vmatprep.subr.bf16.mxu0 0
  %645 = vmatpush1.bf16.msra.mxu0 %v265
  %646 = vmatprep.subr.bf16.mxu0 0
  %647 = vmatpush1.bf16.msra.mxu0 %v266
  %648 = vmatprep.mubr.bf16.mxu0 %v605
  %649 = vmatmul.mubr.bf16.gmra.mrb[0].mxu0 %v604
  %v650 = vpop.f32.mrb[0].mxu0
  %v651 = vadd.f32 0.0, %v650
  %v652 = vpop.f32.mrb[0].mxu0
  %v653 = vpop.f32.mrb[0].mxu0
  %v654 = vpop.f32.mrb[0].mxu0
  %655 = vdwg.mxu0
  %656 = vmatprep.subr.bf16.mxu0 0
  %657 = vmatpush1.bf16.msra.mxu0 %v267
  %658 = vmatprep.subr.bf16.mxu0 0
  %659 = vmatpush1.bf16.msra.mxu0 %v268
  %660 = vmatprep.subr.bf16.mxu0 0
  %661 = vmatpush1.bf16.msra.mxu0 %v269
  %662 = vmatprep.subr.bf16.mxu0 0
  %663 = vmatpush1.bf16.msra.mxu0 %v270
  %664 = vmatprep.subr.bf16.mxu0 0
  %665 = vmatpush1.bf16.msra.mxu0 %v271
  %666 = vmatprep.subr.bf16.mxu0 0
  %667 = vmatpush1.bf16.msra.mxu0 %v272
  %668 = vmatprep.subr.bf16.mxu0 0
  %669 = vmatpush1.bf16.msra.mxu0 %v273
  %670 = vmatprep.subr.bf16.mxu0 0
  %671 = vmatpush1.bf16.msra.mxu0 %v274
  %672 = vmatprep.subr.bf16.mxu0 0
  %673 = vmatpush1.bf16.msra.mxu0 %v275
  %674 = vmatprep.subr.bf16.mxu0 0
  %675 = vmatpush1.bf16.msra.mxu0 %v276
  %676 = vmatprep.subr.bf16.mxu0 0
  %677 = vmatpush1.bf16.msra.mxu0 %v277
  %678 = vmatprep.subr.bf16.mxu0 0
  %679 = vmatpush1.bf16.msra.mxu0 %v278
  %680 = vmatprep.subr.bf16.mxu0 0
  %681 = vmatpush1.bf16.msra.mxu0 %v279
  %682 = vmatprep.subr.bf16.mxu0 0
  %683 = vmatpush1.bf16.msra.mxu0 %v280
  %684 = vmatprep.subr.bf16.mxu0 0
  %685 = vmatpush1.bf16.msra.mxu0 %v281
  %686 = vmatprep.subr.bf16.mxu0 0
  %687 = vmatpush1.bf16.msra.mxu0 %v282
  %688 = vmatprep.mubr.bf16.mxu0 %v607
  %689 = vmatmul.mubr.bf16.gmra.mrb[0].mxu0 %v606
  %v690 = vpop.f32.mrb[0].mxu0
  %v691 = vadd.f32 %v651, %v690
  %v692 = vpop.f32.mrb[0].mxu0
  %v693 = vpop.f32.mrb[0].mxu0
  %v694 = vpop.f32.mrb[0].mxu0
  %695 = vdwg.mxu0
  %696 = vmatprep.subr.bf16.mxu0 0
  %697 = vmatpush1.bf16.msra.mxu0 %v283
  %698 = vmatprep.subr.bf16.mxu0 0
  %699 = vmatpush1.bf16.msra.mxu0 %v284
  %700 = vmatprep.subr.bf16.mxu0 0
  %701 = vmatpush1.bf16.msra.mxu0 %v285
  %702 = vmatprep.subr.bf16.mxu0 0
  %703 = vmatpush1.bf16.msra.mxu0 %v286
  %704 = vmatprep.subr.bf16.mxu0 0
  %705 = vmatpush1.bf16.msra.mxu0 0
  %706 = vmatprep.subr.bf16.mxu0 0
  %707 = vmatpush1.bf16.msra.mxu0 0
  %708 = vmatprep.subr.bf16.mxu0 0
  %709 = vmatpush1.bf16.msra.mxu0 0
  %710 = vmatprep.subr.bf16.mxu0 0
  %711 = vmatpush1.bf16.msra.mxu0 0
  %712 = vmatprep.subr.bf16.mxu0 0
  %713 = vmatpush1.bf16.msra.mxu0 0
  %714 = vmatprep.subr.bf16.mxu0 0
  %715 = vmatpush1.bf16.msra.mxu0 0
  %716 = vmatprep.subr.bf16.mxu0 0
  %717 = vmatpush1.bf16.msra.mxu0 0
  %718 = vmatprep.subr.bf16.mxu0 0
  %719 = vmatpush1.bf16.msra.mxu0 0
  %720 = vmatprep.subr.bf16.mxu0 0
  %721 = vmatpush1.bf16.msra.mxu0 0
  %722 = vmatprep.subr.bf16.mxu0 0
  %723 = vmatpush1.bf16.msra.mxu0 0
  %724 = vmatprep.subr.bf16.mxu0 0
  %725 = vmatpush1.bf16.msra.mxu0 0
  %726 = vmatprep.subr.bf16.mxu0 0
  %727 = vmatpush1.bf16.msra.mxu0 0
  %728 = vmatprep.mubr.bf16.mxu0 0
  %729 = vmatmul.mubr.bf16.gmra.mrb[0].mxu0 %v614
  %v730 = vpop.f32.mrb[0].mxu0
  %v731 = vadd.f32 %v691, %v730
  %v732 = vpop.f32.mrb[0].mxu0
  %v733 = vpop.f32.mrb[0].mxu0
  %v734 = vpop.f32.mrb[0].mxu0
  %735 = vdwg.mxu0
  %v736 = vmax.f32 %v591, %v731
  %s737 = scalar_lea.vmem %s0, 60
  %v738 = vld [vmem:[%s737] sm:$0xff]
  %v739 = vld [vmem:[%s737 + $0x8] sm:$0xff]
  %v740 = vld [vmem:[%s737 + $0x10] sm:$0xf]
  %v744 = vunpack.c.l.b16 %v738
  %v745 = vunpack.c.h.b16 %v738
  %v746 = vunpack.c.l.b16 %v739
  %v747 = vunpack.c.h.b16 %v739
  %v748 = vunpack.c.l.b16 %v740
  %v749 = vpack.c.b16 %v744, %v744
  %v750 = vpack.c.b16 %v745, %v745
  %v751 = vpack.c.b16 %v746, %v746
  %v752 = vpack.c.b16 %v747, %v747
  %v753 = vpack.c.b16 %v748, %v748
  %v759 = vsel %vm323, %v753, 0
  %761 = vmatprep.subr.bf16.mxu0 0
  %762 = vmatpush1.bf16.msra.mxu0 %v251
  %763 = vmatprep.subr.bf16.mxu0 0
  %764 = vmatpush1.bf16.msra.mxu0 %v252
  %765 = vmatprep.subr.bf16.mxu0 0
  %766 = vmatpush1.bf16.msra.mxu0 %v253
  %767 = vmatprep.subr.bf16.mxu0 0
  %768 = vmatpush1.bf16.msra.mxu0 %v254
  %769 = vmatprep.subr.bf16.mxu0 0
  %770 = vmatpush1.bf16.msra.mxu0 %v255
  %771 = vmatprep.subr.bf16.mxu0 0
  %772 = vmatpush1.bf16.msra.mxu0 %v256
  %773 = vmatprep.subr.bf16.mxu0 0
  %774 = vmatpush1.bf16.msra.mxu0 %v257
  %775 = vmatprep.subr.bf16.mxu0 0
  %776 = vmatpush1.bf16.msra.mxu0 %v258
  %777 = vmatprep.subr.bf16.mxu0 0
  %778 = vmatpush1.bf16.msra.mxu0 %v259
  %779 = vmatprep.subr.bf16.mxu0 0
  %780 = vmatpush1.bf16.msra.mxu0 %v260
  %781 = vmatprep.subr.bf16.mxu0 0
  %782 = vmatpush1.bf16.msra.mxu0 %v261
  %783 = vmatprep.subr.bf16.mxu0 0
  %784 = vmatpush1.bf16.msra.mxu0 %v262
  %785 = vmatprep.subr.bf16.mxu0 0
  %786 = vmatpush1.bf16.msra.mxu0 %v263
  %787 = vmatprep.subr.bf16.mxu0 0
  %788 = vmatpush1.bf16.msra.mxu0 %v264
  %789 = vmatprep.subr.bf16.mxu0 0
  %790 = vmatpush1.bf16.msra.mxu0 %v265
  %791 = vmatprep.subr.bf16.mxu0 0
  %792 = vmatpush1.bf16.msra.mxu0 %v266
  %793 = vmatprep.mubr.bf16.mxu0 %v750
  %794 = vmatmul.mubr.bf16.gmra.mrb[0].mxu0 %v749
  %v795 = vpop.f32.mrb[0].mxu0
  %v796 = vadd.f32 0.0, %v795
  %v797 = vpop.f32.mrb[0].mxu0
  %v798 = vpop.f32.mrb[0].mxu0
  %v799 = vpop.f32.mrb[0].mxu0
  %800 = vdwg.mxu0
  %801 = vmatprep.subr.bf16.mxu0 0
  %802 = vmatpush1.bf16.msra.mxu0 %v267
  %803 = vmatprep.subr.bf16.mxu0 0
  %804 = vmatpush1.bf16.msra.mxu0 %v268
  %805 = vmatprep.subr.bf16.mxu0 0
  %806 = vmatpush1.bf16.msra.mxu0 %v269
  %807 = vmatprep.subr.bf16.mxu0 0
  %808 = vmatpush1.bf16.msra.mxu0 %v270
  %809 = vmatprep.subr.bf16.mxu0 0
  %810 = vmatpush1.bf16.msra.mxu0 %v271
  %811 = vmatprep.subr.bf16.mxu0 0
  %812 = vmatpush1.bf16.msra.mxu0 %v272
  %813 = vmatprep.subr.bf16.mxu0 0
  %814 = vmatpush1.bf16.msra.mxu0 %v273
  %815 = vmatprep.subr.bf16.mxu0 0
  %816 = vmatpush1.bf16.msra.mxu0 %v274
  %817 = vmatprep.subr.bf16.mxu0 0
  %818 = vmatpush1.bf16.msra.mxu0 %v275
  %819 = vmatprep.subr.bf16.mxu0 0
  %820 = vmatpush1.bf16.msra.mxu0 %v276
  %821 = vmatprep.subr.bf16.mxu0 0
  %822 = vmatpush1.bf16.msra.mxu0 %v277
  %823 = vmatprep.subr.bf16.mxu0 0
  %824 = vmatpush1.bf16.msra.mxu0 %v278
  %825 = vmatprep.subr.bf16.mxu0 0
  %826 = vmatpush1.bf16.msra.mxu0 %v279
  %827 = vmatprep.subr.bf16.mxu0 0
  %828 = vmatpush1.bf16.msra.mxu0 %v280
  %829 = vmatprep.subr.bf16.mxu0 0
  %830 = vmatpush1.bf16.msra.mxu0 %v281
  %831 = vmatprep.subr.bf16.mxu0 0
  %832 = vmatpush1.bf16.msra.mxu0 %v282
  %833 = vmatprep.mubr.bf16.mxu0 %v752
  %834 = vmatmul.mubr.bf16.gmra.mrb[0].mxu0 %v751
  %v835 = vpop.f32.mrb[0].mxu0
  %v836 = vadd.f32 %v796, %v835
  %v837 = vpop.f32.mrb[0].mxu0
  %v838 = vpop.f32.mrb[0].mxu0
  %v839 = vpop.f32.mrb[0].mxu0
  %840 = vdwg.mxu0
  %841 = vmatprep.subr.bf16.mxu0 0
  %842 = vmatpush1.bf16.msra.mxu0 %v283
  %843 = vmatprep.subr.bf16.mxu0 0
  %844 = vmatpush1.bf16.msra.mxu0 %v284
  %845 = vmatprep.subr.bf16.mxu0 0
  %846 = vmatpush1.bf16.msra.mxu0 %v285
  %847 = vmatprep.subr.bf16.mxu0 0
  %848 = vmatpush1.bf16.msra.mxu0 %v286
  %849 = vmatprep.subr.bf16.mxu0 0
  %850 = vmatpush1.bf16.msra.mxu0 0
  %851 = vmatprep.subr.bf16.mxu0 0
  %852 = vmatpush1.bf16.msra.mxu0 0
  %853 = vmatprep.subr.bf16.mxu0 0
  %854 = vmatpush1.bf16.msra.mxu0 0
  %855 = vmatprep.subr.bf16.mxu0 0
  %856 = vmatpush1.bf16.msra.mxu0 0
  %857 = vmatprep.subr.bf16.mxu0 0
  %858 = vmatpush1.bf16.msra.mxu0 0
  %859 = vmatprep.subr.bf16.mxu0 0
  %860 = vmatpush1.bf16.msra.mxu0 0
  %861 = vmatprep.subr.bf16.mxu0 0
  %862 = vmatpush1.bf16.msra.mxu0 0
  %863 = vmatprep.subr.bf16.mxu0 0
  %864 = vmatpush1.bf16.msra.mxu0 0
  %865 = vmatprep.subr.bf16.mxu0 0
  %866 = vmatpush1.bf16.msra.mxu0 0
  %867 = vmatprep.subr.bf16.mxu0 0
  %868 = vmatpush1.bf16.msra.mxu0 0
  %869 = vmatprep.subr.bf16.mxu0 0
  %870 = vmatpush1.bf16.msra.mxu0 0
  %871 = vmatprep.subr.bf16.mxu0 0
  %872 = vmatpush1.bf16.msra.mxu0 0
  %873 = vmatprep.mubr.bf16.mxu0 0
  %874 = vmatmul.mubr.bf16.gmra.mrb[0].mxu0 %v759
  %v875 = vpop.f32.mrb[0].mxu0
  %v876 = vadd.f32 %v836, %v875
  %v877 = vpop.f32.mrb[0].mxu0
  %v878 = vpop.f32.mrb[0].mxu0
  %v879 = vpop.f32.mrb[0].mxu0
  %880 = vdwg.mxu0
  %v881 = vmax.f32 %v736, %v876
  %v882 = vld [vmem:[%s2] sm:$0x1]
  %v884 = vlaneseq
  %v885 = vshrl.u32 %v884, 7
  %v886 = vsub.s32 0, %v885
  %v887 = vrot.slane %v882, %v886
  %v889 = vadd.f32 %v881, %v887
  %v890 = vmax.f32 %v889, 0.0
  %v891 = vpack.c.bf16 %v890, %v890
  %892 = vst [vmem:[%s3] sm:$0xf] %v891
  // Predicated region
  $region14: #{animal_classifier_forward.9} parent=0 // pred_check
    _
  $region15: #{animal_classifier_forward.9} parent=0 // pred_check_branch
    %894 = sbr.rel (0) target = $region17
  $region16: #{animal_classifier_forward.9} parent=0 // pred_region
    _
  $region17: #{animal_classifier_forward.9} parent=0 // pred_fallthru
    _
  // Predicated region
  $region18: #{animal_classifier_forward.9} parent=0 // pred_check
    _
  $region19: #{animal_classifier_forward.9} parent=0 // pred_check_branch
    %896 = sbr.rel (0) target = $region21
  $region20: #{animal_classifier_forward.9} parent=0 // pred_region
    _
  $region21: #{animal_classifier_forward.9} parent=0 // pred_fallthru
    _

// kernel: animal_classifier_forward.11
$region0: #{animal_classifier_forward.11}
  #allocation0 [shape = 'u32[]', space=smem, size = 0x4, offset = 0x4, fixed_abs, tag = 'smem constant byte address 0x4 - core index']
  #allocation1 [shape = 'u32[144,128]{1,0:T(1,128)}', space=vmem, size = 0x12000, scoped, tag = 'internal scratch']
  %s0 = inlined_call_operand.vmem [shape: bf16[2,256], index: 0, kind: input, shape index: {}]
  %s1 = inlined_call_operand.vmem [shape: bf16[256,512], index: 1, kind: input, shape index: {}]
  %s2 = inlined_call_operand.vmem [shape: f32[1,512], index: 2, kind: input, shape index: {}]
  %s3 = inlined_call_operand.vmem [shape: bf16[512,34], index: 3, kind: input, shape index: {}]
  %s4 = inlined_call_operand.vmem [shape: f32[1,34], index: 4, kind: input, shape index: {}]
  %s5 = inlined_call_operand.hbm [shape: f32[2,24], index: 5, kind: output, shape index: {0}]
  %s6 = inlined_call_operand.hbm [shape: f32[2,10], index: 6, kind: output, shape index: {1}]
  %7 = xla_tuple %s5, %s6
  %s8 = sld [smem:[#allocation0]]
  $region38: #{animal_classifier_forward.11} parent=0
    _
  %s10 = ssub.s32 1, %s8
  %s11 = scalar_select 0, %s10, %s8
  $region1: #{animal_classifier_forward.11} parent=0
    #allocation2 [shape = 'u8[1024]{0}', space=vmem, size = 0x400, scoped, tag = 'output window, operand 0, single buffered']
    #allocation3 [shape = 's32[1]{0}', space=sflag, size = 0x4, scoped, tag = 'scoped memory for animal_classifier_forward.11']
    #allocation4 [shape = 'u8[1024]{0}', space=vmem, size = 0x400, scoped, tag = 'output window, operand 1, single buffered']
    #allocation5 [shape = 's32[1]{0}', space=sflag, size = 0x4, scoped, tag = 'scoped memory for animal_classifier_forward.11']
    %12 = vsyncpa [#allocation3], 0
    %13 = vsyncpa [#allocation5], 0
    // Predicated region
    $region2: #{animal_classifier_forward.11} parent=1 // pred_check
      _
    $region3: #{animal_classifier_forward.11} parent=1 // pred_check_branch
      %15 = sbr.rel (0) target = $region5
    $region4: #{animal_classifier_forward.11} parent=1 // pred_region
      _
    $region5: #{animal_classifier_forward.11} parent=1 // pred_fallthru
      _
    // Predicated region
    $region6: #{animal_classifier_forward.11} parent=1 // pred_check
      _
    $region7: #{animal_classifier_forward.11} parent=1 // pred_check_branch
      %17 = sbr.rel (0) target = $region9
    $region8: #{animal_classifier_forward.11} parent=1 // pred_region
      _
    $region9: #{animal_classifier_forward.11} parent=1 // pred_fallthru
      _
    // Predicated region
    $region10: #{animal_classifier_forward.11} parent=1 // pred_check
      _
    $region11: #{animal_classifier_forward.11} parent=1 // pred_check_branch
      %19 = sbr.rel (0) target = $region13
    $region12: #{animal_classifier_forward.11} parent=1 // pred_region
      _
    $region13: #{animal_classifier_forward.11} parent=1 // pred_fallthru
      _
    // Predicated region
    $region14: #{animal_classifier_forward.11} parent=1 // pred_check
      _
    $region15: #{animal_classifier_forward.11} parent=1 // pred_check_branch
      %21 = sbr.rel (0) target = $region17
    $region16: #{animal_classifier_forward.11} parent=1 // pred_region
      _
    $region17: #{animal_classifier_forward.11} parent=1 // pred_fallthru
      _
    // Predicated region
    $region18: #{animal_classifier_forward.11} parent=1 // pred_check
      _
    $region19: #{animal_classifier_forward.11} parent=1 // pred_check_branch
      %23 = sbr.rel (0) target = $region21
    $region20: #{animal_classifier_forward.11} parent=1 // pred_region
      _
    $region21: #{animal_classifier_forward.11} parent=1 // pred_fallthru
      _
    %v25 = vld [vmem:[%s0] sm:$0x3]
    %v26 = vld [vmem:[%s1] sm:$0xff]
    %v27 = vld [vmem:[%s1 + $0x8] sm:$0xff]
    %v28 = vld [vmem:[%s1 + $0x10] sm:$0xff]
    %v29 = vld [vmem:[%s1 + $0x18] sm:$0xff]
    %v30 = vld [vmem:[%s1 + $0x20] sm:$0xff]
    %v31 = vld [vmem:[%s1 + $0x28] sm:$0xff]
    %v32 = vld [vmem:[%s1 + $0x30] sm:$0xff]
    %v33 = vld [vmem:[%s1 + $0x38] sm:$0xff]
    %v34 = vld [vmem:[%s1 + $0x40] sm:$0xff]
    %v35 = vld [vmem:[%s1 + $0x48] sm:$0xff]
    %v36 = vld [vmem:[%s1 + $0x50] sm:$0xff]
    %v37 = vld [vmem:[%s1 + $0x58] sm:$0xff]
    %v38 = vld [vmem:[%s1 + $0x60] sm:$0xff]
    %v39 = vld [vmem:[%s1 + $0x68] sm:$0xff]
    %v40 = vld [vmem:[%s1 + $0x70] sm:$0xff]
    %v41 = vld [vmem:[%s1 + $0x78] sm:$0xff]
    %v42 = vld [vmem:[%s1 + $0x80] sm:$0xff]
    %v43 = vld [vmem:[%s1 + $0x88] sm:$0xff]
    %v44 = vld [vmem:[%s1 + $0x90] sm:$0xff]
    %v45 = vld [vmem:[%s1 + $0x98] sm:$0xff]
    %v46 = vld [vmem:[%s1 + $0xa0] sm:$0xff]
    %v47 = vld [vmem:[%s1 + $0xa8] sm:$0xff]
    %v48 = vld [vmem:[%s1 + $0xb0] sm:$0xff]
    %v49 = vld [vmem:[%s1 + $0xb8] sm:$0xff]
    %v50 = vld [vmem:[%s1 + $0xc0] sm:$0xff]
    %v51 = vld [vmem:[%s1 + $0xc8] sm:$0xff]
    %v52 = vld [vmem:[%s1 + $0xd0] sm:$0xff]
    %v53 = vld [vmem:[%s1 + $0xd8] sm:$0xff]
    %v54 = vld [vmem:[%s1 + $0xe0] sm:$0xff]
    %v55 = vld [vmem:[%s1 + $0xe8] sm:$0xff]
    %v56 = vld [vmem:[%s1 + $0xf0] sm:$0xff]
    %v57 = vld [vmem:[%s1 + $0xf8] sm:$0xff]
    %v58 = vld [vmem:[%s1 + $0x100] sm:$0xff]
    %v59 = vld [vmem:[%s1 + $0x108] sm:$0xff]
    %v60 = vld [vmem:[%s1 + $0x110] sm:$0xff]
    %v61 = vld [vmem:[%s1 + $0x118] sm:$0xff]
    %v62 = vld [vmem:[%s1 + $0x120] sm:$0xff]
    %v63 = vld [vmem:[%s1 + $0x128] sm:$0xff]
    %v64 = vld [vmem:[%s1 + $0x130] sm:$0xff]
    %v65 = vld [vmem:[%s1 + $0x138] sm:$0xff]
    %v66 = vld [vmem:[%s1 + $0x140] sm:$0xff]
    %v67 = vld [vmem:[%s1 + $0x148] sm:$0xff]
    %v68 = vld [vmem:[%s1 + $0x150] sm:$0xff]
    %v69 = vld [vmem:[%s1 + $0x158] sm:$0xff]
    %v70 = vld [vmem:[%s1 + $0x160] sm:$0xff]
    %v71 = vld [vmem:[%s1 + $0x168] sm:$0xff]
    %v72 = vld [vmem:[%s1 + $0x170] sm:$0xff]
    %v73 = vld [vmem:[%s1 + $0x178] sm:$0xff]
    %v74 = vld [vmem:[%s1 + $0x180] sm:$0xff]
    %v75 = vld [vmem:[%s1 + $0x188] sm:$0xff]
    %v76 = vld [vmem:[%s1 + $0x190] sm:$0xff]
    %v77 = vld [vmem:[%s1 + $0x198] sm:$0xff]
    %v78 = vld [vmem:[%s1 + $0x1a0] sm:$0xff]
    %v79 = vld [vmem:[%s1 + $0x1a8] sm:$0xff]
    %v80 = vld [vmem:[%s1 + $0x1b0] sm:$0xff]
    %v81 = vld [vmem:[%s1 + $0x1b8] sm:$0xff]
    %v82 = vld [vmem:[%s1 + $0x1c0] sm:$0xff]
    %v83 = vld [vmem:[%s1 + $0x1c8] sm:$0xff]
    %v84 = vld [vmem:[%s1 + $0x1d0] sm:$0xff]
    %v85 = vld [vmem:[%s1 + $0x1d8] sm:$0xff]
    %v86 = vld [vmem:[%s1 + $0x1e0] sm:$0xff]
    %v87 = vld [vmem:[%s1 + $0x1e8] sm:$0xff]
    %v88 = vld [vmem:[%s1 + $0x1f0] sm:$0xff]
    %v89 = vld [vmem:[%s1 + $0x1f8] sm:$0xff]
    %v90 = vld [vmem:[%s2] sm:$0xf]
    %v92 = vlaneseq
    %v93 = vshrl.u32 %v92, 7
    %v94 = vsub.s32 0, %v93
    %v95 = vrot.slane %v90, %v94
    %v96 = vlaneseq
    %v97 = vshrl.u32 %v96, 7
    %v98 = vsub.s32 1, %v97
    %v99 = vrot.slane %v90, %v98
    %v100 = vlaneseq
    %v101 = vshrl.u32 %v100, 7
    %v102 = vsub.s32 2, %v101
    %v103 = vrot.slane %v90, %v102
    %v104 = vlaneseq
    %v105 = vshrl.u32 %v104, 7
    %v106 = vsub.s32 3, %v105
    %v107 = vrot.slane %v90, %v106
    %v114 = vunpack.c.l.s4 1966171168
    %v115 = vunpack.c.0.s8 %v114
    %v116 = vlaneseq
    %v117 = vshrl.u32 %v116, 7
    %v118 = vsub.s32 %v115, %v117
    %v119 = vrot.slane %v25, %v118
    %v120 = vcombine.high %v119, %v119
    %v122 = vunpack.c.l.s4 1966171168
    %v123 = vunpack.c.0.s8 %v122
    %v124 = vlaneseq
    %v125 = vshrl.u32 %v124, 7
    %v126 = vsub.s32 %v123, %v125
    %v127 = vrot.slane %v119, %v126
    %v129 = vunpack.c.l.s4 1966171168
    %v130 = vunpack.c.0.s8 %v129
    %v131 = vlaneseq
    %v132 = vshrl.u32 %v131, 7
    %v133 = vsub.s32 %v130, %v132
    %v134 = vrot.slane %v120, %v133
    %v201 = vunpack.c.l.b16 %v26
    %v202 = vunpack.c.h.b16 %v26
    %v203 = vunpack.c.l.b16 %v27
    %v204 = vunpack.c.h.b16 %v27
    %v205 = vunpack.c.l.b16 %v28
    %v206 = vunpack.c.h.b16 %v28
    %v207 = vunpack.c.l.b16 %v29
    %v208 = vunpack.c.h.b16 %v29
    %v209 = vunpack.c.l.b16 %v30
    %v210 = vunpack.c.h.b16 %v30
    %v211 = vunpack.c.l.b16 %v31
    %v212 = vunpack.c.h.b16 %v31
    %v213 = vunpack.c.l.b16 %v32
    %v214 = vunpack.c.h.b16 %v32
    %v215 = vunpack.c.l.b16 %v33
    %v216 = vunpack.c.h.b16 %v33
    %v217 = vunpack.c.l.b16 %v34
    %v218 = vunpack.c.h.b16 %v34
    %v219 = vunpack.c.l.b16 %v35
    %v220 = vunpack.c.h.b16 %v35
    %v221 = vunpack.c.l.b16 %v36
    %v222 = vunpack.c.h.b16 %v36
    %v223 = vunpack.c.l.b16 %v37
    %v224 = vunpack.c.h.b16 %v37
    %v225 = vunpack.c.l.b16 %v38
    %v226 = vunpack.c.h.b16 %v38
    %v227 = vunpack.c.l.b16 %v39
    %v228 = vunpack.c.h.b16 %v39
    %v229 = vunpack.c.l.b16 %v40
    %v230 = vunpack.c.h.b16 %v40
    %v231 = vunpack.c.l.b16 %v41
    %v232 = vunpack.c.h.b16 %v41
    %v233 = vunpack.c.l.b16 %v42
    %v234 = vunpack.c.h.b16 %v42
    %v235 = vunpack.c.l.b16 %v43
    %v236 = vunpack.c.h.b16 %v43
    %v237 = vunpack.c.l.b16 %v44
    %v238 = vunpack.c.h.b16 %v44
    %v239 = vunpack.c.l.b16 %v45
    %v240 = vunpack.c.h.b16 %v45
    %v241 = vunpack.c.l.b16 %v46
    %v242 = vunpack.c.h.b16 %v46
    %v243 = vunpack.c.l.b16 %v47
    %v244 = vunpack.c.h.b16 %v47
    %v245 = vunpack.c.l.b16 %v48
    %v246 = vunpack.c.h.b16 %v48
    %v247 = vunpack.c.l.b16 %v49
    %v248 = vunpack.c.h.b16 %v49
    %v249 = vunpack.c.l.b16 %v50
    %v250 = vunpack.c.h.b16 %v50
    %v251 = vunpack.c.l.b16 %v51
    %v252 = vunpack.c.h.b16 %v51
    %v253 = vunpack.c.l.b16 %v52
    %v254 = vunpack.c.h.b16 %v52
    %v255 = vunpack.c.l.b16 %v53
    %v256 = vunpack.c.h.b16 %v53
    %v257 = vunpack.c.l.b16 %v54
    %v258 = vunpack.c.h.b16 %v54
    %v259 = vunpack.c.l.b16 %v55
    %v260 = vunpack.c.h.b16 %v55
    %v261 = vunpack.c.l.b16 %v56
    %v262 = vunpack.c.h.b16 %v56
    %v263 = vunpack.c.l.b16 %v57
    %v264 = vunpack.c.h.b16 %v57
    %v265 = vunpack.c.l.b16 %v58
    %v266 = vunpack.c.h.b16 %v58
    %v267 = vunpack.c.l.b16 %v59
    %v268 = vunpack.c.h.b16 %v59
    %v269 = vunpack.c.l.b16 %v60
    %v270 = vunpack.c.h.b16 %v60
    %v271 = vunpack.c.l.b16 %v61
    %v272 = vunpack.c.h.b16 %v61
    %v273 = vunpack.c.l.b16 %v62
    %v274 = vunpack.c.h.b16 %v62
    %v275 = vunpack.c.l.b16 %v63
    %v276 = vunpack.c.h.b16 %v63
    %v277 = vunpack.c.l.b16 %v64
    %v278 = vunpack.c.h.b16 %v64
    %v279 = vunpack.c.l.b16 %v65
    %v280 = vunpack.c.h.b16 %v65
    %v281 = vunpack.c.l.b16 %v66
    %v282 = vunpack.c.h.b16 %v66
    %v283 = vunpack.c.l.b16 %v67
    %v284 = vunpack.c.h.b16 %v67
    %v285 = vunpack.c.l.b16 %v68
    %v286 = vunpack.c.h.b16 %v68
    %v287 = vunpack.c.l.b16 %v69
    %v288 = vunpack.c.h.b16 %v69
    %v289 = vunpack.c.l.b16 %v70
    %v290 = vunpack.c.h.b16 %v70
    %v291 = vunpack.c.l.b16 %v71
    %v292 = vunpack.c.h.b16 %v71
    %v293 = vunpack.c.l.b16 %v72
    %v294 = vunpack.c.h.b16 %v72
    %v295 = vunpack.c.l.b16 %v73
    %v296 = vunpack.c.h.b16 %v73
    %v297 = vunpack.c.l.b16 %v74
    %v298 = vunpack.c.h.b16 %v74
    %v299 = vunpack.c.l.b16 %v75
    %v300 = vunpack.c.h.b16 %v75
    %v301 = vunpack.c.l.b16 %v76
    %v302 = vunpack.c.h.b16 %v76
    %v303 = vunpack.c.l.b16 %v77
    %v304 = vunpack.c.h.b16 %v77
    %v305 = vunpack.c.l.b16 %v78
    %v306 = vunpack.c.h.b16 %v78
    %v307 = vunpack.c.l.b16 %v79
    %v308 = vunpack.c.h.b16 %v79
    %v309 = vunpack.c.l.b16 %v80
    %v310 = vunpack.c.h.b16 %v80
    %v311 = vunpack.c.l.b16 %v81
    %v312 = vunpack.c.h.b16 %v81
    %v313 = vunpack.c.l.b16 %v82
    %v314 = vunpack.c.h.b16 %v82
    %v315 = vunpack.c.l.b16 %v83
    %v316 = vunpack.c.h.b16 %v83
    %v317 = vunpack.c.l.b16 %v84
    %v318 = vunpack.c.h.b16 %v84
    %v319 = vunpack.c.l.b16 %v85
    %v320 = vunpack.c.h.b16 %v85
    %v321 = vunpack.c.l.b16 %v86
    %v322 = vunpack.c.h.b16 %v86
    %v323 = vunpack.c.l.b16 %v87
    %v324 = vunpack.c.h.b16 %v87
    %v325 = vunpack.c.l.b16 %v88
    %v326 = vunpack.c.h.b16 %v88
    %v327 = vunpack.c.l.b16 %v89
    %v328 = vunpack.c.h.b16 %v89
    %v329 = vpack.c.b16 %v205, %v201
    %v330 = vpack.c.b16 %v206, %v202
    %v331 = vpack.c.b16 %v207, %v203
    %v332 = vpack.c.b16 %v208, %v204
    %v333 = vpack.c.b16 %v213, %v209
    %v334 = vpack.c.b16 %v214, %v210
    %v335 = vpack.c.b16 %v215, %v211
    %v336 = vpack.c.b16 %v216, %v212
    %v337 = vpack.c.b16 %v221, %v217
    %v338 = vpack.c.b16 %v222, %v218
    %v339 = vpack.c.b16 %v223, %v219
    %v340 = vpack.c.b16 %v224, %v220
    %v341 = vpack.c.b16 %v229, %v225
    %v342 = vpack.c.b16 %v230, %v226
    %v343 = vpack.c.b16 %v231, %v227
    %v344 = vpack.c.b16 %v232, %v228
    %v345 = vpack.c.b16 %v237, %v233
    %v346 = vpack.c.b16 %v238, %v234
    %v347 = vpack.c.b16 %v239, %v235
    %v348 = vpack.c.b16 %v240, %v236
    %v349 = vpack.c.b16 %v245, %v241
    %v350 = vpack.c.b16 %v246, %v242
    %v351 = vpack.c.b16 %v247, %v243
    %v352 = vpack.c.b16 %v248, %v244
    %v353 = vpack.c.b16 %v253, %v249
    %v354 = vpack.c.b16 %v254, %v250
    %v355 = vpack.c.b16 %v255, %v251
    %v356 = vpack.c.b16 %v256, %v252
    %v357 = vpack.c.b16 %v261, %v257
    %v358 = vpack.c.b16 %v262, %v258
    %v359 = vpack.c.b16 %v263, %v259
    %v360 = vpack.c.b16 %v264, %v260
    %v361 = vpack.c.b16 %v269, %v265
    %v362 = vpack.c.b16 %v270, %v266
    %v363 = vpack.c.b16 %v271, %v267
    %v364 = vpack.c.b16 %v272, %v268
    %v365 = vpack.c.b16 %v277, %v273
    %v366 = vpack.c.b16 %v278, %v274
    %v367 = vpack.c.b16 %v279, %v275
    %v368 = vpack.c.b16 %v280, %v276
    %v369 = vpack.c.b16 %v285, %v281
    %v370 = vpack.c.b16 %v286, %v282
    %v371 = vpack.c.b16 %v287, %v283
    %v372 = vpack.c.b16 %v288, %v284
    %v373 = vpack.c.b16 %v293, %v289
    %v374 = vpack.c.b16 %v294, %v290
    %v375 = vpack.c.b16 %v295, %v291
    %v376 = vpack.c.b16 %v296, %v292
    %v377 = vpack.c.b16 %v301, %v297
    %v378 = vpack.c.b16 %v302, %v298
    %v379 = vpack.c.b16 %v303, %v299
    %v380 = vpack.c.b16 %v304, %v300
    %v381 = vpack.c.b16 %v309, %v305
    %v382 = vpack.c.b16 %v310, %v306
    %v383 = vpack.c.b16 %v311, %v307
    %v384 = vpack.c.b16 %v312, %v308
    %v385 = vpack.c.b16 %v317, %v313
    %v386 = vpack.c.b16 %v318, %v314
    %v387 = vpack.c.b16 %v319, %v315
    %v388 = vpack.c.b16 %v320, %v316
    %v389 = vpack.c.b16 %v325, %v321
    %v390 = vpack.c.b16 %v326, %v322
    %v391 = vpack.c.b16 %v327, %v323
    %v392 = vpack.c.b16 %v328, %v324
    %457 = vmatprep.subr.bf16.mxu0 %v330
    %458 = vmatpush1.bf16.msra.mxu0 %v329
    %459 = vmatprep.subr.bf16.mxu0 %v334
    %460 = vmatpush1.bf16.msra.mxu0 %v333
    %461 = vmatprep.subr.bf16.mxu0 %v338
    %462 = vmatpush1.bf16.msra.mxu0 %v337
    %463 = vmatprep.subr.bf16.mxu0 %v342
    %464 = vmatpush1.bf16.msra.mxu0 %v341
    %465 = vmatprep.subr.bf16.mxu0 %v346
    %466 = vmatpush1.bf16.msra.mxu0 %v345
    %467 = vmatprep.subr.bf16.mxu0 %v350
    %468 = vmatpush1.bf16.msra.mxu0 %v349
    %469 = vmatprep.subr.bf16.mxu0 %v354
    %470 = vmatpush1.bf16.msra.mxu0 %v353
    %471 = vmatprep.subr.bf16.mxu0 %v358
    %472 = vmatpush1.bf16.msra.mxu0 %v357
    %473 = vmatprep.subr.bf16.mxu0 %v362
    %474 = vmatpush1.bf16.msra.mxu0 %v361
    %475 = vmatprep.subr.bf16.mxu0 %v366
    %476 = vmatpush1.bf16.msra.mxu0 %v365
    %477 = vmatprep.subr.bf16.mxu0 %v370
    %478 = vmatpush1.bf16.msra.mxu0 %v369
    %479 = vmatprep.subr.bf16.mxu0 %v374
    %480 = vmatpush1.bf16.msra.mxu0 %v373
    %481 = vmatprep.subr.bf16.mxu0 %v378
    %482 = vmatpush1.bf16.msra.mxu0 %v377
    %483 = vmatprep.subr.bf16.mxu0 %v382
    %484 = vmatpush1.bf16.msra.mxu0 %v381
    %485 = vmatprep.subr.bf16.mxu0 %v386
    %486 = vmatpush1.bf16.msra.mxu0 %v385
    %487 = vmatprep.subr.bf16.mxu0 %v390
    %488 = vmatpush1.bf16.msra.mxu0 %v389
    %489 = vmatprep.mubr.bf16.mxu0 %v134
    %490 = vmatmul.mubr.bf16.gmra.mrb[0].mxu0 %v127
    %v491 = vpop.f32.mrb[0].mxu0
    %v492 = vadd.f32 %v95, %v491
    %v493 = vpop.f32.mrb[0].mxu0
    %v494 = vadd.f32 %v99, %v493
    %v495 = vpop.f32.mrb[0].mxu0
    %v496 = vpop.f32.mrb[0].mxu0
    %497 = vdwg.mxu0
    %498 = vmatprep.subr.bf16.mxu0 %v332
    %499 = vmatpush1.bf16.msra.mxu0 %v331
    %500 = vmatprep.subr.bf16.mxu0 %v336
    %501 = vmatpush1.bf16.msra.mxu0 %v335
    %502 = vmatprep.subr.bf16.mxu0 %v340
    %503 = vmatpush1.bf16.msra.mxu0 %v339
    %504 = vmatprep.subr.bf16.mxu0 %v344
    %505 = vmatpush1.bf16.msra.mxu0 %v343
    %506 = vmatprep.subr.bf16.mxu0 %v348
    %507 = vmatpush1.bf16.msra.mxu0 %v347
    %508 = vmatprep.subr.bf16.mxu0 %v352
    %509 = vmatpush1.bf16.msra.mxu0 %v351
    %510 = vmatprep.subr.bf16.mxu0 %v356
    %511 = vmatpush1.bf16.msra.mxu0 %v355
    %512 = vmatprep.subr.bf16.mxu0 %v360
    %513 = vmatpush1.bf16.msra.mxu0 %v359
    %514 = vmatprep.subr.bf16.mxu0 %v364
    %515 = vmatpush1.bf16.msra.mxu0 %v363
    %516 = vmatprep.subr.bf16.mxu0 %v368
    %517 = vmatpush1.bf16.msra.mxu0 %v367
    %518 = vmatprep.subr.bf16.mxu0 %v372
    %519 = vmatpush1.bf16.msra.mxu0 %v371
    %520 = vmatprep.subr.bf16.mxu0 %v376
    %521 = vmatpush1.bf16.msra.mxu0 %v375
    %522 = vmatprep.subr.bf16.mxu0 %v380
    %523 = vmatpush1.bf16.msra.mxu0 %v379
    %524 = vmatprep.subr.bf16.mxu0 %v384
    %525 = vmatpush1.bf16.msra.mxu0 %v383
    %526 = vmatprep.subr.bf16.mxu0 %v388
    %527 = vmatpush1.bf16.msra.mxu0 %v387
    %528 = vmatprep.subr.bf16.mxu0 %v392
    %529 = vmatpush1.bf16.msra.mxu0 %v391
    %530 = vmatprep.mubr.bf16.mxu0 %v134
    %531 = vmatmul.mubr.bf16.gmra.mrb[0].mxu0 %v127
    %v532 = vpop.f32.mrb[0].mxu0
    %v533 = vadd.f32 %v103, %v532
    %v534 = vpop.f32.mrb[0].mxu0
    %v535 = vadd.f32 %v107, %v534
    %v536 = vpop.f32.mrb[0].mxu0
    %v537 = vpop.f32.mrb[0].mxu0
    %538 = vdwg.mxu0
    %v539 = vmax.f32 %v492, 0.0
    %v540 = vmax.f32 %v494, 0.0
    %v541 = vmax.f32 %v533, 0.0
    %v542 = vmax.f32 %v535, 0.0
    %v543 = vpack.c.bf16 %v539, %v539
    %v544 = vpack.c.bf16 %v540, %v540
    %v545 = vpack.c.bf16 %v541, %v541
    %v546 = vpack.c.bf16 %v542, %v542
    %v547 = vld [vmem:[%s3] sm:$0xf]
    %v548 = vld [vmem:[%s3 + $0x4] sm:$0xf]
    %v549 = vld [vmem:[%s3 + $0x8] sm:$0xf]
    %v550 = vld [vmem:[%s3 + $0xc] sm:$0xf]
    %v551 = vld [vmem:[%s3 + $0x10] sm:$0xf]
    %v552 = vld [vmem:[%s3 + $0x14] sm:$0xf]
    %v553 = vld [vmem:[%s3 + $0x18] sm:$0xf]
    %v554 = vld [vmem:[%s3 + $0x1c] sm:$0xf]
    %v555 = vld [vmem:[%s3 + $0x20] sm:$0xf]
    %v556 = vld [vmem:[%s3 + $0x24] sm:$0xf]
    %v557 = vld [vmem:[%s3 + $0x28] sm:$0xf]
    %v558 = vld [vmem:[%s3 + $0x2c] sm:$0xf]
    %v559 = vld [vmem:[%s3 + $0x30] sm:$0xf]
    %v560 = vld [vmem:[%s3 + $0x34] sm:$0xf]
    %v561 = vld [vmem:[%s3 + $0x38] sm:$0xf]
    %v562 = vld [vmem:[%s3 + $0x3c] sm:$0xf]
    %v563 = vld [vmem:[%s3 + $0x40] sm:$0xf]
    %v564 = vld [vmem:[%s3 + $0x44] sm:$0xf]
    %v565 = vld [vmem:[%s3 + $0x48] sm:$0xf]
    %v566 = vld [vmem:[%s3 + $0x4c] sm:$0xf]
    %v567 = vld [vmem:[%s3 + $0x50] sm:$0xf]
    %v568 = vld [vmem:[%s3 + $0x54] sm:$0xf]
    %v569 = vld [vmem:[%s3 + $0x58] sm:$0xf]
    %v570 = vld [vmem:[%s3 + $0x5c] sm:$0xf]
    %v571 = vld [vmem:[%s3 + $0x60] sm:$0xf]
    %v572 = vld [vmem:[%s3 + $0x64] sm:$0xf]
    %v573 = vld [vmem:[%s3 + $0x68] sm:$0xf]
    %v574 = vld [vmem:[%s3 + $0x6c] sm:$0xf]
    %v575 = vld [vmem:[%s3 + $0x70] sm:$0xf]
    %v576 = vld [vmem:[%s3 + $0x74] sm:$0xf]
    %v577 = vld [vmem:[%s3 + $0x78] sm:$0xf]
    %v578 = vld [vmem:[%s3 + $0x7c] sm:$0xf]
    %v579 = vld [vmem:[%s3 + $0x80] sm:$0xf]
    %v580 = vld [vmem:[%s3 + $0x84] sm:$0xf]
    %v581 = vld [vmem:[%s3 + $0x88] sm:$0xf]
    %v582 = vld [vmem:[%s3 + $0x8c] sm:$0xf]
    %v583 = vld [vmem:[%s3 + $0x90] sm:$0xf]
    %v584 = vld [vmem:[%s3 + $0x94] sm:$0xf]
    %v585 = vld [vmem:[%s3 + $0x98] sm:$0xf]
    %v586 = vld [vmem:[%s3 + $0x9c] sm:$0xf]
    %v587 = vld [vmem:[%s3 + $0xa0] sm:$0xf]
    %v588 = vld [vmem:[%s3 + $0xa4] sm:$0xf]
    %v589 = vld [vmem:[%s3 + $0xa8] sm:$0xf]
    %v590 = vld [vmem:[%s3 + $0xac] sm:$0xf]
    %v591 = vld [vmem:[%s3 + $0xb0] sm:$0xf]
    %v592 = vld [vmem:[%s3 + $0xb4] sm:$0xf]
    %v593 = vld [vmem:[%s3 + $0xb8] sm:$0xf]
    %v594 = vld [vmem:[%s3 + $0xbc] sm:$0xf]
    %v595 = vld [vmem:[%s3 + $0xc0] sm:$0xf]
    %v596 = vld [vmem:[%s3 + $0xc4] sm:$0xf]
    %v597 = vld [vmem:[%s3 + $0xc8] sm:$0xf]
    %v598 = vld [vmem:[%s3 + $0xcc] sm:$0xf]
    %v599 = vld [vmem:[%s3 + $0xd0] sm:$0xf]
    %v600 = vld [vmem:[%s3 + $0xd4] sm:$0xf]
    %v601 = vld [vmem:[%s3 + $0xd8] sm:$0xf]
    %v602 = vld [vmem:[%s3 + $0xdc] sm:$0xf]
    %v603 = vld [vmem:[%s3 + $0xe0] sm:$0xf]
    %v604 = vld [vmem:[%s3 + $0xe4] sm:$0xf]
    %v605 = vld [vmem:[%s3 + $0xe8] sm:$0xf]
    %v606 = vld [vmem:[%s3 + $0xec] sm:$0xf]
    %v607 = vld [vmem:[%s3 + $0xf0] sm:$0xf]
    %v608 = vld [vmem:[%s3 + $0xf4] sm:$0xf]
    %v609 = vld [vmem:[%s3 + $0xf8] sm:$0xf]
    %v610 = vld [vmem:[%s3 + $0xfc] sm:$0xf]
    %v611 = vld [vmem:[%s4] sm:$0x1]
    %v613 = vlaneseq
    %v614 = vshrl.u32 %v613, 7
    %v615 = vsub.s32 0, %v614
    %v616 = vrot.slane %v611, %v615
    %v682 = vunpack.c.l.b16 %v547
    %v683 = vunpack.c.l.b16 %v548
    %v684 = vunpack.c.l.b16 %v549
    %v685 = vunpack.c.l.b16 %v550
    %v686 = vunpack.c.l.b16 %v551
    %v687 = vunpack.c.l.b16 %v552
    %v688 = vunpack.c.l.b16 %v553
    %v689 = vunpack.c.l.b16 %v554
    %v690 = vunpack.c.l.b16 %v555
    %v691 = vunpack.c.l.b16 %v556
    %v692 = vunpack.c.l.b16 %v557
    %v693 = vunpack.c.l.b16 %v558
    %v694 = vunpack.c.l.b16 %v559
    %v695 = vunpack.c.l.b16 %v560
    %v696 = vunpack.c.l.b16 %v561
    %v697 = vunpack.c.l.b16 %v562
    %v698 = vunpack.c.l.b16 %v563
    %v699 = vunpack.c.l.b16 %v564
    %v700 = vunpack.c.l.b16 %v565
    %v701 = vunpack.c.l.b16 %v566
    %v702 = vunpack.c.l.b16 %v567
    %v703 = vunpack.c.l.b16 %v568
    %v704 = vunpack.c.l.b16 %v569
    %v705 = vunpack.c.l.b16 %v570
    %v706 = vunpack.c.l.b16 %v571
    %v707 = vunpack.c.l.b16 %v572
    %v708 = vunpack.c.l.b16 %v573
    %v709 = vunpack.c.l.b16 %v574
    %v710 = vunpack.c.l.b16 %v575
    %v711 = vunpack.c.l.b16 %v576
    %v712 = vunpack.c.l.b16 %v577
    %v713 = vunpack.c.l.b16 %v578
    %v714 = vunpack.c.l.b16 %v579
    %v715 = vunpack.c.l.b16 %v580
    %v716 = vunpack.c.l.b16 %v581
    %v717 = vunpack.c.l.b16 %v582
    %v718 = vunpack.c.l.b16 %v583
    %v719 = vunpack.c.l.b16 %v584
    %v720 = vunpack.c.l.b16 %v585
    %v721 = vunpack.c.l.b16 %v586
    %v722 = vunpack.c.l.b16 %v587
    %v723 = vunpack.c.l.b16 %v588
    %v724 = vunpack.c.l.b16 %v589
    %v725 = vunpack.c.l.b16 %v590
    %v726 = vunpack.c.l.b16 %v591
    %v727 = vunpack.c.l.b16 %v592
    %v728 = vunpack.c.l.b16 %v593
    %v729 = vunpack.c.l.b16 %v594
    %v730 = vunpack.c.l.b16 %v595
    %v731 = vunpack.c.l.b16 %v596
    %v732 = vunpack.c.l.b16 %v597
    %v733 = vunpack.c.l.b16 %v598
    %v734 = vunpack.c.l.b16 %v599
    %v735 = vunpack.c.l.b16 %v600
    %v736 = vunpack.c.l.b16 %v601
    %v737 = vunpack.c.l.b16 %v602
    %v738 = vunpack.c.l.b16 %v603
    %v739 = vunpack.c.l.b16 %v604
    %v740 = vunpack.c.l.b16 %v605
    %v741 = vunpack.c.l.b16 %v606
    %v742 = vunpack.c.l.b16 %v607
    %v743 = vunpack.c.l.b16 %v608
    %v744 = vunpack.c.l.b16 %v609
    %v745 = vunpack.c.l.b16 %v610
    %v746 = vpack.c.b16 %v683, %v682
    %v747 = vpack.c.b16 %v685, %v684
    %v748 = vpack.c.b16 %v687, %v686
    %v749 = vpack.c.b16 %v689, %v688
    %v750 = vpack.c.b16 %v691, %v690
    %v751 = vpack.c.b16 %v693, %v692
    %v752 = vpack.c.b16 %v695, %v694
    %v753 = vpack.c.b16 %v697, %v696
    %v754 = vpack.c.b16 %v699, %v698
    %v755 = vpack.c.b16 %v701, %v700
    %v756 = vpack.c.b16 %v703, %v702
    %v757 = vpack.c.b16 %v705, %v704
    %v758 = vpack.c.b16 %v707, %v706
    %v759 = vpack.c.b16 %v709, %v708
    %v760 = vpack.c.b16 %v711, %v710
    %v761 = vpack.c.b16 %v713, %v712
    %v762 = vpack.c.b16 %v715, %v714
    %v763 = vpack.c.b16 %v717, %v716
    %v764 = vpack.c.b16 %v719, %v718
    %v765 = vpack.c.b16 %v721, %v720
    %v766 = vpack.c.b16 %v723, %v722
    %v767 = vpack.c.b16 %v725, %v724
    %v768 = vpack.c.b16 %v727, %v726
    %v769 = vpack.c.b16 %v729, %v728
    %v770 = vpack.c.b16 %v731, %v730
    %v771 = vpack.c.b16 %v733, %v732
    %v772 = vpack.c.b16 %v735, %v734
    %v773 = vpack.c.b16 %v737, %v736
    %v774 = vpack.c.b16 %v739, %v738
    %v775 = vpack.c.b16 %v741, %v740
    %v776 = vpack.c.b16 %v743, %v742
    %v777 = vpack.c.b16 %v745, %v744
    %810 = vmatprep.subr.bf16.mxu0 0
    %811 = vmatpush1.bf16.msra.mxu0 %v746
    %812 = vmatprep.subr.bf16.mxu0 0
    %813 = vmatpush1.bf16.msra.mxu0 %v747
    %814 = vmatprep.subr.bf16.mxu0 0
    %815 = vmatpush1.bf16.msra.mxu0 %v748
    %816 = vmatprep.subr.bf16.mxu0 0
    %817 = vmatpush1.bf16.msra.mxu0 %v749
    %818 = vmatprep.subr.bf16.mxu0 0
    %819 = vmatpush1.bf16.msra.mxu0 %v750
    %820 = vmatprep.subr.bf16.mxu0 0
    %821 = vmatpush1.bf16.msra.mxu0 %v751
    %822 = vmatprep.subr.bf16.mxu0 0
    %823 = vmatpush1.bf16.msra.mxu0 %v752
    %824 = vmatprep.subr.bf16.mxu0 0
    %825 = vmatpush1.bf16.msra.mxu0 %v753
    %826 = vmatprep.subr.bf16.mxu0 0
    %827 = vmatpush1.bf16.msra.mxu0 %v754
    %828 = vmatprep.subr.bf16.mxu0 0
    %829 = vmatpush1.bf16.msra.mxu0 %v755
    %830 = vmatprep.subr.bf16.mxu0 0
    %831 = vmatpush1.bf16.msra.mxu0 %v756
    %832 = vmatprep.subr.bf16.mxu0 0
    %833 = vmatpush1.bf16.msra.mxu0 %v757
    %834 = vmatprep.subr.bf16.mxu0 0
    %835 = vmatpush1.bf16.msra.mxu0 %v758
    %836 = vmatprep.subr.bf16.mxu0 0
    %837 = vmatpush1.bf16.msra.mxu0 %v759
    %838 = vmatprep.subr.bf16.mxu0 0
    %839 = vmatpush1.bf16.msra.mxu0 %v760
    %840 = vmatprep.subr.bf16.mxu0 0
    %841 = vmatpush1.bf16.msra.mxu0 %v761
    %842 = vmatprep.mubr.bf16.mxu0 %v544
    %843 = vmatmul.mubr.bf16.gmra.mrb[0].mxu0 %v543
    %v844 = vpop.f32.mrb[0].mxu0
    %v845 = vadd.f32 %v616, %v844
    %v846 = vpop.f32.mrb[0].mxu0
    %v847 = vpop.f32.mrb[0].mxu0
    %v848 = vpop.f32.mrb[0].mxu0
    %849 = vdwg.mxu0
    %850 = vmatprep.subr.bf16.mxu0 0
    %851 = vmatpush1.bf16.msra.mxu0 %v762
    %852 = vmatprep.subr.bf16.mxu0 0
    %853 = vmatpush1.bf16.msra.mxu0 %v763
    %854 = vmatprep.subr.bf16.mxu0 0
    %855 = vmatpush1.bf16.msra.mxu0 %v764
    %856 = vmatprep.subr.bf16.mxu0 0
    %857 = vmatpush1.bf16.msra.mxu0 %v765
    %858 = vmatprep.subr.bf16.mxu0 0
    %859 = vmatpush1.bf16.msra.mxu0 %v766
    %860 = vmatprep.subr.bf16.mxu0 0
    %861 = vmatpush1.bf16.msra.mxu0 %v767
    %862 = vmatprep.subr.bf16.mxu0 0
    %863 = vmatpush1.bf16.msra.mxu0 %v768
    %864 = vmatprep.subr.bf16.mxu0 0
    %865 = vmatpush1.bf16.msra.mxu0 %v769
    %866 = vmatprep.subr.bf16.mxu0 0
    %867 = vmatpush1.bf16.msra.mxu0 %v770
    %868 = vmatprep.subr.bf16.mxu0 0
    %869 = vmatpush1.bf16.msra.mxu0 %v771
    %870 = vmatprep.subr.bf16.mxu0 0
    %871 = vmatpush1.bf16.msra.mxu0 %v772
    %872 = vmatprep.subr.bf16.mxu0 0
    %873 = vmatpush1.bf16.msra.mxu0 %v773
    %874 = vmatprep.subr.bf16.mxu0 0
    %875 = vmatpush1.bf16.msra.mxu0 %v774
    %876 = vmatprep.subr.bf16.mxu0 0
    %877 = vmatpush1.bf16.msra.mxu0 %v775
    %878 = vmatprep.subr.bf16.mxu0 0
    %879 = vmatpush1.bf16.msra.mxu0 %v776
    %880 = vmatprep.subr.bf16.mxu0 0
    %881 = vmatpush1.bf16.msra.mxu0 %v777
    %882 = vmatprep.mubr.bf16.mxu0 %v546
    %883 = vmatmul.mubr.bf16.gmra.mrb[0].mxu0 %v545
    %v884 = vpop.f32.mrb[0].mxu0
    %v885 = vadd.f32 %v845, %v884
    %v886 = vpop.f32.mrb[0].mxu0
    %v887 = vpop.f32.mrb[0].mxu0
    %v888 = vpop.f32.mrb[0].mxu0
    %889 = vdwg.mxu0
    %v890 = vxor.u32 %v885, 2147483648
    %v891 = vmul.f32 %v890, 1.442695
    %v892 = vpow.pop %v891
    %v893 = vadd.f32 %v892, 1.0
    %v894 = vrcp.pop %v893
    %v895 = vmul.f32 1.0, %v894
    %vm896 = vcmask 189440
    %897 = vst.msk [vmem:[#allocation2] sm:$0x3] %vm896, %v895
    %899 = vrot.lane.b32.xlu0 %v885, 104
    %v900 = vpop.permute.xlu0 %899
    %vm902 = vcmask 74752
    %903 = vst.msk [vmem:[#allocation4] sm:$0x3] %vm902, %v900
    // Predicated region
    $region22: #{animal_classifier_forward.11} parent=1 // pred_check
      _
    $region23: #{animal_classifier_forward.11} parent=1 // pred_check_branch
      %905 = sbr.rel (0) target = $region25
    $region24: #{animal_classifier_forward.11} parent=1 // pred_region
      %s907 = ssub.s32 32, 32
      %908 = vsyncadd [#allocation3], %s907
      %s910 = sshll.u32 [#allocation2], 4
      %s911 = int_to_ptr.vmem [resolvable:$true] %s910
      %913 = dma.vmem_to_hbm [thread:$0]  %s911, 32, %s5, [#allocation3]
    $region25: #{animal_classifier_forward.11} parent=1 // pred_fallthru
      _
    // Predicated region
    $region26: #{animal_classifier_forward.11} parent=1 // pred_check
      _
    $region27: #{animal_classifier_forward.11} parent=1 // pred_check_branch
      %915 = sbr.rel (0) target = $region29
    $region28: #{animal_classifier_forward.11} parent=1 // pred_region
      %s917 = ssub.s32 32, 32
      %918 = vsyncadd [#allocation5], %s917
      %s920 = sshll.u32 [#allocation4], 4
      %s921 = int_to_ptr.vmem [resolvable:$true] %s920
      %923 = dma.vmem_to_hbm [thread:$0]  %s921, 32, %s6, [#allocation5]
    $region29: #{animal_classifier_forward.11} parent=1 // pred_fallthru
      _
    // Predicated region
    $region30: #{animal_classifier_forward.11} parent=1 // pred_check
      _
    $region31: #{animal_classifier_forward.11} parent=1 // pred_check_branch
      %925 = sbr.rel (0) target = $region33
    $region32: #{animal_classifier_forward.11} parent=1 // pred_region
      %926 = dma.done [#allocation3], 32
    $region33: #{animal_classifier_forward.11} parent=1 // pred_fallthru
      _
    // Predicated region
    $region34: #{animal_classifier_forward.11} parent=1 // pred_check
      _
    $region35: #{animal_classifier_forward.11} parent=1 // pred_check_branch
      %928 = sbr.rel (0) target = $region37
    $region36: #{animal_classifier_forward.11} parent=1 // pred_region
      %929 = dma.done [#allocation5], 32
    $region37: #{animal_classifier_forward.11} parent=1 // pred_fallthru
      _
    %930 = vsyncpa [#allocation3], 1
    %931 = vsyncpa [#allocation5], 1

// kernel: animal_classifier_forward.10
$region0: #{animal_classifier_forward.10}
  #allocation0 [shape = 'u32[]', space=smem, size = 0x4, offset = 0x4, fixed_abs, tag = 'smem constant byte address 0x4 - core index']
  #allocation1 [shape = 'u32[144,128]{1,0:T(1,128)}', space=vmem, size = 0x12000, scoped, tag = 'internal scratch']
  %s0 = inlined_call_operand.vmem [shape: bf16[4,2,1152], index: 0, kind: input, shape index: {}]
  %s1 = inlined_call_operand.vmem [shape: bf16[1152,256], index: 1, kind: input, shape index: {}]
  %s2 = inlined_call_operand.vmem [shape: f32[1,256], index: 2, kind: input, shape index: {}]
  %s3 = inlined_call_operand.vmem [shape: bf16[2,256], index: 3, kind: output, shape index: {}]
  %s4 = sld [smem:[#allocation0]]
  $region22: #{animal_classifier_forward.10} parent=0
    _
  %s6 = ssub.s32 1, %s4
  %s7 = scalar_select 0, %s6, %s4
  // Predicated region
  $region2: #{animal_classifier_forward.10} parent=0 // pred_check
    _
  $region3: #{animal_classifier_forward.10} parent=0 // pred_check_branch
    %9 = sbr.rel (0) target = $region5
  $region4: #{animal_classifier_forward.10} parent=0 // pred_region
    _
  $region5: #{animal_classifier_forward.10} parent=0 // pred_fallthru
    _
  // Predicated region
  $region6: #{animal_classifier_forward.10} parent=0 // pred_check
    _
  $region7: #{animal_classifier_forward.10} parent=0 // pred_check_branch
    %11 = sbr.rel (0) target = $region9
  $region8: #{animal_classifier_forward.10} parent=0 // pred_region
    _
  $region9: #{animal_classifier_forward.10} parent=0 // pred_fallthru
    _
  // Predicated region
  $region10: #{animal_classifier_forward.10} parent=0 // pred_check
    _
  $region11: #{animal_classifier_forward.10} parent=0 // pred_check_branch
    %13 = sbr.rel (0) target = $region13
  $region12: #{animal_classifier_forward.10} parent=0 // pred_region
    _
  $region13: #{animal_classifier_forward.10} parent=0 // pred_fallthru
    _
  %v15 = vld [vmem:[%s1] sm:$0xff]
  %v16 = vld [vmem:[%s1 + $0x8] sm:$0xff]
  %v17 = vld [vmem:[%s1 + $0x10] sm:$0xff]
  %v18 = vld [vmem:[%s1 + $0x18] sm:$0xff]
  %v19 = vld [vmem:[%s1 + $0x20] sm:$0xff]
  %v20 = vld [vmem:[%s1 + $0x28] sm:$0xff]
  %v21 = vld [vmem:[%s1 + $0x30] sm:$0xff]
  %v22 = vld [vmem:[%s1 + $0x38] sm:$0xff]
  %v23 = vld [vmem:[%s1 + $0x40] sm:$0xff]
  %v24 = vld [vmem:[%s1 + $0x48] sm:$0xff]
  %v25 = vld [vmem:[%s1 + $0x50] sm:$0xff]
  %v26 = vld [vmem:[%s1 + $0x58] sm:$0xff]
  %v27 = vld [vmem:[%s1 + $0x60] sm:$0xff]
  %v28 = vld [vmem:[%s1 + $0x68] sm:$0xff]
  %v29 = vld [vmem:[%s1 + $0x70] sm:$0xff]
  %v30 = vld [vmem:[%s1 + $0x78] sm:$0xff]
  %v31 = vld [vmem:[%s1 + $0x80] sm:$0xff]
  %v32 = vld [vmem:[%s1 + $0x88] sm:$0xff]
  %v33 = vld [vmem:[%s1 + $0x90] sm:$0xff]
  %v34 = vld [vmem:[%s1 + $0x98] sm:$0xff]
  %v35 = vld [vmem:[%s1 + $0xa0] sm:$0xff]
  %v36 = vld [vmem:[%s1 + $0xa8] sm:$0xff]
  %v37 = vld [vmem:[%s1 + $0xb0] sm:$0xff]
  %v38 = vld [vmem:[%s1 + $0xb8] sm:$0xff]
  %v39 = vld [vmem:[%s1 + $0xc0] sm:$0xff]
  %v40 = vld [vmem:[%s1 + $0xc8] sm:$0xff]
  %v41 = vld [vmem:[%s1 + $0xd0] sm:$0xff]
  %v42 = vld [vmem:[%s1 + $0xd8] sm:$0xff]
  %v43 = vld [vmem:[%s1 + $0xe0] sm:$0xff]
  %v44 = vld [vmem:[%s1 + $0xe8] sm:$0xff]
  %v45 = vld [vmem:[%s1 + $0xf0] sm:$0xff]
  %v46 = vld [vmem:[%s1 + $0xf8] sm:$0xff]
  %v47 = vld [vmem:[%s1 + $0x100] sm:$0xff]
  %v48 = vld [vmem:[%s1 + $0x108] sm:$0xff]
  %v49 = vld [vmem:[%s1 + $0x110] sm:$0xff]
  %v50 = vld [vmem:[%s1 + $0x118] sm:$0xff]
  %v51 = vld [vmem:[%s1 + $0x120] sm:$0xff]
  %v52 = vld [vmem:[%s1 + $0x128] sm:$0xff]
  %v53 = vld [vmem:[%s1 + $0x130] sm:$0xff]
  %v54 = vld [vmem:[%s1 + $0x138] sm:$0xff]
  %v55 = vld [vmem:[%s1 + $0x140] sm:$0xff]
  %v56 = vld [vmem:[%s1 + $0x148] sm:$0xff]
  %v57 = vld [vmem:[%s1 + $0x150] sm:$0xff]
  %v58 = vld [vmem:[%s1 + $0x158] sm:$0xff]
  %v59 = vld [vmem:[%s1 + $0x160] sm:$0xff]
  %v60 = vld [vmem:[%s1 + $0x168] sm:$0xff]
  %v61 = vld [vmem:[%s1 + $0x170] sm:$0xff]
  %v62 = vld [vmem:[%s1 + $0x178] sm:$0xff]
  %v63 = vld [vmem:[%s1 + $0x180] sm:$0xff]
  %v64 = vld [vmem:[%s1 + $0x188] sm:$0xff]
  %v65 = vld [vmem:[%s1 + $0x190] sm:$0xff]
  %v66 = vld [vmem:[%s1 + $0x198] sm:$0xff]
  %v67 = vld [vmem:[%s1 + $0x1a0] sm:$0xff]
  %v68 = vld [vmem:[%s1 + $0x1a8] sm:$0xff]
  %v69 = vld [vmem:[%s1 + $0x1b0] sm:$0xff]
  %v70 = vld [vmem:[%s1 + $0x1b8] sm:$0xff]
  %v71 = vld [vmem:[%s1 + $0x1c0] sm:$0xff]
  %v72 = vld [vmem:[%s1 + $0x1c8] sm:$0xff]
  %v73 = vld [vmem:[%s1 + $0x1d0] sm:$0xff]
  %v74 = vld [vmem:[%s1 + $0x1d8] sm:$0xff]
  %v75 = vld [vmem:[%s1 + $0x1e0] sm:$0xff]
  %v76 = vld [vmem:[%s1 + $0x1e8] sm:$0xff]
  %v77 = vld [vmem:[%s1 + $0x1f0] sm:$0xff]
  %v78 = vld [vmem:[%s1 + $0x1f8] sm:$0xff]
  %v79 = vld [vmem:[%s1 + $0x200] sm:$0xff]
  %v80 = vld [vmem:[%s1 + $0x208] sm:$0xff]
  %v81 = vld [vmem:[%s1 + $0x210] sm:$0xff]
  %v82 = vld [vmem:[%s1 + $0x218] sm:$0xff]
  %v83 = vld [vmem:[%s1 + $0x220] sm:$0xff]
  %v84 = vld [vmem:[%s1 + $0x228] sm:$0xff]
  %v85 = vld [vmem:[%s1 + $0x230] sm:$0xff]
  %v86 = vld [vmem:[%s1 + $0x238] sm:$0xff]
  %v87 = vld [vmem:[%s1 + $0x240] sm:$0xff]
  %v88 = vld [vmem:[%s1 + $0x248] sm:$0xff]
  %v89 = vld [vmem:[%s1 + $0x250] sm:$0xff]
  %v90 = vld [vmem:[%s1 + $0x258] sm:$0xff]
  %v91 = vld [vmem:[%s1 + $0x260] sm:$0xff]
  %v92 = vld [vmem:[%s1 + $0x268] sm:$0xff]
  %v93 = vld [vmem:[%s1 + $0x270] sm:$0xff]
  %v94 = vld [vmem:[%s1 + $0x278] sm:$0xff]
  %v95 = vld [vmem:[%s1 + $0x280] sm:$0xff]
  %v96 = vld [vmem:[%s1 + $0x288] sm:$0xff]
  %v97 = vld [vmem:[%s1 + $0x290] sm:$0xff]
  %v98 = vld [vmem:[%s1 + $0x298] sm:$0xff]
  %v99 = vld [vmem:[%s1 + $0x2a0] sm:$0xff]
  %v100 = vld [vmem:[%s1 + $0x2a8] sm:$0xff]
  %v101 = vld [vmem:[%s1 + $0x2b0] sm:$0xff]
  %v102 = vld [vmem:[%s1 + $0x2b8] sm:$0xff]
  %v103 = vld [vmem:[%s1 + $0x2c0] sm:$0xff]
  %v104 = vld [vmem:[%s1 + $0x2c8] sm:$0xff]
  %v105 = vld [vmem:[%s1 + $0x2d0] sm:$0xff]
  %v106 = vld [vmem:[%s1 + $0x2d8] sm:$0xff]
  %v107 = vld [vmem:[%s1 + $0x2e0] sm:$0xff]
  %v108 = vld [vmem:[%s1 + $0x2e8] sm:$0xff]
  %v109 = vld [vmem:[%s1 + $0x2f0] sm:$0xff]
  %v110 = vld [vmem:[%s1 + $0x2f8] sm:$0xff]
  %v111 = vld [vmem:[%s1 + $0x300] sm:$0xff]
  %v112 = vld [vmem:[%s1 + $0x308] sm:$0xff]
  %v113 = vld [vmem:[%s1 + $0x310] sm:$0xff]
  %v114 = vld [vmem:[%s1 + $0x318] sm:$0xff]
  %v115 = vld [vmem:[%s1 + $0x320] sm:$0xff]
  %v116 = vld [vmem:[%s1 + $0x328] sm:$0xff]
  %v117 = vld [vmem:[%s1 + $0x330] sm:$0xff]
  %v118 = vld [vmem:[%s1 + $0x338] sm:$0xff]
  %v119 = vld [vmem:[%s1 + $0x340] sm:$0xff]
  %v120 = vld [vmem:[%s1 + $0x348] sm:$0xff]
  %v121 = vld [vmem:[%s1 + $0x350] sm:$0xff]
  %v122 = vld [vmem:[%s1 + $0x358] sm:$0xff]
  %v123 = vld [vmem:[%s1 + $0x360] sm:$0xff]
  %v124 = vld [vmem:[%s1 + $0x368] sm:$0xff]
  %v125 = vld [vmem:[%s1 + $0x370] sm:$0xff]
  %v126 = vld [vmem:[%s1 + $0x378] sm:$0xff]
  %v127 = vld [vmem:[%s1 + $0x380] sm:$0xff]
  %v128 = vld [vmem:[%s1 + $0x388] sm:$0xff]
  %v129 = vld [vmem:[%s1 + $0x390] sm:$0xff]
  %v130 = vld [vmem:[%s1 + $0x398] sm:$0xff]
  %v131 = vld [vmem:[%s1 + $0x3a0] sm:$0xff]
  %v132 = vld [vmem:[%s1 + $0x3a8] sm:$0xff]
  %v133 = vld [vmem:[%s1 + $0x3b0] sm:$0xff]
  %v134 = vld [vmem:[%s1 + $0x3b8] sm:$0xff]
  %v135 = vld [vmem:[%s1 + $0x3c0] sm:$0xff]
  %v136 = vld [vmem:[%s1 + $0x3c8] sm:$0xff]
  %v137 = vld [vmem:[%s1 + $0x3d0] sm:$0xff]
  %v138 = vld [vmem:[%s1 + $0x3d8] sm:$0xff]
  %v139 = vld [vmem:[%s1 + $0x3e0] sm:$0xff]
  %v140 = vld [vmem:[%s1 + $0x3e8] sm:$0xff]
  %v141 = vld [vmem:[%s1 + $0x3f0] sm:$0xff]
  %v142 = vld [vmem:[%s1 + $0x3f8] sm:$0xff]
  %v143 = vld [vmem:[%s1 + $0x400] sm:$0xff]
  %v144 = vld [vmem:[%s1 + $0x408] sm:$0xff]
  %v145 = vld [vmem:[%s1 + $0x410] sm:$0xff]
  %v146 = vld [vmem:[%s1 + $0x418] sm:$0xff]
  %v147 = vld [vmem:[%s1 + $0x420] sm:$0xff]
  %v148 = vld [vmem:[%s1 + $0x428] sm:$0xff]
  %v149 = vld [vmem:[%s1 + $0x430] sm:$0xff]
  %v150 = vld [vmem:[%s1 + $0x438] sm:$0xff]
  %v151 = vld [vmem:[%s1 + $0x440] sm:$0xff]
  %v152 = vld [vmem:[%s1 + $0x448] sm:$0xff]
  %v153 = vld [vmem:[%s1 + $0x450] sm:$0xff]
  %v154 = vld [vmem:[%s1 + $0x458] sm:$0xff]
  %v155 = vld [vmem:[%s1 + $0x460] sm:$0xff]
  %v156 = vld [vmem:[%s1 + $0x468] sm:$0xff]
  %v157 = vld [vmem:[%s1 + $0x470] sm:$0xff]
  %v158 = vld [vmem:[%s1 + $0x478] sm:$0xff]
  %v159 = vld [vmem:[%s0] sm:$0xff]
  %v160 = vld [vmem:[%s0 + $0x8] sm:$0x1]
  %v163 = vcombine.high %v159, %v159
  %v165 = vunpack.c.l.s4 1966171168
  %v166 = vunpack.c.0.s8 %v165
  %v167 = vlaneseq
  %v168 = vshrl.u32 %v167, 7
  %v169 = vsub.s32 %v166, %v168
  %v170 = vrot.slane %v159, %v169
  %v172 = vunpack.c.l.s4 1966171168
  %v173 = vunpack.c.0.s8 %v172
  %v174 = vlaneseq
  %v175 = vshrl.u32 %v174, 7
  %v176 = vsub.s32 %v173, %v175
  %v177 = vrot.slane %v163, %v176
  %v178 = vcombine.high %v170, %v170
  %v179 = vcombine.high %v177, %v177
  %v181 = vunpack.c.l.s4 1966171168
  %v182 = vunpack.c.0.s8 %v181
  %v183 = vlaneseq
  %v184 = vshrl.u32 %v183, 7
  %v185 = vsub.s32 %v182, %v184
  %v186 = vrot.slane %v170, %v185
  %v188 = vunpack.c.l.s4 1966171168
  %v189 = vunpack.c.0.s8 %v188
  %v190 = vlaneseq
  %v191 = vshrl.u32 %v190, 7
  %v192 = vsub.s32 %v189, %v191
  %v193 = vrot.slane %v177, %v192
  %v195 = vunpack.c.l.s4 1966171168
  %v196 = vunpack.c.0.s8 %v195
  %v197 = vlaneseq
  %v198 = vshrl.u32 %v197, 7
  %v199 = vsub.s32 %v196, %v198
  %v200 = vrot.slane %v178, %v199
  %v202 = vunpack.c.l.s4 1966171168
  %v203 = vunpack.c.0.s8 %v202
  %v204 = vlaneseq
  %v205 = vshrl.u32 %v204, 7
  %v206 = vsub.s32 %v203, %v205
  %v207 = vrot.slane %v179, %v206
  %v208 = vcombine.high %v186, %v186
  %v209 = vcombine.high %v193, %v193
  %v210 = vcombine.high %v200, %v200
  %v211 = vcombine.high %v207, %v207
  %v213 = vunpack.c.l.s4 1966171168
  %v214 = vunpack.c.0.s8 %v213
  %v215 = vlaneseq
  %v216 = vshrl.u32 %v215, 7
  %v217 = vsub.s32 %v214, %v216
  %v218 = vrot.slane %v160, %v217
  %v220 = vunpack.c.l.s4 1966171168
  %v221 = vunpack.c.0.s8 %v220
  %v222 = vlaneseq
  %v223 = vshrl.u32 %v222, 7
  %v224 = vsub.s32 %v221, %v223
  %v225 = vrot.slane %v218, %v224
  %v379 = vunpack.c.l.b16 %v15
  %v380 = vunpack.c.h.b16 %v15
  %v381 = vunpack.c.l.b16 %v16
  %v382 = vunpack.c.h.b16 %v16
  %v383 = vunpack.c.l.b16 %v17
  %v384 = vunpack.c.h.b16 %v17
  %v385 = vunpack.c.l.b16 %v18
  %v386 = vunpack.c.h.b16 %v18
  %v387 = vunpack.c.l.b16 %v19
  %v388 = vunpack.c.h.b16 %v19
  %v389 = vunpack.c.l.b16 %v20
  %v390 = vunpack.c.h.b16 %v20
  %v391 = vunpack.c.l.b16 %v21
  %v392 = vunpack.c.h.b16 %v21
  %v393 = vunpack.c.l.b16 %v22
  %v394 = vunpack.c.h.b16 %v22
  %v395 = vunpack.c.l.b16 %v23
  %v396 = vunpack.c.h.b16 %v23
  %v397 = vunpack.c.l.b16 %v24
  %v398 = vunpack.c.h.b16 %v24
  %v399 = vunpack.c.l.b16 %v25
  %v400 = vunpack.c.h.b16 %v25
  %v401 = vunpack.c.l.b16 %v26
  %v402 = vunpack.c.h.b16 %v26
  %v403 = vunpack.c.l.b16 %v27
  %v404 = vunpack.c.h.b16 %v27
  %v405 = vunpack.c.l.b16 %v28
  %v406 = vunpack.c.h.b16 %v28
  %v407 = vunpack.c.l.b16 %v29
  %v408 = vunpack.c.h.b16 %v29
  %v409 = vunpack.c.l.b16 %v30
  %v410 = vunpack.c.h.b16 %v30
  %v411 = vunpack.c.l.b16 %v31
  %v412 = vunpack.c.h.b16 %v31
  %v413 = vunpack.c.l.b16 %v32
  %v414 = vunpack.c.h.b16 %v32
  %v415 = vunpack.c.l.b16 %v33
  %v416 = vunpack.c.h.b16 %v33
  %v417 = vunpack.c.l.b16 %v34
  %v418 = vunpack.c.h.b16 %v34
  %v419 = vunpack.c.l.b16 %v35
  %v420 = vunpack.c.h.b16 %v35
  %v421 = vunpack.c.l.b16 %v36
  %v422 = vunpack.c.h.b16 %v36
  %v423 = vunpack.c.l.b16 %v37
  %v424 = vunpack.c.h.b16 %v37
  %v425 = vunpack.c.l.b16 %v38
  %v426 = vunpack.c.h.b16 %v38
  %v427 = vunpack.c.l.b16 %v39
  %v428 = vunpack.c.h.b16 %v39
  %v429 = vunpack.c.l.b16 %v40
  %v430 = vunpack.c.h.b16 %v40
  %v431 = vunpack.c.l.b16 %v41
  %v432 = vunpack.c.h.b16 %v41
  %v433 = vunpack.c.l.b16 %v42
  %v434 = vunpack.c.h.b16 %v42
  %v435 = vunpack.c.l.b16 %v43
  %v436 = vunpack.c.h.b16 %v43
  %v437 = vunpack.c.l.b16 %v44
  %v438 = vunpack.c.h.b16 %v44
  %v439 = vunpack.c.l.b16 %v45
  %v440 = vunpack.c.h.b16 %v45
  %v441 = vunpack.c.l.b16 %v46
  %v442 = vunpack.c.h.b16 %v46
  %v443 = vunpack.c.l.b16 %v47
  %v444 = vunpack.c.h.b16 %v47
  %v445 = vunpack.c.l.b16 %v48
  %v446 = vunpack.c.h.b16 %v48
  %v447 = vunpack.c.l.b16 %v49
  %v448 = vunpack.c.h.b16 %v49
  %v449 = vunpack.c.l.b16 %v50
  %v450 = vunpack.c.h.b16 %v50
  %v451 = vunpack.c.l.b16 %v51
  %v452 = vunpack.c.h.b16 %v51
  %v453 = vunpack.c.l.b16 %v52
  %v454 = vunpack.c.h.b16 %v52
  %v455 = vunpack.c.l.b16 %v53
  %v456 = vunpack.c.h.b16 %v53
  %v457 = vunpack.c.l.b16 %v54
  %v458 = vunpack.c.h.b16 %v54
  %v459 = vunpack.c.l.b16 %v55
  %v460 = vunpack.c.h.b16 %v55
  %v461 = vunpack.c.l.b16 %v56
  %v462 = vunpack.c.h.b16 %v56
  %v463 = vunpack.c.l.b16 %v57
  %v464 = vunpack.c.h.b16 %v57
  %v465 = vunpack.c.l.b16 %v58
  %v466 = vunpack.c.h.b16 %v58
  %v467 = vunpack.c.l.b16 %v59
  %v468 = vunpack.c.h.b16 %v59
  %v469 = vunpack.c.l.b16 %v60
  %v470 = vunpack.c.h.b16 %v60
  %v471 = vunpack.c.l.b16 %v61
  %v472 = vunpack.c.h.b16 %v61
  %v473 = vunpack.c.l.b16 %v62
  %v474 = vunpack.c.h.b16 %v62
  %v475 = vunpack.c.l.b16 %v63
  %v476 = vunpack.c.h.b16 %v63
  %v477 = vunpack.c.l.b16 %v64
  %v478 = vunpack.c.h.b16 %v64
  %v479 = vunpack.c.l.b16 %v65
  %v480 = vunpack.c.h.b16 %v65
  %v481 = vunpack.c.l.b16 %v66
  %v482 = vunpack.c.h.b16 %v66
  %v483 = vunpack.c.l.b16 %v67
  %v484 = vunpack.c.h.b16 %v67
  %v485 = vunpack.c.l.b16 %v68
  %v486 = vunpack.c.h.b16 %v68
  %v487 = vunpack.c.l.b16 %v69
  %v488 = vunpack.c.h.b16 %v69
  %v489 = vunpack.c.l.b16 %v70
  %v490 = vunpack.c.h.b16 %v70
  %v491 = vunpack.c.l.b16 %v71
  %v492 = vunpack.c.h.b16 %v71
  %v493 = vunpack.c.l.b16 %v72
  %v494 = vunpack.c.h.b16 %v72
  %v495 = vunpack.c.l.b16 %v73
  %v496 = vunpack.c.h.b16 %v73
  %v497 = vunpack.c.l.b16 %v74
  %v498 = vunpack.c.h.b16 %v74
  %v499 = vunpack.c.l.b16 %v75
  %v500 = vunpack.c.h.b16 %v75
  %v501 = vunpack.c.l.b16 %v76
  %v502 = vunpack.c.h.b16 %v76
  %v503 = vunpack.c.l.b16 %v77
  %v504 = vunpack.c.h.b16 %v77
  %v505 = vunpack.c.l.b16 %v78
  %v506 = vunpack.c.h.b16 %v78
  %v507 = vunpack.c.l.b16 %v79
  %v508 = vunpack.c.h.b16 %v79
  %v509 = vunpack.c.l.b16 %v80
  %v510 = vunpack.c.h.b16 %v80
  %v511 = vunpack.c.l.b16 %v81
  %v512 = vunpack.c.h.b16 %v81
  %v513 = vunpack.c.l.b16 %v82
  %v514 = vunpack.c.h.b16 %v82
  %v515 = vunpack.c.l.b16 %v83
  %v516 = vunpack.c.h.b16 %v83
  %v517 = vunpack.c.l.b16 %v84
  %v518 = vunpack.c.h.b16 %v84
  %v519 = vunpack.c.l.b16 %v85
  %v520 = vunpack.c.h.b16 %v85
  %v521 = vunpack.c.l.b16 %v86
  %v522 = vunpack.c.h.b16 %v86
  %v523 = vunpack.c.l.b16 %v87
  %v524 = vunpack.c.h.b16 %v87
  %v525 = vunpack.c.l.b16 %v88
  %v526 = vunpack.c.h.b16 %v88
  %v527 = vunpack.c.l.b16 %v89
  %v528 = vunpack.c.h.b16 %v89
  %v529 = vunpack.c.l.b16 %v90
  %v530 = vunpack.c.h.b16 %v90
  %v531 = vunpack.c.l.b16 %v91
  %v532 = vunpack.c.h.b16 %v91
  %v533 = vunpack.c.l.b16 %v92
  %v534 = vunpack.c.h.b16 %v92
  %v535 = vunpack.c.l.b16 %v93
  %v536 = vunpack.c.h.b16 %v93
  %v537 = vunpack.c.l.b16 %v94
  %v538 = vunpack.c.h.b16 %v94
  %v539 = vunpack.c.l.b16 %v95
  %v540 = vunpack.c.h.b16 %v95
  %v541 = vunpack.c.l.b16 %v96
  %v542 = vunpack.c.h.b16 %v96
  %v543 = vunpack.c.l.b16 %v97
  %v544 = vunpack.c.h.b16 %v97
  %v545 = vunpack.c.l.b16 %v98
  %v546 = vunpack.c.h.b16 %v98
  %v547 = vunpack.c.l.b16 %v99
  %v548 = vunpack.c.h.b16 %v99
  %v549 = vunpack.c.l.b16 %v100
  %v550 = vunpack.c.h.b16 %v100
  %v551 = vunpack.c.l.b16 %v101
  %v552 = vunpack.c.h.b16 %v101
  %v553 = vunpack.c.l.b16 %v102
  %v554 = vunpack.c.h.b16 %v102
  %v555 = vunpack.c.l.b16 %v103
  %v556 = vunpack.c.h.b16 %v103
  %v557 = vunpack.c.l.b16 %v104
  %v558 = vunpack.c.h.b16 %v104
  %v559 = vunpack.c.l.b16 %v105
  %v560 = vunpack.c.h.b16 %v105
  %v561 = vunpack.c.l.b16 %v106
  %v562 = vunpack.c.h.b16 %v106
  %v563 = vunpack.c.l.b16 %v107
  %v564 = vunpack.c.h.b16 %v107
  %v565 = vunpack.c.l.b16 %v108
  %v566 = vunpack.c.h.b16 %v108
  %v567 = vunpack.c.l.b16 %v109
  %v568 = vunpack.c.h.b16 %v109
  %v569 = vunpack.c.l.b16 %v110
  %v570 = vunpack.c.h.b16 %v110
  %v571 = vunpack.c.l.b16 %v111
  %v572 = vunpack.c.h.b16 %v111
  %v573 = vunpack.c.l.b16 %v112
  %v574 = vunpack.c.h.b16 %v112
  %v575 = vunpack.c.l.b16 %v113
  %v576 = vunpack.c.h.b16 %v113
  %v577 = vunpack.c.l.b16 %v114
  %v578 = vunpack.c.h.b16 %v114
  %v579 = vunpack.c.l.b16 %v115
  %v580 = vunpack.c.h.b16 %v115
  %v581 = vunpack.c.l.b16 %v116
  %v582 = vunpack.c.h.b16 %v116
  %v583 = vunpack.c.l.b16 %v117
  %v584 = vunpack.c.h.b16 %v117
  %v585 = vunpack.c.l.b16 %v118
  %v586 = vunpack.c.h.b16 %v118
  %v587 = vunpack.c.l.b16 %v119
  %v588 = vunpack.c.h.b16 %v119
  %v589 = vunpack.c.l.b16 %v120
  %v590 = vunpack.c.h.b16 %v120
  %v591 = vunpack.c.l.b16 %v121
  %v592 = vunpack.c.h.b16 %v121
  %v593 = vunpack.c.l.b16 %v122
  %v594 = vunpack.c.h.b16 %v122
  %v595 = vunpack.c.l.b16 %v123
  %v596 = vunpack.c.h.b16 %v123
  %v597 = vunpack.c.l.b16 %v124
  %v598 = vunpack.c.h.b16 %v124
  %v599 = vunpack.c.l.b16 %v125
  %v600 = vunpack.c.h.b16 %v125
  %v601 = vunpack.c.l.b16 %v126
  %v602 = vunpack.c.h.b16 %v126
  %v603 = vunpack.c.l.b16 %v127
  %v604 = vunpack.c.h.b16 %v127
  %v605 = vunpack.c.l.b16 %v128
  %v606 = vunpack.c.h.b16 %v128
  %v607 = vunpack.c.l.b16 %v129
  %v608 = vunpack.c.h.b16 %v129
  %v609 = vunpack.c.l.b16 %v130
  %v610 = vunpack.c.h.b16 %v130
  %v611 = vunpack.c.l.b16 %v131
  %v612 = vunpack.c.h.b16 %v131
  %v613 = vunpack.c.l.b16 %v132
  %v614 = vunpack.c.h.b16 %v132
  %v615 = vunpack.c.l.b16 %v133
  %v616 = vunpack.c.h.b16 %v133
  %v617 = vunpack.c.l.b16 %v134
  %v618 = vunpack.c.h.b16 %v134
  %v619 = vunpack.c.l.b16 %v135
  %v620 = vunpack.c.h.b16 %v135
  %v621 = vunpack.c.l.b16 %v136
  %v622 = vunpack.c.h.b16 %v136
  %v623 = vunpack.c.l.b16 %v137
  %v624 = vunpack.c.h.b16 %v137
  %v625 = vunpack.c.l.b16 %v138
  %v626 = vunpack.c.h.b16 %v138
  %v627 = vunpack.c.l.b16 %v139
  %v628 = vunpack.c.h.b16 %v139
  %v629 = vunpack.c.l.b16 %v140
  %v630 = vunpack.c.h.b16 %v140
  %v631 = vunpack.c.l.b16 %v141
  %v632 = vunpack.c.h.b16 %v141
  %v633 = vunpack.c.l.b16 %v142
  %v634 = vunpack.c.h.b16 %v142
  %v635 = vunpack.c.l.b16 %v143
  %v636 = vunpack.c.h.b16 %v143
  %v637 = vunpack.c.l.b16 %v144
  %v638 = vunpack.c.h.b16 %v144
  %v639 = vunpack.c.l.b16 %v145
  %v640 = vunpack.c.h.b16 %v145
  %v641 = vunpack.c.l.b16 %v146
  %v642 = vunpack.c.h.b16 %v146
  %v643 = vunpack.c.l.b16 %v147
  %v644 = vunpack.c.h.b16 %v147
  %v645 = vunpack.c.l.b16 %v148
  %v646 = vunpack.c.h.b16 %v148
  %v647 = vunpack.c.l.b16 %v149
  %v648 = vunpack.c.h.b16 %v149
  %v649 = vunpack.c.l.b16 %v150
  %v650 = vunpack.c.h.b16 %v150
  %v651 = vunpack.c.l.b16 %v151
  %v652 = vunpack.c.h.b16 %v151
  %v653 = vunpack.c.l.b16 %v152
  %v654 = vunpack.c.h.b16 %v152
  %v655 = vunpack.c.l.b16 %v153
  %v656 = vunpack.c.h.b16 %v153
  %v657 = vunpack.c.l.b16 %v154
  %v658 = vunpack.c.h.b16 %v154
  %v659 = vunpack.c.l.b16 %v155
  %v660 = vunpack.c.h.b16 %v155
  %v661 = vunpack.c.l.b16 %v156
  %v662 = vunpack.c.h.b16 %v156
  %v663 = vunpack.c.l.b16 %v157
  %v664 = vunpack.c.h.b16 %v157
  %v665 = vunpack.c.l.b16 %v158
  %v666 = vunpack.c.h.b16 %v158
  %v667 = vpack.c.b16 %v381, %v379
  %v668 = vpack.c.b16 %v382, %v380
  %v669 = vpack.c.b16 %v385, %v383
  %v670 = vpack.c.b16 %v386, %v384
  %v671 = vpack.c.b16 %v389, %v387
  %v672 = vpack.c.b16 %v390, %v388
  %v673 = vpack.c.b16 %v393, %v391
  %v674 = vpack.c.b16 %v394, %v392
  %v675 = vpack.c.b16 %v397, %v395
  %v676 = vpack.c.b16 %v398, %v396
  %v677 = vpack.c.b16 %v401, %v399
  %v678 = vpack.c.b16 %v402, %v400
  %v679 = vpack.c.b16 %v405, %v403
  %v680 = vpack.c.b16 %v406, %v404
  %v681 = vpack.c.b16 %v409, %v407
  %v682 = vpack.c.b16 %v410, %v408
  %v683 = vpack.c.b16 %v413, %v411
  %v684 = vpack.c.b16 %v414, %v412
  %v685 = vpack.c.b16 %v417, %v415
  %v686 = vpack.c.b16 %v418, %v416
  %v687 = vpack.c.b16 %v421, %v419
  %v688 = vpack.c.b16 %v422, %v420
  %v689 = vpack.c.b16 %v425, %v423
  %v690 = vpack.c.b16 %v426, %v424
  %v691 = vpack.c.b16 %v429, %v427
  %v692 = vpack.c.b16 %v430, %v428
  %v693 = vpack.c.b16 %v433, %v431
  %v694 = vpack.c.b16 %v434, %v432
  %v695 = vpack.c.b16 %v437, %v435
  %v696 = vpack.c.b16 %v438, %v436
  %v697 = vpack.c.b16 %v441, %v439
  %v698 = vpack.c.b16 %v442, %v440
  %v699 = vpack.c.b16 %v445, %v443
  %v700 = vpack.c.b16 %v446, %v444
  %v701 = vpack.c.b16 %v449, %v447
  %v702 = vpack.c.b16 %v450, %v448
  %v703 = vpack.c.b16 %v453, %v451
  %v704 = vpack.c.b16 %v454, %v452
  %v705 = vpack.c.b16 %v457, %v455
  %v706 = vpack.c.b16 %v458, %v456
  %v707 = vpack.c.b16 %v461, %v459
  %v708 = vpack.c.b16 %v462, %v460
  %v709 = vpack.c.b16 %v465, %v463
  %v710 = vpack.c.b16 %v466, %v464
  %v711 = vpack.c.b16 %v469, %v467
  %v712 = vpack.c.b16 %v470, %v468
  %v713 = vpack.c.b16 %v473, %v471
  %v714 = vpack.c.b16 %v474, %v472
  %v715 = vpack.c.b16 %v477, %v475
  %v716 = vpack.c.b16 %v478, %v476
  %v717 = vpack.c.b16 %v481, %v479
  %v718 = vpack.c.b16 %v482, %v480
  %v719 = vpack.c.b16 %v485, %v483
  %v720 = vpack.c.b16 %v486, %v484
  %v721 = vpack.c.b16 %v489, %v487
  %v722 = vpack.c.b16 %v490, %v488
  %v723 = vpack.c.b16 %v493, %v491
  %v724 = vpack.c.b16 %v494, %v492
  %v725 = vpack.c.b16 %v497, %v495
  %v726 = vpack.c.b16 %v498, %v496
  %v727 = vpack.c.b16 %v501, %v499
  %v728 = vpack.c.b16 %v502, %v500
  %v729 = vpack.c.b16 %v505, %v503
  %v730 = vpack.c.b16 %v506, %v504
  %v731 = vpack.c.b16 %v509, %v507
  %v732 = vpack.c.b16 %v510, %v508
  %v733 = vpack.c.b16 %v513, %v511
  %v734 = vpack.c.b16 %v514, %v512
  %v735 = vpack.c.b16 %v517, %v515
  %v736 = vpack.c.b16 %v518, %v516
  %v737 = vpack.c.b16 %v521, %v519
  %v738 = vpack.c.b16 %v522, %v520
  %v739 = vpack.c.b16 %v525, %v523
  %v740 = vpack.c.b16 %v526, %v524
  %v741 = vpack.c.b16 %v529, %v527
  %v742 = vpack.c.b16 %v530, %v528
  %v743 = vpack.c.b16 %v533, %v531
  %v744 = vpack.c.b16 %v534, %v532
  %v745 = vpack.c.b16 %v537, %v535
  %v746 = vpack.c.b16 %v538, %v536
  %v747 = vpack.c.b16 %v541, %v539
  %v748 = vpack.c.b16 %v542, %v540
  %v749 = vpack.c.b16 %v545, %v543
  %v750 = vpack.c.b16 %v546, %v544
  %v751 = vpack.c.b16 %v549, %v547
  %v752 = vpack.c.b16 %v550, %v548
  %v753 = vpack.c.b16 %v553, %v551
  %v754 = vpack.c.b16 %v554, %v552
  %v755 = vpack.c.b16 %v557, %v555
  %v756 = vpack.c.b16 %v558, %v556
  %v757 = vpack.c.b16 %v561, %v559
  %v758 = vpack.c.b16 %v562, %v560
  %v759 = vpack.c.b16 %v565, %v563
  %v760 = vpack.c.b16 %v566, %v564
  %v761 = vpack.c.b16 %v569, %v567
  %v762 = vpack.c.b16 %v570, %v568
  %v763 = vpack.c.b16 %v573, %v571
  %v764 = vpack.c.b16 %v574, %v572
  %v765 = vpack.c.b16 %v577, %v575
  %v766 = vpack.c.b16 %v578, %v576
  %v767 = vpack.c.b16 %v581, %v579
  %v768 = vpack.c.b16 %v582, %v580
  %v769 = vpack.c.b16 %v585, %v583
  %v770 = vpack.c.b16 %v586, %v584
  %v771 = vpack.c.b16 %v589, %v587
  %v772 = vpack.c.b16 %v590, %v588
  %v773 = vpack.c.b16 %v593, %v591
  %v774 = vpack.c.b16 %v594, %v592
  %v775 = vpack.c.b16 %v597, %v595
  %v776 = vpack.c.b16 %v598, %v596
  %v777 = vpack.c.b16 %v601, %v599
  %v778 = vpack.c.b16 %v602, %v600
  %v779 = vpack.c.b16 %v605, %v603
  %v780 = vpack.c.b16 %v606, %v604
  %v781 = vpack.c.b16 %v609, %v607
  %v782 = vpack.c.b16 %v610, %v608
  %v783 = vpack.c.b16 %v613, %v611
  %v784 = vpack.c.b16 %v614, %v612
  %v785 = vpack.c.b16 %v617, %v615
  %v786 = vpack.c.b16 %v618, %v616
  %v787 = vpack.c.b16 %v621, %v619
  %v788 = vpack.c.b16 %v622, %v620
  %v789 = vpack.c.b16 %v625, %v623
  %v790 = vpack.c.b16 %v626, %v624
  %v791 = vpack.c.b16 %v629, %v627
  %v792 = vpack.c.b16 %v630, %v628
  %v793 = vpack.c.b16 %v633, %v631
  %v794 = vpack.c.b16 %v634, %v632
  %v795 = vpack.c.b16 %v637, %v635
  %v796 = vpack.c.b16 %v638, %v636
  %v797 = vpack.c.b16 %v641, %v639
  %v798 = vpack.c.b16 %v642, %v640
  %v799 = vpack.c.b16 %v645, %v643
  %v800 = vpack.c.b16 %v646, %v644
  %v801 = vpack.c.b16 %v649, %v647
  %v802 = vpack.c.b16 %v650, %v648
  %v803 = vpack.c.b16 %v653, %v651
  %v804 = vpack.c.b16 %v654, %v652
  %v805 = vpack.c.b16 %v657, %v655
  %v806 = vpack.c.b16 %v658, %v656
  %v807 = vpack.c.b16 %v661, %v659
  %v808 = vpack.c.b16 %v662, %v660
  %v809 = vpack.c.b16 %v665, %v663
  %v810 = vpack.c.b16 %v666, %v664
  %955 = vmatprep.subr.bf16.mxu0 %v668
  %956 = vmatpush1.bf16.msra.mxu0 %v667
  %957 = vmatprep.subr.bf16.mxu0 %v670
  %958 = vmatpush1.bf16.msra.mxu0 %v669
  %959 = vmatprep.subr.bf16.mxu0 %v672
  %960 = vmatpush1.bf16.msra.mxu0 %v671
  %961 = vmatprep.subr.bf16.mxu0 %v674
  %962 = vmatpush1.bf16.msra.mxu0 %v673
  %963 = vmatprep.subr.bf16.mxu0 %v676
  %964 = vmatpush1.bf16.msra.mxu0 %v675
  %965 = vmatprep.subr.bf16.mxu0 %v678
  %966 = vmatpush1.bf16.msra.mxu0 %v677
  %967 = vmatprep.subr.bf16.mxu0 %v680
  %968 = vmatpush1.bf16.msra.mxu0 %v679
  %969 = vmatprep.subr.bf16.mxu0 %v682
  %970 = vmatpush1.bf16.msra.mxu0 %v681
  %971 = vmatprep.subr.bf16.mxu0 %v684
  %972 = vmatpush1.bf16.msra.mxu0 %v683
  %973 = vmatprep.subr.bf16.mxu0 %v686
  %974 = vmatpush1.bf16.msra.mxu0 %v685
  %975 = vmatprep.subr.bf16.mxu0 %v688
  %976 = vmatpush1.bf16.msra.mxu0 %v687
  %977 = vmatprep.subr.bf16.mxu0 %v690
  %978 = vmatpush1.bf16.msra.mxu0 %v689
  %979 = vmatprep.subr.bf16.mxu0 %v692
  %980 = vmatpush1.bf16.msra.mxu0 %v691
  %981 = vmatprep.subr.bf16.mxu0 %v694
  %982 = vmatpush1.bf16.msra.mxu0 %v693
  %983 = vmatprep.subr.bf16.mxu0 %v696
  %984 = vmatpush1.bf16.msra.mxu0 %v695
  %985 = vmatprep.subr.bf16.mxu0 %v698
  %986 = vmatpush1.bf16.msra.mxu0 %v697
  %987 = vmatprep.mubr.bf16.mxu0 %v200
  %988 = vmatmul.mubr.bf16.gmra.mrb[0].mxu0 %v186
  %v989 = vpop.f32.mrb[0].mxu0
  %v990 = vadd.f32 0.0, %v989
  %v991 = vpop.f32.mrb[0].mxu0
  %v992 = vadd.f32 0.0, %v991
  %v993 = vpop.f32.mrb[0].mxu0
  %v994 = vpop.f32.mrb[0].mxu0
  %995 = vdwg.mxu0
  %996 = vmatprep.subr.bf16.mxu0 %v700
  %997 = vmatpush1.bf16.msra.mxu0 %v699
  %998 = vmatprep.subr.bf16.mxu0 %v702
  %999 = vmatpush1.bf16.msra.mxu0 %v701
  %1000 = vmatprep.subr.bf16.mxu0 %v704
  %1001 = vmatpush1.bf16.msra.mxu0 %v703
  %1002 = vmatprep.subr.bf16.mxu0 %v706
  %1003 = vmatpush1.bf16.msra.mxu0 %v705
  %1004 = vmatprep.subr.bf16.mxu0 %v708
  %1005 = vmatpush1.bf16.msra.mxu0 %v707
  %1006 = vmatprep.subr.bf16.mxu0 %v710
  %1007 = vmatpush1.bf16.msra.mxu0 %v709
  %1008 = vmatprep.subr.bf16.mxu0 %v712
  %1009 = vmatpush1.bf16.msra.mxu0 %v711
  %1010 = vmatprep.subr.bf16.mxu0 %v714
  %1011 = vmatpush1.bf16.msra.mxu0 %v713
  %1012 = vmatprep.subr.bf16.mxu0 %v716
  %1013 = vmatpush1.bf16.msra.mxu0 %v715
  %1014 = vmatprep.subr.bf16.mxu0 %v718
  %1015 = vmatpush1.bf16.msra.mxu0 %v717
  %1016 = vmatprep.subr.bf16.mxu0 %v720
  %1017 = vmatpush1.bf16.msra.mxu0 %v719
  %1018 = vmatprep.subr.bf16.mxu0 %v722
  %1019 = vmatpush1.bf16.msra.mxu0 %v721
  %1020 = vmatprep.subr.bf16.mxu0 %v724
  %1021 = vmatpush1.bf16.msra.mxu0 %v723
  %1022 = vmatprep.subr.bf16.mxu0 %v726
  %1023 = vmatpush1.bf16.msra.mxu0 %v725
  %1024 = vmatprep.subr.bf16.mxu0 %v728
  %1025 = vmatpush1.bf16.msra.mxu0 %v727
  %1026 = vmatprep.subr.bf16.mxu0 %v730
  %1027 = vmatpush1.bf16.msra.mxu0 %v729
  %1028 = vmatprep.mubr.bf16.mxu0 %v210
  %1029 = vmatmul.mubr.bf16.gmra.mrb[0].mxu0 %v208
  %v1030 = vpop.f32.mrb[0].mxu0
  %v1031 = vadd.f32 %v990, %v1030
  %v1032 = vpop.f32.mrb[0].mxu0
  %v1033 = vadd.f32 %v992, %v1032
  %v1034 = vpop.f32.mrb[0].mxu0
  %v1035 = vpop.f32.mrb[0].mxu0
  %1036 = vdwg.mxu0
  %1037 = vmatprep.subr.bf16.mxu0 %v732
  %1038 = vmatpush1.bf16.msra.mxu0 %v731
  %1039 = vmatprep.subr.bf16.mxu0 %v734
  %1040 = vmatpush1.bf16.msra.mxu0 %v733
  %1041 = vmatprep.subr.bf16.mxu0 %v736
  %1042 = vmatpush1.bf16.msra.mxu0 %v735
  %1043 = vmatprep.subr.bf16.mxu0 %v738
  %1044 = vmatpush1.bf16.msra.mxu0 %v737
  %1045 = vmatprep.subr.bf16.mxu0 %v740
  %1046 = vmatpush1.bf16.msra.mxu0 %v739
  %1047 = vmatprep.subr.bf16.mxu0 %v742
  %1048 = vmatpush1.bf16.msra.mxu0 %v741
  %1049 = vmatprep.subr.bf16.mxu0 %v744
  %1050 = vmatpush1.bf16.msra.mxu0 %v743
  %1051 = vmatprep.subr.bf16.mxu0 %v746
  %1052 = vmatpush1.bf16.msra.mxu0 %v745
  %1053 = vmatprep.subr.bf16.mxu0 %v748
  %1054 = vmatpush1.bf16.msra.mxu0 %v747
  %1055 = vmatprep.subr.bf16.mxu0 %v750
  %1056 = vmatpush1.bf16.msra.mxu0 %v749
  %1057 = vmatprep.subr.bf16.mxu0 %v752
  %1058 = vmatpush1.bf16.msra.mxu0 %v751
  %1059 = vmatprep.subr.bf16.mxu0 %v754
  %1060 = vmatpush1.bf16.msra.mxu0 %v753
  %1061 = vmatprep.subr.bf16.mxu0 %v756
  %1062 = vmatpush1.bf16.msra.mxu0 %v755
  %1063 = vmatprep.subr.bf16.mxu0 %v758
  %1064 = vmatpush1.bf16.msra.mxu0 %v757
  %1065 = vmatprep.subr.bf16.mxu0 %v760
  %1066 = vmatpush1.bf16.msra.mxu0 %v759
  %1067 = vmatprep.subr.bf16.mxu0 %v762
  %1068 = vmatpush1.bf16.msra.mxu0 %v761
  %1069 = vmatprep.mubr.bf16.mxu0 %v207
  %1070 = vmatmul.mubr.bf16.gmra.mrb[0].mxu0 %v193
  %v1071 = vpop.f32.mrb[0].mxu0
  %v1072 = vadd.f32 %v1031, %v1071
  %v1073 = vpop.f32.mrb[0].mxu0
  %v1074 = vadd.f32 %v1033, %v1073
  %v1075 = vpop.f32.mrb[0].mxu0
  %v1076 = vpop.f32.mrb[0].mxu0
  %1077 = vdwg.mxu0
  %1078 = vmatprep.subr.bf16.mxu0 %v764
  %1079 = vmatpush1.bf16.msra.mxu0 %v763
  %1080 = vmatprep.subr.bf16.mxu0 %v766
  %1081 = vmatpush1.bf16.msra.mxu0 %v765
  %1082 = vmatprep.subr.bf16.mxu0 %v768
  %1083 = vmatpush1.bf16.msra.mxu0 %v767
  %1084 = vmatprep.subr.bf16.mxu0 %v770
  %1085 = vmatpush1.bf16.msra.mxu0 %v769
  %1086 = vmatprep.subr.bf16.mxu0 %v772
  %1087 = vmatpush1.bf16.msra.mxu0 %v771
  %1088 = vmatprep.subr.bf16.mxu0 %v774
  %1089 = vmatpush1.bf16.msra.mxu0 %v773
  %1090 = vmatprep.subr.bf16.mxu0 %v776
  %1091 = vmatpush1.bf16.msra.mxu0 %v775
  %1092 = vmatprep.subr.bf16.mxu0 %v778
  %1093 = vmatpush1.bf16.msra.mxu0 %v777
  %1094 = vmatprep.subr.bf16.mxu0 %v780
  %1095 = vmatpush1.bf16.msra.mxu0 %v779
  %1096 = vmatprep.subr.bf16.mxu0 %v782
  %1097 = vmatpush1.bf16.msra.mxu0 %v781
  %1098 = vmatprep.subr.bf16.mxu0 %v784
  %1099 = vmatpush1.bf16.msra.mxu0 %v783
  %1100 = vmatprep.subr.bf16.mxu0 %v786
  %1101 = vmatpush1.bf16.msra.mxu0 %v785
  %1102 = vmatprep.subr.bf16.mxu0 %v788
  %1103 = vmatpush1.bf16.msra.mxu0 %v787
  %1104 = vmatprep.subr.bf16.mxu0 %v790
  %1105 = vmatpush1.bf16.msra.mxu0 %v789
  %1106 = vmatprep.subr.bf16.mxu0 %v792
  %1107 = vmatpush1.bf16.msra.mxu0 %v791
  %1108 = vmatprep.subr.bf16.mxu0 %v794
  %1109 = vmatpush1.bf16.msra.mxu0 %v793
  %1110 = vmatprep.mubr.bf16.mxu0 %v211
  %1111 = vmatmul.mubr.bf16.gmra.mrb[0].mxu0 %v209
  %v1112 = vpop.f32.mrb[0].mxu0
  %v1113 = vadd.f32 %v1072, %v1112
  %v1114 = vpop.f32.mrb[0].mxu0
  %v1115 = vadd.f32 %v1074, %v1114
  %v1116 = vpop.f32.mrb[0].mxu0
  %v1117 = vpop.f32.mrb[0].mxu0
  %1118 = vdwg.mxu0
  %1119 = vmatprep.subr.bf16.mxu0 %v796
  %1120 = vmatpush1.bf16.msra.mxu0 %v795
  %1121 = vmatprep.subr.bf16.mxu0 %v798
  %1122 = vmatpush1.bf16.msra.mxu0 %v797
  %1123 = vmatprep.subr.bf16.mxu0 %v800
  %1124 = vmatpush1.bf16.msra.mxu0 %v799
  %1125 = vmatprep.subr.bf16.mxu0 %v802
  %1126 = vmatpush1.bf16.msra.mxu0 %v801
  %1127 = vmatprep.subr.bf16.mxu0 %v804
  %1128 = vmatpush1.bf16.msra.mxu0 %v803
  %1129 = vmatprep.subr.bf16.mxu0 %v806
  %1130 = vmatpush1.bf16.msra.mxu0 %v805
  %1131 = vmatprep.subr.bf16.mxu0 %v808
  %1132 = vmatpush1.bf16.msra.mxu0 %v807
  %1133 = vmatprep.subr.bf16.mxu0 %v810
  %1134 = vmatpush1.bf16.msra.mxu0 %v809
  %1135 = vmatprep.subr.bf16.mxu0 0
  %1136 = vmatpush1.bf16.msra.mxu0 0
  %1137 = vmatprep.subr.bf16.mxu0 0
  %1138 = vmatpush1.bf16.msra.mxu0 0
  %1139 = vmatprep.subr.bf16.mxu0 0
  %1140 = vmatpush1.bf16.msra.mxu0 0
  %1141 = vmatprep.subr.bf16.mxu0 0
  %1142 = vmatpush1.bf16.msra.mxu0 0
  %1143 = vmatprep.subr.bf16.mxu0 0
  %1144 = vmatpush1.bf16.msra.mxu0 0
  %1145 = vmatprep.subr.bf16.mxu0 0
  %1146 = vmatpush1.bf16.msra.mxu0 0
  %1147 = vmatprep.subr.bf16.mxu0 0
  %1148 = vmatpush1.bf16.msra.mxu0 0
  %1149 = vmatprep.subr.bf16.mxu0 0
  %1150 = vmatpush1.bf16.msra.mxu0 0
  %1151 = vmatprep.mubr.bf16.mxu0 0
  %1152 = vmatmul.mubr.bf16.gmra.mrb[0].mxu0 %v225
  %v1153 = vpop.f32.mrb[0].mxu0
  %v1154 = vadd.f32 %v1113, %v1153
  %v1155 = vpop.f32.mrb[0].mxu0
  %v1156 = vadd.f32 %v1115, %v1155
  %v1157 = vpop.f32.mrb[0].mxu0
  %v1158 = vpop.f32.mrb[0].mxu0
  %1159 = vdwg.mxu0
  %s1160 = scalar_lea.vmem %s0, 9
  %v1161 = vld [vmem:[%s1160] sm:$0xff]
  %v1162 = vld [vmem:[%s1160 + $0x8] sm:$0x1]
  %v1165 = vcombine.high %v1161, %v1161
  %v1167 = vunpack.c.l.s4 1966171168
  %v1168 = vunpack.c.0.s8 %v1167
  %v1169 = vlaneseq
  %v1170 = vshrl.u32 %v1169, 7
  %v1171 = vsub.s32 %v1168, %v1170
  %v1172 = vrot.slane %v1161, %v1171
  %v1174 = vunpack.c.l.s4 1966171168
  %v1175 = vunpack.c.0.s8 %v1174
  %v1176 = vlaneseq
  %v1177 = vshrl.u32 %v1176, 7
  %v1178 = vsub.s32 %v1175, %v1177
  %v1179 = vrot.slane %v1165, %v1178
  %v1180 = vcombine.high %v1172, %v1172
  %v1181 = vcombine.high %v1179, %v1179
  %v1183 = vunpack.c.l.s4 1966171168
  %v1184 = vunpack.c.0.s8 %v1183
  %v1185 = vlaneseq
  %v1186 = vshrl.u32 %v1185, 7
  %v1187 = vsub.s32 %v1184, %v1186
  %v1188 = vrot.slane %v1172, %v1187
  %v1190 = vunpack.c.l.s4 1966171168
  %v1191 = vunpack.c.0.s8 %v1190
  %v1192 = vlaneseq
  %v1193 = vshrl.u32 %v1192, 7
  %v1194 = vsub.s32 %v1191, %v1193
  %v1195 = vrot.slane %v1179, %v1194
  %v1197 = vunpack.c.l.s4 1966171168
  %v1198 = vunpack.c.0.s8 %v1197
  %v1199 = vlaneseq
  %v1200 = vshrl.u32 %v1199, 7
  %v1201 = vsub.s32 %v1198, %v1200
  %v1202 = vrot.slane %v1180, %v1201
  %v1204 = vunpack.c.l.s4 1966171168
  %v1205 = vunpack.c.0.s8 %v1204
  %v1206 = vlaneseq
  %v1207 = vshrl.u32 %v1206, 7
  %v1208 = vsub.s32 %v1205, %v1207
  %v1209 = vrot.slane %v1181, %v1208
  %v1210 = vcombine.high %v1188, %v1188
  %v1211 = vcombine.high %v1195, %v1195
  %v1212 = vcombine.high %v1202, %v1202
  %v1213 = vcombine.high %v1209, %v1209
  %v1215 = vunpack.c.l.s4 1966171168
  %v1216 = vunpack.c.0.s8 %v1215
  %v1217 = vlaneseq
  %v1218 = vshrl.u32 %v1217, 7
  %v1219 = vsub.s32 %v1216, %v1218
  %v1220 = vrot.slane %v1162, %v1219
  %v1222 = vunpack.c.l.s4 1966171168
  %v1223 = vunpack.c.0.s8 %v1222
  %v1224 = vlaneseq
  %v1225 = vshrl.u32 %v1224, 7
  %v1226 = vsub.s32 %v1223, %v1225
  %v1227 = vrot.slane %v1220, %v1226
  %1237 = vmatprep.subr.bf16.mxu0 %v668
  %1238 = vmatpush1.bf16.msra.mxu0 %v667
  %1239 = vmatprep.subr.bf16.mxu0 %v670
  %1240 = vmatpush1.bf16.msra.mxu0 %v669
  %1241 = vmatprep.subr.bf16.mxu0 %v672
  %1242 = vmatpush1.bf16.msra.mxu0 %v671
  %1243 = vmatprep.subr.bf16.mxu0 %v674
  %1244 = vmatpush1.bf16.msra.mxu0 %v673
  %1245 = vmatprep.subr.bf16.mxu0 %v676
  %1246 = vmatpush1.bf16.msra.mxu0 %v675
  %1247 = vmatprep.subr.bf16.mxu0 %v678
  %1248 = vmatpush1.bf16.msra.mxu0 %v677
  %1249 = vmatprep.subr.bf16.mxu0 %v680
  %1250 = vmatpush1.bf16.msra.mxu0 %v679
  %1251 = vmatprep.subr.bf16.mxu0 %v682
  %1252 = vmatpush1.bf16.msra.mxu0 %v681
  %1253 = vmatprep.subr.bf16.mxu0 %v684
  %1254 = vmatpush1.bf16.msra.mxu0 %v683
  %1255 = vmatprep.subr.bf16.mxu0 %v686
  %1256 = vmatpush1.bf16.msra.mxu0 %v685
  %1257 = vmatprep.subr.bf16.mxu0 %v688
  %1258 = vmatpush1.bf16.msra.mxu0 %v687
  %1259 = vmatprep.subr.bf16.mxu0 %v690
  %1260 = vmatpush1.bf16.msra.mxu0 %v689
  %1261 = vmatprep.subr.bf16.mxu0 %v692
  %1262 = vmatpush1.bf16.msra.mxu0 %v691
  %1263 = vmatprep.subr.bf16.mxu0 %v694
  %1264 = vmatpush1.bf16.msra.mxu0 %v693
  %1265 = vmatprep.subr.bf16.mxu0 %v696
  %1266 = vmatpush1.bf16.msra.mxu0 %v695
  %1267 = vmatprep.subr.bf16.mxu0 %v698
  %1268 = vmatpush1.bf16.msra.mxu0 %v697
  %1269 = vmatprep.mubr.bf16.mxu0 %v1202
  %1270 = vmatmul.mubr.bf16.gmra.mrb[0].mxu0 %v1188
  %v1271 = vpop.f32.mrb[0].mxu0
  %v1272 = vadd.f32 0.0, %v1271
  %v1273 = vpop.f32.mrb[0].mxu0
  %v1274 = vadd.f32 0.0, %v1273
  %v1275 = vpop.f32.mrb[0].mxu0
  %v1276 = vpop.f32.mrb[0].mxu0
  %1277 = vdwg.mxu0
  %1278 = vmatprep.subr.bf16.mxu0 %v700
  %1279 = vmatpush1.bf16.msra.mxu0 %v699
  %1280 = vmatprep.subr.bf16.mxu0 %v702
  %1281 = vmatpush1.bf16.msra.mxu0 %v701
  %1282 = vmatprep.subr.bf16.mxu0 %v704
  %1283 = vmatpush1.bf16.msra.mxu0 %v703
  %1284 = vmatprep.subr.bf16.mxu0 %v706
  %1285 = vmatpush1.bf16.msra.mxu0 %v705
  %1286 = vmatprep.subr.bf16.mxu0 %v708
  %1287 = vmatpush1.bf16.msra.mxu0 %v707
  %1288 = vmatprep.subr.bf16.mxu0 %v710
  %1289 = vmatpush1.bf16.msra.mxu0 %v709
  %1290 = vmatprep.subr.bf16.mxu0 %v712
  %1291 = vmatpush1.bf16.msra.mxu0 %v711
  %1292 = vmatprep.subr.bf16.mxu0 %v714
  %1293 = vmatpush1.bf16.msra.mxu0 %v713
  %1294 = vmatprep.subr.bf16.mxu0 %v716
  %1295 = vmatpush1.bf16.msra.mxu0 %v715
  %1296 = vmatprep.subr.bf16.mxu0 %v718
  %1297 = vmatpush1.bf16.msra.mxu0 %v717
  %1298 = vmatprep.subr.bf16.mxu0 %v720
  %1299 = vmatpush1.bf16.msra.mxu0 %v719
  %1300 = vmatprep.subr.bf16.mxu0 %v722
  %1301 = vmatpush1.bf16.msra.mxu0 %v721
  %1302 = vmatprep.subr.bf16.mxu0 %v724
  %1303 = vmatpush1.bf16.msra.mxu0 %v723
  %1304 = vmatprep.subr.bf16.mxu0 %v726
  %1305 = vmatpush1.bf16.msra.mxu0 %v725
  %1306 = vmatprep.subr.bf16.mxu0 %v728
  %1307 = vmatpush1.bf16.msra.mxu0 %v727
  %1308 = vmatprep.subr.bf16.mxu0 %v730
  %1309 = vmatpush1.bf16.msra.mxu0 %v729
  %1310 = vmatprep.mubr.bf16.mxu0 %v1212
  %1311 = vmatmul.mubr.bf16.gmra.mrb[0].mxu0 %v1210
  %v1312 = vpop.f32.mrb[0].mxu0
  %v1313 = vadd.f32 %v1272, %v1312
  %v1314 = vpop.f32.mrb[0].mxu0
  %v1315 = vadd.f32 %v1274, %v1314
  %v1316 = vpop.f32.mrb[0].mxu0
  %v1317 = vpop.f32.mrb[0].mxu0
  %1318 = vdwg.mxu0
  %1319 = vmatprep.subr.bf16.mxu0 %v732
  %1320 = vmatpush1.bf16.msra.mxu0 %v731
  %1321 = vmatprep.subr.bf16.mxu0 %v734
  %1322 = vmatpush1.bf16.msra.mxu0 %v733
  %1323 = vmatprep.subr.bf16.mxu0 %v736
  %1324 = vmatpush1.bf16.msra.mxu0 %v735
  %1325 = vmatprep.subr.bf16.mxu0 %v738
  %1326 = vmatpush1.bf16.msra.mxu0 %v737
  %1327 = vmatprep.subr.bf16.mxu0 %v740
  %1328 = vmatpush1.bf16.msra.mxu0 %v739
  %1329 = vmatprep.subr.bf16.mxu0 %v742
  %1330 = vmatpush1.bf16.msra.mxu0 %v741
  %1331 = vmatprep.subr.bf16.mxu0 %v744
  %1332 = vmatpush1.bf16.msra.mxu0 %v743
  %1333 = vmatprep.subr.bf16.mxu0 %v746
  %1334 = vmatpush1.bf16.msra.mxu0 %v745
  %1335 = vmatprep.subr.bf16.mxu0 %v748
  %1336 = vmatpush1.bf16.msra.mxu0 %v747
  %1337 = vmatprep.subr.bf16.mxu0 %v750
  %1338 = vmatpush1.bf16.msra.mxu0 %v749
  %1339 = vmatprep.subr.bf16.mxu0 %v752
  %1340 = vmatpush1.bf16.msra.mxu0 %v751
  %1341 = vmatprep.subr.bf16.mxu0 %v754
  %1342 = vmatpush1.bf16.msra.mxu0 %v753
  %1343 = vmatprep.subr.bf16.mxu0 %v756
  %1344 = vmatpush1.bf16.msra.mxu0 %v755
  %1345 = vmatprep.subr.bf16.mxu0 %v758
  %1346 = vmatpush1.bf16.msra.mxu0 %v757
  %1347 = vmatprep.subr.bf16.mxu0 %v760
  %1348 = vmatpush1.bf16.msra.mxu0 %v759
  %1349 = vmatprep.subr.bf16.mxu0 %v762
  %1350 = vmatpush1.bf16.msra.mxu0 %v761
  %1351 = vmatprep.mubr.bf16.mxu0 %v1209
  %1352 = vmatmul.mubr.bf16.gmra.mrb[0].mxu0 %v1195
  %v1353 = vpop.f32.mrb[0].mxu0
  %v1354 = vadd.f32 %v1313, %v1353
  %v1355 = vpop.f32.mrb[0].mxu0
  %v1356 = vadd.f32 %v1315, %v1355
  %v1357 = vpop.f32.mrb[0].mxu0
  %v1358 = vpop.f32.mrb[0].mxu0
  %1359 = vdwg.mxu0
  %1360 = vmatprep.subr.bf16.mxu0 %v764
  %1361 = vmatpush1.bf16.msra.mxu0 %v763
  %1362 = vmatprep.subr.bf16.mxu0 %v766
  %1363 = vmatpush1.bf16.msra.mxu0 %v765
  %1364 = vmatprep.subr.bf16.mxu0 %v768
  %1365 = vmatpush1.bf16.msra.mxu0 %v767
  %1366 = vmatprep.subr.bf16.mxu0 %v770
  %1367 = vmatpush1.bf16.msra.mxu0 %v769
  %1368 = vmatprep.subr.bf16.mxu0 %v772
  %1369 = vmatpush1.bf16.msra.mxu0 %v771
  %1370 = vmatprep.subr.bf16.mxu0 %v774
  %1371 = vmatpush1.bf16.msra.mxu0 %v773
  %1372 = vmatprep.subr.bf16.mxu0 %v776
  %1373 = vmatpush1.bf16.msra.mxu0 %v775
  %1374 = vmatprep.subr.bf16.mxu0 %v778
  %1375 = vmatpush1.bf16.msra.mxu0 %v777
  %1376 = vmatprep.subr.bf16.mxu0 %v780
  %1377 = vmatpush1.bf16.msra.mxu0 %v779
  %1378 = vmatprep.subr.bf16.mxu0 %v782
  %1379 = vmatpush1.bf16.msra.mxu0 %v781
  %1380 = vmatprep.subr.bf16.mxu0 %v784
  %1381 = vmatpush1.bf16.msra.mxu0 %v783
  %1382 = vmatprep.subr.bf16.mxu0 %v786
  %1383 = vmatpush1.bf16.msra.mxu0 %v785
  %1384 = vmatprep.subr.bf16.mxu0 %v788
  %1385 = vmatpush1.bf16.msra.mxu0 %v787
  %1386 = vmatprep.subr.bf16.mxu0 %v790
  %1387 = vmatpush1.bf16.msra.mxu0 %v789
  %1388 = vmatprep.subr.bf16.mxu0 %v792
  %1389 = vmatpush1.bf16.msra.mxu0 %v791
  %1390 = vmatprep.subr.bf16.mxu0 %v794
  %1391 = vmatpush1.bf16.msra.mxu0 %v793
  %1392 = vmatprep.mubr.bf16.mxu0 %v1213
  %1393 = vmatmul.mubr.bf16.gmra.mrb[0].mxu0 %v1211
  %v1394 = vpop.f32.mrb[0].mxu0
  %v1395 = vadd.f32 %v1354, %v1394
  %v1396 = vpop.f32.mrb[0].mxu0
  %v1397 = vadd.f32 %v1356, %v1396
  %v1398 = vpop.f32.mrb[0].mxu0
  %v1399 = vpop.f32.mrb[0].mxu0
  %1400 = vdwg.mxu0
  %1401 = vmatprep.subr.bf16.mxu0 %v796
  %1402 = vmatpush1.bf16.msra.mxu0 %v795
  %1403 = vmatprep.subr.bf16.mxu0 %v798
  %1404 = vmatpush1.bf16.msra.mxu0 %v797
  %1405 = vmatprep.subr.bf16.mxu0 %v800
  %1406 = vmatpush1.bf16.msra.mxu0 %v799
  %1407 = vmatprep.subr.bf16.mxu0 %v802
  %1408 = vmatpush1.bf16.msra.mxu0 %v801
  %1409 = vmatprep.subr.bf16.mxu0 %v804
  %1410 = vmatpush1.bf16.msra.mxu0 %v803
  %1411 = vmatprep.subr.bf16.mxu0 %v806
  %1412 = vmatpush1.bf16.msra.mxu0 %v805
  %1413 = vmatprep.subr.bf16.mxu0 %v808
  %1414 = vmatpush1.bf16.msra.mxu0 %v807
  %1415 = vmatprep.subr.bf16.mxu0 %v810
  %1416 = vmatpush1.bf16.msra.mxu0 %v809
  %1417 = vmatprep.subr.bf16.mxu0 0
  %1418 = vmatpush1.bf16.msra.mxu0 0
  %1419 = vmatprep.subr.bf16.mxu0 0
  %1420 = vmatpush1.bf16.msra.mxu0 0
  %1421 = vmatprep.subr.bf16.mxu0 0
  %1422 = vmatpush1.bf16.msra.mxu0 0
  %1423 = vmatprep.subr.bf16.mxu0 0
  %1424 = vmatpush1.bf16.msra.mxu0 0
  %1425 = vmatprep.subr.bf16.mxu0 0
  %1426 = vmatpush1.bf16.msra.mxu0 0
  %1427 = vmatprep.subr.bf16.mxu0 0
  %1428 = vmatpush1.bf16.msra.mxu0 0
  %1429 = vmatprep.subr.bf16.mxu0 0
  %1430 = vmatpush1.bf16.msra.mxu0 0
  %1431 = vmatprep.subr.bf16.mxu0 0
  %1432 = vmatpush1.bf16.msra.mxu0 0
  %1433 = vmatprep.mubr.bf16.mxu0 0
  %1434 = vmatmul.mubr.bf16.gmra.mrb[0].mxu0 %v1227
  %v1435 = vpop.f32.mrb[0].mxu0
  %v1436 = vadd.f32 %v1395, %v1435
  %v1437 = vpop.f32.mrb[0].mxu0
  %v1438 = vadd.f32 %v1397, %v1437
  %v1439 = vpop.f32.mrb[0].mxu0
  %v1440 = vpop.f32.mrb[0].mxu0
  %1441 = vdwg.mxu0
  %v1442 = vmax.f32 %v1154, %v1436
  %v1443 = vmax.f32 %v1156, %v1438
  %s1444 = scalar_lea.vmem %s0, 18
  %v1445 = vld [vmem:[%s1444] sm:$0xff]
  %v1446 = vld [vmem:[%s1444 + $0x8] sm:$0x1]
  %v1449 = vcombine.high %v1445, %v1445
  %v1451 = vunpack.c.l.s4 1966171168
  %v1452 = vunpack.c.0.s8 %v1451
  %v1453 = vlaneseq
  %v1454 = vshrl.u32 %v1453, 7
  %v1455 = vsub.s32 %v1452, %v1454
  %v1456 = vrot.slane %v1445, %v1455
  %v1458 = vunpack.c.l.s4 1966171168
  %v1459 = vunpack.c.0.s8 %v1458
  %v1460 = vlaneseq
  %v1461 = vshrl.u32 %v1460, 7
  %v1462 = vsub.s32 %v1459, %v1461
  %v1463 = vrot.slane %v1449, %v1462
  %v1464 = vcombine.high %v1456, %v1456
  %v1465 = vcombine.high %v1463, %v1463
  %v1467 = vunpack.c.l.s4 1966171168
  %v1468 = vunpack.c.0.s8 %v1467
  %v1469 = vlaneseq
  %v1470 = vshrl.u32 %v1469, 7
  %v1471 = vsub.s32 %v1468, %v1470
  %v1472 = vrot.slane %v1456, %v1471
  %v1474 = vunpack.c.l.s4 1966171168
  %v1475 = vunpack.c.0.s8 %v1474
  %v1476 = vlaneseq
  %v1477 = vshrl.u32 %v1476, 7
  %v1478 = vsub.s32 %v1475, %v1477
  %v1479 = vrot.slane %v1463, %v1478
  %v1481 = vunpack.c.l.s4 1966171168
  %v1482 = vunpack.c.0.s8 %v1481
  %v1483 = vlaneseq
  %v1484 = vshrl.u32 %v1483, 7
  %v1485 = vsub.s32 %v1482, %v1484
  %v1486 = vrot.slane %v1464, %v1485
  %v1488 = vunpack.c.l.s4 1966171168
  %v1489 = vunpack.c.0.s8 %v1488
  %v1490 = vlaneseq
  %v1491 = vshrl.u32 %v1490, 7
  %v1492 = vsub.s32 %v1489, %v1491
  %v1493 = vrot.slane %v1465, %v1492
  %v1494 = vcombine.high %v1472, %v1472
  %v1495 = vcombine.high %v1479, %v1479
  %v1496 = vcombine.high %v1486, %v1486
  %v1497 = vcombine.high %v1493, %v1493
  %v1499 = vunpack.c.l.s4 1966171168
  %v1500 = vunpack.c.0.s8 %v1499
  %v1501 = vlaneseq
  %v1502 = vshrl.u32 %v1501, 7
  %v1503 = vsub.s32 %v1500, %v1502
  %v1504 = vrot.slane %v1446, %v1503
  %v1506 = vunpack.c.l.s4 1966171168
  %v1507 = vunpack.c.0.s8 %v1506
  %v1508 = vlaneseq
  %v1509 = vshrl.u32 %v1508, 7
  %v1510 = vsub.s32 %v1507, %v1509
  %v1511 = vrot.slane %v1504, %v1510
  %1521 = vmatprep.subr.bf16.mxu0 %v668
  %1522 = vmatpush1.bf16.msra.mxu0 %v667
  %1523 = vmatprep.subr.bf16.mxu0 %v670
  %1524 = vmatpush1.bf16.msra.mxu0 %v669
  %1525 = vmatprep.subr.bf16.mxu0 %v672
  %1526 = vmatpush1.bf16.msra.mxu0 %v671
  %1527 = vmatprep.subr.bf16.mxu0 %v674
  %1528 = vmatpush1.bf16.msra.mxu0 %v673
  %1529 = vmatprep.subr.bf16.mxu0 %v676
  %1530 = vmatpush1.bf16.msra.mxu0 %v675
  %1531 = vmatprep.subr.bf16.mxu0 %v678
  %1532 = vmatpush1.bf16.msra.mxu0 %v677
  %1533 = vmatprep.subr.bf16.mxu0 %v680
  %1534 = vmatpush1.bf16.msra.mxu0 %v679
  %1535 = vmatprep.subr.bf16.mxu0 %v682
  %1536 = vmatpush1.bf16.msra.mxu0 %v681
  %1537 = vmatprep.subr.bf16.mxu0 %v684
  %1538 = vmatpush1.bf16.msra.mxu0 %v683
  %1539 = vmatprep.subr.bf16.mxu0 %v686
  %1540 = vmatpush1.bf16.msra.mxu0 %v685
  %1541 = vmatprep.subr.bf16.mxu0 %v688
  %1542 = vmatpush1.bf16.msra.mxu0 %v687
  %1543 = vmatprep.subr.bf16.mxu0 %v690
  %1544 = vmatpush1.bf16.msra.mxu0 %v689
  %1545 = vmatprep.subr.bf16.mxu0 %v692
  %1546 = vmatpush1.bf16.msra.mxu0 %v691
  %1547 = vmatprep.subr.bf16.mxu0 %v694
  %1548 = vmatpush1.bf16.msra.mxu0 %v693
  %1549 = vmatprep.subr.bf16.mxu0 %v696
  %1550 = vmatpush1.bf16.msra.mxu0 %v695
  %1551 = vmatprep.subr.bf16.mxu0 %v698
  %1552 = vmatpush1.bf16.msra.mxu0 %v697
  %1553 = vmatprep.mubr.bf16.mxu0 %v1486
  %1554 = vmatmul.mubr.bf16.gmra.mrb[0].mxu0 %v1472
  %v1555 = vpop.f32.mrb[0].mxu0
  %v1556 = vadd.f32 0.0, %v1555
  %v1557 = vpop.f32.mrb[0].mxu0
  %v1558 = vadd.f32 0.0, %v1557
  %v1559 = vpop.f32.mrb[0].mxu0
  %v1560 = vpop.f32.mrb[0].mxu0
  %1561 = vdwg.mxu0
  %1562 = vmatprep.subr.bf16.mxu0 %v700
  %1563 = vmatpush1.bf16.msra.mxu0 %v699
  %1564 = vmatprep.subr.bf16.mxu0 %v702
  %1565 = vmatpush1.bf16.msra.mxu0 %v701
  %1566 = vmatprep.subr.bf16.mxu0 %v704
  %1567 = vmatpush1.bf16.msra.mxu0 %v703
  %1568 = vmatprep.subr.bf16.mxu0 %v706
  %1569 = vmatpush1.bf16.msra.mxu0 %v705
  %1570 = vmatprep.subr.bf16.mxu0 %v708
  %1571 = vmatpush1.bf16.msra.mxu0 %v707
  %1572 = vmatprep.subr.bf16.mxu0 %v710
  %1573 = vmatpush1.bf16.msra.mxu0 %v709
  %1574 = vmatprep.subr.bf16.mxu0 %v712
  %1575 = vmatpush1.bf16.msra.mxu0 %v711
  %1576 = vmatprep.subr.bf16.mxu0 %v714
  %1577 = vmatpush1.bf16.msra.mxu0 %v713
  %1578 = vmatprep.subr.bf16.mxu0 %v716
  %1579 = vmatpush1.bf16.msra.mxu0 %v715
  %1580 = vmatprep.subr.bf16.mxu0 %v718
  %1581 = vmatpush1.bf16.msra.mxu0 %v717
  %1582 = vmatprep.subr.bf16.mxu0 %v720
  %1583 = vmatpush1.bf16.msra.mxu0 %v719
  %1584 = vmatprep.subr.bf16.mxu0 %v722
  %1585 = vmatpush1.bf16.msra.mxu0 %v721
  %1586 = vmatprep.subr.bf16.mxu0 %v724
  %1587 = vmatpush1.bf16.msra.mxu0 %v723
  %1588 = vmatprep.subr.bf16.mxu0 %v726
  %1589 = vmatpush1.bf16.msra.mxu0 %v725
  %1590 = vmatprep.subr.bf16.mxu0 %v728
  %1591 = vmatpush1.bf16.msra.mxu0 %v727
  %1592 = vmatprep.subr.bf16.mxu0 %v730
  %1593 = vmatpush1.bf16.msra.mxu0 %v729
  %1594 = vmatprep.mubr.bf16.mxu0 %v1496
  %1595 = vmatmul.mubr.bf16.gmra.mrb[0].mxu0 %v1494
  %v1596 = vpop.f32.mrb[0].mxu0
  %v1597 = vadd.f32 %v1556, %v1596
  %v1598 = vpop.f32.mrb[0].mxu0
  %v1599 = vadd.f32 %v1558, %v1598
  %v1600 = vpop.f32.mrb[0].mxu0
  %v1601 = vpop.f32.mrb[0].mxu0
  %1602 = vdwg.mxu0
  %1603 = vmatprep.subr.bf16.mxu0 %v732
  %1604 = vmatpush1.bf16.msra.mxu0 %v731
  %1605 = vmatprep.subr.bf16.mxu0 %v734
  %1606 = vmatpush1.bf16.msra.mxu0 %v733
  %1607 = vmatprep.subr.bf16.mxu0 %v736
  %1608 = vmatpush1.bf16.msra.mxu0 %v735
  %1609 = vmatprep.subr.bf16.mxu0 %v738
  %1610 = vmatpush1.bf16.msra.mxu0 %v737
  %1611 = vmatprep.subr.bf16.mxu0 %v740
  %1612 = vmatpush1.bf16.msra.mxu0 %v739
  %1613 = vmatprep.subr.bf16.mxu0 %v742
  %1614 = vmatpush1.bf16.msra.mxu0 %v741
  %1615 = vmatprep.subr.bf16.mxu0 %v744
  %1616 = vmatpush1.bf16.msra.mxu0 %v743
  %1617 = vmatprep.subr.bf16.mxu0 %v746
  %1618 = vmatpush1.bf16.msra.mxu0 %v745
  %1619 = vmatprep.subr.bf16.mxu0 %v748
  %1620 = vmatpush1.bf16.msra.mxu0 %v747
  %1621 = vmatprep.subr.bf16.mxu0 %v750
  %1622 = vmatpush1.bf16.msra.mxu0 %v749
  %1623 = vmatprep.subr.bf16.mxu0 %v752
  %1624 = vmatpush1.bf16.msra.mxu0 %v751
  %1625 = vmatprep.subr.bf16.mxu0 %v754
  %1626 = vmatpush1.bf16.msra.mxu0 %v753
  %1627 = vmatprep.subr.bf16.mxu0 %v756
  %1628 = vmatpush1.bf16.msra.mxu0 %v755
  %1629 = vmatprep.subr.bf16.mxu0 %v758
  %1630 = vmatpush1.bf16.msra.mxu0 %v757
  %1631 = vmatprep.subr.bf16.mxu0 %v760
  %1632 = vmatpush1.bf16.msra.mxu0 %v759
  %1633 = vmatprep.subr.bf16.mxu0 %v762
  %1634 = vmatpush1.bf16.msra.mxu0 %v761
  %1635 = vmatprep.mubr.bf16.mxu0 %v1493
  %1636 = vmatmul.mubr.bf16.gmra.mrb[0].mxu0 %v1479
  %v1637 = vpop.f32.mrb[0].mxu0
  %v1638 = vadd.f32 %v1597, %v1637
  %v1639 = vpop.f32.mrb[0].mxu0
  %v1640 = vadd.f32 %v1599, %v1639
  %v1641 = vpop.f32.mrb[0].mxu0
  %v1642 = vpop.f32.mrb[0].mxu0
  %1643 = vdwg.mxu0
  %1644 = vmatprep.subr.bf16.mxu0 %v764
  %1645 = vmatpush1.bf16.msra.mxu0 %v763
  %1646 = vmatprep.subr.bf16.mxu0 %v766
  %1647 = vmatpush1.bf16.msra.mxu0 %v765
  %1648 = vmatprep.subr.bf16.mxu0 %v768
  %1649 = vmatpush1.bf16.msra.mxu0 %v767
  %1650 = vmatprep.subr.bf16.mxu0 %v770
  %1651 = vmatpush1.bf16.msra.mxu0 %v769
  %1652 = vmatprep.subr.bf16.mxu0 %v772
  %1653 = vmatpush1.bf16.msra.mxu0 %v771
  %1654 = vmatprep.subr.bf16.mxu0 %v774
  %1655 = vmatpush1.bf16.msra.mxu0 %v773
  %1656 = vmatprep.subr.bf16.mxu0 %v776
  %1657 = vmatpush1.bf16.msra.mxu0 %v775
  %1658 = vmatprep.subr.bf16.mxu0 %v778
  %1659 = vmatpush1.bf16.msra.mxu0 %v777
  %1660 = vmatprep.subr.bf16.mxu0 %v780
  %1661 = vmatpush1.bf16.msra.mxu0 %v779
  %1662 = vmatprep.subr.bf16.mxu0 %v782
  %1663 = vmatpush1.bf16.msra.mxu0 %v781
  %1664 = vmatprep.subr.bf16.mxu0 %v784
  %1665 = vmatpush1.bf16.msra.mxu0 %v783
  %1666 = vmatprep.subr.bf16.mxu0 %v786
  %1667 = vmatpush1.bf16.msra.mxu0 %v785
  %1668 = vmatprep.subr.bf16.mxu0 %v788
  %1669 = vmatpush1.bf16.msra.mxu0 %v787
  %1670 = vmatprep.subr.bf16.mxu0 %v790
  %1671 = vmatpush1.bf16.msra.mxu0 %v789
  %1672 = vmatprep.subr.bf16.mxu0 %v792
  %1673 = vmatpush1.bf16.msra.mxu0 %v791
  %1674 = vmatprep.subr.bf16.mxu0 %v794
  %1675 = vmatpush1.bf16.msra.mxu0 %v793
  %1676 = vmatprep.mubr.bf16.mxu0 %v1497
  %1677 = vmatmul.mubr.bf16.gmra.mrb[0].mxu0 %v1495
  %v1678 = vpop.f32.mrb[0].mxu0
  %v1679 = vadd.f32 %v1638, %v1678
  %v1680 = vpop.f32.mrb[0].mxu0
  %v1681 = vadd.f32 %v1640, %v1680
  %v1682 = vpop.f32.mrb[0].mxu0
  %v1683 = vpop.f32.mrb[0].mxu0
  %1684 = vdwg.mxu0
  %1685 = vmatprep.subr.bf16.mxu0 %v796
  %1686 = vmatpush1.bf16.msra.mxu0 %v795
  %1687 = vmatprep.subr.bf16.mxu0 %v798
  %1688 = vmatpush1.bf16.msra.mxu0 %v797
  %1689 = vmatprep.subr.bf16.mxu0 %v800
  %1690 = vmatpush1.bf16.msra.mxu0 %v799
  %1691 = vmatprep.subr.bf16.mxu0 %v802
  %1692 = vmatpush1.bf16.msra.mxu0 %v801
  %1693 = vmatprep.subr.bf16.mxu0 %v804
  %1694 = vmatpush1.bf16.msra.mxu0 %v803
  %1695 = vmatprep.subr.bf16.mxu0 %v806
  %1696 = vmatpush1.bf16.msra.mxu0 %v805
  %1697 = vmatprep.subr.bf16.mxu0 %v808
  %1698 = vmatpush1.bf16.msra.mxu0 %v807
  %1699 = vmatprep.subr.bf16.mxu0 %v810
  %1700 = vmatpush1.bf16.msra.mxu0 %v809
  %1701 = vmatprep.subr.bf16.mxu0 0
  %1702 = vmatpush1.bf16.msra.mxu0 0
  %1703 = vmatprep.subr.bf16.mxu0 0
  %1704 = vmatpush1.bf16.msra.mxu0 0
  %1705 = vmatprep.subr.bf16.mxu0 0
  %1706 = vmatpush1.bf16.msra.mxu0 0
  %1707 = vmatprep.subr.bf16.mxu0 0
  %1708 = vmatpush1.bf16.msra.mxu0 0
  %1709 = vmatprep.subr.bf16.mxu0 0
  %1710 = vmatpush1.bf16.msra.mxu0 0
  %1711 = vmatprep.subr.bf16.mxu0 0
  %1712 = vmatpush1.bf16.msra.mxu0 0
  %1713 = vmatprep.subr.bf16.mxu0 0
  %1714 = vmatpush1.bf16.msra.mxu0 0
  %1715 = vmatprep.subr.bf16.mxu0 0
  %1716 = vmatpush1.bf16.msra.mxu0 0
  %1717 = vmatprep.mubr.bf16.mxu0 0
  %1718 = vmatmul.mubr.bf16.gmra.mrb[0].mxu0 %v1511
  %v1719 = vpop.f32.mrb[0].mxu0
  %v1720 = vadd.f32 %v1679, %v1719
  %v1721 = vpop.f32.mrb[0].mxu0
  %v1722 = vadd.f32 %v1681, %v1721
  %v1723 = vpop.f32.mrb[0].mxu0
  %v1724 = vpop.f32.mrb[0].mxu0
  %1725 = vdwg.mxu0
  %v1726 = vmax.f32 %v1442, %v1720
  %v1727 = vmax.f32 %v1443, %v1722
  %s1728 = scalar_lea.vmem %s0, 27
  %v1729 = vld [vmem:[%s1728] sm:$0xff]
  %v1730 = vld [vmem:[%s1728 + $0x8] sm:$0x1]
  %v1733 = vcombine.high %v1729, %v1729
  %v1735 = vunpack.c.l.s4 1966171168
  %v1736 = vunpack.c.0.s8 %v1735
  %v1737 = vlaneseq
  %v1738 = vshrl.u32 %v1737, 7
  %v1739 = vsub.s32 %v1736, %v1738
  %v1740 = vrot.slane %v1729, %v1739
  %v1742 = vunpack.c.l.s4 1966171168
  %v1743 = vunpack.c.0.s8 %v1742
  %v1744 = vlaneseq
  %v1745 = vshrl.u32 %v1744, 7
  %v1746 = vsub.s32 %v1743, %v1745
  %v1747 = vrot.slane %v1733, %v1746
  %v1748 = vcombine.high %v1740, %v1740
  %v1749 = vcombine.high %v1747, %v1747
  %v1751 = vunpack.c.l.s4 1966171168
  %v1752 = vunpack.c.0.s8 %v1751
  %v1753 = vlaneseq
  %v1754 = vshrl.u32 %v1753, 7
  %v1755 = vsub.s32 %v1752, %v1754
  %v1756 = vrot.slane %v1740, %v1755
  %v1758 = vunpack.c.l.s4 1966171168
  %v1759 = vunpack.c.0.s8 %v1758
  %v1760 = vlaneseq
  %v1761 = vshrl.u32 %v1760, 7
  %v1762 = vsub.s32 %v1759, %v1761
  %v1763 = vrot.slane %v1747, %v1762
  %v1765 = vunpack.c.l.s4 1966171168
  %v1766 = vunpack.c.0.s8 %v1765
  %v1767 = vlaneseq
  %v1768 = vshrl.u32 %v1767, 7
  %v1769 = vsub.s32 %v1766, %v1768
  %v1770 = vrot.slane %v1748, %v1769
  %v1772 = vunpack.c.l.s4 1966171168
  %v1773 = vunpack.c.0.s8 %v1772
  %v1774 = vlaneseq
  %v1775 = vshrl.u32 %v1774, 7
  %v1776 = vsub.s32 %v1773, %v1775
  %v1777 = vrot.slane %v1749, %v1776
  %v1778 = vcombine.high %v1756, %v1756
  %v1779 = vcombine.high %v1763, %v1763
  %v1780 = vcombine.high %v1770, %v1770
  %v1781 = vcombine.high %v1777, %v1777
  %v1783 = vunpack.c.l.s4 1966171168
  %v1784 = vunpack.c.0.s8 %v1783
  %v1785 = vlaneseq
  %v1786 = vshrl.u32 %v1785, 7
  %v1787 = vsub.s32 %v1784, %v1786
  %v1788 = vrot.slane %v1730, %v1787
  %v1790 = vunpack.c.l.s4 1966171168
  %v1791 = vunpack.c.0.s8 %v1790
  %v1792 = vlaneseq
  %v1793 = vshrl.u32 %v1792, 7
  %v1794 = vsub.s32 %v1791, %v1793
  %v1795 = vrot.slane %v1788, %v1794
  %1805 = vmatprep.subr.bf16.mxu0 %v668
  %1806 = vmatpush1.bf16.msra.mxu0 %v667
  %1807 = vmatprep.subr.bf16.mxu0 %v670
  %1808 = vmatpush1.bf16.msra.mxu0 %v669
  %1809 = vmatprep.subr.bf16.mxu0 %v672
  %1810 = vmatpush1.bf16.msra.mxu0 %v671
  %1811 = vmatprep.subr.bf16.mxu0 %v674
  %1812 = vmatpush1.bf16.msra.mxu0 %v673
  %1813 = vmatprep.subr.bf16.mxu0 %v676
  %1814 = vmatpush1.bf16.msra.mxu0 %v675
  %1815 = vmatprep.subr.bf16.mxu0 %v678
  %1816 = vmatpush1.bf16.msra.mxu0 %v677
  %1817 = vmatprep.subr.bf16.mxu0 %v680
  %1818 = vmatpush1.bf16.msra.mxu0 %v679
  %1819 = vmatprep.subr.bf16.mxu0 %v682
  %1820 = vmatpush1.bf16.msra.mxu0 %v681
  %1821 = vmatprep.subr.bf16.mxu0 %v684
  %1822 = vmatpush1.bf16.msra.mxu0 %v683
  %1823 = vmatprep.subr.bf16.mxu0 %v686
  %1824 = vmatpush1.bf16.msra.mxu0 %v685
  %1825 = vmatprep.subr.bf16.mxu0 %v688
  %1826 = vmatpush1.bf16.msra.mxu0 %v687
  %1827 = vmatprep.subr.bf16.mxu0 %v690
  %1828 = vmatpush1.bf16.msra.mxu0 %v689
  %1829 = vmatprep.subr.bf16.mxu0 %v692
  %1830 = vmatpush1.bf16.msra.mxu0 %v691
  %1831 = vmatprep.subr.bf16.mxu0 %v694
  %1832 = vmatpush1.bf16.msra.mxu0 %v693
  %1833 = vmatprep.subr.bf16.mxu0 %v696
  %1834 = vmatpush1.bf16.msra.mxu0 %v695
  %1835 = vmatprep.subr.bf16.mxu0 %v698
  %1836 = vmatpush1.bf16.msra.mxu0 %v697
  %1837 = vmatprep.mubr.bf16.mxu0 %v1770
  %1838 = vmatmul.mubr.bf16.gmra.mrb[0].mxu0 %v1756
  %v1839 = vpop.f32.mrb[0].mxu0
  %v1840 = vadd.f32 0.0, %v1839
  %v1841 = vpop.f32.mrb[0].mxu0
  %v1842 = vadd.f32 0.0, %v1841
  %v1843 = vpop.f32.mrb[0].mxu0
  %v1844 = vpop.f32.mrb[0].mxu0
  %1845 = vdwg.mxu0
  %1846 = vmatprep.subr.bf16.mxu0 %v700
  %1847 = vmatpush1.bf16.msra.mxu0 %v699
  %1848 = vmatprep.subr.bf16.mxu0 %v702
  %1849 = vmatpush1.bf16.msra.mxu0 %v701
  %1850 = vmatprep.subr.bf16.mxu0 %v704
  %1851 = vmatpush1.bf16.msra.mxu0 %v703
  %1852 = vmatprep.subr.bf16.mxu0 %v706
  %1853 = vmatpush1.bf16.msra.mxu0 %v705
  %1854 = vmatprep.subr.bf16.mxu0 %v708
  %1855 = vmatpush1.bf16.msra.mxu0 %v707
  %1856 = vmatprep.subr.bf16.mxu0 %v710
  %1857 = vmatpush1.bf16.msra.mxu0 %v709
  %1858 = vmatprep.subr.bf16.mxu0 %v712
  %1859 = vmatpush1.bf16.msra.mxu0 %v711
  %1860 = vmatprep.subr.bf16.mxu0 %v714
  %1861 = vmatpush1.bf16.msra.mxu0 %v713
  %1862 = vmatprep.subr.bf16.mxu0 %v716
  %1863 = vmatpush1.bf16.msra.mxu0 %v715
  %1864 = vmatprep.subr.bf16.mxu0 %v718
  %1865 = vmatpush1.bf16.msra.mxu0 %v717
  %1866 = vmatprep.subr.bf16.mxu0 %v720
  %1867 = vmatpush1.bf16.msra.mxu0 %v719
  %1868 = vmatprep.subr.bf16.mxu0 %v722
  %1869 = vmatpush1.bf16.msra.mxu0 %v721
  %1870 = vmatprep.subr.bf16.mxu0 %v724
  %1871 = vmatpush1.bf16.msra.mxu0 %v723
  %1872 = vmatprep.subr.bf16.mxu0 %v726
  %1873 = vmatpush1.bf16.msra.mxu0 %v725
  %1874 = vmatprep.subr.bf16.mxu0 %v728
  %1875 = vmatpush1.bf16.msra.mxu0 %v727
  %1876 = vmatprep.subr.bf16.mxu0 %v730
  %1877 = vmatpush1.bf16.msra.mxu0 %v729
  %1878 = vmatprep.mubr.bf16.mxu0 %v1780
  %1879 = vmatmul.mubr.bf16.gmra.mrb[0].mxu0 %v1778
  %v1880 = vpop.f32.mrb[0].mxu0
  %v1881 = vadd.f32 %v1840, %v1880
  %v1882 = vpop.f32.mrb[0].mxu0
  %v1883 = vadd.f32 %v1842, %v1882
  %v1884 = vpop.f32.mrb[0].mxu0
  %v1885 = vpop.f32.mrb[0].mxu0
  %1886 = vdwg.mxu0
  %1887 = vmatprep.subr.bf16.mxu0 %v732
  %1888 = vmatpush1.bf16.msra.mxu0 %v731
  %1889 = vmatprep.subr.bf16.mxu0 %v734
  %1890 = vmatpush1.bf16.msra.mxu0 %v733
  %1891 = vmatprep.subr.bf16.mxu0 %v736
  %1892 = vmatpush1.bf16.msra.mxu0 %v735
  %1893 = vmatprep.subr.bf16.mxu0 %v738
  %1894 = vmatpush1.bf16.msra.mxu0 %v737
  %1895 = vmatprep.subr.bf16.mxu0 %v740
  %1896 = vmatpush1.bf16.msra.mxu0 %v739
  %1897 = vmatprep.subr.bf16.mxu0 %v742
  %1898 = vmatpush1.bf16.msra.mxu0 %v741
  %1899 = vmatprep.subr.bf16.mxu0 %v744
  %1900 = vmatpush1.bf16.msra.mxu0 %v743
  %1901 = vmatprep.subr.bf16.mxu0 %v746
  %1902 = vmatpush1.bf16.msra.mxu0 %v745
  %1903 = vmatprep.subr.bf16.mxu0 %v748
  %1904 = vmatpush1.bf16.msra.mxu0 %v747
  %1905 = vmatprep.subr.bf16.mxu0 %v750
  %1906 = vmatpush1.bf16.msra.mxu0 %v749
  %1907 = vmatprep.subr.bf16.mxu0 %v752
  %1908 = vmatpush1.bf16.msra.mxu0 %v751
  %1909 = vmatprep.subr.bf16.mxu0 %v754
  %1910 = vmatpush1.bf16.msra.mxu0 %v753
  %1911 = vmatprep.subr.bf16.mxu0 %v756
  %1912 = vmatpush1.bf16.msra.mxu0 %v755
  %1913 = vmatprep.subr.bf16.mxu0 %v758
  %1914 = vmatpush1.bf16.msra.mxu0 %v757
  %1915 = vmatprep.subr.bf16.mxu0 %v760
  %1916 = vmatpush1.bf16.msra.mxu0 %v759
  %1917 = vmatprep.subr.bf16.mxu0 %v762
  %1918 = vmatpush1.bf16.msra.mxu0 %v761
  %1919 = vmatprep.mubr.bf16.mxu0 %v1777
  %1920 = vmatmul.mubr.bf16.gmra.mrb[0].mxu0 %v1763
  %v1921 = vpop.f32.mrb[0].mxu0
  %v1922 = vadd.f32 %v1881, %v1921
  %v1923 = vpop.f32.mrb[0].mxu0
  %v1924 = vadd.f32 %v1883, %v1923
  %v1925 = vpop.f32.mrb[0].mxu0
  %v1926 = vpop.f32.mrb[0].mxu0
  %1927 = vdwg.mxu0
  %1928 = vmatprep.subr.bf16.mxu0 %v764
  %1929 = vmatpush1.bf16.msra.mxu0 %v763
  %1930 = vmatprep.subr.bf16.mxu0 %v766
  %1931 = vmatpush1.bf16.msra.mxu0 %v765
  %1932 = vmatprep.subr.bf16.mxu0 %v768
  %1933 = vmatpush1.bf16.msra.mxu0 %v767
  %1934 = vmatprep.subr.bf16.mxu0 %v770
  %1935 = vmatpush1.bf16.msra.mxu0 %v769
  %1936 = vmatprep.subr.bf16.mxu0 %v772
  %1937 = vmatpush1.bf16.msra.mxu0 %v771
  %1938 = vmatprep.subr.bf16.mxu0 %v774
  %1939 = vmatpush1.bf16.msra.mxu0 %v773
  %1940 = vmatprep.subr.bf16.mxu0 %v776
  %1941 = vmatpush1.bf16.msra.mxu0 %v775
  %1942 = vmatprep.subr.bf16.mxu0 %v778
  %1943 = vmatpush1.bf16.msra.mxu0 %v777
  %1944 = vmatprep.subr.bf16.mxu0 %v780
  %1945 = vmatpush1.bf16.msra.mxu0 %v779
  %1946 = vmatprep.subr.bf16.mxu0 %v782
  %1947 = vmatpush1.bf16.msra.mxu0 %v781
  %1948 = vmatprep.subr.bf16.mxu0 %v784
  %1949 = vmatpush1.bf16.msra.mxu0 %v783
  %1950 = vmatprep.subr.bf16.mxu0 %v786
  %1951 = vmatpush1.bf16.msra.mxu0 %v785
  %1952 = vmatprep.subr.bf16.mxu0 %v788
  %1953 = vmatpush1.bf16.msra.mxu0 %v787
  %1954 = vmatprep.subr.bf16.mxu0 %v790
  %1955 = vmatpush1.bf16.msra.mxu0 %v789
  %1956 = vmatprep.subr.bf16.mxu0 %v792
  %1957 = vmatpush1.bf16.msra.mxu0 %v791
  %1958 = vmatprep.subr.bf16.mxu0 %v794
  %1959 = vmatpush1.bf16.msra.mxu0 %v793
  %1960 = vmatprep.mubr.bf16.mxu0 %v1781
  %1961 = vmatmul.mubr.bf16.gmra.mrb[0].mxu0 %v1779
  %v1962 = vpop.f32.mrb[0].mxu0
  %v1963 = vadd.f32 %v1922, %v1962
  %v1964 = vpop.f32.mrb[0].mxu0
  %v1965 = vadd.f32 %v1924, %v1964
  %v1966 = vpop.f32.mrb[0].mxu0
  %v1967 = vpop.f32.mrb[0].mxu0
  %1968 = vdwg.mxu0
  %1969 = vmatprep.subr.bf16.mxu0 %v796
  %1970 = vmatpush1.bf16.msra.mxu0 %v795
  %1971 = vmatprep.subr.bf16.mxu0 %v798
  %1972 = vmatpush1.bf16.msra.mxu0 %v797
  %1973 = vmatprep.subr.bf16.mxu0 %v800
  %1974 = vmatpush1.bf16.msra.mxu0 %v799
  %1975 = vmatprep.subr.bf16.mxu0 %v802
  %1976 = vmatpush1.bf16.msra.mxu0 %v801
  %1977 = vmatprep.subr.bf16.mxu0 %v804
  %1978 = vmatpush1.bf16.msra.mxu0 %v803
  %1979 = vmatprep.subr.bf16.mxu0 %v806
  %1980 = vmatpush1.bf16.msra.mxu0 %v805
  %1981 = vmatprep.subr.bf16.mxu0 %v808
  %1982 = vmatpush1.bf16.msra.mxu0 %v807
  %1983 = vmatprep.subr.bf16.mxu0 %v810
  %1984 = vmatpush1.bf16.msra.mxu0 %v809
  %1985 = vmatprep.subr.bf16.mxu0 0
  %1986 = vmatpush1.bf16.msra.mxu0 0
  %1987 = vmatprep.subr.bf16.mxu0 0
  %1988 = vmatpush1.bf16.msra.mxu0 0
  %1989 = vmatprep.subr.bf16.mxu0 0
  %1990 = vmatpush1.bf16.msra.mxu0 0
  %1991 = vmatprep.subr.bf16.mxu0 0
  %1992 = vmatpush1.bf16.msra.mxu0 0
  %1993 = vmatprep.subr.bf16.mxu0 0
  %1994 = vmatpush1.bf16.msra.mxu0 0
  %1995 = vmatprep.subr.bf16.mxu0 0
  %1996 = vmatpush1.bf16.msra.mxu0 0
  %1997 = vmatprep.subr.bf16.mxu0 0
  %1998 = vmatpush1.bf16.msra.mxu0 0
  %1999 = vmatprep.subr.bf16.mxu0 0
  %2000 = vmatpush1.bf16.msra.mxu0 0
  %2001 = vmatprep.mubr.bf16.mxu0 0
  %2002 = vmatmul.mubr.bf16.gmra.mrb[0].mxu0 %v1795
  %v2003 = vpop.f32.mrb[0].mxu0
  %v2004 = vadd.f32 %v1963, %v2003
  %v2005 = vpop.f32.mrb[0].mxu0
  %v2006 = vadd.f32 %v1965, %v2005
  %v2007 = vpop.f32.mrb[0].mxu0
  %v2008 = vpop.f32.mrb[0].mxu0
  %2009 = vdwg.mxu0
  %v2010 = vmax.f32 %v1726, %v2004
  %v2011 = vmax.f32 %v1727, %v2006
  %v2012 = vld [vmem:[%s2] sm:$0x3]
  %v2014 = vlaneseq
  %v2015 = vshrl.u32 %v2014, 7
  %v2016 = vsub.s32 0, %v2015
  %v2017 = vrot.slane %v2012, %v2016
  %v2018 = vlaneseq
  %v2019 = vshrl.u32 %v2018, 7
  %v2020 = vsub.s32 1, %v2019
  %v2021 = vrot.slane %v2012, %v2020
  %v2024 = vadd.f32 %v2010, %v2017
  %v2025 = vadd.f32 %v2011, %v2021
  %v2026 = vmax.f32 %v2024, 0.0
  %v2027 = vmax.f32 %v2025, 0.0
  %v2028 = vpack.c.bf16 %v2026, %v2026
  %v2029 = vpack.c.bf16 %v2027, %v2027
  %v2032 = vcombine.low %v2028, %v2029
  %v2034 = vunpack.c.l.s4 1966171168
  %v2035 = vunpack.c.0.s8 %v2034
  %v2036 = vlaneseq
  %v2037 = vshrl.u32 %v2036, 7
  %v2038 = vsub.s32 %v2035, %v2037
  %v2039 = vrot.slane %v2032, %v2038
  %v2041 = vunpack.c.l.s4 1966171168
  %v2042 = vunpack.c.0.s8 %v2041
  %v2043 = vlaneseq
  %v2044 = vshrl.u32 %v2043, 7
  %v2045 = vsub.s32 %v2042, %v2044
  %v2046 = vrot.slane %v2039, %v2045
  %2048 = vst [vmem:[%s3] sm:$0x3] %v2046
  // Predicated region
  $region14: #{animal_classifier_forward.10} parent=0 // pred_check
    _
  $region15: #{animal_classifier_forward.10} parent=0 // pred_check_branch
    %2050 = sbr.rel (0) target = $region17
  $region16: #{animal_classifier_forward.10} parent=0 // pred_region
    _
  $region17: #{animal_classifier_forward.10} parent=0 // pred_fallthru
    _
  // Predicated region
  $region18: #{animal_classifier_forward.10} parent=0 // pred_check
    _
  $region19: #{animal_classifier_forward.10} parent=0 // pred_check_branch
    %2052 = sbr.rel (0) target = $region21
  $region20: #{animal_classifier_forward.10} parent=0 // pred_region
    _
  $region21: #{animal_classifier_forward.10} parent=0 // pred_fallthru
    _

</llo_original>
